<compile_context>
chip_gen: v6e
topology: v6e:2x2x1
jax: 0.10.0
libtpu: 0.0.40
codegen_flags: <defaults>
</compile_context>

<pallas_src>
import numpy as np

import jax
import jax.numpy as jnp
from jax.experimental import pallas as pl
from jax.experimental.pallas import tpu as pltpu


LANES = 128


def _round_up(x, m):
    return (x + m - 1) // m * m


# ---------------------------------------------------------------------------
# Trace-time constant builders (numpy -> baked XLA constants, DMA'd once)
# ---------------------------------------------------------------------------

def _shift_matrices_stacked(b, h, w):
    """(9*M, M) 0/1 matrix, M = b*h*w.  Rows [t*M:(t+1)*M] shift the flattened
    (b, h, w) map by tap t of a 3x3 'same' conv; out-of-bounds rows are all
    zero (== zero padding).  Tap order matches the im2col patch order."""
    m = b * h * w
    bb, ii, jj = np.meshgrid(np.arange(b), np.arange(h), np.arange(w),
                             indexing="ij")
    bb, ii, jj = bb.ravel(), ii.ravel(), jj.ravel()
    rows = np.arange(m)
    out = np.zeros((9 * m, m), np.float32)
    for t in range(9):
        di, dj = t // 3 - 1, t % 3 - 1
        si, sj = ii + di, jj + dj
        ok = (si >= 0) & (si < h) & (sj >= 0) & (sj < w)
        src = (bb * h + np.clip(si, 0, h - 1)) * w + np.clip(sj, 0, w - 1)
        out[t * m + rows[ok], src[ok]] = 1.0
    return out


def _pool_matrix(b, h, w):
    """(b*(h/2)*(w/2), b*h*w) 2x2 average-pool matrix on the flattened map."""
    ho, wo = h // 2, w // 2
    mo = b * ho * wo
    bb, io, jo = np.meshgrid(np.arange(b), np.arange(ho), np.arange(wo),
                             indexing="ij")
    bb, io, jo = bb.ravel(), io.ravel(), jo.ravel()
    rows = np.arange(mo)
    p = np.zeros((mo, b * h * w), np.float32)
    for a in (0, 1):
        for c in (0, 1):
            src = (bb * h + 2 * io + a) * w + 2 * jo + c
            p[rows, src] = 0.25
    return p


def _global_diff_matrix(n_pairs, b, h, w):
    """(pad8(n_pairs), b*h*w): row q = +1/(h*w) over batch q's rows (gt) and
    -1/(h*w) over batch (n_pairs+q)'s rows (restored) -> feat3 difference."""
    rows_pad = max(8, _round_up(n_pairs, 8))
    hw = h * w
    d = np.zeros((rows_pad, b * hw), np.float32)
    for q in range(n_pairs):
        d[q, q * hw:(q + 1) * hw] = 1.0 / hw
        d[q, (n_pairs + q) * hw:(n_pairs + q + 1) * hw] = -1.0 / hw
    return d


def _im2col_3x3_same(x_nhwc):
    """3x3 stride-1 'same' patch matrix for the (tiny) raw input only."""
    n, h, w, c = x_nhwc.shape
    xp = jnp.pad(x_nhwc, ((0, 0), (1, 1), (1, 1), (0, 0)))
    patches = [xp[:, i:i + h, j:j + w, :] for i in range(3) for j in range(3)]
    cols = jnp.concatenate(patches, axis=-1)          # (n, h, w, 9c)
    return cols.reshape(n * h * w, 9 * c)


# ---------------------------------------------------------------------------
# The fused Pallas kernel: backbone + fused MSE, one program, all in VMEM
# ---------------------------------------------------------------------------

def _make_fid_kernel(m2, m3, inv_c1, inv_c2, inv_c3, n_feats):
    bf16 = jnp.bfloat16
    f32 = jnp.float32
    inv_n = 1.0 / float(n_feats)

    def kernel(cols1_ref, w1_ref, b1_ref, p1_ref,
               s2_ref, w2_ref, b2_ref, p2_ref,
               s3_ref, w3_ref, b3_ref, dg_ref, o_ref):
        # ---- conv1: patch matrix (prebuilt) @ weights, bias + relu --------
        h1 = jnp.dot(cols1_ref[...], w1_ref[...], preferred_element_type=f32)
        h1 = jnp.maximum(h1 + b1_ref[...], 0.0)                 # (m1, 128) f32

        # ---- 2x2 avg-pool as constant matmul; feat1 diff from row halves --
        x2 = jnp.dot(p1_ref[...], h1.astype(bf16), preferred_element_type=f32)
        d1 = x2[: m2 // 2, :] - x2[m2 // 2:, :]                 # gt - restored

        # ---- conv2: in-VMEM im2col via stacked 0/1 shift matmul -----------
        z2 = jnp.dot(s2_ref[...], x2.astype(bf16),
                     preferred_element_type=f32).astype(bf16)   # (9*m2, 128)
        h2 = jnp.zeros((m2, LANES), f32)
        for t in range(9):                                      # unrolled taps
            h2 = h2 + jnp.dot(z2[t * m2:(t + 1) * m2, :], w2_ref[t],
                              preferred_element_type=f32)
        h2 = jnp.maximum(h2 + b2_ref[...], 0.0)

        x3 = jnp.dot(p2_ref[...], h2.astype(bf16), preferred_element_type=f32)
        d2 = x3[: m3 // 2, :] - x3[m3 // 2:, :]                 # feat2 diff

        # ---- conv3 ---------------------------------------------------------
        z3 = jnp.dot(s3_ref[...], x3.astype(bf16),
                     preferred_element_type=f32).astype(bf16)   # (9*m3, 128)
        h3 = jnp.zeros((m3, LANES), f32)
        for t in range(9):
            h3 = h3 + jnp.dot(z3[t * m3:(t + 1) * m3, :], w3_ref[t],
                              preferred_element_type=f32)
        h3 = jnp.maximum(h3 + b3_ref[...], 0.0)

        # ---- feat3: global-avg-pool(gt) - global-avg-pool(restored), f32 --
        d3 = jnp.dot(dg_ref[...], h3, preferred_element_type=f32)   # (8, 128)

        # ---- fused MSE: padded lanes/rows are exactly 0 in both halves ----
        # (they add 0 to each sum; divide by the REAL element counts).
        total = (jnp.sum(d1 * d1) * inv_c1
                 + jnp.sum(d2 * d2) * inv_c2
                 + jnp.sum(d3 * d3) * inv_c3)
        o_ref[0, 0] = total * inv_n

    return kernel


# ---------------------------------------------------------------------------
# FIDLoss.forward
# ---------------------------------------------------------------------------

def init_inception_params():
    """Deterministic synthetic 'InceptionV3' weights (3 conv blocks)."""
    key = jax.random.PRNGKey(0)
    ks = jax.random.split(key, 6)
    dims = [(3, 8), (8, 16), (16, 32)]  # (Cin, Cout) per 3x3 conv block
    params = {}
    for idx, (cin, cout) in enumerate(dims, start=1):
        fan_in = 9 * cin
        params[f"w{idx}"] = (
            jax.random.normal(ks[2 * (idx - 1)], (fan_in, cout), jnp.float32)
            / jnp.sqrt(float(fan_in)))
        params[f"b{idx}"] = (
            0.01 * jax.random.normal(ks[2 * idx - 1], (1, cout), jnp.float32))
    return params


@jax.jit
def fid_loss(x_gt, x_restored, params):
    """FIDLoss.forward: average of MSE over corresponding inception features,
    computed by a single fused Pallas kernel (one backbone pass on the
    concatenated gt/restored batch)."""
    n = x_gt.shape[0]
    b = 2 * n
    h, w = x_gt.shape[2], x_gt.shape[3]
    h2s, w2s = h // 2, w // 2
    h3s, w3s = h2s // 2, w2s // 2
    m1, m2, m3 = b * h * w, b * h2s * w2s, b * h3s * w3s

    cout1 = params["w1"].shape[1]
    cin2, cout2 = cout1, params["w2"].shape[1]
    cin3, cout3 = cout2, params["w3"].shape[1]

    bf16 = jnp.bfloat16

    # One backbone pass: gt and restored concatenated along batch.
    x_all = jnp.concatenate([x_gt, x_restored], axis=0)
    x_nhwc = jnp.transpose(x_all, (0, 2, 3, 1)).astype(jnp.float32)

    # Layer-1 patch matrix built once from the tiny raw input (cast -> pad).
    cols1 = _im2col_3x3_same(x_nhwc)                       # (m1, 9*Cin)
    k1 = cols1.shape[1]
    k1p = _round_up(max(k1, LANES), LANES)
    cols1 = jnp.pad(cols1.astype(bf16), ((0, 0), (0, k1p - k1)))

    def pad2(a, rows, cols, dtype):
        a = a.astype(dtype)
        return jnp.pad(a, ((0, rows - a.shape[0]), (0, cols - a.shape[1])))

    def pad_taps(wmat, cin, cout):
        wt = wmat.astype(bf16).reshape(9, cin, cout)       # tap-major rows
        return jnp.pad(wt, ((0, 0), (0, LANES - cin), (0, LANES - cout)))

    w1 = pad2(params["w1"], k1p, LANES, bf16)              # (128, 128)
    b1 = pad2(params["b1"], 1, LANES, jnp.float32)
    w2 = pad_taps(params["w2"], cin2, cout2)               # (9, 128, 128)
    b2 = pad2(params["b2"], 1, LANES, jnp.float32)
    w3 = pad_taps(params["w3"], cin3, cout3)               # (9, 128, 128)
    b3 = pad2(params["b3"], 1, LANES, jnp.float32)

    # Constant spatial operators (values 0/1/0.25/1/16 -> exact in bf16).
    p1 = jnp.asarray(_pool_matrix(b, h, w), bf16)                    # (m2, m1)
    s2 = jnp.asarray(_shift_matrices_stacked(b, h2s, w2s), bf16)     # (9m2, m2)
    p2 = jnp.asarray(_pool_matrix(b, h2s, w2s), bf16)                # (m3, m2)
    s3 = jnp.asarray(_shift_matrices_stacked(b, h3s, w3s), bf16)     # (9m3, m3)
    dg = jnp.asarray(_global_diff_matrix(n, b, h3s, w3s), jnp.float32)

    # Real (unpadded) element counts per feature pair.
    inv_c1 = 1.0 / float(n * h2s * w2s * cout1)
    inv_c2 = 1.0 / float(n * h3s * w3s * cout2)
    inv_c3 = 1.0 / float(n * cout3)

    inputs = (cols1, w1, b1, p1, s2, w2, b2, p2, s3, w3, b3, dg)

    flops = (2 * m1 * k1p * LANES                      # conv1
             + 2 * m2 * m1 * LANES                     # pool1
             + 2 * (9 * m2) * m2 * LANES               # conv2 shifts
             + 9 * 2 * m2 * LANES * LANES              # conv2 taps
             + 2 * m3 * m2 * LANES                     # pool2
             + 2 * (9 * m3) * m3 * LANES               # conv3 shifts
             + 9 * 2 * m3 * LANES * LANES              # conv3 taps
             + 2 * dg.shape[0] * m3 * LANES)           # global-pool diff
    bytes_accessed = sum(int(a.size) * a.dtype.itemsize for a in inputs) + 4

    out = pl.pallas_call(
        _make_fid_kernel(m2, m3, inv_c1, inv_c2, inv_c3, n_feats=3),
        out_shape=jax.ShapeDtypeStruct((1, 1), jnp.float32),
        in_specs=[pl.BlockSpec(memory_space=pltpu.MemorySpace.VMEM)
                  for _ in inputs],
        out_specs=pl.BlockSpec(memory_space=pltpu.MemorySpace.SMEM),
        compiler_params=pltpu.CompilerParams(
            vmem_limit_bytes=64 * 1024 * 1024),
        cost_estimate=pl.CostEstimate(flops=flops, transcendentals=0,
                                      bytes_accessed=bytes_accessed),
    )(*inputs)
    return out[0, 0]


if __name__ == "__main__":
    key = jax.random.PRNGKey(0)
    k1, k2 = jax.random.split(key)
    # Small shapes consistent with an image model: N=2, C=3, H=W=16 (NCHW).
    x_gt = jax.random.normal(k1, (2, 3, 16, 16), jnp.float32)
    x_restored = x_gt + 0.1 * jax.random.normal(k2, (2, 3, 16, 16), jnp.float32)

    params = init_inception_params()
    loss = fid_loss(x_gt, x_restored, params)
    jax.block_until_ready(loss)
    print("KERNEL_OK")
</pallas_src>

<mosaic_0001>
module attributes {stable_mosaic.version = 11 : i64} {
  func.func @kernel(%arg0: memref<1024x128xbf16, #tpu.memory_space<vmem>>, %arg1: memref<128x128xbf16, #tpu.memory_space<vmem>>, %arg2: memref<1x128xf32, #tpu.memory_space<vmem>>, %arg3: memref<256x1024xbf16, #tpu.memory_space<vmem>>, %arg4: memref<2304x256xbf16, #tpu.memory_space<vmem>>, %arg5: memref<9x128x128xbf16, #tpu.memory_space<vmem>>, %arg6: memref<1x128xf32, #tpu.memory_space<vmem>>, %arg7: memref<64x256xbf16, #tpu.memory_space<vmem>>, %arg8: memref<576x64xbf16, #tpu.memory_space<vmem>>, %arg9: memref<9x128x128xbf16, #tpu.memory_space<vmem>>, %arg10: memref<1x128xf32, #tpu.memory_space<vmem>>, %arg11: memref<8x64xf32, #tpu.memory_space<vmem>>, %arg12: memref<1x1xf32, #tpu.memory_space<smem>>) attributes {dimension_semantics = [], scalar_prefetch = 0 : i64, scratch_operands = 0 : i64, tpu.core_type = #tpu.core_type<tc>} {
    %c0 = arith.constant 0 : index
    %c0_0 = arith.constant 0 : index
    %0 = vector.load %arg0[%c0, %c0_0] : memref<1024x128xbf16, #tpu.memory_space<vmem>>, vector<1024x128xbf16>
    %c0_1 = arith.constant 0 : index
    %c0_2 = arith.constant 0 : index
    %1 = vector.load %arg1[%c0_1, %c0_2] : memref<128x128xbf16, #tpu.memory_space<vmem>>, vector<128x128xbf16>
    %cst = arith.constant dense<0.000000e+00> : vector<1024x128xf32>
    %2 = tpu.matmul %0, %1, %cst {dimension_numbers = #tpu.dot_dimension_numbers<[1], [0], [0], [1], [0, 0, 1, 1], [], []>} : vector<1024x128xbf16>, vector<128x128xbf16>, vector<1024x128xf32> -> vector<1024x128xf32>
    %c0_3 = arith.constant 0 : index
    %c0_4 = arith.constant 0 : index
    %3 = vector.load %arg2[%c0_3, %c0_4] : memref<1x128xf32, #tpu.memory_space<vmem>>, vector<1x128xf32>
    %4 = vector.broadcast %3 : vector<1x128xf32> to vector<1024x128xf32>
    %5 = arith.addf %2, %4 : vector<1024x128xf32>
    %cst_5 = arith.constant 0.000000e+00 : f32
    %6 = vector.broadcast %cst_5 : f32 to vector<1024x128xf32>
    %7 = arith.maximumf %5, %6 : vector<1024x128xf32>
    %c0_6 = arith.constant 0 : index
    %c0_7 = arith.constant 0 : index
    %8 = vector.load %arg3[%c0_6, %c0_7] : memref<256x1024xbf16, #tpu.memory_space<vmem>>, vector<256x1024xbf16>
    %9 = arith.truncf %7 : vector<1024x128xf32> to vector<1024x128xbf16>
    %cst_8 = arith.constant dense<0.000000e+00> : vector<256x128xf32>
    %10 = tpu.matmul %8, %9, %cst_8 {dimension_numbers = #tpu.dot_dimension_numbers<[1], [0], [0], [1], [0, 0, 1, 1], [], []>} : vector<256x1024xbf16>, vector<1024x128xbf16>, vector<256x128xf32> -> vector<256x128xf32>
    %11 = vector.extract_strided_slice %10 {offsets = [0, 0], sizes = [128, 128], strides = [1, 1]} : vector<256x128xf32> to vector<128x128xf32>
    %12 = vector.extract_strided_slice %10 {offsets = [128, 0], sizes = [128, 128], strides = [1, 1]} : vector<256x128xf32> to vector<128x128xf32>
    %13 = arith.subf %11, %12 : vector<128x128xf32>
    %c0_9 = arith.constant 0 : index
    %c0_10 = arith.constant 0 : index
    %14 = vector.load %arg4[%c0_9, %c0_10] : memref<2304x256xbf16, #tpu.memory_space<vmem>>, vector<2304x256xbf16>
    %15 = arith.truncf %10 : vector<256x128xf32> to vector<256x128xbf16>
    %cst_11 = arith.constant dense<0.000000e+00> : vector<2304x128xf32>
    %16 = tpu.matmul %14, %15, %cst_11 {dimension_numbers = #tpu.dot_dimension_numbers<[1], [0], [0], [1], [0, 0, 1, 1], [], []>} : vector<2304x256xbf16>, vector<256x128xbf16>, vector<2304x128xf32> -> vector<2304x128xf32>
    %17 = arith.truncf %16 : vector<2304x128xf32> to vector<2304x128xbf16>
    %cst_12 = arith.constant 0.000000e+00 : f32
    %18 = vector.broadcast %cst_12 : f32 to vector<256x128xf32>
    %19 = vector.extract_strided_slice %17 {offsets = [0, 0], sizes = [256, 128], strides = [1, 1]} : vector<2304x128xbf16> to vector<256x128xbf16>
    %c0_13 = arith.constant 0 : index
    %c0_14 = arith.constant 0 : index
    %c0_15 = arith.constant 0 : index
    %20 = vector.load %arg5[%c0_13, %c0_14, %c0_15] : memref<9x128x128xbf16, #tpu.memory_space<vmem>>, vector<1x128x128xbf16>
    %21 = vector.shape_cast %20 : vector<1x128x128xbf16> to vector<128x128xbf16>
    %cst_16 = arith.constant dense<0.000000e+00> : vector<256x128xf32>
    %22 = tpu.matmul %19, %21, %cst_16 {dimension_numbers = #tpu.dot_dimension_numbers<[1], [0], [0], [1], [0, 0, 1, 1], [], []>} : vector<256x128xbf16>, vector<128x128xbf16>, vector<256x128xf32> -> vector<256x128xf32>
    %23 = arith.addf %18, %22 : vector<256x128xf32>
    %24 = vector.extract_strided_slice %17 {offsets = [256, 0], sizes = [256, 128], strides = [1, 1]} : vector<2304x128xbf16> to vector<256x128xbf16>
    %c1 = arith.constant 1 : index
    %c0_17 = arith.constant 0 : index
    %c0_18 = arith.constant 0 : index
    %25 = vector.load %arg5[%c1, %c0_17, %c0_18] : memref<9x128x128xbf16, #tpu.memory_space<vmem>>, vector<1x128x128xbf16>
    %26 = vector.shape_cast %25 : vector<1x128x128xbf16> to vector<128x128xbf16>
    %cst_19 = arith.constant dense<0.000000e+00> : vector<256x128xf32>
    %27 = tpu.matmul %24, %26, %cst_19 {dimension_numbers = #tpu.dot_dimension_numbers<[1], [0], [0], [1], [0, 0, 1, 1], [], []>} : vector<256x128xbf16>, vector<128x128xbf16>, vector<256x128xf32> -> vector<256x128xf32>
    %28 = arith.addf %23, %27 : vector<256x128xf32>
    %29 = vector.extract_strided_slice %17 {offsets = [512, 0], sizes = [256, 128], strides = [1, 1]} : vector<2304x128xbf16> to vector<256x128xbf16>
    %c2 = arith.constant 2 : index
    %c0_20 = arith.constant 0 : index
    %c0_21 = arith.constant 0 : index
    %30 = vector.load %arg5[%c2, %c0_20, %c0_21] : memref<9x128x128xbf16, #tpu.memory_space<vmem>>, vector<1x128x128xbf16>
    %31 = vector.shape_cast %30 : vector<1x128x128xbf16> to vector<128x128xbf16>
    %cst_22 = arith.constant dense<0.000000e+00> : vector<256x128xf32>
    %32 = tpu.matmul %29, %31, %cst_22 {dimension_numbers = #tpu.dot_dimension_numbers<[1], [0], [0], [1], [0, 0, 1, 1], [], []>} : vector<256x128xbf16>, vector<128x128xbf16>, vector<256x128xf32> -> vector<256x128xf32>
    %33 = arith.addf %28, %32 : vector<256x128xf32>
    %34 = vector.extract_strided_slice %17 {offsets = [768, 0], sizes = [256, 128], strides = [1, 1]} : vector<2304x128xbf16> to vector<256x128xbf16>
    %c3 = arith.constant 3 : index
    %c0_23 = arith.constant 0 : index
    %c0_24 = arith.constant 0 : index
    %35 = vector.load %arg5[%c3, %c0_23, %c0_24] : memref<9x128x128xbf16, #tpu.memory_space<vmem>>, vector<1x128x128xbf16>
    %36 = vector.shape_cast %35 : vector<1x128x128xbf16> to vector<128x128xbf16>
    %cst_25 = arith.constant dense<0.000000e+00> : vector<256x128xf32>
    %37 = tpu.matmul %34, %36, %cst_25 {dimension_numbers = #tpu.dot_dimension_numbers<[1], [0], [0], [1], [0, 0, 1, 1], [], []>} : vector<256x128xbf16>, vector<128x128xbf16>, vector<256x128xf32> -> vector<256x128xf32>
    %38 = arith.addf %33, %37 : vector<256x128xf32>
    %39 = vector.extract_strided_slice %17 {offsets = [1024, 0], sizes = [256, 128], strides = [1, 1]} : vector<2304x128xbf16> to vector<256x128xbf16>
    %c4 = arith.constant 4 : index
    %c0_26 = arith.constant 0 : index
    %c0_27 = arith.constant 0 : index
    %40 = vector.load %arg5[%c4, %c0_26, %c0_27] : memref<9x128x128xbf16, #tpu.memory_space<vmem>>, vector<1x128x128xbf16>
    %41 = vector.shape_cast %40 : vector<1x128x128xbf16> to vector<128x128xbf16>
    %cst_28 = arith.constant dense<0.000000e+00> : vector<256x128xf32>
    %42 = tpu.matmul %39, %41, %cst_28 {dimension_numbers = #tpu.dot_dimension_numbers<[1], [0], [0], [1], [0, 0, 1, 1], [], []>} : vector<256x128xbf16>, vector<128x128xbf16>, vector<256x128xf32> -> vector<256x128xf32>
    %43 = arith.addf %38, %42 : vector<256x128xf32>
    %44 = vector.extract_strided_slice %17 {offsets = [1280, 0], sizes = [256, 128], strides = [1, 1]} : vector<2304x128xbf16> to vector<256x128xbf16>
    %c5 = arith.constant 5 : index
    %c0_29 = arith.constant 0 : index
    %c0_30 = arith.constant 0 : index
    %45 = vector.load %arg5[%c5, %c0_29, %c0_30] : memref<9x128x128xbf16, #tpu.memory_space<vmem>>, vector<1x128x128xbf16>
    %46 = vector.shape_cast %45 : vector<1x128x128xbf16> to vector<128x128xbf16>
    %cst_31 = arith.constant dense<0.000000e+00> : vector<256x128xf32>
    %47 = tpu.matmul %44, %46, %cst_31 {dimension_numbers = #tpu.dot_dimension_numbers<[1], [0], [0], [1], [0, 0, 1, 1], [], []>} : vector<256x128xbf16>, vector<128x128xbf16>, vector<256x128xf32> -> vector<256x128xf32>
    %48 = arith.addf %43, %47 : vector<256x128xf32>
    %49 = vector.extract_strided_slice %17 {offsets = [1536, 0], sizes = [256, 128], strides = [1, 1]} : vector<2304x128xbf16> to vector<256x128xbf16>
    %c6 = arith.constant 6 : index
    %c0_32 = arith.constant 0 : index
    %c0_33 = arith.constant 0 : index
    %50 = vector.load %arg5[%c6, %c0_32, %c0_33] : memref<9x128x128xbf16, #tpu.memory_space<vmem>>, vector<1x128x128xbf16>
    %51 = vector.shape_cast %50 : vector<1x128x128xbf16> to vector<128x128xbf16>
    %cst_34 = arith.constant dense<0.000000e+00> : vector<256x128xf32>
    %52 = tpu.matmul %49, %51, %cst_34 {dimension_numbers = #tpu.dot_dimension_numbers<[1], [0], [0], [1], [0, 0, 1, 1], [], []>} : vector<256x128xbf16>, vector<128x128xbf16>, vector<256x128xf32> -> vector<256x128xf32>
    %53 = arith.addf %48, %52 : vector<256x128xf32>
    %54 = vector.extract_strided_slice %17 {offsets = [1792, 0], sizes = [256, 128], strides = [1, 1]} : vector<2304x128xbf16> to vector<256x128xbf16>
    %c7 = arith.constant 7 : index
    %c0_35 = arith.constant 0 : index
    %c0_36 = arith.constant 0 : index
    %55 = vector.load %arg5[%c7, %c0_35, %c0_36] : memref<9x128x128xbf16, #tpu.memory_space<vmem>>, vector<1x128x128xbf16>
    %56 = vector.shape_cast %55 : vector<1x128x128xbf16> to vector<128x128xbf16>
    %cst_37 = arith.constant dense<0.000000e+00> : vector<256x128xf32>
    %57 = tpu.matmul %54, %56, %cst_37 {dimension_numbers = #tpu.dot_dimension_numbers<[1], [0], [0], [1], [0, 0, 1, 1], [], []>} : vector<256x128xbf16>, vector<128x128xbf16>, vector<256x128xf32> -> vector<256x128xf32>
    %58 = arith.addf %53, %57 : vector<256x128xf32>
    %59 = vector.extract_strided_slice %17 {offsets = [2048, 0], sizes = [256, 128], strides = [1, 1]} : vector<2304x128xbf16> to vector<256x128xbf16>
    %c8 = arith.constant 8 : index
    %c0_38 = arith.constant 0 : index
    %c0_39 = arith.constant 0 : index
    %60 = vector.load %arg5[%c8, %c0_38, %c0_39] : memref<9x128x128xbf16, #tpu.memory_space<vmem>>, vector<1x128x128xbf16>
    %61 = vector.shape_cast %60 : vector<1x128x128xbf16> to vector<128x128xbf16>
    %cst_40 = arith.constant dense<0.000000e+00> : vector<256x128xf32>
    %62 = tpu.matmul %59, %61, %cst_40 {dimension_numbers = #tpu.dot_dimension_numbers<[1], [0], [0], [1], [0, 0, 1, 1], [], []>} : vector<256x128xbf16>, vector<128x128xbf16>, vector<256x128xf32> -> vector<256x128xf32>
    %63 = arith.addf %58, %62 : vector<256x128xf32>
    %c0_41 = arith.constant 0 : index
    %c0_42 = arith.constant 0 : index
    %64 = vector.load %arg6[%c0_41, %c0_42] : memref<1x128xf32, #tpu.memory_space<vmem>>, vector<1x128xf32>
    %65 = vector.broadcast %64 : vector<1x128xf32> to vector<256x128xf32>
    %66 = arith.addf %63, %65 : vector<256x128xf32>
    %cst_43 = arith.constant 0.000000e+00 : f32
    %67 = vector.broadcast %cst_43 : f32 to vector<256x128xf32>
    %68 = arith.maximumf %66, %67 : vector<256x128xf32>
    %c0_44 = arith.constant 0 : index
    %c0_45 = arith.constant 0 : index
    %69 = vector.load %arg7[%c0_44, %c0_45] : memref<64x256xbf16, #tpu.memory_space<vmem>>, vector<64x256xbf16>
    %70 = arith.truncf %68 : vector<256x128xf32> to vector<256x128xbf16>
    %cst_46 = arith.constant dense<0.000000e+00> : vector<64x128xf32>
    %71 = tpu.matmul %69, %70, %cst_46 {dimension_numbers = #tpu.dot_dimension_numbers<[1], [0], [0], [1], [0, 0, 1, 1], [], []>} : vector<64x256xbf16>, vector<256x128xbf16>, vector<64x128xf32> -> vector<64x128xf32>
    %72 = vector.extract_strided_slice %71 {offsets = [0, 0], sizes = [32, 128], strides = [1, 1]} : vector<64x128xf32> to vector<32x128xf32>
    %73 = vector.extract_strided_slice %71 {offsets = [32, 0], sizes = [32, 128], strides = [1, 1]} : vector<64x128xf32> to vector<32x128xf32>
    %74 = arith.subf %72, %73 : vector<32x128xf32>
    %c0_47 = arith.constant 0 : index
    %c0_48 = arith.constant 0 : index
    %75 = vector.load %arg8[%c0_47, %c0_48] : memref<576x64xbf16, #tpu.memory_space<vmem>>, vector<576x64xbf16>
    %76 = arith.truncf %71 : vector<64x128xf32> to vector<64x128xbf16>
    %cst_49 = arith.constant dense<0.000000e+00> : vector<576x128xf32>
    %77 = tpu.matmul %75, %76, %cst_49 {dimension_numbers = #tpu.dot_dimension_numbers<[1], [0], [0], [1], [0, 0, 1, 1], [], []>} : vector<576x64xbf16>, vector<64x128xbf16>, vector<576x128xf32> -> vector<576x128xf32>
    %78 = arith.truncf %77 : vector<576x128xf32> to vector<576x128xbf16>
    %cst_50 = arith.constant 0.000000e+00 : f32
    %79 = vector.broadcast %cst_50 : f32 to vector<64x128xf32>
    %80 = vector.extract_strided_slice %78 {offsets = [0, 0], sizes = [64, 128], strides = [1, 1]} : vector<576x128xbf16> to vector<64x128xbf16>
    %c0_51 = arith.constant 0 : index
    %c0_52 = arith.constant 0 : index
    %c0_53 = arith.constant 0 : index
    %81 = vector.load %arg9[%c0_51, %c0_52, %c0_53] : memref<9x128x128xbf16, #tpu.memory_space<vmem>>, vector<1x128x128xbf16>
    %82 = vector.shape_cast %81 : vector<1x128x128xbf16> to vector<128x128xbf16>
    %cst_54 = arith.constant dense<0.000000e+00> : vector<64x128xf32>
    %83 = tpu.matmul %80, %82, %cst_54 {dimension_numbers = #tpu.dot_dimension_numbers<[1], [0], [0], [1], [0, 0, 1, 1], [], []>} : vector<64x128xbf16>, vector<128x128xbf16>, vector<64x128xf32> -> vector<64x128xf32>
    %84 = arith.addf %79, %83 : vector<64x128xf32>
    %85 = vector.extract_strided_slice %78 {offsets = [64, 0], sizes = [64, 128], strides = [1, 1]} : vector<576x128xbf16> to vector<64x128xbf16>
    %c1_55 = arith.constant 1 : index
    %c0_56 = arith.constant 0 : index
    %c0_57 = arith.constant 0 : index
    %86 = vector.load %arg9[%c1_55, %c0_56, %c0_57] : memref<9x128x128xbf16, #tpu.memory_space<vmem>>, vector<1x128x128xbf16>
    %87 = vector.shape_cast %86 : vector<1x128x128xbf16> to vector<128x128xbf16>
    %cst_58 = arith.constant dense<0.000000e+00> : vector<64x128xf32>
    %88 = tpu.matmul %85, %87, %cst_58 {dimension_numbers = #tpu.dot_dimension_numbers<[1], [0], [0], [1], [0, 0, 1, 1], [], []>} : vector<64x128xbf16>, vector<128x128xbf16>, vector<64x128xf32> -> vector<64x128xf32>
    %89 = arith.addf %84, %88 : vector<64x128xf32>
    %90 = vector.extract_strided_slice %78 {offsets = [128, 0], sizes = [64, 128], strides = [1, 1]} : vector<576x128xbf16> to vector<64x128xbf16>
    %c2_59 = arith.constant 2 : index
    %c0_60 = arith.constant 0 : index
    %c0_61 = arith.constant 0 : index
    %91 = vector.load %arg9[%c2_59, %c0_60, %c0_61] : memref<9x128x128xbf16, #tpu.memory_space<vmem>>, vector<1x128x128xbf16>
    %92 = vector.shape_cast %91 : vector<1x128x128xbf16> to vector<128x128xbf16>
    %cst_62 = arith.constant dense<0.000000e+00> : vector<64x128xf32>
    %93 = tpu.matmul %90, %92, %cst_62 {dimension_numbers = #tpu.dot_dimension_numbers<[1], [0], [0], [1], [0, 0, 1, 1], [], []>} : vector<64x128xbf16>, vector<128x128xbf16>, vector<64x128xf32> -> vector<64x128xf32>
    %94 = arith.addf %89, %93 : vector<64x128xf32>
    %95 = vector.extract_strided_slice %78 {offsets = [192, 0], sizes = [64, 128], strides = [1, 1]} : vector<576x128xbf16> to vector<64x128xbf16>
    %c3_63 = arith.constant 3 : index
    %c0_64 = arith.constant 0 : index
    %c0_65 = arith.constant 0 : index
    %96 = vector.load %arg9[%c3_63, %c0_64, %c0_65] : memref<9x128x128xbf16, #tpu.memory_space<vmem>>, vector<1x128x128xbf16>
    %97 = vector.shape_cast %96 : vector<1x128x128xbf16> to vector<128x128xbf16>
    %cst_66 = arith.constant dense<0.000000e+00> : vector<64x128xf32>
    %98 = tpu.matmul %95, %97, %cst_66 {dimension_numbers = #tpu.dot_dimension_numbers<[1], [0], [0], [1], [0, 0, 1, 1], [], []>} : vector<64x128xbf16>, vector<128x128xbf16>, vector<64x128xf32> -> vector<64x128xf32>
    %99 = arith.addf %94, %98 : vector<64x128xf32>
    %100 = vector.extract_strided_slice %78 {offsets = [256, 0], sizes = [64, 128], strides = [1, 1]} : vector<576x128xbf16> to vector<64x128xbf16>
    %c4_67 = arith.constant 4 : index
    %c0_68 = arith.constant 0 : index
    %c0_69 = arith.constant 0 : index
    %101 = vector.load %arg9[%c4_67, %c0_68, %c0_69] : memref<9x128x128xbf16, #tpu.memory_space<vmem>>, vector<1x128x128xbf16>
    %102 = vector.shape_cast %101 : vector<1x128x128xbf16> to vector<128x128xbf16>
    %cst_70 = arith.constant dense<0.000000e+00> : vector<64x128xf32>
    %103 = tpu.matmul %100, %102, %cst_70 {dimension_numbers = #tpu.dot_dimension_numbers<[1], [0], [0], [1], [0, 0, 1, 1], [], []>} : vector<64x128xbf16>, vector<128x128xbf16>, vector<64x128xf32> -> vector<64x128xf32>
    %104 = arith.addf %99, %103 : vector<64x128xf32>
    %105 = vector.extract_strided_slice %78 {offsets = [320, 0], sizes = [64, 128], strides = [1, 1]} : vector<576x128xbf16> to vector<64x128xbf16>
    %c5_71 = arith.constant 5 : index
    %c0_72 = arith.constant 0 : index
    %c0_73 = arith.constant 0 : index
    %106 = vector.load %arg9[%c5_71, %c0_72, %c0_73] : memref<9x128x128xbf16, #tpu.memory_space<vmem>>, vector<1x128x128xbf16>
    %107 = vector.shape_cast %106 : vector<1x128x128xbf16> to vector<128x128xbf16>
    %cst_74 = arith.constant dense<0.000000e+00> : vector<64x128xf32>
    %108 = tpu.matmul %105, %107, %cst_74 {dimension_numbers = #tpu.dot_dimension_numbers<[1], [0], [0], [1], [0, 0, 1, 1], [], []>} : vector<64x128xbf16>, vector<128x128xbf16>, vector<64x128xf32> -> vector<64x128xf32>
    %109 = arith.addf %104, %108 : vector<64x128xf32>
    %110 = vector.extract_strided_slice %78 {offsets = [384, 0], sizes = [64, 128], strides = [1, 1]} : vector<576x128xbf16> to vector<64x128xbf16>
    %c6_75 = arith.constant 6 : index
    %c0_76 = arith.constant 0 : index
    %c0_77 = arith.constant 0 : index
    %111 = vector.load %arg9[%c6_75, %c0_76, %c0_77] : memref<9x128x128xbf16, #tpu.memory_space<vmem>>, vector<1x128x128xbf16>
    %112 = vector.shape_cast %111 : vector<1x128x128xbf16> to vector<128x128xbf16>
    %cst_78 = arith.constant dense<0.000000e+00> : vector<64x128xf32>
    %113 = tpu.matmul %110, %112, %cst_78 {dimension_numbers = #tpu.dot_dimension_numbers<[1], [0], [0], [1], [0, 0, 1, 1], [], []>} : vector<64x128xbf16>, vector<128x128xbf16>, vector<64x128xf32> -> vector<64x128xf32>
    %114 = arith.addf %109, %113 : vector<64x128xf32>
    %115 = vector.extract_strided_slice %78 {offsets = [448, 0], sizes = [64, 128], strides = [1, 1]} : vector<576x128xbf16> to vector<64x128xbf16>
    %c7_79 = arith.constant 7 : index
    %c0_80 = arith.constant 0 : index
    %c0_81 = arith.constant 0 : index
    %116 = vector.load %arg9[%c7_79, %c0_80, %c0_81] : memref<9x128x128xbf16, #tpu.memory_space<vmem>>, vector<1x128x128xbf16>
    %117 = vector.shape_cast %116 : vector<1x128x128xbf16> to vector<128x128xbf16>
    %cst_82 = arith.constant dense<0.000000e+00> : vector<64x128xf32>
    %118 = tpu.matmul %115, %117, %cst_82 {dimension_numbers = #tpu.dot_dimension_numbers<[1], [0], [0], [1], [0, 0, 1, 1], [], []>} : vector<64x128xbf16>, vector<128x128xbf16>, vector<64x128xf32> -> vector<64x128xf32>
    %119 = arith.addf %114, %118 : vector<64x128xf32>
    %120 = vector.extract_strided_slice %78 {offsets = [512, 0], sizes = [64, 128], strides = [1, 1]} : vector<576x128xbf16> to vector<64x128xbf16>
    %c8_83 = arith.constant 8 : index
    %c0_84 = arith.constant 0 : index
    %c0_85 = arith.constant 0 : index
    %121 = vector.load %arg9[%c8_83, %c0_84, %c0_85] : memref<9x128x128xbf16, #tpu.memory_space<vmem>>, vector<1x128x128xbf16>
    %122 = vector.shape_cast %121 : vector<1x128x128xbf16> to vector<128x128xbf16>
    %cst_86 = arith.constant dense<0.000000e+00> : vector<64x128xf32>
    %123 = tpu.matmul %120, %122, %cst_86 {dimension_numbers = #tpu.dot_dimension_numbers<[1], [0], [0], [1], [0, 0, 1, 1], [], []>} : vector<64x128xbf16>, vector<128x128xbf16>, vector<64x128xf32> -> vector<64x128xf32>
    %124 = arith.addf %119, %123 : vector<64x128xf32>
    %c0_87 = arith.constant 0 : index
    %c0_88 = arith.constant 0 : index
    %125 = vector.load %arg10[%c0_87, %c0_88] : memref<1x128xf32, #tpu.memory_space<vmem>>, vector<1x128xf32>
    %126 = vector.broadcast %125 : vector<1x128xf32> to vector<64x128xf32>
    %127 = arith.addf %124, %126 : vector<64x128xf32>
    %cst_89 = arith.constant 0.000000e+00 : f32
    %128 = vector.broadcast %cst_89 : f32 to vector<64x128xf32>
    %129 = arith.maximumf %127, %128 : vector<64x128xf32>
    %c0_90 = arith.constant 0 : index
    %c0_91 = arith.constant 0 : index
    %130 = vector.load %arg11[%c0_90, %c0_91] : memref<8x64xf32, #tpu.memory_space<vmem>>, vector<8x64xf32>
    %cst_92 = arith.constant dense<0.000000e+00> : vector<8x128xf32>
    %131 = tpu.matmul %130, %129, %cst_92 {dimension_numbers = #tpu.dot_dimension_numbers<[1], [0], [0], [1], [0, 0, 1, 1], [], []>} : vector<8x64xf32>, vector<64x128xf32>, vector<8x128xf32> -> vector<8x128xf32>
    %132 = arith.mulf %13, %13 : vector<128x128xf32>
    %133 = vector.shape_cast %132 : vector<128x128xf32> to vector<1x128x128xf32>
    %cst_93 = arith.constant dense<0.000000e+00> : vector<1xf32>
    %134 = vector.multi_reduction <add>, %133, %cst_93 [1, 2] : vector<1x128x128xf32> to vector<1xf32>
    %135 = vector.shape_cast %134 : vector<1xf32> to vector<1x1x1xf32>
    %136 = vector.extract %135[0, 0, 0] : f32 from vector<1x1x1xf32>
    %cst_94 = arith.constant 9.765625E-4 : f32
    %137 = arith.mulf %136, %cst_94 : f32
    %138 = arith.mulf %74, %74 : vector<32x128xf32>
    %139 = vector.shape_cast %138 : vector<32x128xf32> to vector<1x32x128xf32>
    %cst_95 = arith.constant dense<0.000000e+00> : vector<1xf32>
    %140 = vector.multi_reduction <add>, %139, %cst_95 [1, 2] : vector<1x32x128xf32> to vector<1xf32>
    %141 = vector.shape_cast %140 : vector<1xf32> to vector<1x1x1xf32>
    %142 = vector.extract %141[0, 0, 0] : f32 from vector<1x1x1xf32>
    %cst_96 = arith.constant 0.001953125 : f32
    %143 = arith.mulf %142, %cst_96 : f32
    %144 = arith.addf %137, %143 : f32
    %145 = arith.mulf %131, %131 : vector<8x128xf32>
    %146 = vector.shape_cast %145 : vector<8x128xf32> to vector<1x8x128xf32>
    %cst_97 = arith.constant dense<0.000000e+00> : vector<1xf32>
    %147 = vector.multi_reduction <add>, %146, %cst_97 [1, 2] : vector<1x8x128xf32> to vector<1xf32>
    %148 = vector.shape_cast %147 : vector<1xf32> to vector<1x1x1xf32>
    %149 = vector.extract %148[0, 0, 0] : f32 from vector<1x1x1xf32>
    %cst_98 = arith.constant 1.562500e-02 : f32
    %150 = arith.mulf %149, %cst_98 : f32
    %151 = arith.addf %144, %150 : f32
    %cst_99 = arith.constant 0.333333343 : f32
    %152 = arith.mulf %151, %cst_99 : f32
    %c0_100 = arith.constant 0 : index
    %c0_101 = arith.constant 0 : index
    %153 = memref.load %arg12[%c0_100, %c0_101] : memref<1x1xf32, #tpu.memory_space<smem>>
    memref.store %152, %arg12[%c0_100, %c0_101] : memref<1x1xf32, #tpu.memory_space<smem>>
    return
  }
}

</mosaic_0001>

<llo_original>
// kernel: fid_loss.1
$region0: #{fid_loss.1}
  #allocation0 [shape = 'u32[]', space=smem, size = 0x4, offset = 0x4, fixed_abs, tag = 'smem constant byte address 0x4 - core index']
  #allocation1 [shape = 'u32[144,128]{1,0:T(1,128)}', space=vmem, size = 0x12000, scoped, tag = 'internal scratch']
  %s0 = inlined_call_operand.vmem [shape: bf16[1024,128], index: 0, kind: input, shape index: {}]
  %s1 = inlined_call_operand.vmem [shape: bf16[128,128], index: 1, kind: input, shape index: {}]
  %s2 = inlined_call_operand.vmem [shape: f32[1,128], index: 2, kind: input, shape index: {}]
  %s3 = inlined_call_operand.vmem [shape: bf16[256,1024], index: 3, kind: input, shape index: {}]
  %s4 = inlined_call_operand.vmem [shape: bf16[2304,256], index: 4, kind: input, shape index: {}]
  %s5 = inlined_call_operand.vmem [shape: bf16[9,128,128], index: 5, kind: input, shape index: {}]
  %s6 = inlined_call_operand.vmem [shape: f32[1,128], index: 6, kind: input, shape index: {}]
  %s7 = inlined_call_operand.vmem [shape: bf16[64,256], index: 7, kind: input, shape index: {}]
  %s8 = inlined_call_operand.vmem [shape: bf16[576,64], index: 8, kind: input, shape index: {}]
  %s9 = inlined_call_operand.vmem [shape: bf16[9,128,128], index: 9, kind: input, shape index: {}]
  %s10 = inlined_call_operand.vmem [shape: f32[1,128], index: 10, kind: input, shape index: {}]
  %s11 = inlined_call_operand.vmem [shape: f32[8,64], index: 11, kind: input, shape index: {}]
  %s12 = inlined_call_operand.hbm [shape: f32[1,1], index: 12, kind: output, shape index: {}]
  %s13 = sld [smem:[#allocation0]]
  $region58: #{fid_loss.1} parent=0
    _
  %s15 = ssub.s32 1, %s13
  %s16 = scalar_select 0, %s15, %s13
  $region1: #{fid_loss.1} parent=0
    #allocation2 [shape = 'u8[512]{0}', space=smem, size = 0x200, scoped, tag = 'output window, operand 0, single buffered']
    #allocation3 [shape = 's32[1]{0}', space=sflag, size = 0x4, scoped, tag = 'scoped memory for fid_loss.1']
    %17 = vsyncpa [#allocation3], 0
    // Predicated region
    $region2: #{fid_loss.1} parent=1 // pred_check
      _
    $region3: #{fid_loss.1} parent=1 // pred_check_branch
      %19 = sbr.rel (0) target = $region5
    $region4: #{fid_loss.1} parent=1 // pred_region
      _
    $region5: #{fid_loss.1} parent=1 // pred_fallthru
      _
    // Predicated region
    $region6: #{fid_loss.1} parent=1 // pred_check
      _
    $region7: #{fid_loss.1} parent=1 // pred_check_branch
      %21 = sbr.rel (0) target = $region9
    $region8: #{fid_loss.1} parent=1 // pred_region
      _
    $region9: #{fid_loss.1} parent=1 // pred_fallthru
      _
    // Predicated region
    $region10: #{fid_loss.1} parent=1 // pred_check
      _
    $region11: #{fid_loss.1} parent=1 // pred_check_branch
      %23 = sbr.rel (0) target = $region13
    $region12: #{fid_loss.1} parent=1 // pred_region
      _
    $region13: #{fid_loss.1} parent=1 // pred_fallthru
      _
    // Predicated region
    $region14: #{fid_loss.1} parent=1 // pred_check
      _
    $region15: #{fid_loss.1} parent=1 // pred_check_branch
      %25 = sbr.rel (0) target = $region17
    $region16: #{fid_loss.1} parent=1 // pred_region
      _
    $region17: #{fid_loss.1} parent=1 // pred_fallthru
      _
    // Predicated region
    $region18: #{fid_loss.1} parent=1 // pred_check
      _
    $region19: #{fid_loss.1} parent=1 // pred_check_branch
      %27 = sbr.rel (0) target = $region21
    $region20: #{fid_loss.1} parent=1 // pred_region
      _
    $region21: #{fid_loss.1} parent=1 // pred_fallthru
      _
    // Predicated region
    $region22: #{fid_loss.1} parent=1 // pred_check
      _
    $region23: #{fid_loss.1} parent=1 // pred_check_branch
      %29 = sbr.rel (0) target = $region25
    $region24: #{fid_loss.1} parent=1 // pred_region
      _
    $region25: #{fid_loss.1} parent=1 // pred_fallthru
      _
    // Predicated region
    $region26: #{fid_loss.1} parent=1 // pred_check
      _
    $region27: #{fid_loss.1} parent=1 // pred_check_branch
      %31 = sbr.rel (0) target = $region29
    $region28: #{fid_loss.1} parent=1 // pred_region
      _
    $region29: #{fid_loss.1} parent=1 // pred_fallthru
      _
    // Predicated region
    $region30: #{fid_loss.1} parent=1 // pred_check
      _
    $region31: #{fid_loss.1} parent=1 // pred_check_branch
      %33 = sbr.rel (0) target = $region33
    $region32: #{fid_loss.1} parent=1 // pred_region
      _
    $region33: #{fid_loss.1} parent=1 // pred_fallthru
      _
    // Predicated region
    $region34: #{fid_loss.1} parent=1 // pred_check
      _
    $region35: #{fid_loss.1} parent=1 // pred_check_branch
      %35 = sbr.rel (0) target = $region37
    $region36: #{fid_loss.1} parent=1 // pred_region
      _
    $region37: #{fid_loss.1} parent=1 // pred_fallthru
      _
    // Predicated region
    $region38: #{fid_loss.1} parent=1 // pred_check
      _
    $region39: #{fid_loss.1} parent=1 // pred_check_branch
      %37 = sbr.rel (0) target = $region41
    $region40: #{fid_loss.1} parent=1 // pred_region
      _
    $region41: #{fid_loss.1} parent=1 // pred_fallthru
      _
    // Predicated region
    $region42: #{fid_loss.1} parent=1 // pred_check
      _
    $region43: #{fid_loss.1} parent=1 // pred_check_branch
      %39 = sbr.rel (0) target = $region45
    $region44: #{fid_loss.1} parent=1 // pred_region
      _
    $region45: #{fid_loss.1} parent=1 // pred_fallthru
      _
    // Predicated region
    $region46: #{fid_loss.1} parent=1 // pred_check
      _
    $region47: #{fid_loss.1} parent=1 // pred_check_branch
      %41 = sbr.rel (0) target = $region49
    $region48: #{fid_loss.1} parent=1 // pred_region
      _
    $region49: #{fid_loss.1} parent=1 // pred_fallthru
      _
    %v43 = vld [vmem:[%s0] sm:$0xf]
    %v44 = vld [vmem:[%s0 + $0x4] sm:$0xf]
    %v45 = vld [vmem:[%s0 + $0x8] sm:$0xf]
    %v46 = vld [vmem:[%s0 + $0xc] sm:$0xf]
    %v47 = vld [vmem:[%s0 + $0x10] sm:$0xf]
    %v48 = vld [vmem:[%s0 + $0x14] sm:$0xf]
    %v49 = vld [vmem:[%s0 + $0x18] sm:$0xf]
    %v50 = vld [vmem:[%s0 + $0x1c] sm:$0xf]
    %v51 = vld [vmem:[%s0 + $0x20] sm:$0xf]
    %v52 = vld [vmem:[%s0 + $0x24] sm:$0xf]
    %v53 = vld [vmem:[%s0 + $0x28] sm:$0xf]
    %v54 = vld [vmem:[%s0 + $0x2c] sm:$0xf]
    %v55 = vld [vmem:[%s0 + $0x30] sm:$0xf]
    %v56 = vld [vmem:[%s0 + $0x34] sm:$0xf]
    %v57 = vld [vmem:[%s0 + $0x38] sm:$0xf]
    %v58 = vld [vmem:[%s0 + $0x3c] sm:$0xf]
    %v59 = vld [vmem:[%s0 + $0x40] sm:$0xf]
    %v60 = vld [vmem:[%s0 + $0x44] sm:$0xf]
    %v61 = vld [vmem:[%s0 + $0x48] sm:$0xf]
    %v62 = vld [vmem:[%s0 + $0x4c] sm:$0xf]
    %v63 = vld [vmem:[%s0 + $0x50] sm:$0xf]
    %v64 = vld [vmem:[%s0 + $0x54] sm:$0xf]
    %v65 = vld [vmem:[%s0 + $0x58] sm:$0xf]
    %v66 = vld [vmem:[%s0 + $0x5c] sm:$0xf]
    %v67 = vld [vmem:[%s0 + $0x60] sm:$0xf]
    %v68 = vld [vmem:[%s0 + $0x64] sm:$0xf]
    %v69 = vld [vmem:[%s0 + $0x68] sm:$0xf]
    %v70 = vld [vmem:[%s0 + $0x6c] sm:$0xf]
    %v71 = vld [vmem:[%s0 + $0x70] sm:$0xf]
    %v72 = vld [vmem:[%s0 + $0x74] sm:$0xf]
    %v73 = vld [vmem:[%s0 + $0x78] sm:$0xf]
    %v74 = vld [vmem:[%s0 + $0x7c] sm:$0xf]
    %v75 = vld [vmem:[%s0 + $0x80] sm:$0xf]
    %v76 = vld [vmem:[%s0 + $0x84] sm:$0xf]
    %v77 = vld [vmem:[%s0 + $0x88] sm:$0xf]
    %v78 = vld [vmem:[%s0 + $0x8c] sm:$0xf]
    %v79 = vld [vmem:[%s0 + $0x90] sm:$0xf]
    %v80 = vld [vmem:[%s0 + $0x94] sm:$0xf]
    %v81 = vld [vmem:[%s0 + $0x98] sm:$0xf]
    %v82 = vld [vmem:[%s0 + $0x9c] sm:$0xf]
    %v83 = vld [vmem:[%s0 + $0xa0] sm:$0xf]
    %v84 = vld [vmem:[%s0 + $0xa4] sm:$0xf]
    %v85 = vld [vmem:[%s0 + $0xa8] sm:$0xf]
    %v86 = vld [vmem:[%s0 + $0xac] sm:$0xf]
    %v87 = vld [vmem:[%s0 + $0xb0] sm:$0xf]
    %v88 = vld [vmem:[%s0 + $0xb4] sm:$0xf]
    %v89 = vld [vmem:[%s0 + $0xb8] sm:$0xf]
    %v90 = vld [vmem:[%s0 + $0xbc] sm:$0xf]
    %v91 = vld [vmem:[%s0 + $0xc0] sm:$0xf]
    %v92 = vld [vmem:[%s0 + $0xc4] sm:$0xf]
    %v93 = vld [vmem:[%s0 + $0xc8] sm:$0xf]
    %v94 = vld [vmem:[%s0 + $0xcc] sm:$0xf]
    %v95 = vld [vmem:[%s0 + $0xd0] sm:$0xf]
    %v96 = vld [vmem:[%s0 + $0xd4] sm:$0xf]
    %v97 = vld [vmem:[%s0 + $0xd8] sm:$0xf]
    %v98 = vld [vmem:[%s0 + $0xdc] sm:$0xf]
    %v99 = vld [vmem:[%s0 + $0xe0] sm:$0xf]
    %v100 = vld [vmem:[%s0 + $0xe4] sm:$0xf]
    %v101 = vld [vmem:[%s0 + $0xe8] sm:$0xf]
    %v102 = vld [vmem:[%s0 + $0xec] sm:$0xf]
    %v103 = vld [vmem:[%s0 + $0xf0] sm:$0xf]
    %v104 = vld [vmem:[%s0 + $0xf4] sm:$0xf]
    %v105 = vld [vmem:[%s0 + $0xf8] sm:$0xf]
    %v106 = vld [vmem:[%s0 + $0xfc] sm:$0xf]
    %v107 = vld [vmem:[%s0 + $0x100] sm:$0xf]
    %v108 = vld [vmem:[%s0 + $0x104] sm:$0xf]
    %v109 = vld [vmem:[%s0 + $0x108] sm:$0xf]
    %v110 = vld [vmem:[%s0 + $0x10c] sm:$0xf]
    %v111 = vld [vmem:[%s0 + $0x110] sm:$0xf]
    %v112 = vld [vmem:[%s0 + $0x114] sm:$0xf]
    %v113 = vld [vmem:[%s0 + $0x118] sm:$0xf]
    %v114 = vld [vmem:[%s0 + $0x11c] sm:$0xf]
    %v115 = vld [vmem:[%s0 + $0x120] sm:$0xf]
    %v116 = vld [vmem:[%s0 + $0x124] sm:$0xf]
    %v117 = vld [vmem:[%s0 + $0x128] sm:$0xf]
    %v118 = vld [vmem:[%s0 + $0x12c] sm:$0xf]
    %v119 = vld [vmem:[%s0 + $0x130] sm:$0xf]
    %v120 = vld [vmem:[%s0 + $0x134] sm:$0xf]
    %v121 = vld [vmem:[%s0 + $0x138] sm:$0xf]
    %v122 = vld [vmem:[%s0 + $0x13c] sm:$0xf]
    %v123 = vld [vmem:[%s0 + $0x140] sm:$0xf]
    %v124 = vld [vmem:[%s0 + $0x144] sm:$0xf]
    %v125 = vld [vmem:[%s0 + $0x148] sm:$0xf]
    %v126 = vld [vmem:[%s0 + $0x14c] sm:$0xf]
    %v127 = vld [vmem:[%s0 + $0x150] sm:$0xf]
    %v128 = vld [vmem:[%s0 + $0x154] sm:$0xf]
    %v129 = vld [vmem:[%s0 + $0x158] sm:$0xf]
    %v130 = vld [vmem:[%s0 + $0x15c] sm:$0xf]
    %v131 = vld [vmem:[%s0 + $0x160] sm:$0xf]
    %v132 = vld [vmem:[%s0 + $0x164] sm:$0xf]
    %v133 = vld [vmem:[%s0 + $0x168] sm:$0xf]
    %v134 = vld [vmem:[%s0 + $0x16c] sm:$0xf]
    %v135 = vld [vmem:[%s0 + $0x170] sm:$0xf]
    %v136 = vld [vmem:[%s0 + $0x174] sm:$0xf]
    %v137 = vld [vmem:[%s0 + $0x178] sm:$0xf]
    %v138 = vld [vmem:[%s0 + $0x17c] sm:$0xf]
    %v139 = vld [vmem:[%s0 + $0x180] sm:$0xf]
    %v140 = vld [vmem:[%s0 + $0x184] sm:$0xf]
    %v141 = vld [vmem:[%s0 + $0x188] sm:$0xf]
    %v142 = vld [vmem:[%s0 + $0x18c] sm:$0xf]
    %v143 = vld [vmem:[%s0 + $0x190] sm:$0xf]
    %v144 = vld [vmem:[%s0 + $0x194] sm:$0xf]
    %v145 = vld [vmem:[%s0 + $0x198] sm:$0xf]
    %v146 = vld [vmem:[%s0 + $0x19c] sm:$0xf]
    %v147 = vld [vmem:[%s0 + $0x1a0] sm:$0xf]
    %v148 = vld [vmem:[%s0 + $0x1a4] sm:$0xf]
    %v149 = vld [vmem:[%s0 + $0x1a8] sm:$0xf]
    %v150 = vld [vmem:[%s0 + $0x1ac] sm:$0xf]
    %v151 = vld [vmem:[%s0 + $0x1b0] sm:$0xf]
    %v152 = vld [vmem:[%s0 + $0x1b4] sm:$0xf]
    %v153 = vld [vmem:[%s0 + $0x1b8] sm:$0xf]
    %v154 = vld [vmem:[%s0 + $0x1bc] sm:$0xf]
    %v155 = vld [vmem:[%s0 + $0x1c0] sm:$0xf]
    %v156 = vld [vmem:[%s0 + $0x1c4] sm:$0xf]
    %v157 = vld [vmem:[%s0 + $0x1c8] sm:$0xf]
    %v158 = vld [vmem:[%s0 + $0x1cc] sm:$0xf]
    %v159 = vld [vmem:[%s0 + $0x1d0] sm:$0xf]
    %v160 = vld [vmem:[%s0 + $0x1d4] sm:$0xf]
    %v161 = vld [vmem:[%s0 + $0x1d8] sm:$0xf]
    %v162 = vld [vmem:[%s0 + $0x1dc] sm:$0xf]
    %v163 = vld [vmem:[%s0 + $0x1e0] sm:$0xf]
    %v164 = vld [vmem:[%s0 + $0x1e4] sm:$0xf]
    %v165 = vld [vmem:[%s0 + $0x1e8] sm:$0xf]
    %v166 = vld [vmem:[%s0 + $0x1ec] sm:$0xf]
    %v167 = vld [vmem:[%s0 + $0x1f0] sm:$0xf]
    %v168 = vld [vmem:[%s0 + $0x1f4] sm:$0xf]
    %v169 = vld [vmem:[%s0 + $0x1f8] sm:$0xf]
    %v170 = vld [vmem:[%s0 + $0x1fc] sm:$0xf]
    %v171 = vld [vmem:[%s1] sm:$0xf]
    %v172 = vld [vmem:[%s1 + $0x4] sm:$0xf]
    %v173 = vld [vmem:[%s1 + $0x8] sm:$0xf]
    %v174 = vld [vmem:[%s1 + $0xc] sm:$0xf]
    %v175 = vld [vmem:[%s1 + $0x10] sm:$0xf]
    %v176 = vld [vmem:[%s1 + $0x14] sm:$0xf]
    %v177 = vld [vmem:[%s1 + $0x18] sm:$0xf]
    %v178 = vld [vmem:[%s1 + $0x1c] sm:$0xf]
    %v179 = vld [vmem:[%s1 + $0x20] sm:$0xf]
    %v180 = vld [vmem:[%s1 + $0x24] sm:$0xf]
    %v181 = vld [vmem:[%s1 + $0x28] sm:$0xf]
    %v182 = vld [vmem:[%s1 + $0x2c] sm:$0xf]
    %v183 = vld [vmem:[%s1 + $0x30] sm:$0xf]
    %v184 = vld [vmem:[%s1 + $0x34] sm:$0xf]
    %v185 = vld [vmem:[%s1 + $0x38] sm:$0xf]
    %v186 = vld [vmem:[%s1 + $0x3c] sm:$0xf]
    %v187 = vld [vmem:[%s2] sm:$0x1]
    %v189 = vlaneseq
    %v190 = vshrl.u32 %v189, 7
    %v191 = vsub.s32 0, %v190
    %v192 = vrot.slane %v187, %v191
    %v322 = vunpack.c.l.b16 %v43
    %v323 = vunpack.c.l.b16 %v44
    %v324 = vunpack.c.l.b16 %v45
    %v325 = vunpack.c.l.b16 %v46
    %v326 = vunpack.c.l.b16 %v47
    %v327 = vunpack.c.l.b16 %v48
    %v328 = vunpack.c.l.b16 %v49
    %v329 = vunpack.c.l.b16 %v50
    %v330 = vunpack.c.l.b16 %v51
    %v331 = vunpack.c.l.b16 %v52
    %v332 = vunpack.c.l.b16 %v53
    %v333 = vunpack.c.l.b16 %v54
    %v334 = vunpack.c.l.b16 %v55
    %v335 = vunpack.c.l.b16 %v56
    %v336 = vunpack.c.l.b16 %v57
    %v337 = vunpack.c.l.b16 %v58
    %v338 = vunpack.c.l.b16 %v59
    %v339 = vunpack.c.l.b16 %v60
    %v340 = vunpack.c.l.b16 %v61
    %v341 = vunpack.c.l.b16 %v62
    %v342 = vunpack.c.l.b16 %v63
    %v343 = vunpack.c.l.b16 %v64
    %v344 = vunpack.c.l.b16 %v65
    %v345 = vunpack.c.l.b16 %v66
    %v346 = vunpack.c.l.b16 %v67
    %v347 = vunpack.c.l.b16 %v68
    %v348 = vunpack.c.l.b16 %v69
    %v349 = vunpack.c.l.b16 %v70
    %v350 = vunpack.c.l.b16 %v71
    %v351 = vunpack.c.l.b16 %v72
    %v352 = vunpack.c.l.b16 %v73
    %v353 = vunpack.c.l.b16 %v74
    %v354 = vunpack.c.l.b16 %v75
    %v355 = vunpack.c.l.b16 %v76
    %v356 = vunpack.c.l.b16 %v77
    %v357 = vunpack.c.l.b16 %v78
    %v358 = vunpack.c.l.b16 %v79
    %v359 = vunpack.c.l.b16 %v80
    %v360 = vunpack.c.l.b16 %v81
    %v361 = vunpack.c.l.b16 %v82
    %v362 = vunpack.c.l.b16 %v83
    %v363 = vunpack.c.l.b16 %v84
    %v364 = vunpack.c.l.b16 %v85
    %v365 = vunpack.c.l.b16 %v86
    %v366 = vunpack.c.l.b16 %v87
    %v367 = vunpack.c.l.b16 %v88
    %v368 = vunpack.c.l.b16 %v89
    %v369 = vunpack.c.l.b16 %v90
    %v370 = vunpack.c.l.b16 %v91
    %v371 = vunpack.c.l.b16 %v92
    %v372 = vunpack.c.l.b16 %v93
    %v373 = vunpack.c.l.b16 %v94
    %v374 = vunpack.c.l.b16 %v95
    %v375 = vunpack.c.l.b16 %v96
    %v376 = vunpack.c.l.b16 %v97
    %v377 = vunpack.c.l.b16 %v98
    %v378 = vunpack.c.l.b16 %v99
    %v379 = vunpack.c.l.b16 %v100
    %v380 = vunpack.c.l.b16 %v101
    %v381 = vunpack.c.l.b16 %v102
    %v382 = vunpack.c.l.b16 %v103
    %v383 = vunpack.c.l.b16 %v104
    %v384 = vunpack.c.l.b16 %v105
    %v385 = vunpack.c.l.b16 %v106
    %v386 = vunpack.c.l.b16 %v107
    %v387 = vunpack.c.l.b16 %v108
    %v388 = vunpack.c.l.b16 %v109
    %v389 = vunpack.c.l.b16 %v110
    %v390 = vunpack.c.l.b16 %v111
    %v391 = vunpack.c.l.b16 %v112
    %v392 = vunpack.c.l.b16 %v113
    %v393 = vunpack.c.l.b16 %v114
    %v394 = vunpack.c.l.b16 %v115
    %v395 = vunpack.c.l.b16 %v116
    %v396 = vunpack.c.l.b16 %v117
    %v397 = vunpack.c.l.b16 %v118
    %v398 = vunpack.c.l.b16 %v119
    %v399 = vunpack.c.l.b16 %v120
    %v400 = vunpack.c.l.b16 %v121
    %v401 = vunpack.c.l.b16 %v122
    %v402 = vunpack.c.l.b16 %v123
    %v403 = vunpack.c.l.b16 %v124
    %v404 = vunpack.c.l.b16 %v125
    %v405 = vunpack.c.l.b16 %v126
    %v406 = vunpack.c.l.b16 %v127
    %v407 = vunpack.c.l.b16 %v128
    %v408 = vunpack.c.l.b16 %v129
    %v409 = vunpack.c.l.b16 %v130
    %v410 = vunpack.c.l.b16 %v131
    %v411 = vunpack.c.l.b16 %v132
    %v412 = vunpack.c.l.b16 %v133
    %v413 = vunpack.c.l.b16 %v134
    %v414 = vunpack.c.l.b16 %v135
    %v415 = vunpack.c.l.b16 %v136
    %v416 = vunpack.c.l.b16 %v137
    %v417 = vunpack.c.l.b16 %v138
    %v418 = vunpack.c.l.b16 %v139
    %v419 = vunpack.c.l.b16 %v140
    %v420 = vunpack.c.l.b16 %v141
    %v421 = vunpack.c.l.b16 %v142
    %v422 = vunpack.c.l.b16 %v143
    %v423 = vunpack.c.l.b16 %v144
    %v424 = vunpack.c.l.b16 %v145
    %v425 = vunpack.c.l.b16 %v146
    %v426 = vunpack.c.l.b16 %v147
    %v427 = vunpack.c.l.b16 %v148
    %v428 = vunpack.c.l.b16 %v149
    %v429 = vunpack.c.l.b16 %v150
    %v430 = vunpack.c.l.b16 %v151
    %v431 = vunpack.c.l.b16 %v152
    %v432 = vunpack.c.l.b16 %v153
    %v433 = vunpack.c.l.b16 %v154
    %v434 = vunpack.c.l.b16 %v155
    %v435 = vunpack.c.l.b16 %v156
    %v436 = vunpack.c.l.b16 %v157
    %v437 = vunpack.c.l.b16 %v158
    %v438 = vunpack.c.l.b16 %v159
    %v439 = vunpack.c.l.b16 %v160
    %v440 = vunpack.c.l.b16 %v161
    %v441 = vunpack.c.l.b16 %v162
    %v442 = vunpack.c.l.b16 %v163
    %v443 = vunpack.c.l.b16 %v164
    %v444 = vunpack.c.l.b16 %v165
    %v445 = vunpack.c.l.b16 %v166
    %v446 = vunpack.c.l.b16 %v167
    %v447 = vunpack.c.l.b16 %v168
    %v448 = vunpack.c.l.b16 %v169
    %v449 = vunpack.c.l.b16 %v170
    %v450 = vpack.c.b16 %v323, %v322
    %v451 = vpack.c.b16 %v325, %v324
    %v452 = vpack.c.b16 %v327, %v326
    %v453 = vpack.c.b16 %v329, %v328
    %v454 = vpack.c.b16 %v331, %v330
    %v455 = vpack.c.b16 %v333, %v332
    %v456 = vpack.c.b16 %v335, %v334
    %v457 = vpack.c.b16 %v337, %v336
    %v458 = vpack.c.b16 %v339, %v338
    %v459 = vpack.c.b16 %v341, %v340
    %v460 = vpack.c.b16 %v343, %v342
    %v461 = vpack.c.b16 %v345, %v344
    %v462 = vpack.c.b16 %v347, %v346
    %v463 = vpack.c.b16 %v349, %v348
    %v464 = vpack.c.b16 %v351, %v350
    %v465 = vpack.c.b16 %v353, %v352
    %v466 = vpack.c.b16 %v355, %v354
    %v467 = vpack.c.b16 %v357, %v356
    %v468 = vpack.c.b16 %v359, %v358
    %v469 = vpack.c.b16 %v361, %v360
    %v470 = vpack.c.b16 %v363, %v362
    %v471 = vpack.c.b16 %v365, %v364
    %v472 = vpack.c.b16 %v367, %v366
    %v473 = vpack.c.b16 %v369, %v368
    %v474 = vpack.c.b16 %v371, %v370
    %v475 = vpack.c.b16 %v373, %v372
    %v476 = vpack.c.b16 %v375, %v374
    %v477 = vpack.c.b16 %v377, %v376
    %v478 = vpack.c.b16 %v379, %v378
    %v479 = vpack.c.b16 %v381, %v380
    %v480 = vpack.c.b16 %v383, %v382
    %v481 = vpack.c.b16 %v385, %v384
    %v482 = vpack.c.b16 %v387, %v386
    %v483 = vpack.c.b16 %v389, %v388
    %v484 = vpack.c.b16 %v391, %v390
    %v485 = vpack.c.b16 %v393, %v392
    %v486 = vpack.c.b16 %v395, %v394
    %v487 = vpack.c.b16 %v397, %v396
    %v488 = vpack.c.b16 %v399, %v398
    %v489 = vpack.c.b16 %v401, %v400
    %v490 = vpack.c.b16 %v403, %v402
    %v491 = vpack.c.b16 %v405, %v404
    %v492 = vpack.c.b16 %v407, %v406
    %v493 = vpack.c.b16 %v409, %v408
    %v494 = vpack.c.b16 %v411, %v410
    %v495 = vpack.c.b16 %v413, %v412
    %v496 = vpack.c.b16 %v415, %v414
    %v497 = vpack.c.b16 %v417, %v416
    %v498 = vpack.c.b16 %v419, %v418
    %v499 = vpack.c.b16 %v421, %v420
    %v500 = vpack.c.b16 %v423, %v422
    %v501 = vpack.c.b16 %v425, %v424
    %v502 = vpack.c.b16 %v427, %v426
    %v503 = vpack.c.b16 %v429, %v428
    %v504 = vpack.c.b16 %v431, %v430
    %v505 = vpack.c.b16 %v433, %v432
    %v506 = vpack.c.b16 %v435, %v434
    %v507 = vpack.c.b16 %v437, %v436
    %v508 = vpack.c.b16 %v439, %v438
    %v509 = vpack.c.b16 %v441, %v440
    %v510 = vpack.c.b16 %v443, %v442
    %v511 = vpack.c.b16 %v445, %v444
    %v512 = vpack.c.b16 %v447, %v446
    %v513 = vpack.c.b16 %v449, %v448
    %v594 = vunpack.c.l.b16 %v171
    %v595 = vunpack.c.l.b16 %v172
    %v596 = vunpack.c.l.b16 %v173
    %v597 = vunpack.c.l.b16 %v174
    %v598 = vunpack.c.l.b16 %v175
    %v599 = vunpack.c.l.b16 %v176
    %v600 = vunpack.c.l.b16 %v177
    %v601 = vunpack.c.l.b16 %v178
    %v602 = vunpack.c.l.b16 %v179
    %v603 = vunpack.c.l.b16 %v180
    %v604 = vunpack.c.l.b16 %v181
    %v605 = vunpack.c.l.b16 %v182
    %v606 = vunpack.c.l.b16 %v183
    %v607 = vunpack.c.l.b16 %v184
    %v608 = vunpack.c.l.b16 %v185
    %v609 = vunpack.c.l.b16 %v186
    %v610 = vpack.c.b16 %v595, %v594
    %v611 = vpack.c.b16 %v597, %v596
    %v612 = vpack.c.b16 %v599, %v598
    %v613 = vpack.c.b16 %v601, %v600
    %v614 = vpack.c.b16 %v603, %v602
    %v615 = vpack.c.b16 %v605, %v604
    %v616 = vpack.c.b16 %v607, %v606
    %v617 = vpack.c.b16 %v609, %v608
    %626 = vmatprep.subr.bf16.mxu0 0
    %627 = vmatpush1.bf16.msra.mxu0 %v617
    %628 = vmatprep.subr.bf16.mxu0 0
    %629 = vmatpush1.bf16.msra.mxu0 %v616
    %630 = vmatprep.subr.bf16.mxu0 0
    %631 = vmatpush1.bf16.msra.mxu0 %v615
    %632 = vmatprep.subr.bf16.mxu0 0
    %633 = vmatpush1.bf16.msra.mxu0 %v614
    %634 = vmatprep.subr.bf16.mxu0 0
    %635 = vmatpush1.bf16.msra.mxu0 %v613
    %636 = vmatprep.subr.bf16.mxu0 0
    %637 = vmatpush1.bf16.msra.mxu0 %v612
    %638 = vmatprep.subr.bf16.mxu0 0
    %639 = vmatpush1.bf16.msra.mxu0 %v611
    %640 = vmatprep.subr.bf16.mxu0 0
    %641 = vmatpush1.bf16.msra.mxu0 %v610
    %642 = vmatprep.subr.bf16.mxu0 0
    %643 = vmatpush2.bf16.msra.mxu0 0
    %644 = vmatprep.subr.bf16.mxu0 0
    %645 = vmatpush2.bf16.msra.mxu0 0
    %646 = vmatprep.subr.bf16.mxu0 0
    %647 = vmatpush2.bf16.msra.mxu0 0
    %648 = vmatprep.subr.bf16.mxu0 0
    %649 = vmatpush2.bf16.msra.mxu0 0
    %650 = vmatprep.subr.bf16.mxu0 0
    %651 = vmatpush2.bf16.msra.mxu0 0
    %652 = vmatprep.subr.bf16.mxu0 0
    %653 = vmatpush2.bf16.msra.mxu0 0
    %654 = vmatprep.subr.bf16.mxu0 0
    %655 = vmatpush2.bf16.msra.mxu0 0
    %656 = vmatprep.subr.bf16.mxu0 0
    %657 = vmatpush2.bf16.msra.mxu0 0
    %658 = vmatprep.mubr.bf16.mxu0 0
    %659 = vmatmul.mubr.bf16.gmra.mxu0 %v450
    %v660 = vpop.f32.mrf.mxu0
    %v661 = vadd.f32 %v192, %v660
    %v662 = vpop.f32.mrf.mxu0
    %v663 = vpop.f32.mrf.mxu0
    %v664 = vadd.f32 %v192, %v663
    %v665 = vpop.f32.mrf.mxu0
    %666 = vmatprep.mubr.bf16.mxu0 0
    %667 = vmatmul.mubr.bf16.gmra.mxu0 %v451
    %v668 = vpop.f32.mrf.mxu0
    %v669 = vadd.f32 %v192, %v668
    %v670 = vpop.f32.mrf.mxu0
    %v671 = vpop.f32.mrf.mxu0
    %v672 = vadd.f32 %v192, %v671
    %v673 = vpop.f32.mrf.mxu0
    %674 = vmatprep.mubr.bf16.mxu0 0
    %675 = vmatmul.mubr.bf16.gmra.mxu0 %v452
    %v676 = vpop.f32.mrf.mxu0
    %v677 = vadd.f32 %v192, %v676
    %v678 = vpop.f32.mrf.mxu0
    %v679 = vpop.f32.mrf.mxu0
    %v680 = vadd.f32 %v192, %v679
    %v681 = vpop.f32.mrf.mxu0
    %682 = vmatprep.mubr.bf16.mxu0 0
    %683 = vmatmul.mubr.bf16.gmra.mxu0 %v453
    %v684 = vpop.f32.mrf.mxu0
    %v685 = vadd.f32 %v192, %v684
    %v686 = vpop.f32.mrf.mxu0
    %v687 = vpop.f32.mrf.mxu0
    %v688 = vadd.f32 %v192, %v687
    %v689 = vpop.f32.mrf.mxu0
    %690 = vmatprep.mubr.bf16.mxu0 0
    %691 = vmatmul.mubr.bf16.gmra.mxu0 %v454
    %v692 = vpop.f32.mrf.mxu0
    %v693 = vadd.f32 %v192, %v692
    %v694 = vpop.f32.mrf.mxu0
    %v695 = vpop.f32.mrf.mxu0
    %v696 = vadd.f32 %v192, %v695
    %v697 = vpop.f32.mrf.mxu0
    %698 = vmatprep.mubr.bf16.mxu0 0
    %699 = vmatmul.mubr.bf16.gmra.mxu0 %v455
    %v700 = vpop.f32.mrf.mxu0
    %v701 = vadd.f32 %v192, %v700
    %v702 = vpop.f32.mrf.mxu0
    %v703 = vpop.f32.mrf.mxu0
    %v704 = vadd.f32 %v192, %v703
    %v705 = vpop.f32.mrf.mxu0
    %706 = vmatprep.mubr.bf16.mxu0 0
    %707 = vmatmul.mubr.bf16.gmra.mxu0 %v456
    %v708 = vpop.f32.mrf.mxu0
    %v709 = vadd.f32 %v192, %v708
    %v710 = vpop.f32.mrf.mxu0
    %v711 = vpop.f32.mrf.mxu0
    %v712 = vadd.f32 %v192, %v711
    %v713 = vpop.f32.mrf.mxu0
    %714 = vmatprep.mubr.bf16.mxu0 0
    %715 = vmatmul.mubr.bf16.gmra.mxu0 %v457
    %v716 = vpop.f32.mrf.mxu0
    %v717 = vadd.f32 %v192, %v716
    %v718 = vpop.f32.mrf.mxu0
    %v719 = vpop.f32.mrf.mxu0
    %v720 = vadd.f32 %v192, %v719
    %v721 = vpop.f32.mrf.mxu0
    %722 = vmatprep.mubr.bf16.mxu0 0
    %723 = vmatmul.mubr.bf16.gmra.mxu0 %v458
    %v724 = vpop.f32.mrf.mxu0
    %v725 = vadd.f32 %v192, %v724
    %v726 = vpop.f32.mrf.mxu0
    %v727 = vpop.f32.mrf.mxu0
    %v728 = vadd.f32 %v192, %v727
    %v729 = vpop.f32.mrf.mxu0
    %730 = vmatprep.mubr.bf16.mxu0 0
    %731 = vmatmul.mubr.bf16.gmra.mxu0 %v459
    %v732 = vpop.f32.mrf.mxu0
    %v733 = vadd.f32 %v192, %v732
    %v734 = vpop.f32.mrf.mxu0
    %v735 = vpop.f32.mrf.mxu0
    %v736 = vadd.f32 %v192, %v735
    %v737 = vpop.f32.mrf.mxu0
    %738 = vmatprep.mubr.bf16.mxu0 0
    %739 = vmatmul.mubr.bf16.gmra.mxu0 %v460
    %v740 = vpop.f32.mrf.mxu0
    %v741 = vadd.f32 %v192, %v740
    %v742 = vpop.f32.mrf.mxu0
    %v743 = vpop.f32.mrf.mxu0
    %v744 = vadd.f32 %v192, %v743
    %v745 = vpop.f32.mrf.mxu0
    %746 = vmatprep.mubr.bf16.mxu0 0
    %747 = vmatmul.mubr.bf16.gmra.mxu0 %v461
    %v748 = vpop.f32.mrf.mxu0
    %v749 = vadd.f32 %v192, %v748
    %v750 = vpop.f32.mrf.mxu0
    %v751 = vpop.f32.mrf.mxu0
    %v752 = vadd.f32 %v192, %v751
    %v753 = vpop.f32.mrf.mxu0
    %754 = vmatprep.mubr.bf16.mxu0 0
    %755 = vmatmul.mubr.bf16.gmra.mxu0 %v462
    %v756 = vpop.f32.mrf.mxu0
    %v757 = vadd.f32 %v192, %v756
    %v758 = vpop.f32.mrf.mxu0
    %v759 = vpop.f32.mrf.mxu0
    %v760 = vadd.f32 %v192, %v759
    %v761 = vpop.f32.mrf.mxu0
    %762 = vmatprep.mubr.bf16.mxu0 0
    %763 = vmatmul.mubr.bf16.gmra.mxu0 %v463
    %v764 = vpop.f32.mrf.mxu0
    %v765 = vadd.f32 %v192, %v764
    %v766 = vpop.f32.mrf.mxu0
    %v767 = vpop.f32.mrf.mxu0
    %v768 = vadd.f32 %v192, %v767
    %v769 = vpop.f32.mrf.mxu0
    %770 = vmatprep.mubr.bf16.mxu0 0
    %771 = vmatmul.mubr.bf16.gmra.mxu0 %v464
    %v772 = vpop.f32.mrf.mxu0
    %v773 = vadd.f32 %v192, %v772
    %v774 = vpop.f32.mrf.mxu0
    %v775 = vpop.f32.mrf.mxu0
    %v776 = vadd.f32 %v192, %v775
    %v777 = vpop.f32.mrf.mxu0
    %778 = vmatprep.mubr.bf16.mxu0 0
    %779 = vmatmul.mubr.bf16.gmra.mxu0 %v465
    %v780 = vpop.f32.mrf.mxu0
    %v781 = vadd.f32 %v192, %v780
    %v782 = vpop.f32.mrf.mxu0
    %v783 = vpop.f32.mrf.mxu0
    %v784 = vadd.f32 %v192, %v783
    %v785 = vpop.f32.mrf.mxu0
    %786 = vmatprep.mubr.bf16.mxu0 0
    %787 = vmatmul.mubr.bf16.gmra.mxu0 %v466
    %v788 = vpop.f32.mrf.mxu0
    %v789 = vadd.f32 %v192, %v788
    %v790 = vpop.f32.mrf.mxu0
    %v791 = vpop.f32.mrf.mxu0
    %v792 = vadd.f32 %v192, %v791
    %v793 = vpop.f32.mrf.mxu0
    %794 = vmatprep.mubr.bf16.mxu0 0
    %795 = vmatmul.mubr.bf16.gmra.mxu0 %v467
    %v796 = vpop.f32.mrf.mxu0
    %v797 = vadd.f32 %v192, %v796
    %v798 = vpop.f32.mrf.mxu0
    %v799 = vpop.f32.mrf.mxu0
    %v800 = vadd.f32 %v192, %v799
    %v801 = vpop.f32.mrf.mxu0
    %802 = vmatprep.mubr.bf16.mxu0 0
    %803 = vmatmul.mubr.bf16.gmra.mxu0 %v468
    %v804 = vpop.f32.mrf.mxu0
    %v805 = vadd.f32 %v192, %v804
    %v806 = vpop.f32.mrf.mxu0
    %v807 = vpop.f32.mrf.mxu0
    %v808 = vadd.f32 %v192, %v807
    %v809 = vpop.f32.mrf.mxu0
    %810 = vmatprep.mubr.bf16.mxu0 0
    %811 = vmatmul.mubr.bf16.gmra.mxu0 %v469
    %v812 = vpop.f32.mrf.mxu0
    %v813 = vadd.f32 %v192, %v812
    %v814 = vpop.f32.mrf.mxu0
    %v815 = vpop.f32.mrf.mxu0
    %v816 = vadd.f32 %v192, %v815
    %v817 = vpop.f32.mrf.mxu0
    %818 = vmatprep.mubr.bf16.mxu0 0
    %819 = vmatmul.mubr.bf16.gmra.mxu0 %v470
    %v820 = vpop.f32.mrf.mxu0
    %v821 = vadd.f32 %v192, %v820
    %v822 = vpop.f32.mrf.mxu0
    %v823 = vpop.f32.mrf.mxu0
    %v824 = vadd.f32 %v192, %v823
    %v825 = vpop.f32.mrf.mxu0
    %826 = vmatprep.mubr.bf16.mxu0 0
    %827 = vmatmul.mubr.bf16.gmra.mxu0 %v471
    %v828 = vpop.f32.mrf.mxu0
    %v829 = vadd.f32 %v192, %v828
    %v830 = vpop.f32.mrf.mxu0
    %v831 = vpop.f32.mrf.mxu0
    %v832 = vadd.f32 %v192, %v831
    %v833 = vpop.f32.mrf.mxu0
    %834 = vmatprep.mubr.bf16.mxu0 0
    %835 = vmatmul.mubr.bf16.gmra.mxu0 %v472
    %v836 = vpop.f32.mrf.mxu0
    %v837 = vadd.f32 %v192, %v836
    %v838 = vpop.f32.mrf.mxu0
    %v839 = vpop.f32.mrf.mxu0
    %v840 = vadd.f32 %v192, %v839
    %v841 = vpop.f32.mrf.mxu0
    %842 = vmatprep.mubr.bf16.mxu0 0
    %843 = vmatmul.mubr.bf16.gmra.mxu0 %v473
    %v844 = vpop.f32.mrf.mxu0
    %v845 = vadd.f32 %v192, %v844
    %v846 = vpop.f32.mrf.mxu0
    %v847 = vpop.f32.mrf.mxu0
    %v848 = vadd.f32 %v192, %v847
    %v849 = vpop.f32.mrf.mxu0
    %850 = vmatprep.mubr.bf16.mxu0 0
    %851 = vmatmul.mubr.bf16.gmra.mxu0 %v474
    %v852 = vpop.f32.mrf.mxu0
    %v853 = vadd.f32 %v192, %v852
    %v854 = vpop.f32.mrf.mxu0
    %v855 = vpop.f32.mrf.mxu0
    %v856 = vadd.f32 %v192, %v855
    %v857 = vpop.f32.mrf.mxu0
    %858 = vmatprep.mubr.bf16.mxu0 0
    %859 = vmatmul.mubr.bf16.gmra.mxu0 %v475
    %v860 = vpop.f32.mrf.mxu0
    %v861 = vadd.f32 %v192, %v860
    %v862 = vpop.f32.mrf.mxu0
    %v863 = vpop.f32.mrf.mxu0
    %v864 = vadd.f32 %v192, %v863
    %v865 = vpop.f32.mrf.mxu0
    %866 = vmatprep.mubr.bf16.mxu0 0
    %867 = vmatmul.mubr.bf16.gmra.mxu0 %v476
    %v868 = vpop.f32.mrf.mxu0
    %v869 = vadd.f32 %v192, %v868
    %v870 = vpop.f32.mrf.mxu0
    %v871 = vpop.f32.mrf.mxu0
    %v872 = vadd.f32 %v192, %v871
    %v873 = vpop.f32.mrf.mxu0
    %874 = vmatprep.mubr.bf16.mxu0 0
    %875 = vmatmul.mubr.bf16.gmra.mxu0 %v477
    %v876 = vpop.f32.mrf.mxu0
    %v877 = vadd.f32 %v192, %v876
    %v878 = vpop.f32.mrf.mxu0
    %v879 = vpop.f32.mrf.mxu0
    %v880 = vadd.f32 %v192, %v879
    %v881 = vpop.f32.mrf.mxu0
    %882 = vmatprep.mubr.bf16.mxu0 0
    %883 = vmatmul.mubr.bf16.gmra.mxu0 %v478
    %v884 = vpop.f32.mrf.mxu0
    %v885 = vadd.f32 %v192, %v884
    %v886 = vpop.f32.mrf.mxu0
    %v887 = vpop.f32.mrf.mxu0
    %v888 = vadd.f32 %v192, %v887
    %v889 = vpop.f32.mrf.mxu0
    %890 = vmatprep.mubr.bf16.mxu0 0
    %891 = vmatmul.mubr.bf16.gmra.mxu0 %v479
    %v892 = vpop.f32.mrf.mxu0
    %v893 = vadd.f32 %v192, %v892
    %v894 = vpop.f32.mrf.mxu0
    %v895 = vpop.f32.mrf.mxu0
    %v896 = vadd.f32 %v192, %v895
    %v897 = vpop.f32.mrf.mxu0
    %898 = vmatprep.mubr.bf16.mxu0 0
    %899 = vmatmul.mubr.bf16.gmra.mxu0 %v480
    %v900 = vpop.f32.mrf.mxu0
    %v901 = vadd.f32 %v192, %v900
    %v902 = vpop.f32.mrf.mxu0
    %v903 = vpop.f32.mrf.mxu0
    %v904 = vadd.f32 %v192, %v903
    %v905 = vpop.f32.mrf.mxu0
    %906 = vmatprep.mubr.bf16.mxu0 0
    %907 = vmatmul.mubr.bf16.gmra.mxu0 %v481
    %v908 = vpop.f32.mrf.mxu0
    %v909 = vadd.f32 %v192, %v908
    %v910 = vpop.f32.mrf.mxu0
    %v911 = vpop.f32.mrf.mxu0
    %v912 = vadd.f32 %v192, %v911
    %v913 = vpop.f32.mrf.mxu0
    %914 = vmatprep.mubr.bf16.mxu0 0
    %915 = vmatmul.mubr.bf16.gmra.mxu0 %v482
    %v916 = vpop.f32.mrf.mxu0
    %v917 = vadd.f32 %v192, %v916
    %v918 = vpop.f32.mrf.mxu0
    %v919 = vpop.f32.mrf.mxu0
    %v920 = vadd.f32 %v192, %v919
    %v921 = vpop.f32.mrf.mxu0
    %922 = vmatprep.mubr.bf16.mxu0 0
    %923 = vmatmul.mubr.bf16.gmra.mxu0 %v483
    %v924 = vpop.f32.mrf.mxu0
    %v925 = vadd.f32 %v192, %v924
    %v926 = vpop.f32.mrf.mxu0
    %v927 = vpop.f32.mrf.mxu0
    %v928 = vadd.f32 %v192, %v927
    %v929 = vpop.f32.mrf.mxu0
    %930 = vmatprep.mubr.bf16.mxu0 0
    %931 = vmatmul.mubr.bf16.gmra.mxu0 %v484
    %v932 = vpop.f32.mrf.mxu0
    %v933 = vadd.f32 %v192, %v932
    %v934 = vpop.f32.mrf.mxu0
    %v935 = vpop.f32.mrf.mxu0
    %v936 = vadd.f32 %v192, %v935
    %v937 = vpop.f32.mrf.mxu0
    %938 = vmatprep.mubr.bf16.mxu0 0
    %939 = vmatmul.mubr.bf16.gmra.mxu0 %v485
    %v940 = vpop.f32.mrf.mxu0
    %v941 = vadd.f32 %v192, %v940
    %v942 = vpop.f32.mrf.mxu0
    %v943 = vpop.f32.mrf.mxu0
    %v944 = vadd.f32 %v192, %v943
    %v945 = vpop.f32.mrf.mxu0
    %946 = vmatprep.mubr.bf16.mxu0 0
    %947 = vmatmul.mubr.bf16.gmra.mxu0 %v486
    %v948 = vpop.f32.mrf.mxu0
    %v949 = vadd.f32 %v192, %v948
    %v950 = vpop.f32.mrf.mxu0
    %v951 = vpop.f32.mrf.mxu0
    %v952 = vadd.f32 %v192, %v951
    %v953 = vpop.f32.mrf.mxu0
    %954 = vmatprep.mubr.bf16.mxu0 0
    %955 = vmatmul.mubr.bf16.gmra.mxu0 %v487
    %v956 = vpop.f32.mrf.mxu0
    %v957 = vadd.f32 %v192, %v956
    %v958 = vpop.f32.mrf.mxu0
    %v959 = vpop.f32.mrf.mxu0
    %v960 = vadd.f32 %v192, %v959
    %v961 = vpop.f32.mrf.mxu0
    %962 = vmatprep.mubr.bf16.mxu0 0
    %963 = vmatmul.mubr.bf16.gmra.mxu0 %v488
    %v964 = vpop.f32.mrf.mxu0
    %v965 = vadd.f32 %v192, %v964
    %v966 = vpop.f32.mrf.mxu0
    %v967 = vpop.f32.mrf.mxu0
    %v968 = vadd.f32 %v192, %v967
    %v969 = vpop.f32.mrf.mxu0
    %970 = vmatprep.mubr.bf16.mxu0 0
    %971 = vmatmul.mubr.bf16.gmra.mxu0 %v489
    %v972 = vpop.f32.mrf.mxu0
    %v973 = vadd.f32 %v192, %v972
    %v974 = vpop.f32.mrf.mxu0
    %v975 = vpop.f32.mrf.mxu0
    %v976 = vadd.f32 %v192, %v975
    %v977 = vpop.f32.mrf.mxu0
    %978 = vmatprep.mubr.bf16.mxu0 0
    %979 = vmatmul.mubr.bf16.gmra.mxu0 %v490
    %v980 = vpop.f32.mrf.mxu0
    %v981 = vadd.f32 %v192, %v980
    %v982 = vpop.f32.mrf.mxu0
    %v983 = vpop.f32.mrf.mxu0
    %v984 = vadd.f32 %v192, %v983
    %v985 = vpop.f32.mrf.mxu0
    %986 = vmatprep.mubr.bf16.mxu0 0
    %987 = vmatmul.mubr.bf16.gmra.mxu0 %v491
    %v988 = vpop.f32.mrf.mxu0
    %v989 = vadd.f32 %v192, %v988
    %v990 = vpop.f32.mrf.mxu0
    %v991 = vpop.f32.mrf.mxu0
    %v992 = vadd.f32 %v192, %v991
    %v993 = vpop.f32.mrf.mxu0
    %994 = vmatprep.mubr.bf16.mxu0 0
    %995 = vmatmul.mubr.bf16.gmra.mxu0 %v492
    %v996 = vpop.f32.mrf.mxu0
    %v997 = vadd.f32 %v192, %v996
    %v998 = vpop.f32.mrf.mxu0
    %v999 = vpop.f32.mrf.mxu0
    %v1000 = vadd.f32 %v192, %v999
    %v1001 = vpop.f32.mrf.mxu0
    %1002 = vmatprep.mubr.bf16.mxu0 0
    %1003 = vmatmul.mubr.bf16.gmra.mxu0 %v493
    %v1004 = vpop.f32.mrf.mxu0
    %v1005 = vadd.f32 %v192, %v1004
    %v1006 = vpop.f32.mrf.mxu0
    %v1007 = vpop.f32.mrf.mxu0
    %v1008 = vadd.f32 %v192, %v1007
    %v1009 = vpop.f32.mrf.mxu0
    %1010 = vmatprep.mubr.bf16.mxu0 0
    %1011 = vmatmul.mubr.bf16.gmra.mxu0 %v494
    %v1012 = vpop.f32.mrf.mxu0
    %v1013 = vadd.f32 %v192, %v1012
    %v1014 = vpop.f32.mrf.mxu0
    %v1015 = vpop.f32.mrf.mxu0
    %v1016 = vadd.f32 %v192, %v1015
    %v1017 = vpop.f32.mrf.mxu0
    %1018 = vmatprep.mubr.bf16.mxu0 0
    %1019 = vmatmul.mubr.bf16.gmra.mxu0 %v495
    %v1020 = vpop.f32.mrf.mxu0
    %v1021 = vadd.f32 %v192, %v1020
    %v1022 = vpop.f32.mrf.mxu0
    %v1023 = vpop.f32.mrf.mxu0
    %v1024 = vadd.f32 %v192, %v1023
    %v1025 = vpop.f32.mrf.mxu0
    %1026 = vmatprep.mubr.bf16.mxu0 0
    %1027 = vmatmul.mubr.bf16.gmra.mxu0 %v496
    %v1028 = vpop.f32.mrf.mxu0
    %v1029 = vadd.f32 %v192, %v1028
    %v1030 = vpop.f32.mrf.mxu0
    %v1031 = vpop.f32.mrf.mxu0
    %v1032 = vadd.f32 %v192, %v1031
    %v1033 = vpop.f32.mrf.mxu0
    %1034 = vmatprep.mubr.bf16.mxu0 0
    %1035 = vmatmul.mubr.bf16.gmra.mxu0 %v497
    %v1036 = vpop.f32.mrf.mxu0
    %v1037 = vadd.f32 %v192, %v1036
    %v1038 = vpop.f32.mrf.mxu0
    %v1039 = vpop.f32.mrf.mxu0
    %v1040 = vadd.f32 %v192, %v1039
    %v1041 = vpop.f32.mrf.mxu0
    %1042 = vmatprep.mubr.bf16.mxu0 0
    %1043 = vmatmul.mubr.bf16.gmra.mxu0 %v498
    %v1044 = vpop.f32.mrf.mxu0
    %v1045 = vadd.f32 %v192, %v1044
    %v1046 = vpop.f32.mrf.mxu0
    %v1047 = vpop.f32.mrf.mxu0
    %v1048 = vadd.f32 %v192, %v1047
    %v1049 = vpop.f32.mrf.mxu0
    %1050 = vmatprep.mubr.bf16.mxu0 0
    %1051 = vmatmul.mubr.bf16.gmra.mxu0 %v499
    %v1052 = vpop.f32.mrf.mxu0
    %v1053 = vadd.f32 %v192, %v1052
    %v1054 = vpop.f32.mrf.mxu0
    %v1055 = vpop.f32.mrf.mxu0
    %v1056 = vadd.f32 %v192, %v1055
    %v1057 = vpop.f32.mrf.mxu0
    %1058 = vmatprep.mubr.bf16.mxu0 0
    %1059 = vmatmul.mubr.bf16.gmra.mxu0 %v500
    %v1060 = vpop.f32.mrf.mxu0
    %v1061 = vadd.f32 %v192, %v1060
    %v1062 = vpop.f32.mrf.mxu0
    %v1063 = vpop.f32.mrf.mxu0
    %v1064 = vadd.f32 %v192, %v1063
    %v1065 = vpop.f32.mrf.mxu0
    %1066 = vmatprep.mubr.bf16.mxu0 0
    %1067 = vmatmul.mubr.bf16.gmra.mxu0 %v501
    %v1068 = vpop.f32.mrf.mxu0
    %v1069 = vadd.f32 %v192, %v1068
    %v1070 = vpop.f32.mrf.mxu0
    %v1071 = vpop.f32.mrf.mxu0
    %v1072 = vadd.f32 %v192, %v1071
    %v1073 = vpop.f32.mrf.mxu0
    %1074 = vmatprep.mubr.bf16.mxu0 0
    %1075 = vmatmul.mubr.bf16.gmra.mxu0 %v502
    %v1076 = vpop.f32.mrf.mxu0
    %v1077 = vadd.f32 %v192, %v1076
    %v1078 = vpop.f32.mrf.mxu0
    %v1079 = vpop.f32.mrf.mxu0
    %v1080 = vadd.f32 %v192, %v1079
    %v1081 = vpop.f32.mrf.mxu0
    %1082 = vmatprep.mubr.bf16.mxu0 0
    %1083 = vmatmul.mubr.bf16.gmra.mxu0 %v503
    %v1084 = vpop.f32.mrf.mxu0
    %v1085 = vadd.f32 %v192, %v1084
    %v1086 = vpop.f32.mrf.mxu0
    %v1087 = vpop.f32.mrf.mxu0
    %v1088 = vadd.f32 %v192, %v1087
    %v1089 = vpop.f32.mrf.mxu0
    %1090 = vmatprep.mubr.bf16.mxu0 0
    %1091 = vmatmul.mubr.bf16.gmra.mxu0 %v504
    %v1092 = vpop.f32.mrf.mxu0
    %v1093 = vadd.f32 %v192, %v1092
    %v1094 = vpop.f32.mrf.mxu0
    %v1095 = vpop.f32.mrf.mxu0
    %v1096 = vadd.f32 %v192, %v1095
    %v1097 = vpop.f32.mrf.mxu0
    %1098 = vmatprep.mubr.bf16.mxu0 0
    %1099 = vmatmul.mubr.bf16.gmra.mxu0 %v505
    %v1100 = vpop.f32.mrf.mxu0
    %v1101 = vadd.f32 %v192, %v1100
    %v1102 = vpop.f32.mrf.mxu0
    %v1103 = vpop.f32.mrf.mxu0
    %v1104 = vadd.f32 %v192, %v1103
    %v1105 = vpop.f32.mrf.mxu0
    %1106 = vmatprep.mubr.bf16.mxu0 0
    %1107 = vmatmul.mubr.bf16.gmra.mxu0 %v506
    %v1108 = vpop.f32.mrf.mxu0
    %v1109 = vadd.f32 %v192, %v1108
    %v1110 = vpop.f32.mrf.mxu0
    %v1111 = vpop.f32.mrf.mxu0
    %v1112 = vadd.f32 %v192, %v1111
    %v1113 = vpop.f32.mrf.mxu0
    %1114 = vmatprep.mubr.bf16.mxu0 0
    %1115 = vmatmul.mubr.bf16.gmra.mxu0 %v507
    %v1116 = vpop.f32.mrf.mxu0
    %v1117 = vadd.f32 %v192, %v1116
    %v1118 = vpop.f32.mrf.mxu0
    %v1119 = vpop.f32.mrf.mxu0
    %v1120 = vadd.f32 %v192, %v1119
    %v1121 = vpop.f32.mrf.mxu0
    %1122 = vmatprep.mubr.bf16.mxu0 0
    %1123 = vmatmul.mubr.bf16.gmra.mxu0 %v508
    %v1124 = vpop.f32.mrf.mxu0
    %v1125 = vadd.f32 %v192, %v1124
    %v1126 = vpop.f32.mrf.mxu0
    %v1127 = vpop.f32.mrf.mxu0
    %v1128 = vadd.f32 %v192, %v1127
    %v1129 = vpop.f32.mrf.mxu0
    %1130 = vmatprep.mubr.bf16.mxu0 0
    %1131 = vmatmul.mubr.bf16.gmra.mxu0 %v509
    %v1132 = vpop.f32.mrf.mxu0
    %v1133 = vadd.f32 %v192, %v1132
    %v1134 = vpop.f32.mrf.mxu0
    %v1135 = vpop.f32.mrf.mxu0
    %v1136 = vadd.f32 %v192, %v1135
    %v1137 = vpop.f32.mrf.mxu0
    %1138 = vmatprep.mubr.bf16.mxu0 0
    %1139 = vmatmul.mubr.bf16.gmra.mxu0 %v510
    %v1140 = vpop.f32.mrf.mxu0
    %v1141 = vadd.f32 %v192, %v1140
    %v1142 = vpop.f32.mrf.mxu0
    %v1143 = vpop.f32.mrf.mxu0
    %v1144 = vadd.f32 %v192, %v1143
    %v1145 = vpop.f32.mrf.mxu0
    %1146 = vmatprep.mubr.bf16.mxu0 0
    %1147 = vmatmul.mubr.bf16.gmra.mxu0 %v511
    %v1148 = vpop.f32.mrf.mxu0
    %v1149 = vadd.f32 %v192, %v1148
    %v1150 = vpop.f32.mrf.mxu0
    %v1151 = vpop.f32.mrf.mxu0
    %v1152 = vadd.f32 %v192, %v1151
    %v1153 = vpop.f32.mrf.mxu0
    %1154 = vmatprep.mubr.bf16.mxu0 0
    %1155 = vmatmul.mubr.bf16.gmra.mxu0 %v512
    %v1156 = vpop.f32.mrf.mxu0
    %v1157 = vadd.f32 %v192, %v1156
    %v1158 = vpop.f32.mrf.mxu0
    %v1159 = vpop.f32.mrf.mxu0
    %v1160 = vadd.f32 %v192, %v1159
    %v1161 = vpop.f32.mrf.mxu0
    %1162 = vmatprep.mubr.bf16.mxu0 0
    %1163 = vmatmul.mubr.bf16.gmra.mxu0 %v513
    %v1164 = vpop.f32.mrf.mxu0
    %v1165 = vadd.f32 %v192, %v1164
    %v1166 = vpop.f32.mrf.mxu0
    %v1167 = vpop.f32.mrf.mxu0
    %v1168 = vadd.f32 %v192, %v1167
    %v1169 = vpop.f32.mrf.mxu0
    %1170 = vdwg.mxu0
    %v1171 = vmax.f32 %v661, 0.0
    %v1172 = vmax.f32 %v664, 0.0
    %v1173 = vmax.f32 %v669, 0.0
    %v1174 = vmax.f32 %v672, 0.0
    %v1175 = vmax.f32 %v677, 0.0
    %v1176 = vmax.f32 %v680, 0.0
    %v1177 = vmax.f32 %v685, 0.0
    %v1178 = vmax.f32 %v688, 0.0
    %v1179 = vmax.f32 %v693, 0.0
    %v1180 = vmax.f32 %v696, 0.0
    %v1181 = vmax.f32 %v701, 0.0
    %v1182 = vmax.f32 %v704, 0.0
    %v1183 = vmax.f32 %v709, 0.0
    %v1184 = vmax.f32 %v712, 0.0
    %v1185 = vmax.f32 %v717, 0.0
    %v1186 = vmax.f32 %v720, 0.0
    %v1187 = vmax.f32 %v725, 0.0
    %v1188 = vmax.f32 %v728, 0.0
    %v1189 = vmax.f32 %v733, 0.0
    %v1190 = vmax.f32 %v736, 0.0
    %v1191 = vmax.f32 %v741, 0.0
    %v1192 = vmax.f32 %v744, 0.0
    %v1193 = vmax.f32 %v749, 0.0
    %v1194 = vmax.f32 %v752, 0.0
    %v1195 = vmax.f32 %v757, 0.0
    %v1196 = vmax.f32 %v760, 0.0
    %v1197 = vmax.f32 %v765, 0.0
    %v1198 = vmax.f32 %v768, 0.0
    %v1199 = vmax.f32 %v773, 0.0
    %v1200 = vmax.f32 %v776, 0.0
    %v1201 = vmax.f32 %v781, 0.0
    %v1202 = vmax.f32 %v784, 0.0
    %v1203 = vmax.f32 %v789, 0.0
    %v1204 = vmax.f32 %v792, 0.0
    %v1205 = vmax.f32 %v797, 0.0
    %v1206 = vmax.f32 %v800, 0.0
    %v1207 = vmax.f32 %v805, 0.0
    %v1208 = vmax.f32 %v808, 0.0
    %v1209 = vmax.f32 %v813, 0.0
    %v1210 = vmax.f32 %v816, 0.0
    %v1211 = vmax.f32 %v821, 0.0
    %v1212 = vmax.f32 %v824, 0.0
    %v1213 = vmax.f32 %v829, 0.0
    %v1214 = vmax.f32 %v832, 0.0
    %v1215 = vmax.f32 %v837, 0.0
    %v1216 = vmax.f32 %v840, 0.0
    %v1217 = vmax.f32 %v845, 0.0
    %v1218 = vmax.f32 %v848, 0.0
    %v1219 = vmax.f32 %v853, 0.0
    %v1220 = vmax.f32 %v856, 0.0
    %v1221 = vmax.f32 %v861, 0.0
    %v1222 = vmax.f32 %v864, 0.0
    %v1223 = vmax.f32 %v869, 0.0
    %v1224 = vmax.f32 %v872, 0.0
    %v1225 = vmax.f32 %v877, 0.0
    %v1226 = vmax.f32 %v880, 0.0
    %v1227 = vmax.f32 %v885, 0.0
    %v1228 = vmax.f32 %v888, 0.0
    %v1229 = vmax.f32 %v893, 0.0
    %v1230 = vmax.f32 %v896, 0.0
    %v1231 = vmax.f32 %v901, 0.0
    %v1232 = vmax.f32 %v904, 0.0
    %v1233 = vmax.f32 %v909, 0.0
    %v1234 = vmax.f32 %v912, 0.0
    %v1235 = vmax.f32 %v917, 0.0
    %v1236 = vmax.f32 %v920, 0.0
    %v1237 = vmax.f32 %v925, 0.0
    %v1238 = vmax.f32 %v928, 0.0
    %v1239 = vmax.f32 %v933, 0.0
    %v1240 = vmax.f32 %v936, 0.0
    %v1241 = vmax.f32 %v941, 0.0
    %v1242 = vmax.f32 %v944, 0.0
    %v1243 = vmax.f32 %v949, 0.0
    %v1244 = vmax.f32 %v952, 0.0
    %v1245 = vmax.f32 %v957, 0.0
    %v1246 = vmax.f32 %v960, 0.0
    %v1247 = vmax.f32 %v965, 0.0
    %v1248 = vmax.f32 %v968, 0.0
    %v1249 = vmax.f32 %v973, 0.0
    %v1250 = vmax.f32 %v976, 0.0
    %v1251 = vmax.f32 %v981, 0.0
    %v1252 = vmax.f32 %v984, 0.0
    %v1253 = vmax.f32 %v989, 0.0
    %v1254 = vmax.f32 %v992, 0.0
    %v1255 = vmax.f32 %v997, 0.0
    %v1256 = vmax.f32 %v1000, 0.0
    %v1257 = vmax.f32 %v1005, 0.0
    %v1258 = vmax.f32 %v1008, 0.0
    %v1259 = vmax.f32 %v1013, 0.0
    %v1260 = vmax.f32 %v1016, 0.0
    %v1261 = vmax.f32 %v1021, 0.0
    %v1262 = vmax.f32 %v1024, 0.0
    %v1263 = vmax.f32 %v1029, 0.0
    %v1264 = vmax.f32 %v1032, 0.0
    %v1265 = vmax.f32 %v1037, 0.0
    %v1266 = vmax.f32 %v1040, 0.0
    %v1267 = vmax.f32 %v1045, 0.0
    %v1268 = vmax.f32 %v1048, 0.0
    %v1269 = vmax.f32 %v1053, 0.0
    %v1270 = vmax.f32 %v1056, 0.0
    %v1271 = vmax.f32 %v1061, 0.0
    %v1272 = vmax.f32 %v1064, 0.0
    %v1273 = vmax.f32 %v1069, 0.0
    %v1274 = vmax.f32 %v1072, 0.0
    %v1275 = vmax.f32 %v1077, 0.0
    %v1276 = vmax.f32 %v1080, 0.0
    %v1277 = vmax.f32 %v1085, 0.0
    %v1278 = vmax.f32 %v1088, 0.0
    %v1279 = vmax.f32 %v1093, 0.0
    %v1280 = vmax.f32 %v1096, 0.0
    %v1281 = vmax.f32 %v1101, 0.0
    %v1282 = vmax.f32 %v1104, 0.0
    %v1283 = vmax.f32 %v1109, 0.0
    %v1284 = vmax.f32 %v1112, 0.0
    %v1285 = vmax.f32 %v1117, 0.0
    %v1286 = vmax.f32 %v1120, 0.0
    %v1287 = vmax.f32 %v1125, 0.0
    %v1288 = vmax.f32 %v1128, 0.0
    %v1289 = vmax.f32 %v1133, 0.0
    %v1290 = vmax.f32 %v1136, 0.0
    %v1291 = vmax.f32 %v1141, 0.0
    %v1292 = vmax.f32 %v1144, 0.0
    %v1293 = vmax.f32 %v1149, 0.0
    %v1294 = vmax.f32 %v1152, 0.0
    %v1295 = vmax.f32 %v1157, 0.0
    %v1296 = vmax.f32 %v1160, 0.0
    %v1297 = vmax.f32 %v1165, 0.0
    %v1298 = vmax.f32 %v1168, 0.0
    %v1299 = vld [vmem:[%s3] sm:$0xff]
    %v1300 = vld [vmem:[%s3 + $0x8] sm:$0xff]
    %v1301 = vld [vmem:[%s3 + $0x10] sm:$0xff]
    %v1302 = vld [vmem:[%s3 + $0x18] sm:$0xff]
    %v1303 = vld [vmem:[%s3 + $0x20] sm:$0xff]
    %v1304 = vld [vmem:[%s3 + $0x28] sm:$0xff]
    %v1305 = vld [vmem:[%s3 + $0x30] sm:$0xff]
    %v1306 = vld [vmem:[%s3 + $0x38] sm:$0xff]
    %v1307 = vld [vmem:[%s3 + $0x40] sm:$0xff]
    %v1308 = vld [vmem:[%s3 + $0x48] sm:$0xff]
    %v1309 = vld [vmem:[%s3 + $0x50] sm:$0xff]
    %v1310 = vld [vmem:[%s3 + $0x58] sm:$0xff]
    %v1311 = vld [vmem:[%s3 + $0x60] sm:$0xff]
    %v1312 = vld [vmem:[%s3 + $0x68] sm:$0xff]
    %v1313 = vld [vmem:[%s3 + $0x70] sm:$0xff]
    %v1314 = vld [vmem:[%s3 + $0x78] sm:$0xff]
    %v1315 = vld [vmem:[%s3 + $0x80] sm:$0xff]
    %v1316 = vld [vmem:[%s3 + $0x88] sm:$0xff]
    %v1317 = vld [vmem:[%s3 + $0x90] sm:$0xff]
    %v1318 = vld [vmem:[%s3 + $0x98] sm:$0xff]
    %v1319 = vld [vmem:[%s3 + $0xa0] sm:$0xff]
    %v1320 = vld [vmem:[%s3 + $0xa8] sm:$0xff]
    %v1321 = vld [vmem:[%s3 + $0xb0] sm:$0xff]
    %v1322 = vld [vmem:[%s3 + $0xb8] sm:$0xff]
    %v1323 = vld [vmem:[%s3 + $0xc0] sm:$0xff]
    %v1324 = vld [vmem:[%s3 + $0xc8] sm:$0xff]
    %v1325 = vld [vmem:[%s3 + $0xd0] sm:$0xff]
    %v1326 = vld [vmem:[%s3 + $0xd8] sm:$0xff]
    %v1327 = vld [vmem:[%s3 + $0xe0] sm:$0xff]
    %v1328 = vld [vmem:[%s3 + $0xe8] sm:$0xff]
    %v1329 = vld [vmem:[%s3 + $0xf0] sm:$0xff]
    %v1330 = vld [vmem:[%s3 + $0xf8] sm:$0xff]
    %v1331 = vld [vmem:[%s3 + $0x100] sm:$0xff]
    %v1332 = vld [vmem:[%s3 + $0x108] sm:$0xff]
    %v1333 = vld [vmem:[%s3 + $0x110] sm:$0xff]
    %v1334 = vld [vmem:[%s3 + $0x118] sm:$0xff]
    %v1335 = vld [vmem:[%s3 + $0x120] sm:$0xff]
    %v1336 = vld [vmem:[%s3 + $0x128] sm:$0xff]
    %v1337 = vld [vmem:[%s3 + $0x130] sm:$0xff]
    %v1338 = vld [vmem:[%s3 + $0x138] sm:$0xff]
    %v1339 = vld [vmem:[%s3 + $0x140] sm:$0xff]
    %v1340 = vld [vmem:[%s3 + $0x148] sm:$0xff]
    %v1341 = vld [vmem:[%s3 + $0x150] sm:$0xff]
    %v1342 = vld [vmem:[%s3 + $0x158] sm:$0xff]
    %v1343 = vld [vmem:[%s3 + $0x160] sm:$0xff]
    %v1344 = vld [vmem:[%s3 + $0x168] sm:$0xff]
    %v1345 = vld [vmem:[%s3 + $0x170] sm:$0xff]
    %v1346 = vld [vmem:[%s3 + $0x178] sm:$0xff]
    %v1347 = vld [vmem:[%s3 + $0x180] sm:$0xff]
    %v1348 = vld [vmem:[%s3 + $0x188] sm:$0xff]
    %v1349 = vld [vmem:[%s3 + $0x190] sm:$0xff]
    %v1350 = vld [vmem:[%s3 + $0x198] sm:$0xff]
    %v1351 = vld [vmem:[%s3 + $0x1a0] sm:$0xff]
    %v1352 = vld [vmem:[%s3 + $0x1a8] sm:$0xff]
    %v1353 = vld [vmem:[%s3 + $0x1b0] sm:$0xff]
    %v1354 = vld [vmem:[%s3 + $0x1b8] sm:$0xff]
    %v1355 = vld [vmem:[%s3 + $0x1c0] sm:$0xff]
    %v1356 = vld [vmem:[%s3 + $0x1c8] sm:$0xff]
    %v1357 = vld [vmem:[%s3 + $0x1d0] sm:$0xff]
    %v1358 = vld [vmem:[%s3 + $0x1d8] sm:$0xff]
    %v1359 = vld [vmem:[%s3 + $0x1e0] sm:$0xff]
    %v1360 = vld [vmem:[%s3 + $0x1e8] sm:$0xff]
    %v1361 = vld [vmem:[%s3 + $0x1f0] sm:$0xff]
    %v1362 = vld [vmem:[%s3 + $0x1f8] sm:$0xff]
    %v1363 = vld [vmem:[%s3 + $0x200] sm:$0xff]
    %v1364 = vld [vmem:[%s3 + $0x208] sm:$0xff]
    %v1365 = vld [vmem:[%s3 + $0x210] sm:$0xff]
    %v1366 = vld [vmem:[%s3 + $0x218] sm:$0xff]
    %v1367 = vld [vmem:[%s3 + $0x220] sm:$0xff]
    %v1368 = vld [vmem:[%s3 + $0x228] sm:$0xff]
    %v1369 = vld [vmem:[%s3 + $0x230] sm:$0xff]
    %v1370 = vld [vmem:[%s3 + $0x238] sm:$0xff]
    %v1371 = vld [vmem:[%s3 + $0x240] sm:$0xff]
    %v1372 = vld [vmem:[%s3 + $0x248] sm:$0xff]
    %v1373 = vld [vmem:[%s3 + $0x250] sm:$0xff]
    %v1374 = vld [vmem:[%s3 + $0x258] sm:$0xff]
    %v1375 = vld [vmem:[%s3 + $0x260] sm:$0xff]
    %v1376 = vld [vmem:[%s3 + $0x268] sm:$0xff]
    %v1377 = vld [vmem:[%s3 + $0x270] sm:$0xff]
    %v1378 = vld [vmem:[%s3 + $0x278] sm:$0xff]
    %v1379 = vld [vmem:[%s3 + $0x280] sm:$0xff]
    %v1380 = vld [vmem:[%s3 + $0x288] sm:$0xff]
    %v1381 = vld [vmem:[%s3 + $0x290] sm:$0xff]
    %v1382 = vld [vmem:[%s3 + $0x298] sm:$0xff]
    %v1383 = vld [vmem:[%s3 + $0x2a0] sm:$0xff]
    %v1384 = vld [vmem:[%s3 + $0x2a8] sm:$0xff]
    %v1385 = vld [vmem:[%s3 + $0x2b0] sm:$0xff]
    %v1386 = vld [vmem:[%s3 + $0x2b8] sm:$0xff]
    %v1387 = vld [vmem:[%s3 + $0x2c0] sm:$0xff]
    %v1388 = vld [vmem:[%s3 + $0x2c8] sm:$0xff]
    %v1389 = vld [vmem:[%s3 + $0x2d0] sm:$0xff]
    %v1390 = vld [vmem:[%s3 + $0x2d8] sm:$0xff]
    %v1391 = vld [vmem:[%s3 + $0x2e0] sm:$0xff]
    %v1392 = vld [vmem:[%s3 + $0x2e8] sm:$0xff]
    %v1393 = vld [vmem:[%s3 + $0x2f0] sm:$0xff]
    %v1394 = vld [vmem:[%s3 + $0x2f8] sm:$0xff]
    %v1395 = vld [vmem:[%s3 + $0x300] sm:$0xff]
    %v1396 = vld [vmem:[%s3 + $0x308] sm:$0xff]
    %v1397 = vld [vmem:[%s3 + $0x310] sm:$0xff]
    %v1398 = vld [vmem:[%s3 + $0x318] sm:$0xff]
    %v1399 = vld [vmem:[%s3 + $0x320] sm:$0xff]
    %v1400 = vld [vmem:[%s3 + $0x328] sm:$0xff]
    %v1401 = vld [vmem:[%s3 + $0x330] sm:$0xff]
    %v1402 = vld [vmem:[%s3 + $0x338] sm:$0xff]
    %v1403 = vld [vmem:[%s3 + $0x340] sm:$0xff]
    %v1404 = vld [vmem:[%s3 + $0x348] sm:$0xff]
    %v1405 = vld [vmem:[%s3 + $0x350] sm:$0xff]
    %v1406 = vld [vmem:[%s3 + $0x358] sm:$0xff]
    %v1407 = vld [vmem:[%s3 + $0x360] sm:$0xff]
    %v1408 = vld [vmem:[%s3 + $0x368] sm:$0xff]
    %v1409 = vld [vmem:[%s3 + $0x370] sm:$0xff]
    %v1410 = vld [vmem:[%s3 + $0x378] sm:$0xff]
    %v1411 = vld [vmem:[%s3 + $0x380] sm:$0xff]
    %v1412 = vld [vmem:[%s3 + $0x388] sm:$0xff]
    %v1413 = vld [vmem:[%s3 + $0x390] sm:$0xff]
    %v1414 = vld [vmem:[%s3 + $0x398] sm:$0xff]
    %v1415 = vld [vmem:[%s3 + $0x3a0] sm:$0xff]
    %v1416 = vld [vmem:[%s3 + $0x3a8] sm:$0xff]
    %v1417 = vld [vmem:[%s3 + $0x3b0] sm:$0xff]
    %v1418 = vld [vmem:[%s3 + $0x3b8] sm:$0xff]
    %v1419 = vld [vmem:[%s3 + $0x3c0] sm:$0xff]
    %v1420 = vld [vmem:[%s3 + $0x3c8] sm:$0xff]
    %v1421 = vld [vmem:[%s3 + $0x3d0] sm:$0xff]
    %v1422 = vld [vmem:[%s3 + $0x3d8] sm:$0xff]
    %v1423 = vld [vmem:[%s3 + $0x3e0] sm:$0xff]
    %v1424 = vld [vmem:[%s3 + $0x3e8] sm:$0xff]
    %v1425 = vld [vmem:[%s3 + $0x3f0] sm:$0xff]
    %v1426 = vld [vmem:[%s3 + $0x3f8] sm:$0xff]
    %v1427 = vpack.c.bf16 %v1172, %v1171
    %v1428 = vpack.c.bf16 %v1174, %v1173
    %v1429 = vpack.c.bf16 %v1176, %v1175
    %v1430 = vpack.c.bf16 %v1178, %v1177
    %v1431 = vpack.c.bf16 %v1180, %v1179
    %v1432 = vpack.c.bf16 %v1182, %v1181
    %v1433 = vpack.c.bf16 %v1184, %v1183
    %v1434 = vpack.c.bf16 %v1186, %v1185
    %v1435 = vpack.c.bf16 %v1188, %v1187
    %v1436 = vpack.c.bf16 %v1190, %v1189
    %v1437 = vpack.c.bf16 %v1192, %v1191
    %v1438 = vpack.c.bf16 %v1194, %v1193
    %v1439 = vpack.c.bf16 %v1196, %v1195
    %v1440 = vpack.c.bf16 %v1198, %v1197
    %v1441 = vpack.c.bf16 %v1200, %v1199
    %v1442 = vpack.c.bf16 %v1202, %v1201
    %v1443 = vpack.c.bf16 %v1204, %v1203
    %v1444 = vpack.c.bf16 %v1206, %v1205
    %v1445 = vpack.c.bf16 %v1208, %v1207
    %v1446 = vpack.c.bf16 %v1210, %v1209
    %v1447 = vpack.c.bf16 %v1212, %v1211
    %v1448 = vpack.c.bf16 %v1214, %v1213
    %v1449 = vpack.c.bf16 %v1216, %v1215
    %v1450 = vpack.c.bf16 %v1218, %v1217
    %v1451 = vpack.c.bf16 %v1220, %v1219
    %v1452 = vpack.c.bf16 %v1222, %v1221
    %v1453 = vpack.c.bf16 %v1224, %v1223
    %v1454 = vpack.c.bf16 %v1226, %v1225
    %v1455 = vpack.c.bf16 %v1228, %v1227
    %v1456 = vpack.c.bf16 %v1230, %v1229
    %v1457 = vpack.c.bf16 %v1232, %v1231
    %v1458 = vpack.c.bf16 %v1234, %v1233
    %v1459 = vpack.c.bf16 %v1236, %v1235
    %v1460 = vpack.c.bf16 %v1238, %v1237
    %v1461 = vpack.c.bf16 %v1240, %v1239
    %v1462 = vpack.c.bf16 %v1242, %v1241
    %v1463 = vpack.c.bf16 %v1244, %v1243
    %v1464 = vpack.c.bf16 %v1246, %v1245
    %v1465 = vpack.c.bf16 %v1248, %v1247
    %v1466 = vpack.c.bf16 %v1250, %v1249
    %v1467 = vpack.c.bf16 %v1252, %v1251
    %v1468 = vpack.c.bf16 %v1254, %v1253
    %v1469 = vpack.c.bf16 %v1256, %v1255
    %v1470 = vpack.c.bf16 %v1258, %v1257
    %v1471 = vpack.c.bf16 %v1260, %v1259
    %v1472 = vpack.c.bf16 %v1262, %v1261
    %v1473 = vpack.c.bf16 %v1264, %v1263
    %v1474 = vpack.c.bf16 %v1266, %v1265
    %v1475 = vpack.c.bf16 %v1268, %v1267
    %v1476 = vpack.c.bf16 %v1270, %v1269
    %v1477 = vpack.c.bf16 %v1272, %v1271
    %v1478 = vpack.c.bf16 %v1274, %v1273
    %v1479 = vpack.c.bf16 %v1276, %v1275
    %v1480 = vpack.c.bf16 %v1278, %v1277
    %v1481 = vpack.c.bf16 %v1280, %v1279
    %v1482 = vpack.c.bf16 %v1282, %v1281
    %v1483 = vpack.c.bf16 %v1284, %v1283
    %v1484 = vpack.c.bf16 %v1286, %v1285
    %v1485 = vpack.c.bf16 %v1288, %v1287
    %v1486 = vpack.c.bf16 %v1290, %v1289
    %v1487 = vpack.c.bf16 %v1292, %v1291
    %v1488 = vpack.c.bf16 %v1294, %v1293
    %v1489 = vpack.c.bf16 %v1296, %v1295
    %v1490 = vpack.c.bf16 %v1298, %v1297
    %v1619 = vunpack.c.l.b16 %v1299
    %v1620 = vunpack.c.h.b16 %v1299
    %v1621 = vunpack.c.l.b16 %v1300
    %v1622 = vunpack.c.h.b16 %v1300
    %v1623 = vunpack.c.l.b16 %v1301
    %v1624 = vunpack.c.h.b16 %v1301
    %v1625 = vunpack.c.l.b16 %v1302
    %v1626 = vunpack.c.h.b16 %v1302
    %v1627 = vunpack.c.l.b16 %v1303
    %v1628 = vunpack.c.h.b16 %v1303
    %v1629 = vunpack.c.l.b16 %v1304
    %v1630 = vunpack.c.h.b16 %v1304
    %v1631 = vunpack.c.l.b16 %v1305
    %v1632 = vunpack.c.h.b16 %v1305
    %v1633 = vunpack.c.l.b16 %v1306
    %v1634 = vunpack.c.h.b16 %v1306
    %v1635 = vunpack.c.l.b16 %v1307
    %v1636 = vunpack.c.h.b16 %v1307
    %v1637 = vunpack.c.l.b16 %v1308
    %v1638 = vunpack.c.h.b16 %v1308
    %v1639 = vunpack.c.l.b16 %v1309
    %v1640 = vunpack.c.h.b16 %v1309
    %v1641 = vunpack.c.l.b16 %v1310
    %v1642 = vunpack.c.h.b16 %v1310
    %v1643 = vunpack.c.l.b16 %v1311
    %v1644 = vunpack.c.h.b16 %v1311
    %v1645 = vunpack.c.l.b16 %v1312
    %v1646 = vunpack.c.h.b16 %v1312
    %v1647 = vunpack.c.l.b16 %v1313
    %v1648 = vunpack.c.h.b16 %v1313
    %v1649 = vunpack.c.l.b16 %v1314
    %v1650 = vunpack.c.h.b16 %v1314
    %v1651 = vunpack.c.l.b16 %v1315
    %v1652 = vunpack.c.h.b16 %v1315
    %v1653 = vunpack.c.l.b16 %v1316
    %v1654 = vunpack.c.h.b16 %v1316
    %v1655 = vunpack.c.l.b16 %v1317
    %v1656 = vunpack.c.h.b16 %v1317
    %v1657 = vunpack.c.l.b16 %v1318
    %v1658 = vunpack.c.h.b16 %v1318
    %v1659 = vunpack.c.l.b16 %v1319
    %v1660 = vunpack.c.h.b16 %v1319
    %v1661 = vunpack.c.l.b16 %v1320
    %v1662 = vunpack.c.h.b16 %v1320
    %v1663 = vunpack.c.l.b16 %v1321
    %v1664 = vunpack.c.h.b16 %v1321
    %v1665 = vunpack.c.l.b16 %v1322
    %v1666 = vunpack.c.h.b16 %v1322
    %v1667 = vunpack.c.l.b16 %v1323
    %v1668 = vunpack.c.h.b16 %v1323
    %v1669 = vunpack.c.l.b16 %v1324
    %v1670 = vunpack.c.h.b16 %v1324
    %v1671 = vunpack.c.l.b16 %v1325
    %v1672 = vunpack.c.h.b16 %v1325
    %v1673 = vunpack.c.l.b16 %v1326
    %v1674 = vunpack.c.h.b16 %v1326
    %v1675 = vunpack.c.l.b16 %v1327
    %v1676 = vunpack.c.h.b16 %v1327
    %v1677 = vunpack.c.l.b16 %v1328
    %v1678 = vunpack.c.h.b16 %v1328
    %v1679 = vunpack.c.l.b16 %v1329
    %v1680 = vunpack.c.h.b16 %v1329
    %v1681 = vunpack.c.l.b16 %v1330
    %v1682 = vunpack.c.h.b16 %v1330
    %v1683 = vunpack.c.l.b16 %v1331
    %v1684 = vunpack.c.h.b16 %v1331
    %v1685 = vunpack.c.l.b16 %v1332
    %v1686 = vunpack.c.h.b16 %v1332
    %v1687 = vunpack.c.l.b16 %v1333
    %v1688 = vunpack.c.h.b16 %v1333
    %v1689 = vunpack.c.l.b16 %v1334
    %v1690 = vunpack.c.h.b16 %v1334
    %v1691 = vunpack.c.l.b16 %v1335
    %v1692 = vunpack.c.h.b16 %v1335
    %v1693 = vunpack.c.l.b16 %v1336
    %v1694 = vunpack.c.h.b16 %v1336
    %v1695 = vunpack.c.l.b16 %v1337
    %v1696 = vunpack.c.h.b16 %v1337
    %v1697 = vunpack.c.l.b16 %v1338
    %v1698 = vunpack.c.h.b16 %v1338
    %v1699 = vunpack.c.l.b16 %v1339
    %v1700 = vunpack.c.h.b16 %v1339
    %v1701 = vunpack.c.l.b16 %v1340
    %v1702 = vunpack.c.h.b16 %v1340
    %v1703 = vunpack.c.l.b16 %v1341
    %v1704 = vunpack.c.h.b16 %v1341
    %v1705 = vunpack.c.l.b16 %v1342
    %v1706 = vunpack.c.h.b16 %v1342
    %v1707 = vunpack.c.l.b16 %v1343
    %v1708 = vunpack.c.h.b16 %v1343
    %v1709 = vunpack.c.l.b16 %v1344
    %v1710 = vunpack.c.h.b16 %v1344
    %v1711 = vunpack.c.l.b16 %v1345
    %v1712 = vunpack.c.h.b16 %v1345
    %v1713 = vunpack.c.l.b16 %v1346
    %v1714 = vunpack.c.h.b16 %v1346
    %v1715 = vunpack.c.l.b16 %v1347
    %v1716 = vunpack.c.h.b16 %v1347
    %v1717 = vunpack.c.l.b16 %v1348
    %v1718 = vunpack.c.h.b16 %v1348
    %v1719 = vunpack.c.l.b16 %v1349
    %v1720 = vunpack.c.h.b16 %v1349
    %v1721 = vunpack.c.l.b16 %v1350
    %v1722 = vunpack.c.h.b16 %v1350
    %v1723 = vunpack.c.l.b16 %v1351
    %v1724 = vunpack.c.h.b16 %v1351
    %v1725 = vunpack.c.l.b16 %v1352
    %v1726 = vunpack.c.h.b16 %v1352
    %v1727 = vunpack.c.l.b16 %v1353
    %v1728 = vunpack.c.h.b16 %v1353
    %v1729 = vunpack.c.l.b16 %v1354
    %v1730 = vunpack.c.h.b16 %v1354
    %v1731 = vunpack.c.l.b16 %v1355
    %v1732 = vunpack.c.h.b16 %v1355
    %v1733 = vunpack.c.l.b16 %v1356
    %v1734 = vunpack.c.h.b16 %v1356
    %v1735 = vunpack.c.l.b16 %v1357
    %v1736 = vunpack.c.h.b16 %v1357
    %v1737 = vunpack.c.l.b16 %v1358
    %v1738 = vunpack.c.h.b16 %v1358
    %v1739 = vunpack.c.l.b16 %v1359
    %v1740 = vunpack.c.h.b16 %v1359
    %v1741 = vunpack.c.l.b16 %v1360
    %v1742 = vunpack.c.h.b16 %v1360
    %v1743 = vunpack.c.l.b16 %v1361
    %v1744 = vunpack.c.h.b16 %v1361
    %v1745 = vunpack.c.l.b16 %v1362
    %v1746 = vunpack.c.h.b16 %v1362
    %v1747 = vunpack.c.l.b16 %v1363
    %v1748 = vunpack.c.h.b16 %v1363
    %v1749 = vunpack.c.l.b16 %v1364
    %v1750 = vunpack.c.h.b16 %v1364
    %v1751 = vunpack.c.l.b16 %v1365
    %v1752 = vunpack.c.h.b16 %v1365
    %v1753 = vunpack.c.l.b16 %v1366
    %v1754 = vunpack.c.h.b16 %v1366
    %v1755 = vunpack.c.l.b16 %v1367
    %v1756 = vunpack.c.h.b16 %v1367
    %v1757 = vunpack.c.l.b16 %v1368
    %v1758 = vunpack.c.h.b16 %v1368
    %v1759 = vunpack.c.l.b16 %v1369
    %v1760 = vunpack.c.h.b16 %v1369
    %v1761 = vunpack.c.l.b16 %v1370
    %v1762 = vunpack.c.h.b16 %v1370
    %v1763 = vunpack.c.l.b16 %v1371
    %v1764 = vunpack.c.h.b16 %v1371
    %v1765 = vunpack.c.l.b16 %v1372
    %v1766 = vunpack.c.h.b16 %v1372
    %v1767 = vunpack.c.l.b16 %v1373
    %v1768 = vunpack.c.h.b16 %v1373
    %v1769 = vunpack.c.l.b16 %v1374
    %v1770 = vunpack.c.h.b16 %v1374
    %v1771 = vunpack.c.l.b16 %v1375
    %v1772 = vunpack.c.h.b16 %v1375
    %v1773 = vunpack.c.l.b16 %v1376
    %v1774 = vunpack.c.h.b16 %v1376
    %v1775 = vunpack.c.l.b16 %v1377
    %v1776 = vunpack.c.h.b16 %v1377
    %v1777 = vunpack.c.l.b16 %v1378
    %v1778 = vunpack.c.h.b16 %v1378
    %v1779 = vunpack.c.l.b16 %v1379
    %v1780 = vunpack.c.h.b16 %v1379
    %v1781 = vunpack.c.l.b16 %v1380
    %v1782 = vunpack.c.h.b16 %v1380
    %v1783 = vunpack.c.l.b16 %v1381
    %v1784 = vunpack.c.h.b16 %v1381
    %v1785 = vunpack.c.l.b16 %v1382
    %v1786 = vunpack.c.h.b16 %v1382
    %v1787 = vunpack.c.l.b16 %v1383
    %v1788 = vunpack.c.h.b16 %v1383
    %v1789 = vunpack.c.l.b16 %v1384
    %v1790 = vunpack.c.h.b16 %v1384
    %v1791 = vunpack.c.l.b16 %v1385
    %v1792 = vunpack.c.h.b16 %v1385
    %v1793 = vunpack.c.l.b16 %v1386
    %v1794 = vunpack.c.h.b16 %v1386
    %v1795 = vunpack.c.l.b16 %v1387
    %v1796 = vunpack.c.h.b16 %v1387
    %v1797 = vunpack.c.l.b16 %v1388
    %v1798 = vunpack.c.h.b16 %v1388
    %v1799 = vunpack.c.l.b16 %v1389
    %v1800 = vunpack.c.h.b16 %v1389
    %v1801 = vunpack.c.l.b16 %v1390
    %v1802 = vunpack.c.h.b16 %v1390
    %v1803 = vunpack.c.l.b16 %v1391
    %v1804 = vunpack.c.h.b16 %v1391
    %v1805 = vunpack.c.l.b16 %v1392
    %v1806 = vunpack.c.h.b16 %v1392
    %v1807 = vunpack.c.l.b16 %v1393
    %v1808 = vunpack.c.h.b16 %v1393
    %v1809 = vunpack.c.l.b16 %v1394
    %v1810 = vunpack.c.h.b16 %v1394
    %v1811 = vunpack.c.l.b16 %v1395
    %v1812 = vunpack.c.h.b16 %v1395
    %v1813 = vunpack.c.l.b16 %v1396
    %v1814 = vunpack.c.h.b16 %v1396
    %v1815 = vunpack.c.l.b16 %v1397
    %v1816 = vunpack.c.h.b16 %v1397
    %v1817 = vunpack.c.l.b16 %v1398
    %v1818 = vunpack.c.h.b16 %v1398
    %v1819 = vunpack.c.l.b16 %v1399
    %v1820 = vunpack.c.h.b16 %v1399
    %v1821 = vunpack.c.l.b16 %v1400
    %v1822 = vunpack.c.h.b16 %v1400
    %v1823 = vunpack.c.l.b16 %v1401
    %v1824 = vunpack.c.h.b16 %v1401
    %v1825 = vunpack.c.l.b16 %v1402
    %v1826 = vunpack.c.h.b16 %v1402
    %v1827 = vunpack.c.l.b16 %v1403
    %v1828 = vunpack.c.h.b16 %v1403
    %v1829 = vunpack.c.l.b16 %v1404
    %v1830 = vunpack.c.h.b16 %v1404
    %v1831 = vunpack.c.l.b16 %v1405
    %v1832 = vunpack.c.h.b16 %v1405
    %v1833 = vunpack.c.l.b16 %v1406
    %v1834 = vunpack.c.h.b16 %v1406
    %v1835 = vunpack.c.l.b16 %v1407
    %v1836 = vunpack.c.h.b16 %v1407
    %v1837 = vunpack.c.l.b16 %v1408
    %v1838 = vunpack.c.h.b16 %v1408
    %v1839 = vunpack.c.l.b16 %v1409
    %v1840 = vunpack.c.h.b16 %v1409
    %v1841 = vunpack.c.l.b16 %v1410
    %v1842 = vunpack.c.h.b16 %v1410
    %v1843 = vunpack.c.l.b16 %v1411
    %v1844 = vunpack.c.h.b16 %v1411
    %v1845 = vunpack.c.l.b16 %v1412
    %v1846 = vunpack.c.h.b16 %v1412
    %v1847 = vunpack.c.l.b16 %v1413
    %v1848 = vunpack.c.h.b16 %v1413
    %v1849 = vunpack.c.l.b16 %v1414
    %v1850 = vunpack.c.h.b16 %v1414
    %v1851 = vunpack.c.l.b16 %v1415
    %v1852 = vunpack.c.h.b16 %v1415
    %v1853 = vunpack.c.l.b16 %v1416
    %v1854 = vunpack.c.h.b16 %v1416
    %v1855 = vunpack.c.l.b16 %v1417
    %v1856 = vunpack.c.h.b16 %v1417
    %v1857 = vunpack.c.l.b16 %v1418
    %v1858 = vunpack.c.h.b16 %v1418
    %v1859 = vunpack.c.l.b16 %v1419
    %v1860 = vunpack.c.h.b16 %v1419
    %v1861 = vunpack.c.l.b16 %v1420
    %v1862 = vunpack.c.h.b16 %v1420
    %v1863 = vunpack.c.l.b16 %v1421
    %v1864 = vunpack.c.h.b16 %v1421
    %v1865 = vunpack.c.l.b16 %v1422
    %v1866 = vunpack.c.h.b16 %v1422
    %v1867 = vunpack.c.l.b16 %v1423
    %v1868 = vunpack.c.h.b16 %v1423
    %v1869 = vunpack.c.l.b16 %v1424
    %v1870 = vunpack.c.h.b16 %v1424
    %v1871 = vunpack.c.l.b16 %v1425
    %v1872 = vunpack.c.h.b16 %v1425
    %v1873 = vunpack.c.l.b16 %v1426
    %v1874 = vunpack.c.h.b16 %v1426
    %v1875 = vpack.c.b16 %v1627, %v1619
    %v1876 = vpack.c.b16 %v1628, %v1620
    %v1877 = vpack.c.b16 %v1629, %v1621
    %v1878 = vpack.c.b16 %v1630, %v1622
    %v1879 = vpack.c.b16 %v1631, %v1623
    %v1880 = vpack.c.b16 %v1632, %v1624
    %v1881 = vpack.c.b16 %v1633, %v1625
    %v1882 = vpack.c.b16 %v1634, %v1626
    %v1883 = vpack.c.b16 %v1643, %v1635
    %v1884 = vpack.c.b16 %v1644, %v1636
    %v1885 = vpack.c.b16 %v1645, %v1637
    %v1886 = vpack.c.b16 %v1646, %v1638
    %v1887 = vpack.c.b16 %v1647, %v1639
    %v1888 = vpack.c.b16 %v1648, %v1640
    %v1889 = vpack.c.b16 %v1649, %v1641
    %v1890 = vpack.c.b16 %v1650, %v1642
    %v1891 = vpack.c.b16 %v1659, %v1651
    %v1892 = vpack.c.b16 %v1660, %v1652
    %v1893 = vpack.c.b16 %v1661, %v1653
    %v1894 = vpack.c.b16 %v1662, %v1654
    %v1895 = vpack.c.b16 %v1663, %v1655
    %v1896 = vpack.c.b16 %v1664, %v1656
    %v1897 = vpack.c.b16 %v1665, %v1657
    %v1898 = vpack.c.b16 %v1666, %v1658
    %v1899 = vpack.c.b16 %v1675, %v1667
    %v1900 = vpack.c.b16 %v1676, %v1668
    %v1901 = vpack.c.b16 %v1677, %v1669
    %v1902 = vpack.c.b16 %v1678, %v1670
    %v1903 = vpack.c.b16 %v1679, %v1671
    %v1904 = vpack.c.b16 %v1680, %v1672
    %v1905 = vpack.c.b16 %v1681, %v1673
    %v1906 = vpack.c.b16 %v1682, %v1674
    %v1907 = vpack.c.b16 %v1691, %v1683
    %v1908 = vpack.c.b16 %v1692, %v1684
    %v1909 = vpack.c.b16 %v1693, %v1685
    %v1910 = vpack.c.b16 %v1694, %v1686
    %v1911 = vpack.c.b16 %v1695, %v1687
    %v1912 = vpack.c.b16 %v1696, %v1688
    %v1913 = vpack.c.b16 %v1697, %v1689
    %v1914 = vpack.c.b16 %v1698, %v1690
    %v1915 = vpack.c.b16 %v1707, %v1699
    %v1916 = vpack.c.b16 %v1708, %v1700
    %v1917 = vpack.c.b16 %v1709, %v1701
    %v1918 = vpack.c.b16 %v1710, %v1702
    %v1919 = vpack.c.b16 %v1711, %v1703
    %v1920 = vpack.c.b16 %v1712, %v1704
    %v1921 = vpack.c.b16 %v1713, %v1705
    %v1922 = vpack.c.b16 %v1714, %v1706
    %v1923 = vpack.c.b16 %v1723, %v1715
    %v1924 = vpack.c.b16 %v1724, %v1716
    %v1925 = vpack.c.b16 %v1725, %v1717
    %v1926 = vpack.c.b16 %v1726, %v1718
    %v1927 = vpack.c.b16 %v1727, %v1719
    %v1928 = vpack.c.b16 %v1728, %v1720
    %v1929 = vpack.c.b16 %v1729, %v1721
    %v1930 = vpack.c.b16 %v1730, %v1722
    %v1931 = vpack.c.b16 %v1739, %v1731
    %v1932 = vpack.c.b16 %v1740, %v1732
    %v1933 = vpack.c.b16 %v1741, %v1733
    %v1934 = vpack.c.b16 %v1742, %v1734
    %v1935 = vpack.c.b16 %v1743, %v1735
    %v1936 = vpack.c.b16 %v1744, %v1736
    %v1937 = vpack.c.b16 %v1745, %v1737
    %v1938 = vpack.c.b16 %v1746, %v1738
    %v1939 = vpack.c.b16 %v1755, %v1747
    %v1940 = vpack.c.b16 %v1756, %v1748
    %v1941 = vpack.c.b16 %v1757, %v1749
    %v1942 = vpack.c.b16 %v1758, %v1750
    %v1943 = vpack.c.b16 %v1759, %v1751
    %v1944 = vpack.c.b16 %v1760, %v1752
    %v1945 = vpack.c.b16 %v1761, %v1753
    %v1946 = vpack.c.b16 %v1762, %v1754
    %v1947 = vpack.c.b16 %v1771, %v1763
    %v1948 = vpack.c.b16 %v1772, %v1764
    %v1949 = vpack.c.b16 %v1773, %v1765
    %v1950 = vpack.c.b16 %v1774, %v1766
    %v1951 = vpack.c.b16 %v1775, %v1767
    %v1952 = vpack.c.b16 %v1776, %v1768
    %v1953 = vpack.c.b16 %v1777, %v1769
    %v1954 = vpack.c.b16 %v1778, %v1770
    %v1955 = vpack.c.b16 %v1787, %v1779
    %v1956 = vpack.c.b16 %v1788, %v1780
    %v1957 = vpack.c.b16 %v1789, %v1781
    %v1958 = vpack.c.b16 %v1790, %v1782
    %v1959 = vpack.c.b16 %v1791, %v1783
    %v1960 = vpack.c.b16 %v1792, %v1784
    %v1961 = vpack.c.b16 %v1793, %v1785
    %v1962 = vpack.c.b16 %v1794, %v1786
    %v1963 = vpack.c.b16 %v1803, %v1795
    %v1964 = vpack.c.b16 %v1804, %v1796
    %v1965 = vpack.c.b16 %v1805, %v1797
    %v1966 = vpack.c.b16 %v1806, %v1798
    %v1967 = vpack.c.b16 %v1807, %v1799
    %v1968 = vpack.c.b16 %v1808, %v1800
    %v1969 = vpack.c.b16 %v1809, %v1801
    %v1970 = vpack.c.b16 %v1810, %v1802
    %v1971 = vpack.c.b16 %v1819, %v1811
    %v1972 = vpack.c.b16 %v1820, %v1812
    %v1973 = vpack.c.b16 %v1821, %v1813
    %v1974 = vpack.c.b16 %v1822, %v1814
    %v1975 = vpack.c.b16 %v1823, %v1815
    %v1976 = vpack.c.b16 %v1824, %v1816
    %v1977 = vpack.c.b16 %v1825, %v1817
    %v1978 = vpack.c.b16 %v1826, %v1818
    %v1979 = vpack.c.b16 %v1835, %v1827
    %v1980 = vpack.c.b16 %v1836, %v1828
    %v1981 = vpack.c.b16 %v1837, %v1829
    %v1982 = vpack.c.b16 %v1838, %v1830
    %v1983 = vpack.c.b16 %v1839, %v1831
    %v1984 = vpack.c.b16 %v1840, %v1832
    %v1985 = vpack.c.b16 %v1841, %v1833
    %v1986 = vpack.c.b16 %v1842, %v1834
    %v1987 = vpack.c.b16 %v1851, %v1843
    %v1988 = vpack.c.b16 %v1852, %v1844
    %v1989 = vpack.c.b16 %v1853, %v1845
    %v1990 = vpack.c.b16 %v1854, %v1846
    %v1991 = vpack.c.b16 %v1855, %v1847
    %v1992 = vpack.c.b16 %v1856, %v1848
    %v1993 = vpack.c.b16 %v1857, %v1849
    %v1994 = vpack.c.b16 %v1858, %v1850
    %v1995 = vpack.c.b16 %v1867, %v1859
    %v1996 = vpack.c.b16 %v1868, %v1860
    %v1997 = vpack.c.b16 %v1869, %v1861
    %v1998 = vpack.c.b16 %v1870, %v1862
    %v1999 = vpack.c.b16 %v1871, %v1863
    %v2000 = vpack.c.b16 %v1872, %v1864
    %v2001 = vpack.c.b16 %v1873, %v1865
    %v2002 = vpack.c.b16 %v1874, %v1866
    %2131 = vmatprep.subr.bf16.mxu0 0
    %2132 = vmatpush1.bf16.msra.mxu0 %v1434
    %2133 = vmatprep.subr.bf16.mxu0 0
    %2134 = vmatpush1.bf16.msra.mxu0 %v1433
    %2135 = vmatprep.subr.bf16.mxu0 0
    %2136 = vmatpush1.bf16.msra.mxu0 %v1432
    %2137 = vmatprep.subr.bf16.mxu0 0
    %2138 = vmatpush1.bf16.msra.mxu0 %v1431
    %2139 = vmatprep.subr.bf16.mxu0 0
    %2140 = vmatpush1.bf16.msra.mxu0 %v1430
    %2141 = vmatprep.subr.bf16.mxu0 0
    %2142 = vmatpush1.bf16.msra.mxu0 %v1429
    %2143 = vmatprep.subr.bf16.mxu0 0
    %2144 = vmatpush1.bf16.msra.mxu0 %v1428
    %2145 = vmatprep.subr.bf16.mxu0 0
    %2146 = vmatpush1.bf16.msra.mxu0 %v1427
    %2147 = vmatprep.subr.bf16.mxu0 0
    %2148 = vmatpush2.bf16.msra.mxu0 %v1442
    %2149 = vmatprep.subr.bf16.mxu0 0
    %2150 = vmatpush2.bf16.msra.mxu0 %v1441
    %2151 = vmatprep.subr.bf16.mxu0 0
    %2152 = vmatpush2.bf16.msra.mxu0 %v1440
    %2153 = vmatprep.subr.bf16.mxu0 0
    %2154 = vmatpush2.bf16.msra.mxu0 %v1439
    %2155 = vmatprep.subr.bf16.mxu0 0
    %2156 = vmatpush2.bf16.msra.mxu0 %v1438
    %2157 = vmatprep.subr.bf16.mxu0 0
    %2158 = vmatpush2.bf16.msra.mxu0 %v1437
    %2159 = vmatprep.subr.bf16.mxu0 0
    %2160 = vmatpush2.bf16.msra.mxu0 %v1436
    %2161 = vmatprep.subr.bf16.mxu0 0
    %2162 = vmatpush2.bf16.msra.mxu0 %v1435
    %2163 = vmatprep.mubr.bf16.mxu0 %v1876
    %2164 = vmatmul.mubr.bf16.gmra.mxu0 %v1875
    %v2165 = vpop.f32.mrf.mxu0
    %v2166 = vadd.f32 0.0, %v2165
    %v2167 = vpop.f32.mrf.mxu0
    %v2168 = vpop.f32.mrf.mxu0
    %v2169 = vadd.f32 0.0, %v2168
    %v2170 = vpop.f32.mrf.mxu0
    %2171 = vmatprep.mubr.bf16.mxu0 %v1884
    %2172 = vmatmul.mubr.bf16.gmra.mxu0 %v1883
    %v2173 = vpop.f32.mrf.mxu0
    %v2174 = vadd.f32 0.0, %v2173
    %v2175 = vpop.f32.mrf.mxu0
    %v2176 = vpop.f32.mrf.mxu0
    %v2177 = vadd.f32 0.0, %v2176
    %v2178 = vpop.f32.mrf.mxu0
    %2179 = vmatprep.mubr.bf16.mxu0 %v1892
    %2180 = vmatmul.mubr.bf16.gmra.mxu0 %v1891
    %v2181 = vpop.f32.mrf.mxu0
    %v2182 = vadd.f32 0.0, %v2181
    %v2183 = vpop.f32.mrf.mxu0
    %v2184 = vpop.f32.mrf.mxu0
    %v2185 = vadd.f32 0.0, %v2184
    %v2186 = vpop.f32.mrf.mxu0
    %2187 = vmatprep.mubr.bf16.mxu0 %v1900
    %2188 = vmatmul.mubr.bf16.gmra.mxu0 %v1899
    %v2189 = vpop.f32.mrf.mxu0
    %v2190 = vadd.f32 0.0, %v2189
    %v2191 = vpop.f32.mrf.mxu0
    %v2192 = vpop.f32.mrf.mxu0
    %v2193 = vadd.f32 0.0, %v2192
    %v2194 = vpop.f32.mrf.mxu0
    %2195 = vmatprep.mubr.bf16.mxu0 %v1908
    %2196 = vmatmul.mubr.bf16.gmra.mxu0 %v1907
    %v2197 = vpop.f32.mrf.mxu0
    %v2198 = vadd.f32 0.0, %v2197
    %v2199 = vpop.f32.mrf.mxu0
    %v2200 = vpop.f32.mrf.mxu0
    %v2201 = vadd.f32 0.0, %v2200
    %v2202 = vpop.f32.mrf.mxu0
    %2203 = vmatprep.mubr.bf16.mxu0 %v1916
    %2204 = vmatmul.mubr.bf16.gmra.mxu0 %v1915
    %v2205 = vpop.f32.mrf.mxu0
    %v2206 = vadd.f32 0.0, %v2205
    %v2207 = vpop.f32.mrf.mxu0
    %v2208 = vpop.f32.mrf.mxu0
    %v2209 = vadd.f32 0.0, %v2208
    %v2210 = vpop.f32.mrf.mxu0
    %2211 = vmatprep.mubr.bf16.mxu0 %v1924
    %2212 = vmatmul.mubr.bf16.gmra.mxu0 %v1923
    %v2213 = vpop.f32.mrf.mxu0
    %v2214 = vadd.f32 0.0, %v2213
    %v2215 = vpop.f32.mrf.mxu0
    %v2216 = vpop.f32.mrf.mxu0
    %v2217 = vadd.f32 0.0, %v2216
    %v2218 = vpop.f32.mrf.mxu0
    %2219 = vmatprep.mubr.bf16.mxu0 %v1932
    %2220 = vmatmul.mubr.bf16.gmra.mxu0 %v1931
    %v2221 = vpop.f32.mrf.mxu0
    %v2222 = vadd.f32 0.0, %v2221
    %v2223 = vpop.f32.mrf.mxu0
    %v2224 = vpop.f32.mrf.mxu0
    %v2225 = vadd.f32 0.0, %v2224
    %v2226 = vpop.f32.mrf.mxu0
    %2227 = vmatprep.mubr.bf16.mxu0 %v1940
    %2228 = vmatmul.mubr.bf16.gmra.mxu0 %v1939
    %v2229 = vpop.f32.mrf.mxu0
    %v2230 = vadd.f32 0.0, %v2229
    %v2231 = vpop.f32.mrf.mxu0
    %v2232 = vpop.f32.mrf.mxu0
    %v2233 = vadd.f32 0.0, %v2232
    %v2234 = vpop.f32.mrf.mxu0
    %2235 = vmatprep.mubr.bf16.mxu0 %v1948
    %2236 = vmatmul.mubr.bf16.gmra.mxu0 %v1947
    %v2237 = vpop.f32.mrf.mxu0
    %v2238 = vadd.f32 0.0, %v2237
    %v2239 = vpop.f32.mrf.mxu0
    %v2240 = vpop.f32.mrf.mxu0
    %v2241 = vadd.f32 0.0, %v2240
    %v2242 = vpop.f32.mrf.mxu0
    %2243 = vmatprep.mubr.bf16.mxu0 %v1956
    %2244 = vmatmul.mubr.bf16.gmra.mxu0 %v1955
    %v2245 = vpop.f32.mrf.mxu0
    %v2246 = vadd.f32 0.0, %v2245
    %v2247 = vpop.f32.mrf.mxu0
    %v2248 = vpop.f32.mrf.mxu0
    %v2249 = vadd.f32 0.0, %v2248
    %v2250 = vpop.f32.mrf.mxu0
    %2251 = vmatprep.mubr.bf16.mxu0 %v1964
    %2252 = vmatmul.mubr.bf16.gmra.mxu0 %v1963
    %v2253 = vpop.f32.mrf.mxu0
    %v2254 = vadd.f32 0.0, %v2253
    %v2255 = vpop.f32.mrf.mxu0
    %v2256 = vpop.f32.mrf.mxu0
    %v2257 = vadd.f32 0.0, %v2256
    %v2258 = vpop.f32.mrf.mxu0
    %2259 = vmatprep.mubr.bf16.mxu0 %v1972
    %2260 = vmatmul.mubr.bf16.gmra.mxu0 %v1971
    %v2261 = vpop.f32.mrf.mxu0
    %v2262 = vadd.f32 0.0, %v2261
    %v2263 = vpop.f32.mrf.mxu0
    %v2264 = vpop.f32.mrf.mxu0
    %v2265 = vadd.f32 0.0, %v2264
    %v2266 = vpop.f32.mrf.mxu0
    %2267 = vmatprep.mubr.bf16.mxu0 %v1980
    %2268 = vmatmul.mubr.bf16.gmra.mxu0 %v1979
    %v2269 = vpop.f32.mrf.mxu0
    %v2270 = vadd.f32 0.0, %v2269
    %v2271 = vpop.f32.mrf.mxu0
    %v2272 = vpop.f32.mrf.mxu0
    %v2273 = vadd.f32 0.0, %v2272
    %v2274 = vpop.f32.mrf.mxu0
    %2275 = vmatprep.mubr.bf16.mxu0 %v1988
    %2276 = vmatmul.mubr.bf16.gmra.mxu0 %v1987
    %v2277 = vpop.f32.mrf.mxu0
    %v2278 = vadd.f32 0.0, %v2277
    %v2279 = vpop.f32.mrf.mxu0
    %v2280 = vpop.f32.mrf.mxu0
    %v2281 = vadd.f32 0.0, %v2280
    %v2282 = vpop.f32.mrf.mxu0
    %2283 = vmatprep.mubr.bf16.mxu0 %v1996
    %2284 = vmatmul.mubr.bf16.gmra.mxu0 %v1995
    %v2285 = vpop.f32.mrf.mxu0
    %v2286 = vadd.f32 0.0, %v2285
    %v2287 = vpop.f32.mrf.mxu0
    %v2288 = vpop.f32.mrf.mxu0
    %v2289 = vadd.f32 0.0, %v2288
    %v2290 = vpop.f32.mrf.mxu0
    %2291 = vdwg.mxu0
    %2292 = vmatprep.subr.bf16.mxu0 0
    %2293 = vmatpush1.bf16.msra.mxu0 %v1450
    %2294 = vmatprep.subr.bf16.mxu0 0
    %2295 = vmatpush1.bf16.msra.mxu0 %v1449
    %2296 = vmatprep.subr.bf16.mxu0 0
    %2297 = vmatpush1.bf16.msra.mxu0 %v1448
    %2298 = vmatprep.subr.bf16.mxu0 0
    %2299 = vmatpush1.bf16.msra.mxu0 %v1447
    %2300 = vmatprep.subr.bf16.mxu0 0
    %2301 = vmatpush1.bf16.msra.mxu0 %v1446
    %2302 = vmatprep.subr.bf16.mxu0 0
    %2303 = vmatpush1.bf16.msra.mxu0 %v1445
    %2304 = vmatprep.subr.bf16.mxu0 0
    %2305 = vmatpush1.bf16.msra.mxu0 %v1444
    %2306 = vmatprep.subr.bf16.mxu0 0
    %2307 = vmatpush1.bf16.msra.mxu0 %v1443
    %2308 = vmatprep.subr.bf16.mxu0 0
    %2309 = vmatpush2.bf16.msra.mxu0 %v1458
    %2310 = vmatprep.subr.bf16.mxu0 0
    %2311 = vmatpush2.bf16.msra.mxu0 %v1457
    %2312 = vmatprep.subr.bf16.mxu0 0
    %2313 = vmatpush2.bf16.msra.mxu0 %v1456
    %2314 = vmatprep.subr.bf16.mxu0 0
    %2315 = vmatpush2.bf16.msra.mxu0 %v1455
    %2316 = vmatprep.subr.bf16.mxu0 0
    %2317 = vmatpush2.bf16.msra.mxu0 %v1454
    %2318 = vmatprep.subr.bf16.mxu0 0
    %2319 = vmatpush2.bf16.msra.mxu0 %v1453
    %2320 = vmatprep.subr.bf16.mxu0 0
    %2321 = vmatpush2.bf16.msra.mxu0 %v1452
    %2322 = vmatprep.subr.bf16.mxu0 0
    %2323 = vmatpush2.bf16.msra.mxu0 %v1451
    %2324 = vmatprep.mubr.bf16.mxu0 %v1878
    %2325 = vmatmul.mubr.bf16.gmra.mxu0 %v1877
    %v2326 = vpop.f32.mrf.mxu0
    %v2327 = vadd.f32 %v2166, %v2326
    %v2328 = vpop.f32.mrf.mxu0
    %v2329 = vpop.f32.mrf.mxu0
    %v2330 = vadd.f32 %v2169, %v2329
    %v2331 = vpop.f32.mrf.mxu0
    %2332 = vmatprep.mubr.bf16.mxu0 %v1886
    %2333 = vmatmul.mubr.bf16.gmra.mxu0 %v1885
    %v2334 = vpop.f32.mrf.mxu0
    %v2335 = vadd.f32 %v2174, %v2334
    %v2336 = vpop.f32.mrf.mxu0
    %v2337 = vpop.f32.mrf.mxu0
    %v2338 = vadd.f32 %v2177, %v2337
    %v2339 = vpop.f32.mrf.mxu0
    %2340 = vmatprep.mubr.bf16.mxu0 %v1894
    %2341 = vmatmul.mubr.bf16.gmra.mxu0 %v1893
    %v2342 = vpop.f32.mrf.mxu0
    %v2343 = vadd.f32 %v2182, %v2342
    %v2344 = vpop.f32.mrf.mxu0
    %v2345 = vpop.f32.mrf.mxu0
    %v2346 = vadd.f32 %v2185, %v2345
    %v2347 = vpop.f32.mrf.mxu0
    %2348 = vmatprep.mubr.bf16.mxu0 %v1902
    %2349 = vmatmul.mubr.bf16.gmra.mxu0 %v1901
    %v2350 = vpop.f32.mrf.mxu0
    %v2351 = vadd.f32 %v2190, %v2350
    %v2352 = vpop.f32.mrf.mxu0
    %v2353 = vpop.f32.mrf.mxu0
    %v2354 = vadd.f32 %v2193, %v2353
    %v2355 = vpop.f32.mrf.mxu0
    %2356 = vmatprep.mubr.bf16.mxu0 %v1910
    %2357 = vmatmul.mubr.bf16.gmra.mxu0 %v1909
    %v2358 = vpop.f32.mrf.mxu0
    %v2359 = vadd.f32 %v2198, %v2358
    %v2360 = vpop.f32.mrf.mxu0
    %v2361 = vpop.f32.mrf.mxu0
    %v2362 = vadd.f32 %v2201, %v2361
    %v2363 = vpop.f32.mrf.mxu0
    %2364 = vmatprep.mubr.bf16.mxu0 %v1918
    %2365 = vmatmul.mubr.bf16.gmra.mxu0 %v1917
    %v2366 = vpop.f32.mrf.mxu0
    %v2367 = vadd.f32 %v2206, %v2366
    %v2368 = vpop.f32.mrf.mxu0
    %v2369 = vpop.f32.mrf.mxu0
    %v2370 = vadd.f32 %v2209, %v2369
    %v2371 = vpop.f32.mrf.mxu0
    %2372 = vmatprep.mubr.bf16.mxu0 %v1926
    %2373 = vmatmul.mubr.bf16.gmra.mxu0 %v1925
    %v2374 = vpop.f32.mrf.mxu0
    %v2375 = vadd.f32 %v2214, %v2374
    %v2376 = vpop.f32.mrf.mxu0
    %v2377 = vpop.f32.mrf.mxu0
    %v2378 = vadd.f32 %v2217, %v2377
    %v2379 = vpop.f32.mrf.mxu0
    %2380 = vmatprep.mubr.bf16.mxu0 %v1934
    %2381 = vmatmul.mubr.bf16.gmra.mxu0 %v1933
    %v2382 = vpop.f32.mrf.mxu0
    %v2383 = vadd.f32 %v2222, %v2382
    %v2384 = vpop.f32.mrf.mxu0
    %v2385 = vpop.f32.mrf.mxu0
    %v2386 = vadd.f32 %v2225, %v2385
    %v2387 = vpop.f32.mrf.mxu0
    %2388 = vmatprep.mubr.bf16.mxu0 %v1942
    %2389 = vmatmul.mubr.bf16.gmra.mxu0 %v1941
    %v2390 = vpop.f32.mrf.mxu0
    %v2391 = vadd.f32 %v2230, %v2390
    %v2392 = vpop.f32.mrf.mxu0
    %v2393 = vpop.f32.mrf.mxu0
    %v2394 = vadd.f32 %v2233, %v2393
    %v2395 = vpop.f32.mrf.mxu0
    %2396 = vmatprep.mubr.bf16.mxu0 %v1950
    %2397 = vmatmul.mubr.bf16.gmra.mxu0 %v1949
    %v2398 = vpop.f32.mrf.mxu0
    %v2399 = vadd.f32 %v2238, %v2398
    %v2400 = vpop.f32.mrf.mxu0
    %v2401 = vpop.f32.mrf.mxu0
    %v2402 = vadd.f32 %v2241, %v2401
    %v2403 = vpop.f32.mrf.mxu0
    %2404 = vmatprep.mubr.bf16.mxu0 %v1958
    %2405 = vmatmul.mubr.bf16.gmra.mxu0 %v1957
    %v2406 = vpop.f32.mrf.mxu0
    %v2407 = vadd.f32 %v2246, %v2406
    %v2408 = vpop.f32.mrf.mxu0
    %v2409 = vpop.f32.mrf.mxu0
    %v2410 = vadd.f32 %v2249, %v2409
    %v2411 = vpop.f32.mrf.mxu0
    %2412 = vmatprep.mubr.bf16.mxu0 %v1966
    %2413 = vmatmul.mubr.bf16.gmra.mxu0 %v1965
    %v2414 = vpop.f32.mrf.mxu0
    %v2415 = vadd.f32 %v2254, %v2414
    %v2416 = vpop.f32.mrf.mxu0
    %v2417 = vpop.f32.mrf.mxu0
    %v2418 = vadd.f32 %v2257, %v2417
    %v2419 = vpop.f32.mrf.mxu0
    %2420 = vmatprep.mubr.bf16.mxu0 %v1974
    %2421 = vmatmul.mubr.bf16.gmra.mxu0 %v1973
    %v2422 = vpop.f32.mrf.mxu0
    %v2423 = vadd.f32 %v2262, %v2422
    %v2424 = vpop.f32.mrf.mxu0
    %v2425 = vpop.f32.mrf.mxu0
    %v2426 = vadd.f32 %v2265, %v2425
    %v2427 = vpop.f32.mrf.mxu0
    %2428 = vmatprep.mubr.bf16.mxu0 %v1982
    %2429 = vmatmul.mubr.bf16.gmra.mxu0 %v1981
    %v2430 = vpop.f32.mrf.mxu0
    %v2431 = vadd.f32 %v2270, %v2430
    %v2432 = vpop.f32.mrf.mxu0
    %v2433 = vpop.f32.mrf.mxu0
    %v2434 = vadd.f32 %v2273, %v2433
    %v2435 = vpop.f32.mrf.mxu0
    %2436 = vmatprep.mubr.bf16.mxu0 %v1990
    %2437 = vmatmul.mubr.bf16.gmra.mxu0 %v1989
    %v2438 = vpop.f32.mrf.mxu0
    %v2439 = vadd.f32 %v2278, %v2438
    %v2440 = vpop.f32.mrf.mxu0
    %v2441 = vpop.f32.mrf.mxu0
    %v2442 = vadd.f32 %v2281, %v2441
    %v2443 = vpop.f32.mrf.mxu0
    %2444 = vmatprep.mubr.bf16.mxu0 %v1998
    %2445 = vmatmul.mubr.bf16.gmra.mxu0 %v1997
    %v2446 = vpop.f32.mrf.mxu0
    %v2447 = vadd.f32 %v2286, %v2446
    %v2448 = vpop.f32.mrf.mxu0
    %v2449 = vpop.f32.mrf.mxu0
    %v2450 = vadd.f32 %v2289, %v2449
    %v2451 = vpop.f32.mrf.mxu0
    %2452 = vdwg.mxu0
    %2453 = vmatprep.subr.bf16.mxu0 0
    %2454 = vmatpush1.bf16.msra.mxu0 %v1466
    %2455 = vmatprep.subr.bf16.mxu0 0
    %2456 = vmatpush1.bf16.msra.mxu0 %v1465
    %2457 = vmatprep.subr.bf16.mxu0 0
    %2458 = vmatpush1.bf16.msra.mxu0 %v1464
    %2459 = vmatprep.subr.bf16.mxu0 0
    %2460 = vmatpush1.bf16.msra.mxu0 %v1463
    %2461 = vmatprep.subr.bf16.mxu0 0
    %2462 = vmatpush1.bf16.msra.mxu0 %v1462
    %2463 = vmatprep.subr.bf16.mxu0 0
    %2464 = vmatpush1.bf16.msra.mxu0 %v1461
    %2465 = vmatprep.subr.bf16.mxu0 0
    %2466 = vmatpush1.bf16.msra.mxu0 %v1460
    %2467 = vmatprep.subr.bf16.mxu0 0
    %2468 = vmatpush1.bf16.msra.mxu0 %v1459
    %2469 = vmatprep.subr.bf16.mxu0 0
    %2470 = vmatpush2.bf16.msra.mxu0 %v1474
    %2471 = vmatprep.subr.bf16.mxu0 0
    %2472 = vmatpush2.bf16.msra.mxu0 %v1473
    %2473 = vmatprep.subr.bf16.mxu0 0
    %2474 = vmatpush2.bf16.msra.mxu0 %v1472
    %2475 = vmatprep.subr.bf16.mxu0 0
    %2476 = vmatpush2.bf16.msra.mxu0 %v1471
    %2477 = vmatprep.subr.bf16.mxu0 0
    %2478 = vmatpush2.bf16.msra.mxu0 %v1470
    %2479 = vmatprep.subr.bf16.mxu0 0
    %2480 = vmatpush2.bf16.msra.mxu0 %v1469
    %2481 = vmatprep.subr.bf16.mxu0 0
    %2482 = vmatpush2.bf16.msra.mxu0 %v1468
    %2483 = vmatprep.subr.bf16.mxu0 0
    %2484 = vmatpush2.bf16.msra.mxu0 %v1467
    %2485 = vmatprep.mubr.bf16.mxu0 %v1880
    %2486 = vmatmul.mubr.bf16.gmra.mxu0 %v1879
    %v2487 = vpop.f32.mrf.mxu0
    %v2488 = vadd.f32 %v2327, %v2487
    %v2489 = vpop.f32.mrf.mxu0
    %v2490 = vpop.f32.mrf.mxu0
    %v2491 = vadd.f32 %v2330, %v2490
    %v2492 = vpop.f32.mrf.mxu0
    %2493 = vmatprep.mubr.bf16.mxu0 %v1888
    %2494 = vmatmul.mubr.bf16.gmra.mxu0 %v1887
    %v2495 = vpop.f32.mrf.mxu0
    %v2496 = vadd.f32 %v2335, %v2495
    %v2497 = vpop.f32.mrf.mxu0
    %v2498 = vpop.f32.mrf.mxu0
    %v2499 = vadd.f32 %v2338, %v2498
    %v2500 = vpop.f32.mrf.mxu0
    %2501 = vmatprep.mubr.bf16.mxu0 %v1896
    %2502 = vmatmul.mubr.bf16.gmra.mxu0 %v1895
    %v2503 = vpop.f32.mrf.mxu0
    %v2504 = vadd.f32 %v2343, %v2503
    %v2505 = vpop.f32.mrf.mxu0
    %v2506 = vpop.f32.mrf.mxu0
    %v2507 = vadd.f32 %v2346, %v2506
    %v2508 = vpop.f32.mrf.mxu0
    %2509 = vmatprep.mubr.bf16.mxu0 %v1904
    %2510 = vmatmul.mubr.bf16.gmra.mxu0 %v1903
    %v2511 = vpop.f32.mrf.mxu0
    %v2512 = vadd.f32 %v2351, %v2511
    %v2513 = vpop.f32.mrf.mxu0
    %v2514 = vpop.f32.mrf.mxu0
    %v2515 = vadd.f32 %v2354, %v2514
    %v2516 = vpop.f32.mrf.mxu0
    %2517 = vmatprep.mubr.bf16.mxu0 %v1912
    %2518 = vmatmul.mubr.bf16.gmra.mxu0 %v1911
    %v2519 = vpop.f32.mrf.mxu0
    %v2520 = vadd.f32 %v2359, %v2519
    %v2521 = vpop.f32.mrf.mxu0
    %v2522 = vpop.f32.mrf.mxu0
    %v2523 = vadd.f32 %v2362, %v2522
    %v2524 = vpop.f32.mrf.mxu0
    %2525 = vmatprep.mubr.bf16.mxu0 %v1920
    %2526 = vmatmul.mubr.bf16.gmra.mxu0 %v1919
    %v2527 = vpop.f32.mrf.mxu0
    %v2528 = vadd.f32 %v2367, %v2527
    %v2529 = vpop.f32.mrf.mxu0
    %v2530 = vpop.f32.mrf.mxu0
    %v2531 = vadd.f32 %v2370, %v2530
    %v2532 = vpop.f32.mrf.mxu0
    %2533 = vmatprep.mubr.bf16.mxu0 %v1928
    %2534 = vmatmul.mubr.bf16.gmra.mxu0 %v1927
    %v2535 = vpop.f32.mrf.mxu0
    %v2536 = vadd.f32 %v2375, %v2535
    %v2537 = vpop.f32.mrf.mxu0
    %v2538 = vpop.f32.mrf.mxu0
    %v2539 = vadd.f32 %v2378, %v2538
    %v2540 = vpop.f32.mrf.mxu0
    %2541 = vmatprep.mubr.bf16.mxu0 %v1936
    %2542 = vmatmul.mubr.bf16.gmra.mxu0 %v1935
    %v2543 = vpop.f32.mrf.mxu0
    %v2544 = vadd.f32 %v2383, %v2543
    %v2545 = vpop.f32.mrf.mxu0
    %v2546 = vpop.f32.mrf.mxu0
    %v2547 = vadd.f32 %v2386, %v2546
    %v2548 = vpop.f32.mrf.mxu0
    %2549 = vmatprep.mubr.bf16.mxu0 %v1944
    %2550 = vmatmul.mubr.bf16.gmra.mxu0 %v1943
    %v2551 = vpop.f32.mrf.mxu0
    %v2552 = vadd.f32 %v2391, %v2551
    %v2553 = vpop.f32.mrf.mxu0
    %v2554 = vpop.f32.mrf.mxu0
    %v2555 = vadd.f32 %v2394, %v2554
    %v2556 = vpop.f32.mrf.mxu0
    %2557 = vmatprep.mubr.bf16.mxu0 %v1952
    %2558 = vmatmul.mubr.bf16.gmra.mxu0 %v1951
    %v2559 = vpop.f32.mrf.mxu0
    %v2560 = vadd.f32 %v2399, %v2559
    %v2561 = vpop.f32.mrf.mxu0
    %v2562 = vpop.f32.mrf.mxu0
    %v2563 = vadd.f32 %v2402, %v2562
    %v2564 = vpop.f32.mrf.mxu0
    %2565 = vmatprep.mubr.bf16.mxu0 %v1960
    %2566 = vmatmul.mubr.bf16.gmra.mxu0 %v1959
    %v2567 = vpop.f32.mrf.mxu0
    %v2568 = vadd.f32 %v2407, %v2567
    %v2569 = vpop.f32.mrf.mxu0
    %v2570 = vpop.f32.mrf.mxu0
    %v2571 = vadd.f32 %v2410, %v2570
    %v2572 = vpop.f32.mrf.mxu0
    %2573 = vmatprep.mubr.bf16.mxu0 %v1968
    %2574 = vmatmul.mubr.bf16.gmra.mxu0 %v1967
    %v2575 = vpop.f32.mrf.mxu0
    %v2576 = vadd.f32 %v2415, %v2575
    %v2577 = vpop.f32.mrf.mxu0
    %v2578 = vpop.f32.mrf.mxu0
    %v2579 = vadd.f32 %v2418, %v2578
    %v2580 = vpop.f32.mrf.mxu0
    %2581 = vmatprep.mubr.bf16.mxu0 %v1976
    %2582 = vmatmul.mubr.bf16.gmra.mxu0 %v1975
    %v2583 = vpop.f32.mrf.mxu0
    %v2584 = vadd.f32 %v2423, %v2583
    %v2585 = vpop.f32.mrf.mxu0
    %v2586 = vpop.f32.mrf.mxu0
    %v2587 = vadd.f32 %v2426, %v2586
    %v2588 = vpop.f32.mrf.mxu0
    %2589 = vmatprep.mubr.bf16.mxu0 %v1984
    %2590 = vmatmul.mubr.bf16.gmra.mxu0 %v1983
    %v2591 = vpop.f32.mrf.mxu0
    %v2592 = vadd.f32 %v2431, %v2591
    %v2593 = vpop.f32.mrf.mxu0
    %v2594 = vpop.f32.mrf.mxu0
    %v2595 = vadd.f32 %v2434, %v2594
    %v2596 = vpop.f32.mrf.mxu0
    %2597 = vmatprep.mubr.bf16.mxu0 %v1992
    %2598 = vmatmul.mubr.bf16.gmra.mxu0 %v1991
    %v2599 = vpop.f32.mrf.mxu0
    %v2600 = vadd.f32 %v2439, %v2599
    %v2601 = vpop.f32.mrf.mxu0
    %v2602 = vpop.f32.mrf.mxu0
    %v2603 = vadd.f32 %v2442, %v2602
    %v2604 = vpop.f32.mrf.mxu0
    %2605 = vmatprep.mubr.bf16.mxu0 %v2000
    %2606 = vmatmul.mubr.bf16.gmra.mxu0 %v1999
    %v2607 = vpop.f32.mrf.mxu0
    %v2608 = vadd.f32 %v2447, %v2607
    %v2609 = vpop.f32.mrf.mxu0
    %v2610 = vpop.f32.mrf.mxu0
    %v2611 = vadd.f32 %v2450, %v2610
    %v2612 = vpop.f32.mrf.mxu0
    %2613 = vdwg.mxu0
    %2614 = vmatprep.subr.bf16.mxu0 0
    %2615 = vmatpush1.bf16.msra.mxu0 %v1482
    %2616 = vmatprep.subr.bf16.mxu0 0
    %2617 = vmatpush1.bf16.msra.mxu0 %v1481
    %2618 = vmatprep.subr.bf16.mxu0 0
    %2619 = vmatpush1.bf16.msra.mxu0 %v1480
    %2620 = vmatprep.subr.bf16.mxu0 0
    %2621 = vmatpush1.bf16.msra.mxu0 %v1479
    %2622 = vmatprep.subr.bf16.mxu0 0
    %2623 = vmatpush1.bf16.msra.mxu0 %v1478
    %2624 = vmatprep.subr.bf16.mxu0 0
    %2625 = vmatpush1.bf16.msra.mxu0 %v1477
    %2626 = vmatprep.subr.bf16.mxu0 0
    %2627 = vmatpush1.bf16.msra.mxu0 %v1476
    %2628 = vmatprep.subr.bf16.mxu0 0
    %2629 = vmatpush1.bf16.msra.mxu0 %v1475
    %2630 = vmatprep.subr.bf16.mxu0 0
    %2631 = vmatpush2.bf16.msra.mxu0 %v1490
    %2632 = vmatprep.subr.bf16.mxu0 0
    %2633 = vmatpush2.bf16.msra.mxu0 %v1489
    %2634 = vmatprep.subr.bf16.mxu0 0
    %2635 = vmatpush2.bf16.msra.mxu0 %v1488
    %2636 = vmatprep.subr.bf16.mxu0 0
    %2637 = vmatpush2.bf16.msra.mxu0 %v1487
    %2638 = vmatprep.subr.bf16.mxu0 0
    %2639 = vmatpush2.bf16.msra.mxu0 %v1486
    %2640 = vmatprep.subr.bf16.mxu0 0
    %2641 = vmatpush2.bf16.msra.mxu0 %v1485
    %2642 = vmatprep.subr.bf16.mxu0 0
    %2643 = vmatpush2.bf16.msra.mxu0 %v1484
    %2644 = vmatprep.subr.bf16.mxu0 0
    %2645 = vmatpush2.bf16.msra.mxu0 %v1483
    %2646 = vmatprep.mubr.bf16.mxu0 %v1882
    %2647 = vmatmul.mubr.bf16.gmra.mxu0 %v1881
    %v2648 = vpop.f32.mrf.mxu0
    %v2649 = vadd.f32 %v2488, %v2648
    %v2650 = vpop.f32.mrf.mxu0
    %v2651 = vpop.f32.mrf.mxu0
    %v2652 = vadd.f32 %v2491, %v2651
    %v2653 = vpop.f32.mrf.mxu0
    %2654 = vmatprep.mubr.bf16.mxu0 %v1890
    %2655 = vmatmul.mubr.bf16.gmra.mxu0 %v1889
    %v2656 = vpop.f32.mrf.mxu0
    %v2657 = vadd.f32 %v2496, %v2656
    %v2658 = vpop.f32.mrf.mxu0
    %v2659 = vpop.f32.mrf.mxu0
    %v2660 = vadd.f32 %v2499, %v2659
    %v2661 = vpop.f32.mrf.mxu0
    %2662 = vmatprep.mubr.bf16.mxu0 %v1898
    %2663 = vmatmul.mubr.bf16.gmra.mxu0 %v1897
    %v2664 = vpop.f32.mrf.mxu0
    %v2665 = vadd.f32 %v2504, %v2664
    %v2666 = vpop.f32.mrf.mxu0
    %v2667 = vpop.f32.mrf.mxu0
    %v2668 = vadd.f32 %v2507, %v2667
    %v2669 = vpop.f32.mrf.mxu0
    %2670 = vmatprep.mubr.bf16.mxu0 %v1906
    %2671 = vmatmul.mubr.bf16.gmra.mxu0 %v1905
    %v2672 = vpop.f32.mrf.mxu0
    %v2673 = vadd.f32 %v2512, %v2672
    %v2674 = vpop.f32.mrf.mxu0
    %v2675 = vpop.f32.mrf.mxu0
    %v2676 = vadd.f32 %v2515, %v2675
    %v2677 = vpop.f32.mrf.mxu0
    %2678 = vmatprep.mubr.bf16.mxu0 %v1914
    %2679 = vmatmul.mubr.bf16.gmra.mxu0 %v1913
    %v2680 = vpop.f32.mrf.mxu0
    %v2681 = vadd.f32 %v2520, %v2680
    %v2682 = vpop.f32.mrf.mxu0
    %v2683 = vpop.f32.mrf.mxu0
    %v2684 = vadd.f32 %v2523, %v2683
    %v2685 = vpop.f32.mrf.mxu0
    %2686 = vmatprep.mubr.bf16.mxu0 %v1922
    %2687 = vmatmul.mubr.bf16.gmra.mxu0 %v1921
    %v2688 = vpop.f32.mrf.mxu0
    %v2689 = vadd.f32 %v2528, %v2688
    %v2690 = vpop.f32.mrf.mxu0
    %v2691 = vpop.f32.mrf.mxu0
    %v2692 = vadd.f32 %v2531, %v2691
    %v2693 = vpop.f32.mrf.mxu0
    %2694 = vmatprep.mubr.bf16.mxu0 %v1930
    %2695 = vmatmul.mubr.bf16.gmra.mxu0 %v1929
    %v2696 = vpop.f32.mrf.mxu0
    %v2697 = vadd.f32 %v2536, %v2696
    %v2698 = vpop.f32.mrf.mxu0
    %v2699 = vpop.f32.mrf.mxu0
    %v2700 = vadd.f32 %v2539, %v2699
    %v2701 = vpop.f32.mrf.mxu0
    %2702 = vmatprep.mubr.bf16.mxu0 %v1938
    %2703 = vmatmul.mubr.bf16.gmra.mxu0 %v1937
    %v2704 = vpop.f32.mrf.mxu0
    %v2705 = vadd.f32 %v2544, %v2704
    %v2706 = vpop.f32.mrf.mxu0
    %v2707 = vpop.f32.mrf.mxu0
    %v2708 = vadd.f32 %v2547, %v2707
    %v2709 = vpop.f32.mrf.mxu0
    %2710 = vmatprep.mubr.bf16.mxu0 %v1946
    %2711 = vmatmul.mubr.bf16.gmra.mxu0 %v1945
    %v2712 = vpop.f32.mrf.mxu0
    %v2713 = vadd.f32 %v2552, %v2712
    %v2714 = vpop.f32.mrf.mxu0
    %v2715 = vpop.f32.mrf.mxu0
    %v2716 = vadd.f32 %v2555, %v2715
    %v2717 = vpop.f32.mrf.mxu0
    %2718 = vmatprep.mubr.bf16.mxu0 %v1954
    %2719 = vmatmul.mubr.bf16.gmra.mxu0 %v1953
    %v2720 = vpop.f32.mrf.mxu0
    %v2721 = vadd.f32 %v2560, %v2720
    %v2722 = vpop.f32.mrf.mxu0
    %v2723 = vpop.f32.mrf.mxu0
    %v2724 = vadd.f32 %v2563, %v2723
    %v2725 = vpop.f32.mrf.mxu0
    %2726 = vmatprep.mubr.bf16.mxu0 %v1962
    %2727 = vmatmul.mubr.bf16.gmra.mxu0 %v1961
    %v2728 = vpop.f32.mrf.mxu0
    %v2729 = vadd.f32 %v2568, %v2728
    %v2730 = vpop.f32.mrf.mxu0
    %v2731 = vpop.f32.mrf.mxu0
    %v2732 = vadd.f32 %v2571, %v2731
    %v2733 = vpop.f32.mrf.mxu0
    %2734 = vmatprep.mubr.bf16.mxu0 %v1970
    %2735 = vmatmul.mubr.bf16.gmra.mxu0 %v1969
    %v2736 = vpop.f32.mrf.mxu0
    %v2737 = vadd.f32 %v2576, %v2736
    %v2738 = vpop.f32.mrf.mxu0
    %v2739 = vpop.f32.mrf.mxu0
    %v2740 = vadd.f32 %v2579, %v2739
    %v2741 = vpop.f32.mrf.mxu0
    %2742 = vmatprep.mubr.bf16.mxu0 %v1978
    %2743 = vmatmul.mubr.bf16.gmra.mxu0 %v1977
    %v2744 = vpop.f32.mrf.mxu0
    %v2745 = vadd.f32 %v2584, %v2744
    %v2746 = vpop.f32.mrf.mxu0
    %v2747 = vpop.f32.mrf.mxu0
    %v2748 = vadd.f32 %v2587, %v2747
    %v2749 = vpop.f32.mrf.mxu0
    %2750 = vmatprep.mubr.bf16.mxu0 %v1986
    %2751 = vmatmul.mubr.bf16.gmra.mxu0 %v1985
    %v2752 = vpop.f32.mrf.mxu0
    %v2753 = vadd.f32 %v2592, %v2752
    %v2754 = vpop.f32.mrf.mxu0
    %v2755 = vpop.f32.mrf.mxu0
    %v2756 = vadd.f32 %v2595, %v2755
    %v2757 = vpop.f32.mrf.mxu0
    %2758 = vmatprep.mubr.bf16.mxu0 %v1994
    %2759 = vmatmul.mubr.bf16.gmra.mxu0 %v1993
    %v2760 = vpop.f32.mrf.mxu0
    %v2761 = vadd.f32 %v2600, %v2760
    %v2762 = vpop.f32.mrf.mxu0
    %v2763 = vpop.f32.mrf.mxu0
    %v2764 = vadd.f32 %v2603, %v2763
    %v2765 = vpop.f32.mrf.mxu0
    %2766 = vmatprep.mubr.bf16.mxu0 %v2002
    %2767 = vmatmul.mubr.bf16.gmra.mxu0 %v2001
    %v2768 = vpop.f32.mrf.mxu0
    %v2769 = vadd.f32 %v2608, %v2768
    %v2770 = vpop.f32.mrf.mxu0
    %v2771 = vpop.f32.mrf.mxu0
    %v2772 = vadd.f32 %v2611, %v2771
    %v2773 = vpop.f32.mrf.mxu0
    %2774 = vdwg.mxu0
    %v2775 = vsub.f32 %v2649, %v2713
    %v2776 = vsub.f32 %v2652, %v2716
    %v2777 = vsub.f32 %v2657, %v2721
    %v2778 = vsub.f32 %v2660, %v2724
    %v2779 = vsub.f32 %v2665, %v2729
    %v2780 = vsub.f32 %v2668, %v2732
    %v2781 = vsub.f32 %v2673, %v2737
    %v2782 = vsub.f32 %v2676, %v2740
    %v2783 = vsub.f32 %v2681, %v2745
    %v2784 = vsub.f32 %v2684, %v2748
    %v2785 = vsub.f32 %v2689, %v2753
    %v2786 = vsub.f32 %v2692, %v2756
    %v2787 = vsub.f32 %v2697, %v2761
    %v2788 = vsub.f32 %v2700, %v2764
    %v2789 = vsub.f32 %v2705, %v2769
    %v2790 = vsub.f32 %v2708, %v2772
    %v2791 = vld [vmem:[%s4] sm:$0xff]
    %v2792 = vld [vmem:[%s4 + $0x8] sm:$0xff]
    %v2793 = vld [vmem:[%s4 + $0x10] sm:$0xff]
    %v2794 = vld [vmem:[%s4 + $0x18] sm:$0xff]
    %v2795 = vld [vmem:[%s4 + $0x20] sm:$0xff]
    %v2796 = vld [vmem:[%s4 + $0x28] sm:$0xff]
    %v2797 = vld [vmem:[%s4 + $0x30] sm:$0xff]
    %v2798 = vld [vmem:[%s4 + $0x38] sm:$0xff]
    %v2799 = vld [vmem:[%s4 + $0x40] sm:$0xff]
    %v2800 = vld [vmem:[%s4 + $0x48] sm:$0xff]
    %v2801 = vld [vmem:[%s4 + $0x50] sm:$0xff]
    %v2802 = vld [vmem:[%s4 + $0x58] sm:$0xff]
    %v2803 = vld [vmem:[%s4 + $0x60] sm:$0xff]
    %v2804 = vld [vmem:[%s4 + $0x68] sm:$0xff]
    %v2805 = vld [vmem:[%s4 + $0x70] sm:$0xff]
    %v2806 = vld [vmem:[%s4 + $0x78] sm:$0xff]
    %v2807 = vld [vmem:[%s4 + $0x80] sm:$0xff]
    %v2808 = vld [vmem:[%s4 + $0x88] sm:$0xff]
    %v2809 = vld [vmem:[%s4 + $0x90] sm:$0xff]
    %v2810 = vld [vmem:[%s4 + $0x98] sm:$0xff]
    %v2811 = vld [vmem:[%s4 + $0xa0] sm:$0xff]
    %v2812 = vld [vmem:[%s4 + $0xa8] sm:$0xff]
    %v2813 = vld [vmem:[%s4 + $0xb0] sm:$0xff]
    %v2814 = vld [vmem:[%s4 + $0xb8] sm:$0xff]
    %v2815 = vld [vmem:[%s4 + $0xc0] sm:$0xff]
    %v2816 = vld [vmem:[%s4 + $0xc8] sm:$0xff]
    %v2817 = vld [vmem:[%s4 + $0xd0] sm:$0xff]
    %v2818 = vld [vmem:[%s4 + $0xd8] sm:$0xff]
    %v2819 = vld [vmem:[%s4 + $0xe0] sm:$0xff]
    %v2820 = vld [vmem:[%s4 + $0xe8] sm:$0xff]
    %v2821 = vld [vmem:[%s4 + $0xf0] sm:$0xff]
    %v2822 = vld [vmem:[%s4 + $0xf8] sm:$0xff]
    %v2823 = vld [vmem:[%s4 + $0x100] sm:$0xff]
    %v2824 = vld [vmem:[%s4 + $0x108] sm:$0xff]
    %v2825 = vld [vmem:[%s4 + $0x110] sm:$0xff]
    %v2826 = vld [vmem:[%s4 + $0x118] sm:$0xff]
    %v2827 = vld [vmem:[%s4 + $0x120] sm:$0xff]
    %v2828 = vld [vmem:[%s4 + $0x128] sm:$0xff]
    %v2829 = vld [vmem:[%s4 + $0x130] sm:$0xff]
    %v2830 = vld [vmem:[%s4 + $0x138] sm:$0xff]
    %v2831 = vld [vmem:[%s4 + $0x140] sm:$0xff]
    %v2832 = vld [vmem:[%s4 + $0x148] sm:$0xff]
    %v2833 = vld [vmem:[%s4 + $0x150] sm:$0xff]
    %v2834 = vld [vmem:[%s4 + $0x158] sm:$0xff]
    %v2835 = vld [vmem:[%s4 + $0x160] sm:$0xff]
    %v2836 = vld [vmem:[%s4 + $0x168] sm:$0xff]
    %v2837 = vld [vmem:[%s4 + $0x170] sm:$0xff]
    %v2838 = vld [vmem:[%s4 + $0x178] sm:$0xff]
    %v2839 = vld [vmem:[%s4 + $0x180] sm:$0xff]
    %v2840 = vld [vmem:[%s4 + $0x188] sm:$0xff]
    %v2841 = vld [vmem:[%s4 + $0x190] sm:$0xff]
    %v2842 = vld [vmem:[%s4 + $0x198] sm:$0xff]
    %v2843 = vld [vmem:[%s4 + $0x1a0] sm:$0xff]
    %v2844 = vld [vmem:[%s4 + $0x1a8] sm:$0xff]
    %v2845 = vld [vmem:[%s4 + $0x1b0] sm:$0xff]
    %v2846 = vld [vmem:[%s4 + $0x1b8] sm:$0xff]
    %v2847 = vld [vmem:[%s4 + $0x1c0] sm:$0xff]
    %v2848 = vld [vmem:[%s4 + $0x1c8] sm:$0xff]
    %v2849 = vld [vmem:[%s4 + $0x1d0] sm:$0xff]
    %v2850 = vld [vmem:[%s4 + $0x1d8] sm:$0xff]
    %v2851 = vld [vmem:[%s4 + $0x1e0] sm:$0xff]
    %v2852 = vld [vmem:[%s4 + $0x1e8] sm:$0xff]
    %v2853 = vld [vmem:[%s4 + $0x1f0] sm:$0xff]
    %v2854 = vld [vmem:[%s4 + $0x1f8] sm:$0xff]
    %v2855 = vld [vmem:[%s4 + $0x200] sm:$0xff]
    %v2856 = vld [vmem:[%s4 + $0x208] sm:$0xff]
    %v2857 = vld [vmem:[%s4 + $0x210] sm:$0xff]
    %v2858 = vld [vmem:[%s4 + $0x218] sm:$0xff]
    %v2859 = vld [vmem:[%s4 + $0x220] sm:$0xff]
    %v2860 = vld [vmem:[%s4 + $0x228] sm:$0xff]
    %v2861 = vld [vmem:[%s4 + $0x230] sm:$0xff]
    %v2862 = vld [vmem:[%s4 + $0x238] sm:$0xff]
    %v2863 = vld [vmem:[%s4 + $0x240] sm:$0xff]
    %v2864 = vld [vmem:[%s4 + $0x248] sm:$0xff]
    %v2865 = vld [vmem:[%s4 + $0x250] sm:$0xff]
    %v2866 = vld [vmem:[%s4 + $0x258] sm:$0xff]
    %v2867 = vld [vmem:[%s4 + $0x260] sm:$0xff]
    %v2868 = vld [vmem:[%s4 + $0x268] sm:$0xff]
    %v2869 = vld [vmem:[%s4 + $0x270] sm:$0xff]
    %v2870 = vld [vmem:[%s4 + $0x278] sm:$0xff]
    %v2871 = vld [vmem:[%s4 + $0x280] sm:$0xff]
    %v2872 = vld [vmem:[%s4 + $0x288] sm:$0xff]
    %v2873 = vld [vmem:[%s4 + $0x290] sm:$0xff]
    %v2874 = vld [vmem:[%s4 + $0x298] sm:$0xff]
    %v2875 = vld [vmem:[%s4 + $0x2a0] sm:$0xff]
    %v2876 = vld [vmem:[%s4 + $0x2a8] sm:$0xff]
    %v2877 = vld [vmem:[%s4 + $0x2b0] sm:$0xff]
    %v2878 = vld [vmem:[%s4 + $0x2b8] sm:$0xff]
    %v2879 = vld [vmem:[%s4 + $0x2c0] sm:$0xff]
    %v2880 = vld [vmem:[%s4 + $0x2c8] sm:$0xff]
    %v2881 = vld [vmem:[%s4 + $0x2d0] sm:$0xff]
    %v2882 = vld [vmem:[%s4 + $0x2d8] sm:$0xff]
    %v2883 = vld [vmem:[%s4 + $0x2e0] sm:$0xff]
    %v2884 = vld [vmem:[%s4 + $0x2e8] sm:$0xff]
    %v2885 = vld [vmem:[%s4 + $0x2f0] sm:$0xff]
    %v2886 = vld [vmem:[%s4 + $0x2f8] sm:$0xff]
    %v2887 = vld [vmem:[%s4 + $0x300] sm:$0xff]
    %v2888 = vld [vmem:[%s4 + $0x308] sm:$0xff]
    %v2889 = vld [vmem:[%s4 + $0x310] sm:$0xff]
    %v2890 = vld [vmem:[%s4 + $0x318] sm:$0xff]
    %v2891 = vld [vmem:[%s4 + $0x320] sm:$0xff]
    %v2892 = vld [vmem:[%s4 + $0x328] sm:$0xff]
    %v2893 = vld [vmem:[%s4 + $0x330] sm:$0xff]
    %v2894 = vld [vmem:[%s4 + $0x338] sm:$0xff]
    %v2895 = vld [vmem:[%s4 + $0x340] sm:$0xff]
    %v2896 = vld [vmem:[%s4 + $0x348] sm:$0xff]
    %v2897 = vld [vmem:[%s4 + $0x350] sm:$0xff]
    %v2898 = vld [vmem:[%s4 + $0x358] sm:$0xff]
    %v2899 = vld [vmem:[%s4 + $0x360] sm:$0xff]
    %v2900 = vld [vmem:[%s4 + $0x368] sm:$0xff]
    %v2901 = vld [vmem:[%s4 + $0x370] sm:$0xff]
    %v2902 = vld [vmem:[%s4 + $0x378] sm:$0xff]
    %v2903 = vld [vmem:[%s4 + $0x380] sm:$0xff]
    %v2904 = vld [vmem:[%s4 + $0x388] sm:$0xff]
    %v2905 = vld [vmem:[%s4 + $0x390] sm:$0xff]
    %v2906 = vld [vmem:[%s4 + $0x398] sm:$0xff]
    %v2907 = vld [vmem:[%s4 + $0x3a0] sm:$0xff]
    %v2908 = vld [vmem:[%s4 + $0x3a8] sm:$0xff]
    %v2909 = vld [vmem:[%s4 + $0x3b0] sm:$0xff]
    %v2910 = vld [vmem:[%s4 + $0x3b8] sm:$0xff]
    %v2911 = vld [vmem:[%s4 + $0x3c0] sm:$0xff]
    %v2912 = vld [vmem:[%s4 + $0x3c8] sm:$0xff]
    %v2913 = vld [vmem:[%s4 + $0x3d0] sm:$0xff]
    %v2914 = vld [vmem:[%s4 + $0x3d8] sm:$0xff]
    %v2915 = vld [vmem:[%s4 + $0x3e0] sm:$0xff]
    %v2916 = vld [vmem:[%s4 + $0x3e8] sm:$0xff]
    %v2917 = vld [vmem:[%s4 + $0x3f0] sm:$0xff]
    %v2918 = vld [vmem:[%s4 + $0x3f8] sm:$0xff]
    %v2919 = vld [vmem:[%s4 + $0x400] sm:$0xff]
    %v2920 = vld [vmem:[%s4 + $0x408] sm:$0xff]
    %v2921 = vld [vmem:[%s4 + $0x410] sm:$0xff]
    %v2922 = vld [vmem:[%s4 + $0x418] sm:$0xff]
    %v2923 = vld [vmem:[%s4 + $0x420] sm:$0xff]
    %v2924 = vld [vmem:[%s4 + $0x428] sm:$0xff]
    %v2925 = vld [vmem:[%s4 + $0x430] sm:$0xff]
    %v2926 = vld [vmem:[%s4 + $0x438] sm:$0xff]
    %v2927 = vld [vmem:[%s4 + $0x440] sm:$0xff]
    %v2928 = vld [vmem:[%s4 + $0x448] sm:$0xff]
    %v2929 = vld [vmem:[%s4 + $0x450] sm:$0xff]
    %v2930 = vld [vmem:[%s4 + $0x458] sm:$0xff]
    %v2931 = vld [vmem:[%s4 + $0x460] sm:$0xff]
    %v2932 = vld [vmem:[%s4 + $0x468] sm:$0xff]
    %v2933 = vld [vmem:[%s4 + $0x470] sm:$0xff]
    %v2934 = vld [vmem:[%s4 + $0x478] sm:$0xff]
    %v2935 = vld [vmem:[%s4 + $0x480] sm:$0xff]
    %v2936 = vld [vmem:[%s4 + $0x488] sm:$0xff]
    %v2937 = vld [vmem:[%s4 + $0x490] sm:$0xff]
    %v2938 = vld [vmem:[%s4 + $0x498] sm:$0xff]
    %v2939 = vld [vmem:[%s4 + $0x4a0] sm:$0xff]
    %v2940 = vld [vmem:[%s4 + $0x4a8] sm:$0xff]
    %v2941 = vld [vmem:[%s4 + $0x4b0] sm:$0xff]
    %v2942 = vld [vmem:[%s4 + $0x4b8] sm:$0xff]
    %v2943 = vld [vmem:[%s4 + $0x4c0] sm:$0xff]
    %v2944 = vld [vmem:[%s4 + $0x4c8] sm:$0xff]
    %v2945 = vld [vmem:[%s4 + $0x4d0] sm:$0xff]
    %v2946 = vld [vmem:[%s4 + $0x4d8] sm:$0xff]
    %v2947 = vld [vmem:[%s4 + $0x4e0] sm:$0xff]
    %v2948 = vld [vmem:[%s4 + $0x4e8] sm:$0xff]
    %v2949 = vld [vmem:[%s4 + $0x4f0] sm:$0xff]
    %v2950 = vld [vmem:[%s4 + $0x4f8] sm:$0xff]
    %v2951 = vld [vmem:[%s4 + $0x500] sm:$0xff]
    %v2952 = vld [vmem:[%s4 + $0x508] sm:$0xff]
    %v2953 = vld [vmem:[%s4 + $0x510] sm:$0xff]
    %v2954 = vld [vmem:[%s4 + $0x518] sm:$0xff]
    %v2955 = vld [vmem:[%s4 + $0x520] sm:$0xff]
    %v2956 = vld [vmem:[%s4 + $0x528] sm:$0xff]
    %v2957 = vld [vmem:[%s4 + $0x530] sm:$0xff]
    %v2958 = vld [vmem:[%s4 + $0x538] sm:$0xff]
    %v2959 = vld [vmem:[%s4 + $0x540] sm:$0xff]
    %v2960 = vld [vmem:[%s4 + $0x548] sm:$0xff]
    %v2961 = vld [vmem:[%s4 + $0x550] sm:$0xff]
    %v2962 = vld [vmem:[%s4 + $0x558] sm:$0xff]
    %v2963 = vld [vmem:[%s4 + $0x560] sm:$0xff]
    %v2964 = vld [vmem:[%s4 + $0x568] sm:$0xff]
    %v2965 = vld [vmem:[%s4 + $0x570] sm:$0xff]
    %v2966 = vld [vmem:[%s4 + $0x578] sm:$0xff]
    %v2967 = vld [vmem:[%s4 + $0x580] sm:$0xff]
    %v2968 = vld [vmem:[%s4 + $0x588] sm:$0xff]
    %v2969 = vld [vmem:[%s4 + $0x590] sm:$0xff]
    %v2970 = vld [vmem:[%s4 + $0x598] sm:$0xff]
    %v2971 = vld [vmem:[%s4 + $0x5a0] sm:$0xff]
    %v2972 = vld [vmem:[%s4 + $0x5a8] sm:$0xff]
    %v2973 = vld [vmem:[%s4 + $0x5b0] sm:$0xff]
    %v2974 = vld [vmem:[%s4 + $0x5b8] sm:$0xff]
    %v2975 = vld [vmem:[%s4 + $0x5c0] sm:$0xff]
    %v2976 = vld [vmem:[%s4 + $0x5c8] sm:$0xff]
    %v2977 = vld [vmem:[%s4 + $0x5d0] sm:$0xff]
    %v2978 = vld [vmem:[%s4 + $0x5d8] sm:$0xff]
    %v2979 = vld [vmem:[%s4 + $0x5e0] sm:$0xff]
    %v2980 = vld [vmem:[%s4 + $0x5e8] sm:$0xff]
    %v2981 = vld [vmem:[%s4 + $0x5f0] sm:$0xff]
    %v2982 = vld [vmem:[%s4 + $0x5f8] sm:$0xff]
    %v2983 = vld [vmem:[%s4 + $0x600] sm:$0xff]
    %v2984 = vld [vmem:[%s4 + $0x608] sm:$0xff]
    %v2985 = vld [vmem:[%s4 + $0x610] sm:$0xff]
    %v2986 = vld [vmem:[%s4 + $0x618] sm:$0xff]
    %v2987 = vld [vmem:[%s4 + $0x620] sm:$0xff]
    %v2988 = vld [vmem:[%s4 + $0x628] sm:$0xff]
    %v2989 = vld [vmem:[%s4 + $0x630] sm:$0xff]
    %v2990 = vld [vmem:[%s4 + $0x638] sm:$0xff]
    %v2991 = vld [vmem:[%s4 + $0x640] sm:$0xff]
    %v2992 = vld [vmem:[%s4 + $0x648] sm:$0xff]
    %v2993 = vld [vmem:[%s4 + $0x650] sm:$0xff]
    %v2994 = vld [vmem:[%s4 + $0x658] sm:$0xff]
    %v2995 = vld [vmem:[%s4 + $0x660] sm:$0xff]
    %v2996 = vld [vmem:[%s4 + $0x668] sm:$0xff]
    %v2997 = vld [vmem:[%s4 + $0x670] sm:$0xff]
    %v2998 = vld [vmem:[%s4 + $0x678] sm:$0xff]
    %v2999 = vld [vmem:[%s4 + $0x680] sm:$0xff]
    %v3000 = vld [vmem:[%s4 + $0x688] sm:$0xff]
    %v3001 = vld [vmem:[%s4 + $0x690] sm:$0xff]
    %v3002 = vld [vmem:[%s4 + $0x698] sm:$0xff]
    %v3003 = vld [vmem:[%s4 + $0x6a0] sm:$0xff]
    %v3004 = vld [vmem:[%s4 + $0x6a8] sm:$0xff]
    %v3005 = vld [vmem:[%s4 + $0x6b0] sm:$0xff]
    %v3006 = vld [vmem:[%s4 + $0x6b8] sm:$0xff]
    %v3007 = vld [vmem:[%s4 + $0x6c0] sm:$0xff]
    %v3008 = vld [vmem:[%s4 + $0x6c8] sm:$0xff]
    %v3009 = vld [vmem:[%s4 + $0x6d0] sm:$0xff]
    %v3010 = vld [vmem:[%s4 + $0x6d8] sm:$0xff]
    %v3011 = vld [vmem:[%s4 + $0x6e0] sm:$0xff]
    %v3012 = vld [vmem:[%s4 + $0x6e8] sm:$0xff]
    %v3013 = vld [vmem:[%s4 + $0x6f0] sm:$0xff]
    %v3014 = vld [vmem:[%s4 + $0x6f8] sm:$0xff]
    %v3015 = vld [vmem:[%s4 + $0x700] sm:$0xff]
    %v3016 = vld [vmem:[%s4 + $0x708] sm:$0xff]
    %v3017 = vld [vmem:[%s4 + $0x710] sm:$0xff]
    %v3018 = vld [vmem:[%s4 + $0x718] sm:$0xff]
    %v3019 = vld [vmem:[%s4 + $0x720] sm:$0xff]
    %v3020 = vld [vmem:[%s4 + $0x728] sm:$0xff]
    %v3021 = vld [vmem:[%s4 + $0x730] sm:$0xff]
    %v3022 = vld [vmem:[%s4 + $0x738] sm:$0xff]
    %v3023 = vld [vmem:[%s4 + $0x740] sm:$0xff]
    %v3024 = vld [vmem:[%s4 + $0x748] sm:$0xff]
    %v3025 = vld [vmem:[%s4 + $0x750] sm:$0xff]
    %v3026 = vld [vmem:[%s4 + $0x758] sm:$0xff]
    %v3027 = vld [vmem:[%s4 + $0x760] sm:$0xff]
    %v3028 = vld [vmem:[%s4 + $0x768] sm:$0xff]
    %v3029 = vld [vmem:[%s4 + $0x770] sm:$0xff]
    %v3030 = vld [vmem:[%s4 + $0x778] sm:$0xff]
    %v3031 = vld [vmem:[%s4 + $0x780] sm:$0xff]
    %v3032 = vld [vmem:[%s4 + $0x788] sm:$0xff]
    %v3033 = vld [vmem:[%s4 + $0x790] sm:$0xff]
    %v3034 = vld [vmem:[%s4 + $0x798] sm:$0xff]
    %v3035 = vld [vmem:[%s4 + $0x7a0] sm:$0xff]
    %v3036 = vld [vmem:[%s4 + $0x7a8] sm:$0xff]
    %v3037 = vld [vmem:[%s4 + $0x7b0] sm:$0xff]
    %v3038 = vld [vmem:[%s4 + $0x7b8] sm:$0xff]
    %v3039 = vld [vmem:[%s4 + $0x7c0] sm:$0xff]
    %v3040 = vld [vmem:[%s4 + $0x7c8] sm:$0xff]
    %v3041 = vld [vmem:[%s4 + $0x7d0] sm:$0xff]
    %v3042 = vld [vmem:[%s4 + $0x7d8] sm:$0xff]
    %v3043 = vld [vmem:[%s4 + $0x7e0] sm:$0xff]
    %v3044 = vld [vmem:[%s4 + $0x7e8] sm:$0xff]
    %v3045 = vld [vmem:[%s4 + $0x7f0] sm:$0xff]
    %v3046 = vld [vmem:[%s4 + $0x7f8] sm:$0xff]
    %v3047 = vld [vmem:[%s4 + $0x800] sm:$0xff]
    %v3048 = vld [vmem:[%s4 + $0x808] sm:$0xff]
    %v3049 = vld [vmem:[%s4 + $0x810] sm:$0xff]
    %v3050 = vld [vmem:[%s4 + $0x818] sm:$0xff]
    %v3051 = vld [vmem:[%s4 + $0x820] sm:$0xff]
    %v3052 = vld [vmem:[%s4 + $0x828] sm:$0xff]
    %v3053 = vld [vmem:[%s4 + $0x830] sm:$0xff]
    %v3054 = vld [vmem:[%s4 + $0x838] sm:$0xff]
    %v3055 = vld [vmem:[%s4 + $0x840] sm:$0xff]
    %v3056 = vld [vmem:[%s4 + $0x848] sm:$0xff]
    %v3057 = vld [vmem:[%s4 + $0x850] sm:$0xff]
    %v3058 = vld [vmem:[%s4 + $0x858] sm:$0xff]
    %v3059 = vld [vmem:[%s4 + $0x860] sm:$0xff]
    %v3060 = vld [vmem:[%s4 + $0x868] sm:$0xff]
    %v3061 = vld [vmem:[%s4 + $0x870] sm:$0xff]
    %v3062 = vld [vmem:[%s4 + $0x878] sm:$0xff]
    %v3063 = vld [vmem:[%s4 + $0x880] sm:$0xff]
    %v3064 = vld [vmem:[%s4 + $0x888] sm:$0xff]
    %v3065 = vld [vmem:[%s4 + $0x890] sm:$0xff]
    %v3066 = vld [vmem:[%s4 + $0x898] sm:$0xff]
    %v3067 = vld [vmem:[%s4 + $0x8a0] sm:$0xff]
    %v3068 = vld [vmem:[%s4 + $0x8a8] sm:$0xff]
    %v3069 = vld [vmem:[%s4 + $0x8b0] sm:$0xff]
    %v3070 = vld [vmem:[%s4 + $0x8b8] sm:$0xff]
    %v3071 = vld [vmem:[%s4 + $0x8c0] sm:$0xff]
    %v3072 = vld [vmem:[%s4 + $0x8c8] sm:$0xff]
    %v3073 = vld [vmem:[%s4 + $0x8d0] sm:$0xff]
    %v3074 = vld [vmem:[%s4 + $0x8d8] sm:$0xff]
    %v3075 = vld [vmem:[%s4 + $0x8e0] sm:$0xff]
    %v3076 = vld [vmem:[%s4 + $0x8e8] sm:$0xff]
    %v3077 = vld [vmem:[%s4 + $0x8f0] sm:$0xff]
    %v3078 = vld [vmem:[%s4 + $0x8f8] sm:$0xff]
    %v3079 = vpack.c.bf16 %v2652, %v2649
    %v3080 = vpack.c.bf16 %v2660, %v2657
    %v3081 = vpack.c.bf16 %v2668, %v2665
    %v3082 = vpack.c.bf16 %v2676, %v2673
    %v3083 = vpack.c.bf16 %v2684, %v2681
    %v3084 = vpack.c.bf16 %v2692, %v2689
    %v3085 = vpack.c.bf16 %v2700, %v2697
    %v3086 = vpack.c.bf16 %v2708, %v2705
    %v3087 = vpack.c.bf16 %v2716, %v2713
    %v3088 = vpack.c.bf16 %v2724, %v2721
    %v3089 = vpack.c.bf16 %v2732, %v2729
    %v3090 = vpack.c.bf16 %v2740, %v2737
    %v3091 = vpack.c.bf16 %v2748, %v2745
    %v3092 = vpack.c.bf16 %v2756, %v2753
    %v3093 = vpack.c.bf16 %v2764, %v2761
    %v3094 = vpack.c.bf16 %v2772, %v2769
    %v3383 = vunpack.c.l.b16 %v2791
    %v3384 = vunpack.c.h.b16 %v2791
    %v3385 = vunpack.c.l.b16 %v2792
    %v3386 = vunpack.c.h.b16 %v2792
    %v3387 = vunpack.c.l.b16 %v2793
    %v3388 = vunpack.c.h.b16 %v2793
    %v3389 = vunpack.c.l.b16 %v2794
    %v3390 = vunpack.c.h.b16 %v2794
    %v3391 = vunpack.c.l.b16 %v2795
    %v3392 = vunpack.c.h.b16 %v2795
    %v3393 = vunpack.c.l.b16 %v2796
    %v3394 = vunpack.c.h.b16 %v2796
    %v3395 = vunpack.c.l.b16 %v2797
    %v3396 = vunpack.c.h.b16 %v2797
    %v3397 = vunpack.c.l.b16 %v2798
    %v3398 = vunpack.c.h.b16 %v2798
    %v3399 = vunpack.c.l.b16 %v2799
    %v3400 = vunpack.c.h.b16 %v2799
    %v3401 = vunpack.c.l.b16 %v2800
    %v3402 = vunpack.c.h.b16 %v2800
    %v3403 = vunpack.c.l.b16 %v2801
    %v3404 = vunpack.c.h.b16 %v2801
    %v3405 = vunpack.c.l.b16 %v2802
    %v3406 = vunpack.c.h.b16 %v2802
    %v3407 = vunpack.c.l.b16 %v2803
    %v3408 = vunpack.c.h.b16 %v2803
    %v3409 = vunpack.c.l.b16 %v2804
    %v3410 = vunpack.c.h.b16 %v2804
    %v3411 = vunpack.c.l.b16 %v2805
    %v3412 = vunpack.c.h.b16 %v2805
    %v3413 = vunpack.c.l.b16 %v2806
    %v3414 = vunpack.c.h.b16 %v2806
    %v3415 = vunpack.c.l.b16 %v2807
    %v3416 = vunpack.c.h.b16 %v2807
    %v3417 = vunpack.c.l.b16 %v2808
    %v3418 = vunpack.c.h.b16 %v2808
    %v3419 = vunpack.c.l.b16 %v2809
    %v3420 = vunpack.c.h.b16 %v2809
    %v3421 = vunpack.c.l.b16 %v2810
    %v3422 = vunpack.c.h.b16 %v2810
    %v3423 = vunpack.c.l.b16 %v2811
    %v3424 = vunpack.c.h.b16 %v2811
    %v3425 = vunpack.c.l.b16 %v2812
    %v3426 = vunpack.c.h.b16 %v2812
    %v3427 = vunpack.c.l.b16 %v2813
    %v3428 = vunpack.c.h.b16 %v2813
    %v3429 = vunpack.c.l.b16 %v2814
    %v3430 = vunpack.c.h.b16 %v2814
    %v3431 = vunpack.c.l.b16 %v2815
    %v3432 = vunpack.c.h.b16 %v2815
    %v3433 = vunpack.c.l.b16 %v2816
    %v3434 = vunpack.c.h.b16 %v2816
    %v3435 = vunpack.c.l.b16 %v2817
    %v3436 = vunpack.c.h.b16 %v2817
    %v3437 = vunpack.c.l.b16 %v2818
    %v3438 = vunpack.c.h.b16 %v2818
    %v3439 = vunpack.c.l.b16 %v2819
    %v3440 = vunpack.c.h.b16 %v2819
    %v3441 = vunpack.c.l.b16 %v2820
    %v3442 = vunpack.c.h.b16 %v2820
    %v3443 = vunpack.c.l.b16 %v2821
    %v3444 = vunpack.c.h.b16 %v2821
    %v3445 = vunpack.c.l.b16 %v2822
    %v3446 = vunpack.c.h.b16 %v2822
    %v3447 = vunpack.c.l.b16 %v2823
    %v3448 = vunpack.c.h.b16 %v2823
    %v3449 = vunpack.c.l.b16 %v2824
    %v3450 = vunpack.c.h.b16 %v2824
    %v3451 = vunpack.c.l.b16 %v2825
    %v3452 = vunpack.c.h.b16 %v2825
    %v3453 = vunpack.c.l.b16 %v2826
    %v3454 = vunpack.c.h.b16 %v2826
    %v3455 = vunpack.c.l.b16 %v2827
    %v3456 = vunpack.c.h.b16 %v2827
    %v3457 = vunpack.c.l.b16 %v2828
    %v3458 = vunpack.c.h.b16 %v2828
    %v3459 = vunpack.c.l.b16 %v2829
    %v3460 = vunpack.c.h.b16 %v2829
    %v3461 = vunpack.c.l.b16 %v2830
    %v3462 = vunpack.c.h.b16 %v2830
    %v3463 = vunpack.c.l.b16 %v2831
    %v3464 = vunpack.c.h.b16 %v2831
    %v3465 = vunpack.c.l.b16 %v2832
    %v3466 = vunpack.c.h.b16 %v2832
    %v3467 = vunpack.c.l.b16 %v2833
    %v3468 = vunpack.c.h.b16 %v2833
    %v3469 = vunpack.c.l.b16 %v2834
    %v3470 = vunpack.c.h.b16 %v2834
    %v3471 = vunpack.c.l.b16 %v2835
    %v3472 = vunpack.c.h.b16 %v2835
    %v3473 = vunpack.c.l.b16 %v2836
    %v3474 = vunpack.c.h.b16 %v2836
    %v3475 = vunpack.c.l.b16 %v2837
    %v3476 = vunpack.c.h.b16 %v2837
    %v3477 = vunpack.c.l.b16 %v2838
    %v3478 = vunpack.c.h.b16 %v2838
    %v3479 = vunpack.c.l.b16 %v2839
    %v3480 = vunpack.c.h.b16 %v2839
    %v3481 = vunpack.c.l.b16 %v2840
    %v3482 = vunpack.c.h.b16 %v2840
    %v3483 = vunpack.c.l.b16 %v2841
    %v3484 = vunpack.c.h.b16 %v2841
    %v3485 = vunpack.c.l.b16 %v2842
    %v3486 = vunpack.c.h.b16 %v2842
    %v3487 = vunpack.c.l.b16 %v2843
    %v3488 = vunpack.c.h.b16 %v2843
    %v3489 = vunpack.c.l.b16 %v2844
    %v3490 = vunpack.c.h.b16 %v2844
    %v3491 = vunpack.c.l.b16 %v2845
    %v3492 = vunpack.c.h.b16 %v2845
    %v3493 = vunpack.c.l.b16 %v2846
    %v3494 = vunpack.c.h.b16 %v2846
    %v3495 = vunpack.c.l.b16 %v2847
    %v3496 = vunpack.c.h.b16 %v2847
    %v3497 = vunpack.c.l.b16 %v2848
    %v3498 = vunpack.c.h.b16 %v2848
    %v3499 = vunpack.c.l.b16 %v2849
    %v3500 = vunpack.c.h.b16 %v2849
    %v3501 = vunpack.c.l.b16 %v2850
    %v3502 = vunpack.c.h.b16 %v2850
    %v3503 = vunpack.c.l.b16 %v2851
    %v3504 = vunpack.c.h.b16 %v2851
    %v3505 = vunpack.c.l.b16 %v2852
    %v3506 = vunpack.c.h.b16 %v2852
    %v3507 = vunpack.c.l.b16 %v2853
    %v3508 = vunpack.c.h.b16 %v2853
    %v3509 = vunpack.c.l.b16 %v2854
    %v3510 = vunpack.c.h.b16 %v2854
    %v3511 = vunpack.c.l.b16 %v2855
    %v3512 = vunpack.c.h.b16 %v2855
    %v3513 = vunpack.c.l.b16 %v2856
    %v3514 = vunpack.c.h.b16 %v2856
    %v3515 = vunpack.c.l.b16 %v2857
    %v3516 = vunpack.c.h.b16 %v2857
    %v3517 = vunpack.c.l.b16 %v2858
    %v3518 = vunpack.c.h.b16 %v2858
    %v3519 = vunpack.c.l.b16 %v2859
    %v3520 = vunpack.c.h.b16 %v2859
    %v3521 = vunpack.c.l.b16 %v2860
    %v3522 = vunpack.c.h.b16 %v2860
    %v3523 = vunpack.c.l.b16 %v2861
    %v3524 = vunpack.c.h.b16 %v2861
    %v3525 = vunpack.c.l.b16 %v2862
    %v3526 = vunpack.c.h.b16 %v2862
    %v3527 = vunpack.c.l.b16 %v2863
    %v3528 = vunpack.c.h.b16 %v2863
    %v3529 = vunpack.c.l.b16 %v2864
    %v3530 = vunpack.c.h.b16 %v2864
    %v3531 = vunpack.c.l.b16 %v2865
    %v3532 = vunpack.c.h.b16 %v2865
    %v3533 = vunpack.c.l.b16 %v2866
    %v3534 = vunpack.c.h.b16 %v2866
    %v3535 = vunpack.c.l.b16 %v2867
    %v3536 = vunpack.c.h.b16 %v2867
    %v3537 = vunpack.c.l.b16 %v2868
    %v3538 = vunpack.c.h.b16 %v2868
    %v3539 = vunpack.c.l.b16 %v2869
    %v3540 = vunpack.c.h.b16 %v2869
    %v3541 = vunpack.c.l.b16 %v2870
    %v3542 = vunpack.c.h.b16 %v2870
    %v3543 = vunpack.c.l.b16 %v2871
    %v3544 = vunpack.c.h.b16 %v2871
    %v3545 = vunpack.c.l.b16 %v2872
    %v3546 = vunpack.c.h.b16 %v2872
    %v3547 = vunpack.c.l.b16 %v2873
    %v3548 = vunpack.c.h.b16 %v2873
    %v3549 = vunpack.c.l.b16 %v2874
    %v3550 = vunpack.c.h.b16 %v2874
    %v3551 = vunpack.c.l.b16 %v2875
    %v3552 = vunpack.c.h.b16 %v2875
    %v3553 = vunpack.c.l.b16 %v2876
    %v3554 = vunpack.c.h.b16 %v2876
    %v3555 = vunpack.c.l.b16 %v2877
    %v3556 = vunpack.c.h.b16 %v2877
    %v3557 = vunpack.c.l.b16 %v2878
    %v3558 = vunpack.c.h.b16 %v2878
    %v3559 = vunpack.c.l.b16 %v2879
    %v3560 = vunpack.c.h.b16 %v2879
    %v3561 = vunpack.c.l.b16 %v2880
    %v3562 = vunpack.c.h.b16 %v2880
    %v3563 = vunpack.c.l.b16 %v2881
    %v3564 = vunpack.c.h.b16 %v2881
    %v3565 = vunpack.c.l.b16 %v2882
    %v3566 = vunpack.c.h.b16 %v2882
    %v3567 = vunpack.c.l.b16 %v2883
    %v3568 = vunpack.c.h.b16 %v2883
    %v3569 = vunpack.c.l.b16 %v2884
    %v3570 = vunpack.c.h.b16 %v2884
    %v3571 = vunpack.c.l.b16 %v2885
    %v3572 = vunpack.c.h.b16 %v2885
    %v3573 = vunpack.c.l.b16 %v2886
    %v3574 = vunpack.c.h.b16 %v2886
    %v3575 = vunpack.c.l.b16 %v2887
    %v3576 = vunpack.c.h.b16 %v2887
    %v3577 = vunpack.c.l.b16 %v2888
    %v3578 = vunpack.c.h.b16 %v2888
    %v3579 = vunpack.c.l.b16 %v2889
    %v3580 = vunpack.c.h.b16 %v2889
    %v3581 = vunpack.c.l.b16 %v2890
    %v3582 = vunpack.c.h.b16 %v2890
    %v3583 = vunpack.c.l.b16 %v2891
    %v3584 = vunpack.c.h.b16 %v2891
    %v3585 = vunpack.c.l.b16 %v2892
    %v3586 = vunpack.c.h.b16 %v2892
    %v3587 = vunpack.c.l.b16 %v2893
    %v3588 = vunpack.c.h.b16 %v2893
    %v3589 = vunpack.c.l.b16 %v2894
    %v3590 = vunpack.c.h.b16 %v2894
    %v3591 = vunpack.c.l.b16 %v2895
    %v3592 = vunpack.c.h.b16 %v2895
    %v3593 = vunpack.c.l.b16 %v2896
    %v3594 = vunpack.c.h.b16 %v2896
    %v3595 = vunpack.c.l.b16 %v2897
    %v3596 = vunpack.c.h.b16 %v2897
    %v3597 = vunpack.c.l.b16 %v2898
    %v3598 = vunpack.c.h.b16 %v2898
    %v3599 = vunpack.c.l.b16 %v2899
    %v3600 = vunpack.c.h.b16 %v2899
    %v3601 = vunpack.c.l.b16 %v2900
    %v3602 = vunpack.c.h.b16 %v2900
    %v3603 = vunpack.c.l.b16 %v2901
    %v3604 = vunpack.c.h.b16 %v2901
    %v3605 = vunpack.c.l.b16 %v2902
    %v3606 = vunpack.c.h.b16 %v2902
    %v3607 = vunpack.c.l.b16 %v2903
    %v3608 = vunpack.c.h.b16 %v2903
    %v3609 = vunpack.c.l.b16 %v2904
    %v3610 = vunpack.c.h.b16 %v2904
    %v3611 = vunpack.c.l.b16 %v2905
    %v3612 = vunpack.c.h.b16 %v2905
    %v3613 = vunpack.c.l.b16 %v2906
    %v3614 = vunpack.c.h.b16 %v2906
    %v3615 = vunpack.c.l.b16 %v2907
    %v3616 = vunpack.c.h.b16 %v2907
    %v3617 = vunpack.c.l.b16 %v2908
    %v3618 = vunpack.c.h.b16 %v2908
    %v3619 = vunpack.c.l.b16 %v2909
    %v3620 = vunpack.c.h.b16 %v2909
    %v3621 = vunpack.c.l.b16 %v2910
    %v3622 = vunpack.c.h.b16 %v2910
    %v3623 = vunpack.c.l.b16 %v2911
    %v3624 = vunpack.c.h.b16 %v2911
    %v3625 = vunpack.c.l.b16 %v2912
    %v3626 = vunpack.c.h.b16 %v2912
    %v3627 = vunpack.c.l.b16 %v2913
    %v3628 = vunpack.c.h.b16 %v2913
    %v3629 = vunpack.c.l.b16 %v2914
    %v3630 = vunpack.c.h.b16 %v2914
    %v3631 = vunpack.c.l.b16 %v2915
    %v3632 = vunpack.c.h.b16 %v2915
    %v3633 = vunpack.c.l.b16 %v2916
    %v3634 = vunpack.c.h.b16 %v2916
    %v3635 = vunpack.c.l.b16 %v2917
    %v3636 = vunpack.c.h.b16 %v2917
    %v3637 = vunpack.c.l.b16 %v2918
    %v3638 = vunpack.c.h.b16 %v2918
    %v3639 = vunpack.c.l.b16 %v2919
    %v3640 = vunpack.c.h.b16 %v2919
    %v3641 = vunpack.c.l.b16 %v2920
    %v3642 = vunpack.c.h.b16 %v2920
    %v3643 = vunpack.c.l.b16 %v2921
    %v3644 = vunpack.c.h.b16 %v2921
    %v3645 = vunpack.c.l.b16 %v2922
    %v3646 = vunpack.c.h.b16 %v2922
    %v3647 = vunpack.c.l.b16 %v2923
    %v3648 = vunpack.c.h.b16 %v2923
    %v3649 = vunpack.c.l.b16 %v2924
    %v3650 = vunpack.c.h.b16 %v2924
    %v3651 = vunpack.c.l.b16 %v2925
    %v3652 = vunpack.c.h.b16 %v2925
    %v3653 = vunpack.c.l.b16 %v2926
    %v3654 = vunpack.c.h.b16 %v2926
    %v3655 = vunpack.c.l.b16 %v2927
    %v3656 = vunpack.c.h.b16 %v2927
    %v3657 = vunpack.c.l.b16 %v2928
    %v3658 = vunpack.c.h.b16 %v2928
    %v3659 = vunpack.c.l.b16 %v2929
    %v3660 = vunpack.c.h.b16 %v2929
    %v3661 = vunpack.c.l.b16 %v2930
    %v3662 = vunpack.c.h.b16 %v2930
    %v3663 = vunpack.c.l.b16 %v2931
    %v3664 = vunpack.c.h.b16 %v2931
    %v3665 = vunpack.c.l.b16 %v2932
    %v3666 = vunpack.c.h.b16 %v2932
    %v3667 = vunpack.c.l.b16 %v2933
    %v3668 = vunpack.c.h.b16 %v2933
    %v3669 = vunpack.c.l.b16 %v2934
    %v3670 = vunpack.c.h.b16 %v2934
    %v3671 = vunpack.c.l.b16 %v2935
    %v3672 = vunpack.c.h.b16 %v2935
    %v3673 = vunpack.c.l.b16 %v2936
    %v3674 = vunpack.c.h.b16 %v2936
    %v3675 = vunpack.c.l.b16 %v2937
    %v3676 = vunpack.c.h.b16 %v2937
    %v3677 = vunpack.c.l.b16 %v2938
    %v3678 = vunpack.c.h.b16 %v2938
    %v3679 = vunpack.c.l.b16 %v2939
    %v3680 = vunpack.c.h.b16 %v2939
    %v3681 = vunpack.c.l.b16 %v2940
    %v3682 = vunpack.c.h.b16 %v2940
    %v3683 = vunpack.c.l.b16 %v2941
    %v3684 = vunpack.c.h.b16 %v2941
    %v3685 = vunpack.c.l.b16 %v2942
    %v3686 = vunpack.c.h.b16 %v2942
    %v3687 = vunpack.c.l.b16 %v2943
    %v3688 = vunpack.c.h.b16 %v2943
    %v3689 = vunpack.c.l.b16 %v2944
    %v3690 = vunpack.c.h.b16 %v2944
    %v3691 = vunpack.c.l.b16 %v2945
    %v3692 = vunpack.c.h.b16 %v2945
    %v3693 = vunpack.c.l.b16 %v2946
    %v3694 = vunpack.c.h.b16 %v2946
    %v3695 = vunpack.c.l.b16 %v2947
    %v3696 = vunpack.c.h.b16 %v2947
    %v3697 = vunpack.c.l.b16 %v2948
    %v3698 = vunpack.c.h.b16 %v2948
    %v3699 = vunpack.c.l.b16 %v2949
    %v3700 = vunpack.c.h.b16 %v2949
    %v3701 = vunpack.c.l.b16 %v2950
    %v3702 = vunpack.c.h.b16 %v2950
    %v3703 = vunpack.c.l.b16 %v2951
    %v3704 = vunpack.c.h.b16 %v2951
    %v3705 = vunpack.c.l.b16 %v2952
    %v3706 = vunpack.c.h.b16 %v2952
    %v3707 = vunpack.c.l.b16 %v2953
    %v3708 = vunpack.c.h.b16 %v2953
    %v3709 = vunpack.c.l.b16 %v2954
    %v3710 = vunpack.c.h.b16 %v2954
    %v3711 = vunpack.c.l.b16 %v2955
    %v3712 = vunpack.c.h.b16 %v2955
    %v3713 = vunpack.c.l.b16 %v2956
    %v3714 = vunpack.c.h.b16 %v2956
    %v3715 = vunpack.c.l.b16 %v2957
    %v3716 = vunpack.c.h.b16 %v2957
    %v3717 = vunpack.c.l.b16 %v2958
    %v3718 = vunpack.c.h.b16 %v2958
    %v3719 = vunpack.c.l.b16 %v2959
    %v3720 = vunpack.c.h.b16 %v2959
    %v3721 = vunpack.c.l.b16 %v2960
    %v3722 = vunpack.c.h.b16 %v2960
    %v3723 = vunpack.c.l.b16 %v2961
    %v3724 = vunpack.c.h.b16 %v2961
    %v3725 = vunpack.c.l.b16 %v2962
    %v3726 = vunpack.c.h.b16 %v2962
    %v3727 = vunpack.c.l.b16 %v2963
    %v3728 = vunpack.c.h.b16 %v2963
    %v3729 = vunpack.c.l.b16 %v2964
    %v3730 = vunpack.c.h.b16 %v2964
    %v3731 = vunpack.c.l.b16 %v2965
    %v3732 = vunpack.c.h.b16 %v2965
    %v3733 = vunpack.c.l.b16 %v2966
    %v3734 = vunpack.c.h.b16 %v2966
    %v3735 = vunpack.c.l.b16 %v2967
    %v3736 = vunpack.c.h.b16 %v2967
    %v3737 = vunpack.c.l.b16 %v2968
    %v3738 = vunpack.c.h.b16 %v2968
    %v3739 = vunpack.c.l.b16 %v2969
    %v3740 = vunpack.c.h.b16 %v2969
    %v3741 = vunpack.c.l.b16 %v2970
    %v3742 = vunpack.c.h.b16 %v2970
    %v3743 = vunpack.c.l.b16 %v2971
    %v3744 = vunpack.c.h.b16 %v2971
    %v3745 = vunpack.c.l.b16 %v2972
    %v3746 = vunpack.c.h.b16 %v2972
    %v3747 = vunpack.c.l.b16 %v2973
    %v3748 = vunpack.c.h.b16 %v2973
    %v3749 = vunpack.c.l.b16 %v2974
    %v3750 = vunpack.c.h.b16 %v2974
    %v3751 = vunpack.c.l.b16 %v2975
    %v3752 = vunpack.c.h.b16 %v2975
    %v3753 = vunpack.c.l.b16 %v2976
    %v3754 = vunpack.c.h.b16 %v2976
    %v3755 = vunpack.c.l.b16 %v2977
    %v3756 = vunpack.c.h.b16 %v2977
    %v3757 = vunpack.c.l.b16 %v2978
    %v3758 = vunpack.c.h.b16 %v2978
    %v3759 = vunpack.c.l.b16 %v2979
    %v3760 = vunpack.c.h.b16 %v2979
    %v3761 = vunpack.c.l.b16 %v2980
    %v3762 = vunpack.c.h.b16 %v2980
    %v3763 = vunpack.c.l.b16 %v2981
    %v3764 = vunpack.c.h.b16 %v2981
    %v3765 = vunpack.c.l.b16 %v2982
    %v3766 = vunpack.c.h.b16 %v2982
    %v3767 = vunpack.c.l.b16 %v2983
    %v3768 = vunpack.c.h.b16 %v2983
    %v3769 = vunpack.c.l.b16 %v2984
    %v3770 = vunpack.c.h.b16 %v2984
    %v3771 = vunpack.c.l.b16 %v2985
    %v3772 = vunpack.c.h.b16 %v2985
    %v3773 = vunpack.c.l.b16 %v2986
    %v3774 = vunpack.c.h.b16 %v2986
    %v3775 = vunpack.c.l.b16 %v2987
    %v3776 = vunpack.c.h.b16 %v2987
    %v3777 = vunpack.c.l.b16 %v2988
    %v3778 = vunpack.c.h.b16 %v2988
    %v3779 = vunpack.c.l.b16 %v2989
    %v3780 = vunpack.c.h.b16 %v2989
    %v3781 = vunpack.c.l.b16 %v2990
    %v3782 = vunpack.c.h.b16 %v2990
    %v3783 = vunpack.c.l.b16 %v2991
    %v3784 = vunpack.c.h.b16 %v2991
    %v3785 = vunpack.c.l.b16 %v2992
    %v3786 = vunpack.c.h.b16 %v2992
    %v3787 = vunpack.c.l.b16 %v2993
    %v3788 = vunpack.c.h.b16 %v2993
    %v3789 = vunpack.c.l.b16 %v2994
    %v3790 = vunpack.c.h.b16 %v2994
    %v3791 = vunpack.c.l.b16 %v2995
    %v3792 = vunpack.c.h.b16 %v2995
    %v3793 = vunpack.c.l.b16 %v2996
    %v3794 = vunpack.c.h.b16 %v2996
    %v3795 = vunpack.c.l.b16 %v2997
    %v3796 = vunpack.c.h.b16 %v2997
    %v3797 = vunpack.c.l.b16 %v2998
    %v3798 = vunpack.c.h.b16 %v2998
    %v3799 = vunpack.c.l.b16 %v2999
    %v3800 = vunpack.c.h.b16 %v2999
    %v3801 = vunpack.c.l.b16 %v3000
    %v3802 = vunpack.c.h.b16 %v3000
    %v3803 = vunpack.c.l.b16 %v3001
    %v3804 = vunpack.c.h.b16 %v3001
    %v3805 = vunpack.c.l.b16 %v3002
    %v3806 = vunpack.c.h.b16 %v3002
    %v3807 = vunpack.c.l.b16 %v3003
    %v3808 = vunpack.c.h.b16 %v3003
    %v3809 = vunpack.c.l.b16 %v3004
    %v3810 = vunpack.c.h.b16 %v3004
    %v3811 = vunpack.c.l.b16 %v3005
    %v3812 = vunpack.c.h.b16 %v3005
    %v3813 = vunpack.c.l.b16 %v3006
    %v3814 = vunpack.c.h.b16 %v3006
    %v3815 = vunpack.c.l.b16 %v3007
    %v3816 = vunpack.c.h.b16 %v3007
    %v3817 = vunpack.c.l.b16 %v3008
    %v3818 = vunpack.c.h.b16 %v3008
    %v3819 = vunpack.c.l.b16 %v3009
    %v3820 = vunpack.c.h.b16 %v3009
    %v3821 = vunpack.c.l.b16 %v3010
    %v3822 = vunpack.c.h.b16 %v3010
    %v3823 = vunpack.c.l.b16 %v3011
    %v3824 = vunpack.c.h.b16 %v3011
    %v3825 = vunpack.c.l.b16 %v3012
    %v3826 = vunpack.c.h.b16 %v3012
    %v3827 = vunpack.c.l.b16 %v3013
    %v3828 = vunpack.c.h.b16 %v3013
    %v3829 = vunpack.c.l.b16 %v3014
    %v3830 = vunpack.c.h.b16 %v3014
    %v3831 = vunpack.c.l.b16 %v3015
    %v3832 = vunpack.c.h.b16 %v3015
    %v3833 = vunpack.c.l.b16 %v3016
    %v3834 = vunpack.c.h.b16 %v3016
    %v3835 = vunpack.c.l.b16 %v3017
    %v3836 = vunpack.c.h.b16 %v3017
    %v3837 = vunpack.c.l.b16 %v3018
    %v3838 = vunpack.c.h.b16 %v3018
    %v3839 = vunpack.c.l.b16 %v3019
    %v3840 = vunpack.c.h.b16 %v3019
    %v3841 = vunpack.c.l.b16 %v3020
    %v3842 = vunpack.c.h.b16 %v3020
    %v3843 = vunpack.c.l.b16 %v3021
    %v3844 = vunpack.c.h.b16 %v3021
    %v3845 = vunpack.c.l.b16 %v3022
    %v3846 = vunpack.c.h.b16 %v3022
    %v3847 = vunpack.c.l.b16 %v3023
    %v3848 = vunpack.c.h.b16 %v3023
    %v3849 = vunpack.c.l.b16 %v3024
    %v3850 = vunpack.c.h.b16 %v3024
    %v3851 = vunpack.c.l.b16 %v3025
    %v3852 = vunpack.c.h.b16 %v3025
    %v3853 = vunpack.c.l.b16 %v3026
    %v3854 = vunpack.c.h.b16 %v3026
    %v3855 = vunpack.c.l.b16 %v3027
    %v3856 = vunpack.c.h.b16 %v3027
    %v3857 = vunpack.c.l.b16 %v3028
    %v3858 = vunpack.c.h.b16 %v3028
    %v3859 = vunpack.c.l.b16 %v3029
    %v3860 = vunpack.c.h.b16 %v3029
    %v3861 = vunpack.c.l.b16 %v3030
    %v3862 = vunpack.c.h.b16 %v3030
    %v3863 = vunpack.c.l.b16 %v3031
    %v3864 = vunpack.c.h.b16 %v3031
    %v3865 = vunpack.c.l.b16 %v3032
    %v3866 = vunpack.c.h.b16 %v3032
    %v3867 = vunpack.c.l.b16 %v3033
    %v3868 = vunpack.c.h.b16 %v3033
    %v3869 = vunpack.c.l.b16 %v3034
    %v3870 = vunpack.c.h.b16 %v3034
    %v3871 = vunpack.c.l.b16 %v3035
    %v3872 = vunpack.c.h.b16 %v3035
    %v3873 = vunpack.c.l.b16 %v3036
    %v3874 = vunpack.c.h.b16 %v3036
    %v3875 = vunpack.c.l.b16 %v3037
    %v3876 = vunpack.c.h.b16 %v3037
    %v3877 = vunpack.c.l.b16 %v3038
    %v3878 = vunpack.c.h.b16 %v3038
    %v3879 = vunpack.c.l.b16 %v3039
    %v3880 = vunpack.c.h.b16 %v3039
    %v3881 = vunpack.c.l.b16 %v3040
    %v3882 = vunpack.c.h.b16 %v3040
    %v3883 = vunpack.c.l.b16 %v3041
    %v3884 = vunpack.c.h.b16 %v3041
    %v3885 = vunpack.c.l.b16 %v3042
    %v3886 = vunpack.c.h.b16 %v3042
    %v3887 = vunpack.c.l.b16 %v3043
    %v3888 = vunpack.c.h.b16 %v3043
    %v3889 = vunpack.c.l.b16 %v3044
    %v3890 = vunpack.c.h.b16 %v3044
    %v3891 = vunpack.c.l.b16 %v3045
    %v3892 = vunpack.c.h.b16 %v3045
    %v3893 = vunpack.c.l.b16 %v3046
    %v3894 = vunpack.c.h.b16 %v3046
    %v3895 = vunpack.c.l.b16 %v3047
    %v3896 = vunpack.c.h.b16 %v3047
    %v3897 = vunpack.c.l.b16 %v3048
    %v3898 = vunpack.c.h.b16 %v3048
    %v3899 = vunpack.c.l.b16 %v3049
    %v3900 = vunpack.c.h.b16 %v3049
    %v3901 = vunpack.c.l.b16 %v3050
    %v3902 = vunpack.c.h.b16 %v3050
    %v3903 = vunpack.c.l.b16 %v3051
    %v3904 = vunpack.c.h.b16 %v3051
    %v3905 = vunpack.c.l.b16 %v3052
    %v3906 = vunpack.c.h.b16 %v3052
    %v3907 = vunpack.c.l.b16 %v3053
    %v3908 = vunpack.c.h.b16 %v3053
    %v3909 = vunpack.c.l.b16 %v3054
    %v3910 = vunpack.c.h.b16 %v3054
    %v3911 = vunpack.c.l.b16 %v3055
    %v3912 = vunpack.c.h.b16 %v3055
    %v3913 = vunpack.c.l.b16 %v3056
    %v3914 = vunpack.c.h.b16 %v3056
    %v3915 = vunpack.c.l.b16 %v3057
    %v3916 = vunpack.c.h.b16 %v3057
    %v3917 = vunpack.c.l.b16 %v3058
    %v3918 = vunpack.c.h.b16 %v3058
    %v3919 = vunpack.c.l.b16 %v3059
    %v3920 = vunpack.c.h.b16 %v3059
    %v3921 = vunpack.c.l.b16 %v3060
    %v3922 = vunpack.c.h.b16 %v3060
    %v3923 = vunpack.c.l.b16 %v3061
    %v3924 = vunpack.c.h.b16 %v3061
    %v3925 = vunpack.c.l.b16 %v3062
    %v3926 = vunpack.c.h.b16 %v3062
    %v3927 = vunpack.c.l.b16 %v3063
    %v3928 = vunpack.c.h.b16 %v3063
    %v3929 = vunpack.c.l.b16 %v3064
    %v3930 = vunpack.c.h.b16 %v3064
    %v3931 = vunpack.c.l.b16 %v3065
    %v3932 = vunpack.c.h.b16 %v3065
    %v3933 = vunpack.c.l.b16 %v3066
    %v3934 = vunpack.c.h.b16 %v3066
    %v3935 = vunpack.c.l.b16 %v3067
    %v3936 = vunpack.c.h.b16 %v3067
    %v3937 = vunpack.c.l.b16 %v3068
    %v3938 = vunpack.c.h.b16 %v3068
    %v3939 = vunpack.c.l.b16 %v3069
    %v3940 = vunpack.c.h.b16 %v3069
    %v3941 = vunpack.c.l.b16 %v3070
    %v3942 = vunpack.c.h.b16 %v3070
    %v3943 = vunpack.c.l.b16 %v3071
    %v3944 = vunpack.c.h.b16 %v3071
    %v3945 = vunpack.c.l.b16 %v3072
    %v3946 = vunpack.c.h.b16 %v3072
    %v3947 = vunpack.c.l.b16 %v3073
    %v3948 = vunpack.c.h.b16 %v3073
    %v3949 = vunpack.c.l.b16 %v3074
    %v3950 = vunpack.c.h.b16 %v3074
    %v3951 = vunpack.c.l.b16 %v3075
    %v3952 = vunpack.c.h.b16 %v3075
    %v3953 = vunpack.c.l.b16 %v3076
    %v3954 = vunpack.c.h.b16 %v3076
    %v3955 = vunpack.c.l.b16 %v3077
    %v3956 = vunpack.c.h.b16 %v3077
    %v3957 = vunpack.c.l.b16 %v3078
    %v3958 = vunpack.c.h.b16 %v3078
    %v3959 = vpack.c.b16 %v3385, %v3383
    %v3960 = vpack.c.b16 %v3386, %v3384
    %v3961 = vpack.c.b16 %v3389, %v3387
    %v3962 = vpack.c.b16 %v3390, %v3388
    %v3963 = vpack.c.b16 %v3393, %v3391
    %v3964 = vpack.c.b16 %v3394, %v3392
    %v3965 = vpack.c.b16 %v3397, %v3395
    %v3966 = vpack.c.b16 %v3398, %v3396
    %v3967 = vpack.c.b16 %v3401, %v3399
    %v3968 = vpack.c.b16 %v3402, %v3400
    %v3969 = vpack.c.b16 %v3405, %v3403
    %v3970 = vpack.c.b16 %v3406, %v3404
    %v3971 = vpack.c.b16 %v3409, %v3407
    %v3972 = vpack.c.b16 %v3410, %v3408
    %v3973 = vpack.c.b16 %v3413, %v3411
    %v3974 = vpack.c.b16 %v3414, %v3412
    %v3975 = vpack.c.b16 %v3417, %v3415
    %v3976 = vpack.c.b16 %v3418, %v3416
    %v3977 = vpack.c.b16 %v3421, %v3419
    %v3978 = vpack.c.b16 %v3422, %v3420
    %v3979 = vpack.c.b16 %v3425, %v3423
    %v3980 = vpack.c.b16 %v3426, %v3424
    %v3981 = vpack.c.b16 %v3429, %v3427
    %v3982 = vpack.c.b16 %v3430, %v3428
    %v3983 = vpack.c.b16 %v3433, %v3431
    %v3984 = vpack.c.b16 %v3434, %v3432
    %v3985 = vpack.c.b16 %v3437, %v3435
    %v3986 = vpack.c.b16 %v3438, %v3436
    %v3987 = vpack.c.b16 %v3441, %v3439
    %v3988 = vpack.c.b16 %v3442, %v3440
    %v3989 = vpack.c.b16 %v3445, %v3443
    %v3990 = vpack.c.b16 %v3446, %v3444
    %v3991 = vpack.c.b16 %v3449, %v3447
    %v3992 = vpack.c.b16 %v3450, %v3448
    %v3993 = vpack.c.b16 %v3453, %v3451
    %v3994 = vpack.c.b16 %v3454, %v3452
    %v3995 = vpack.c.b16 %v3457, %v3455
    %v3996 = vpack.c.b16 %v3458, %v3456
    %v3997 = vpack.c.b16 %v3461, %v3459
    %v3998 = vpack.c.b16 %v3462, %v3460
    %v3999 = vpack.c.b16 %v3465, %v3463
    %v4000 = vpack.c.b16 %v3466, %v3464
    %v4001 = vpack.c.b16 %v3469, %v3467
    %v4002 = vpack.c.b16 %v3470, %v3468
    %v4003 = vpack.c.b16 %v3473, %v3471
    %v4004 = vpack.c.b16 %v3474, %v3472
    %v4005 = vpack.c.b16 %v3477, %v3475
    %v4006 = vpack.c.b16 %v3478, %v3476
    %v4007 = vpack.c.b16 %v3481, %v3479
    %v4008 = vpack.c.b16 %v3482, %v3480
    %v4009 = vpack.c.b16 %v3485, %v3483
    %v4010 = vpack.c.b16 %v3486, %v3484
    %v4011 = vpack.c.b16 %v3489, %v3487
    %v4012 = vpack.c.b16 %v3490, %v3488
    %v4013 = vpack.c.b16 %v3493, %v3491
    %v4014 = vpack.c.b16 %v3494, %v3492
    %v4015 = vpack.c.b16 %v3497, %v3495
    %v4016 = vpack.c.b16 %v3498, %v3496
    %v4017 = vpack.c.b16 %v3501, %v3499
    %v4018 = vpack.c.b16 %v3502, %v3500
    %v4019 = vpack.c.b16 %v3505, %v3503
    %v4020 = vpack.c.b16 %v3506, %v3504
    %v4021 = vpack.c.b16 %v3509, %v3507
    %v4022 = vpack.c.b16 %v3510, %v3508
    %v4023 = vpack.c.b16 %v3513, %v3511
    %v4024 = vpack.c.b16 %v3514, %v3512
    %v4025 = vpack.c.b16 %v3517, %v3515
    %v4026 = vpack.c.b16 %v3518, %v3516
    %v4027 = vpack.c.b16 %v3521, %v3519
    %v4028 = vpack.c.b16 %v3522, %v3520
    %v4029 = vpack.c.b16 %v3525, %v3523
    %v4030 = vpack.c.b16 %v3526, %v3524
    %v4031 = vpack.c.b16 %v3529, %v3527
    %v4032 = vpack.c.b16 %v3530, %v3528
    %v4033 = vpack.c.b16 %v3533, %v3531
    %v4034 = vpack.c.b16 %v3534, %v3532
    %v4035 = vpack.c.b16 %v3537, %v3535
    %v4036 = vpack.c.b16 %v3538, %v3536
    %v4037 = vpack.c.b16 %v3541, %v3539
    %v4038 = vpack.c.b16 %v3542, %v3540
    %v4039 = vpack.c.b16 %v3545, %v3543
    %v4040 = vpack.c.b16 %v3546, %v3544
    %v4041 = vpack.c.b16 %v3549, %v3547
    %v4042 = vpack.c.b16 %v3550, %v3548
    %v4043 = vpack.c.b16 %v3553, %v3551
    %v4044 = vpack.c.b16 %v3554, %v3552
    %v4045 = vpack.c.b16 %v3557, %v3555
    %v4046 = vpack.c.b16 %v3558, %v3556
    %v4047 = vpack.c.b16 %v3561, %v3559
    %v4048 = vpack.c.b16 %v3562, %v3560
    %v4049 = vpack.c.b16 %v3565, %v3563
    %v4050 = vpack.c.b16 %v3566, %v3564
    %v4051 = vpack.c.b16 %v3569, %v3567
    %v4052 = vpack.c.b16 %v3570, %v3568
    %v4053 = vpack.c.b16 %v3573, %v3571
    %v4054 = vpack.c.b16 %v3574, %v3572
    %v4055 = vpack.c.b16 %v3577, %v3575
    %v4056 = vpack.c.b16 %v3578, %v3576
    %v4057 = vpack.c.b16 %v3581, %v3579
    %v4058 = vpack.c.b16 %v3582, %v3580
    %v4059 = vpack.c.b16 %v3585, %v3583
    %v4060 = vpack.c.b16 %v3586, %v3584
    %v4061 = vpack.c.b16 %v3589, %v3587
    %v4062 = vpack.c.b16 %v3590, %v3588
    %v4063 = vpack.c.b16 %v3593, %v3591
    %v4064 = vpack.c.b16 %v3594, %v3592
    %v4065 = vpack.c.b16 %v3597, %v3595
    %v4066 = vpack.c.b16 %v3598, %v3596
    %v4067 = vpack.c.b16 %v3601, %v3599
    %v4068 = vpack.c.b16 %v3602, %v3600
    %v4069 = vpack.c.b16 %v3605, %v3603
    %v4070 = vpack.c.b16 %v3606, %v3604
    %v4071 = vpack.c.b16 %v3609, %v3607
    %v4072 = vpack.c.b16 %v3610, %v3608
    %v4073 = vpack.c.b16 %v3613, %v3611
    %v4074 = vpack.c.b16 %v3614, %v3612
    %v4075 = vpack.c.b16 %v3617, %v3615
    %v4076 = vpack.c.b16 %v3618, %v3616
    %v4077 = vpack.c.b16 %v3621, %v3619
    %v4078 = vpack.c.b16 %v3622, %v3620
    %v4079 = vpack.c.b16 %v3625, %v3623
    %v4080 = vpack.c.b16 %v3626, %v3624
    %v4081 = vpack.c.b16 %v3629, %v3627
    %v4082 = vpack.c.b16 %v3630, %v3628
    %v4083 = vpack.c.b16 %v3633, %v3631
    %v4084 = vpack.c.b16 %v3634, %v3632
    %v4085 = vpack.c.b16 %v3637, %v3635
    %v4086 = vpack.c.b16 %v3638, %v3636
    %v4087 = vpack.c.b16 %v3641, %v3639
    %v4088 = vpack.c.b16 %v3642, %v3640
    %v4089 = vpack.c.b16 %v3645, %v3643
    %v4090 = vpack.c.b16 %v3646, %v3644
    %v4091 = vpack.c.b16 %v3649, %v3647
    %v4092 = vpack.c.b16 %v3650, %v3648
    %v4093 = vpack.c.b16 %v3653, %v3651
    %v4094 = vpack.c.b16 %v3654, %v3652
    %v4095 = vpack.c.b16 %v3657, %v3655
    %v4096 = vpack.c.b16 %v3658, %v3656
    %v4097 = vpack.c.b16 %v3661, %v3659
    %v4098 = vpack.c.b16 %v3662, %v3660
    %v4099 = vpack.c.b16 %v3665, %v3663
    %v4100 = vpack.c.b16 %v3666, %v3664
    %v4101 = vpack.c.b16 %v3669, %v3667
    %v4102 = vpack.c.b16 %v3670, %v3668
    %v4103 = vpack.c.b16 %v3673, %v3671
    %v4104 = vpack.c.b16 %v3674, %v3672
    %v4105 = vpack.c.b16 %v3677, %v3675
    %v4106 = vpack.c.b16 %v3678, %v3676
    %v4107 = vpack.c.b16 %v3681, %v3679
    %v4108 = vpack.c.b16 %v3682, %v3680
    %v4109 = vpack.c.b16 %v3685, %v3683
    %v4110 = vpack.c.b16 %v3686, %v3684
    %v4111 = vpack.c.b16 %v3689, %v3687
    %v4112 = vpack.c.b16 %v3690, %v3688
    %v4113 = vpack.c.b16 %v3693, %v3691
    %v4114 = vpack.c.b16 %v3694, %v3692
    %v4115 = vpack.c.b16 %v3697, %v3695
    %v4116 = vpack.c.b16 %v3698, %v3696
    %v4117 = vpack.c.b16 %v3701, %v3699
    %v4118 = vpack.c.b16 %v3702, %v3700
    %v4119 = vpack.c.b16 %v3705, %v3703
    %v4120 = vpack.c.b16 %v3706, %v3704
    %v4121 = vpack.c.b16 %v3709, %v3707
    %v4122 = vpack.c.b16 %v3710, %v3708
    %v4123 = vpack.c.b16 %v3713, %v3711
    %v4124 = vpack.c.b16 %v3714, %v3712
    %v4125 = vpack.c.b16 %v3717, %v3715
    %v4126 = vpack.c.b16 %v3718, %v3716
    %v4127 = vpack.c.b16 %v3721, %v3719
    %v4128 = vpack.c.b16 %v3722, %v3720
    %v4129 = vpack.c.b16 %v3725, %v3723
    %v4130 = vpack.c.b16 %v3726, %v3724
    %v4131 = vpack.c.b16 %v3729, %v3727
    %v4132 = vpack.c.b16 %v3730, %v3728
    %v4133 = vpack.c.b16 %v3733, %v3731
    %v4134 = vpack.c.b16 %v3734, %v3732
    %v4135 = vpack.c.b16 %v3737, %v3735
    %v4136 = vpack.c.b16 %v3738, %v3736
    %v4137 = vpack.c.b16 %v3741, %v3739
    %v4138 = vpack.c.b16 %v3742, %v3740
    %v4139 = vpack.c.b16 %v3745, %v3743
    %v4140 = vpack.c.b16 %v3746, %v3744
    %v4141 = vpack.c.b16 %v3749, %v3747
    %v4142 = vpack.c.b16 %v3750, %v3748
    %v4143 = vpack.c.b16 %v3753, %v3751
    %v4144 = vpack.c.b16 %v3754, %v3752
    %v4145 = vpack.c.b16 %v3757, %v3755
    %v4146 = vpack.c.b16 %v3758, %v3756
    %v4147 = vpack.c.b16 %v3761, %v3759
    %v4148 = vpack.c.b16 %v3762, %v3760
    %v4149 = vpack.c.b16 %v3765, %v3763
    %v4150 = vpack.c.b16 %v3766, %v3764
    %v4151 = vpack.c.b16 %v3769, %v3767
    %v4152 = vpack.c.b16 %v3770, %v3768
    %v4153 = vpack.c.b16 %v3773, %v3771
    %v4154 = vpack.c.b16 %v3774, %v3772
    %v4155 = vpack.c.b16 %v3777, %v3775
    %v4156 = vpack.c.b16 %v3778, %v3776
    %v4157 = vpack.c.b16 %v3781, %v3779
    %v4158 = vpack.c.b16 %v3782, %v3780
    %v4159 = vpack.c.b16 %v3785, %v3783
    %v4160 = vpack.c.b16 %v3786, %v3784
    %v4161 = vpack.c.b16 %v3789, %v3787
    %v4162 = vpack.c.b16 %v3790, %v3788
    %v4163 = vpack.c.b16 %v3793, %v3791
    %v4164 = vpack.c.b16 %v3794, %v3792
    %v4165 = vpack.c.b16 %v3797, %v3795
    %v4166 = vpack.c.b16 %v3798, %v3796
    %v4167 = vpack.c.b16 %v3801, %v3799
    %v4168 = vpack.c.b16 %v3802, %v3800
    %v4169 = vpack.c.b16 %v3805, %v3803
    %v4170 = vpack.c.b16 %v3806, %v3804
    %v4171 = vpack.c.b16 %v3809, %v3807
    %v4172 = vpack.c.b16 %v3810, %v3808
    %v4173 = vpack.c.b16 %v3813, %v3811
    %v4174 = vpack.c.b16 %v3814, %v3812
    %v4175 = vpack.c.b16 %v3817, %v3815
    %v4176 = vpack.c.b16 %v3818, %v3816
    %v4177 = vpack.c.b16 %v3821, %v3819
    %v4178 = vpack.c.b16 %v3822, %v3820
    %v4179 = vpack.c.b16 %v3825, %v3823
    %v4180 = vpack.c.b16 %v3826, %v3824
    %v4181 = vpack.c.b16 %v3829, %v3827
    %v4182 = vpack.c.b16 %v3830, %v3828
    %v4183 = vpack.c.b16 %v3833, %v3831
    %v4184 = vpack.c.b16 %v3834, %v3832
    %v4185 = vpack.c.b16 %v3837, %v3835
    %v4186 = vpack.c.b16 %v3838, %v3836
    %v4187 = vpack.c.b16 %v3841, %v3839
    %v4188 = vpack.c.b16 %v3842, %v3840
    %v4189 = vpack.c.b16 %v3845, %v3843
    %v4190 = vpack.c.b16 %v3846, %v3844
    %v4191 = vpack.c.b16 %v3849, %v3847
    %v4192 = vpack.c.b16 %v3850, %v3848
    %v4193 = vpack.c.b16 %v3853, %v3851
    %v4194 = vpack.c.b16 %v3854, %v3852
    %v4195 = vpack.c.b16 %v3857, %v3855
    %v4196 = vpack.c.b16 %v3858, %v3856
    %v4197 = vpack.c.b16 %v3861, %v3859
    %v4198 = vpack.c.b16 %v3862, %v3860
    %v4199 = vpack.c.b16 %v3865, %v3863
    %v4200 = vpack.c.b16 %v3866, %v3864
    %v4201 = vpack.c.b16 %v3869, %v3867
    %v4202 = vpack.c.b16 %v3870, %v3868
    %v4203 = vpack.c.b16 %v3873, %v3871
    %v4204 = vpack.c.b16 %v3874, %v3872
    %v4205 = vpack.c.b16 %v3877, %v3875
    %v4206 = vpack.c.b16 %v3878, %v3876
    %v4207 = vpack.c.b16 %v3881, %v3879
    %v4208 = vpack.c.b16 %v3882, %v3880
    %v4209 = vpack.c.b16 %v3885, %v3883
    %v4210 = vpack.c.b16 %v3886, %v3884
    %v4211 = vpack.c.b16 %v3889, %v3887
    %v4212 = vpack.c.b16 %v3890, %v3888
    %v4213 = vpack.c.b16 %v3893, %v3891
    %v4214 = vpack.c.b16 %v3894, %v3892
    %v4215 = vpack.c.b16 %v3897, %v3895
    %v4216 = vpack.c.b16 %v3898, %v3896
    %v4217 = vpack.c.b16 %v3901, %v3899
    %v4218 = vpack.c.b16 %v3902, %v3900
    %v4219 = vpack.c.b16 %v3905, %v3903
    %v4220 = vpack.c.b16 %v3906, %v3904
    %v4221 = vpack.c.b16 %v3909, %v3907
    %v4222 = vpack.c.b16 %v3910, %v3908
    %v4223 = vpack.c.b16 %v3913, %v3911
    %v4224 = vpack.c.b16 %v3914, %v3912
    %v4225 = vpack.c.b16 %v3917, %v3915
    %v4226 = vpack.c.b16 %v3918, %v3916
    %v4227 = vpack.c.b16 %v3921, %v3919
    %v4228 = vpack.c.b16 %v3922, %v3920
    %v4229 = vpack.c.b16 %v3925, %v3923
    %v4230 = vpack.c.b16 %v3926, %v3924
    %v4231 = vpack.c.b16 %v3929, %v3927
    %v4232 = vpack.c.b16 %v3930, %v3928
    %v4233 = vpack.c.b16 %v3933, %v3931
    %v4234 = vpack.c.b16 %v3934, %v3932
    %v4235 = vpack.c.b16 %v3937, %v3935
    %v4236 = vpack.c.b16 %v3938, %v3936
    %v4237 = vpack.c.b16 %v3941, %v3939
    %v4238 = vpack.c.b16 %v3942, %v3940
    %v4239 = vpack.c.b16 %v3945, %v3943
    %v4240 = vpack.c.b16 %v3946, %v3944
    %v4241 = vpack.c.b16 %v3949, %v3947
    %v4242 = vpack.c.b16 %v3950, %v3948
    %v4243 = vpack.c.b16 %v3953, %v3951
    %v4244 = vpack.c.b16 %v3954, %v3952
    %v4245 = vpack.c.b16 %v3957, %v3955
    %v4246 = vpack.c.b16 %v3958, %v3956
    %4535 = vmatprep.subr.bf16.mxu0 0
    %4536 = vmatpush1.bf16.msra.mxu0 %v3086
    %4537 = vmatprep.subr.bf16.mxu0 0
    %4538 = vmatpush1.bf16.msra.mxu0 %v3085
    %4539 = vmatprep.subr.bf16.mxu0 0
    %4540 = vmatpush1.bf16.msra.mxu0 %v3084
    %4541 = vmatprep.subr.bf16.mxu0 0
    %4542 = vmatpush1.bf16.msra.mxu0 %v3083
    %4543 = vmatprep.subr.bf16.mxu0 0
    %4544 = vmatpush1.bf16.msra.mxu0 %v3082
    %4545 = vmatprep.subr.bf16.mxu0 0
    %4546 = vmatpush1.bf16.msra.mxu0 %v3081
    %4547 = vmatprep.subr.bf16.mxu0 0
    %4548 = vmatpush1.bf16.msra.mxu0 %v3080
    %4549 = vmatprep.subr.bf16.mxu0 0
    %4550 = vmatpush1.bf16.msra.mxu0 %v3079
    %4551 = vmatprep.subr.bf16.mxu0 0
    %4552 = vmatpush2.bf16.msra.mxu0 %v3094
    %4553 = vmatprep.subr.bf16.mxu0 0
    %4554 = vmatpush2.bf16.msra.mxu0 %v3093
    %4555 = vmatprep.subr.bf16.mxu0 0
    %4556 = vmatpush2.bf16.msra.mxu0 %v3092
    %4557 = vmatprep.subr.bf16.mxu0 0
    %4558 = vmatpush2.bf16.msra.mxu0 %v3091
    %4559 = vmatprep.subr.bf16.mxu0 0
    %4560 = vmatpush2.bf16.msra.mxu0 %v3090
    %4561 = vmatprep.subr.bf16.mxu0 0
    %4562 = vmatpush2.bf16.msra.mxu0 %v3089
    %4563 = vmatprep.subr.bf16.mxu0 0
    %4564 = vmatpush2.bf16.msra.mxu0 %v3088
    %4565 = vmatprep.subr.bf16.mxu0 0
    %4566 = vmatpush2.bf16.msra.mxu0 %v3087
    %4567 = vmatprep.mubr.bf16.mxu0 %v3960
    %4568 = vmatmul.mubr.bf16.gmra.mxu0 %v3959
    %v4569 = vpop.f32.mrf.mxu0
    %v4570 = vadd.f32 0.0, %v4569
    %v4571 = vpop.f32.mrf.mxu0
    %v4572 = vpop.f32.mrf.mxu0
    %v4573 = vadd.f32 0.0, %v4572
    %v4574 = vpop.f32.mrf.mxu0
    %4575 = vmatprep.mubr.bf16.mxu0 %v3962
    %4576 = vmatmul.mubr.bf16.gmra.mxu0 %v3961
    %v4577 = vpop.f32.mrf.mxu0
    %v4578 = vadd.f32 0.0, %v4577
    %v4579 = vpop.f32.mrf.mxu0
    %v4580 = vpop.f32.mrf.mxu0
    %v4581 = vadd.f32 0.0, %v4580
    %v4582 = vpop.f32.mrf.mxu0
    %4583 = vmatprep.mubr.bf16.mxu0 %v3964
    %4584 = vmatmul.mubr.bf16.gmra.mxu0 %v3963
    %v4585 = vpop.f32.mrf.mxu0
    %v4586 = vadd.f32 0.0, %v4585
    %v4587 = vpop.f32.mrf.mxu0
    %v4588 = vpop.f32.mrf.mxu0
    %v4589 = vadd.f32 0.0, %v4588
    %v4590 = vpop.f32.mrf.mxu0
    %4591 = vmatprep.mubr.bf16.mxu0 %v3966
    %4592 = vmatmul.mubr.bf16.gmra.mxu0 %v3965
    %v4593 = vpop.f32.mrf.mxu0
    %v4594 = vadd.f32 0.0, %v4593
    %v4595 = vpop.f32.mrf.mxu0
    %v4596 = vpop.f32.mrf.mxu0
    %v4597 = vadd.f32 0.0, %v4596
    %v4598 = vpop.f32.mrf.mxu0
    %4599 = vmatprep.mubr.bf16.mxu0 %v3968
    %4600 = vmatmul.mubr.bf16.gmra.mxu0 %v3967
    %v4601 = vpop.f32.mrf.mxu0
    %v4602 = vadd.f32 0.0, %v4601
    %v4603 = vpop.f32.mrf.mxu0
    %v4604 = vpop.f32.mrf.mxu0
    %v4605 = vadd.f32 0.0, %v4604
    %v4606 = vpop.f32.mrf.mxu0
    %4607 = vmatprep.mubr.bf16.mxu0 %v3970
    %4608 = vmatmul.mubr.bf16.gmra.mxu0 %v3969
    %v4609 = vpop.f32.mrf.mxu0
    %v4610 = vadd.f32 0.0, %v4609
    %v4611 = vpop.f32.mrf.mxu0
    %v4612 = vpop.f32.mrf.mxu0
    %v4613 = vadd.f32 0.0, %v4612
    %v4614 = vpop.f32.mrf.mxu0
    %4615 = vmatprep.mubr.bf16.mxu0 %v3972
    %4616 = vmatmul.mubr.bf16.gmra.mxu0 %v3971
    %v4617 = vpop.f32.mrf.mxu0
    %v4618 = vadd.f32 0.0, %v4617
    %v4619 = vpop.f32.mrf.mxu0
    %v4620 = vpop.f32.mrf.mxu0
    %v4621 = vadd.f32 0.0, %v4620
    %v4622 = vpop.f32.mrf.mxu0
    %4623 = vmatprep.mubr.bf16.mxu0 %v3974
    %4624 = vmatmul.mubr.bf16.gmra.mxu0 %v3973
    %v4625 = vpop.f32.mrf.mxu0
    %v4626 = vadd.f32 0.0, %v4625
    %v4627 = vpop.f32.mrf.mxu0
    %v4628 = vpop.f32.mrf.mxu0
    %v4629 = vadd.f32 0.0, %v4628
    %v4630 = vpop.f32.mrf.mxu0
    %4631 = vmatprep.mubr.bf16.mxu0 %v3976
    %4632 = vmatmul.mubr.bf16.gmra.mxu0 %v3975
    %v4633 = vpop.f32.mrf.mxu0
    %v4634 = vadd.f32 0.0, %v4633
    %v4635 = vpop.f32.mrf.mxu0
    %v4636 = vpop.f32.mrf.mxu0
    %v4637 = vadd.f32 0.0, %v4636
    %v4638 = vpop.f32.mrf.mxu0
    %4639 = vmatprep.mubr.bf16.mxu0 %v3978
    %4640 = vmatmul.mubr.bf16.gmra.mxu0 %v3977
    %v4641 = vpop.f32.mrf.mxu0
    %v4642 = vadd.f32 0.0, %v4641
    %v4643 = vpop.f32.mrf.mxu0
    %v4644 = vpop.f32.mrf.mxu0
    %v4645 = vadd.f32 0.0, %v4644
    %v4646 = vpop.f32.mrf.mxu0
    %4647 = vmatprep.mubr.bf16.mxu0 %v3980
    %4648 = vmatmul.mubr.bf16.gmra.mxu0 %v3979
    %v4649 = vpop.f32.mrf.mxu0
    %v4650 = vadd.f32 0.0, %v4649
    %v4651 = vpop.f32.mrf.mxu0
    %v4652 = vpop.f32.mrf.mxu0
    %v4653 = vadd.f32 0.0, %v4652
    %v4654 = vpop.f32.mrf.mxu0
    %4655 = vmatprep.mubr.bf16.mxu0 %v3982
    %4656 = vmatmul.mubr.bf16.gmra.mxu0 %v3981
    %v4657 = vpop.f32.mrf.mxu0
    %v4658 = vadd.f32 0.0, %v4657
    %v4659 = vpop.f32.mrf.mxu0
    %v4660 = vpop.f32.mrf.mxu0
    %v4661 = vadd.f32 0.0, %v4660
    %v4662 = vpop.f32.mrf.mxu0
    %4663 = vmatprep.mubr.bf16.mxu0 %v3984
    %4664 = vmatmul.mubr.bf16.gmra.mxu0 %v3983
    %v4665 = vpop.f32.mrf.mxu0
    %v4666 = vadd.f32 0.0, %v4665
    %v4667 = vpop.f32.mrf.mxu0
    %v4668 = vpop.f32.mrf.mxu0
    %v4669 = vadd.f32 0.0, %v4668
    %v4670 = vpop.f32.mrf.mxu0
    %4671 = vmatprep.mubr.bf16.mxu0 %v3986
    %4672 = vmatmul.mubr.bf16.gmra.mxu0 %v3985
    %v4673 = vpop.f32.mrf.mxu0
    %v4674 = vadd.f32 0.0, %v4673
    %v4675 = vpop.f32.mrf.mxu0
    %v4676 = vpop.f32.mrf.mxu0
    %v4677 = vadd.f32 0.0, %v4676
    %v4678 = vpop.f32.mrf.mxu0
    %4679 = vmatprep.mubr.bf16.mxu0 %v3988
    %4680 = vmatmul.mubr.bf16.gmra.mxu0 %v3987
    %v4681 = vpop.f32.mrf.mxu0
    %v4682 = vadd.f32 0.0, %v4681
    %v4683 = vpop.f32.mrf.mxu0
    %v4684 = vpop.f32.mrf.mxu0
    %v4685 = vadd.f32 0.0, %v4684
    %v4686 = vpop.f32.mrf.mxu0
    %4687 = vmatprep.mubr.bf16.mxu0 %v3990
    %4688 = vmatmul.mubr.bf16.gmra.mxu0 %v3989
    %v4689 = vpop.f32.mrf.mxu0
    %v4690 = vadd.f32 0.0, %v4689
    %v4691 = vpop.f32.mrf.mxu0
    %v4692 = vpop.f32.mrf.mxu0
    %v4693 = vadd.f32 0.0, %v4692
    %v4694 = vpop.f32.mrf.mxu0
    %4695 = vmatprep.mubr.bf16.mxu0 %v3992
    %4696 = vmatmul.mubr.bf16.gmra.mxu0 %v3991
    %v4697 = vpop.f32.mrf.mxu0
    %v4698 = vadd.f32 0.0, %v4697
    %v4699 = vpop.f32.mrf.mxu0
    %v4700 = vpop.f32.mrf.mxu0
    %v4701 = vadd.f32 0.0, %v4700
    %v4702 = vpop.f32.mrf.mxu0
    %4703 = vmatprep.mubr.bf16.mxu0 %v3994
    %4704 = vmatmul.mubr.bf16.gmra.mxu0 %v3993
    %v4705 = vpop.f32.mrf.mxu0
    %v4706 = vadd.f32 0.0, %v4705
    %v4707 = vpop.f32.mrf.mxu0
    %v4708 = vpop.f32.mrf.mxu0
    %v4709 = vadd.f32 0.0, %v4708
    %v4710 = vpop.f32.mrf.mxu0
    %4711 = vmatprep.mubr.bf16.mxu0 %v3996
    %4712 = vmatmul.mubr.bf16.gmra.mxu0 %v3995
    %v4713 = vpop.f32.mrf.mxu0
    %v4714 = vadd.f32 0.0, %v4713
    %v4715 = vpop.f32.mrf.mxu0
    %v4716 = vpop.f32.mrf.mxu0
    %v4717 = vadd.f32 0.0, %v4716
    %v4718 = vpop.f32.mrf.mxu0
    %4719 = vmatprep.mubr.bf16.mxu0 %v3998
    %4720 = vmatmul.mubr.bf16.gmra.mxu0 %v3997
    %v4721 = vpop.f32.mrf.mxu0
    %v4722 = vadd.f32 0.0, %v4721
    %v4723 = vpop.f32.mrf.mxu0
    %v4724 = vpop.f32.mrf.mxu0
    %v4725 = vadd.f32 0.0, %v4724
    %v4726 = vpop.f32.mrf.mxu0
    %4727 = vmatprep.mubr.bf16.mxu0 %v4000
    %4728 = vmatmul.mubr.bf16.gmra.mxu0 %v3999
    %v4729 = vpop.f32.mrf.mxu0
    %v4730 = vadd.f32 0.0, %v4729
    %v4731 = vpop.f32.mrf.mxu0
    %v4732 = vpop.f32.mrf.mxu0
    %v4733 = vadd.f32 0.0, %v4732
    %v4734 = vpop.f32.mrf.mxu0
    %4735 = vmatprep.mubr.bf16.mxu0 %v4002
    %4736 = vmatmul.mubr.bf16.gmra.mxu0 %v4001
    %v4737 = vpop.f32.mrf.mxu0
    %v4738 = vadd.f32 0.0, %v4737
    %v4739 = vpop.f32.mrf.mxu0
    %v4740 = vpop.f32.mrf.mxu0
    %v4741 = vadd.f32 0.0, %v4740
    %v4742 = vpop.f32.mrf.mxu0
    %4743 = vmatprep.mubr.bf16.mxu0 %v4004
    %4744 = vmatmul.mubr.bf16.gmra.mxu0 %v4003
    %v4745 = vpop.f32.mrf.mxu0
    %v4746 = vadd.f32 0.0, %v4745
    %v4747 = vpop.f32.mrf.mxu0
    %v4748 = vpop.f32.mrf.mxu0
    %v4749 = vadd.f32 0.0, %v4748
    %v4750 = vpop.f32.mrf.mxu0
    %4751 = vmatprep.mubr.bf16.mxu0 %v4006
    %4752 = vmatmul.mubr.bf16.gmra.mxu0 %v4005
    %v4753 = vpop.f32.mrf.mxu0
    %v4754 = vadd.f32 0.0, %v4753
    %v4755 = vpop.f32.mrf.mxu0
    %v4756 = vpop.f32.mrf.mxu0
    %v4757 = vadd.f32 0.0, %v4756
    %v4758 = vpop.f32.mrf.mxu0
    %4759 = vmatprep.mubr.bf16.mxu0 %v4008
    %4760 = vmatmul.mubr.bf16.gmra.mxu0 %v4007
    %v4761 = vpop.f32.mrf.mxu0
    %v4762 = vadd.f32 0.0, %v4761
    %v4763 = vpop.f32.mrf.mxu0
    %v4764 = vpop.f32.mrf.mxu0
    %v4765 = vadd.f32 0.0, %v4764
    %v4766 = vpop.f32.mrf.mxu0
    %4767 = vmatprep.mubr.bf16.mxu0 %v4010
    %4768 = vmatmul.mubr.bf16.gmra.mxu0 %v4009
    %v4769 = vpop.f32.mrf.mxu0
    %v4770 = vadd.f32 0.0, %v4769
    %v4771 = vpop.f32.mrf.mxu0
    %v4772 = vpop.f32.mrf.mxu0
    %v4773 = vadd.f32 0.0, %v4772
    %v4774 = vpop.f32.mrf.mxu0
    %4775 = vmatprep.mubr.bf16.mxu0 %v4012
    %4776 = vmatmul.mubr.bf16.gmra.mxu0 %v4011
    %v4777 = vpop.f32.mrf.mxu0
    %v4778 = vadd.f32 0.0, %v4777
    %v4779 = vpop.f32.mrf.mxu0
    %v4780 = vpop.f32.mrf.mxu0
    %v4781 = vadd.f32 0.0, %v4780
    %v4782 = vpop.f32.mrf.mxu0
    %4783 = vmatprep.mubr.bf16.mxu0 %v4014
    %4784 = vmatmul.mubr.bf16.gmra.mxu0 %v4013
    %v4785 = vpop.f32.mrf.mxu0
    %v4786 = vadd.f32 0.0, %v4785
    %v4787 = vpop.f32.mrf.mxu0
    %v4788 = vpop.f32.mrf.mxu0
    %v4789 = vadd.f32 0.0, %v4788
    %v4790 = vpop.f32.mrf.mxu0
    %4791 = vmatprep.mubr.bf16.mxu0 %v4016
    %4792 = vmatmul.mubr.bf16.gmra.mxu0 %v4015
    %v4793 = vpop.f32.mrf.mxu0
    %v4794 = vadd.f32 0.0, %v4793
    %v4795 = vpop.f32.mrf.mxu0
    %v4796 = vpop.f32.mrf.mxu0
    %v4797 = vadd.f32 0.0, %v4796
    %v4798 = vpop.f32.mrf.mxu0
    %4799 = vmatprep.mubr.bf16.mxu0 %v4018
    %4800 = vmatmul.mubr.bf16.gmra.mxu0 %v4017
    %v4801 = vpop.f32.mrf.mxu0
    %v4802 = vadd.f32 0.0, %v4801
    %v4803 = vpop.f32.mrf.mxu0
    %v4804 = vpop.f32.mrf.mxu0
    %v4805 = vadd.f32 0.0, %v4804
    %v4806 = vpop.f32.mrf.mxu0
    %4807 = vmatprep.mubr.bf16.mxu0 %v4020
    %4808 = vmatmul.mubr.bf16.gmra.mxu0 %v4019
    %v4809 = vpop.f32.mrf.mxu0
    %v4810 = vadd.f32 0.0, %v4809
    %v4811 = vpop.f32.mrf.mxu0
    %v4812 = vpop.f32.mrf.mxu0
    %v4813 = vadd.f32 0.0, %v4812
    %v4814 = vpop.f32.mrf.mxu0
    %4815 = vmatprep.mubr.bf16.mxu0 %v4022
    %4816 = vmatmul.mubr.bf16.gmra.mxu0 %v4021
    %v4817 = vpop.f32.mrf.mxu0
    %v4818 = vadd.f32 0.0, %v4817
    %v4819 = vpop.f32.mrf.mxu0
    %v4820 = vpop.f32.mrf.mxu0
    %v4821 = vadd.f32 0.0, %v4820
    %v4822 = vpop.f32.mrf.mxu0
    %4823 = vmatprep.mubr.bf16.mxu0 %v4024
    %4824 = vmatmul.mubr.bf16.gmra.mxu0 %v4023
    %v4825 = vpop.f32.mrf.mxu0
    %v4826 = vadd.f32 0.0, %v4825
    %v4827 = vpop.f32.mrf.mxu0
    %v4828 = vpop.f32.mrf.mxu0
    %v4829 = vadd.f32 0.0, %v4828
    %v4830 = vpop.f32.mrf.mxu0
    %4831 = vmatprep.mubr.bf16.mxu0 %v4026
    %4832 = vmatmul.mubr.bf16.gmra.mxu0 %v4025
    %v4833 = vpop.f32.mrf.mxu0
    %v4834 = vadd.f32 0.0, %v4833
    %v4835 = vpop.f32.mrf.mxu0
    %v4836 = vpop.f32.mrf.mxu0
    %v4837 = vadd.f32 0.0, %v4836
    %v4838 = vpop.f32.mrf.mxu0
    %4839 = vmatprep.mubr.bf16.mxu0 %v4028
    %4840 = vmatmul.mubr.bf16.gmra.mxu0 %v4027
    %v4841 = vpop.f32.mrf.mxu0
    %v4842 = vadd.f32 0.0, %v4841
    %v4843 = vpop.f32.mrf.mxu0
    %v4844 = vpop.f32.mrf.mxu0
    %v4845 = vadd.f32 0.0, %v4844
    %v4846 = vpop.f32.mrf.mxu0
    %4847 = vmatprep.mubr.bf16.mxu0 %v4030
    %4848 = vmatmul.mubr.bf16.gmra.mxu0 %v4029
    %v4849 = vpop.f32.mrf.mxu0
    %v4850 = vadd.f32 0.0, %v4849
    %v4851 = vpop.f32.mrf.mxu0
    %v4852 = vpop.f32.mrf.mxu0
    %v4853 = vadd.f32 0.0, %v4852
    %v4854 = vpop.f32.mrf.mxu0
    %4855 = vmatprep.mubr.bf16.mxu0 %v4032
    %4856 = vmatmul.mubr.bf16.gmra.mxu0 %v4031
    %v4857 = vpop.f32.mrf.mxu0
    %v4858 = vadd.f32 0.0, %v4857
    %v4859 = vpop.f32.mrf.mxu0
    %v4860 = vpop.f32.mrf.mxu0
    %v4861 = vadd.f32 0.0, %v4860
    %v4862 = vpop.f32.mrf.mxu0
    %4863 = vmatprep.mubr.bf16.mxu0 %v4034
    %4864 = vmatmul.mubr.bf16.gmra.mxu0 %v4033
    %v4865 = vpop.f32.mrf.mxu0
    %v4866 = vadd.f32 0.0, %v4865
    %v4867 = vpop.f32.mrf.mxu0
    %v4868 = vpop.f32.mrf.mxu0
    %v4869 = vadd.f32 0.0, %v4868
    %v4870 = vpop.f32.mrf.mxu0
    %4871 = vmatprep.mubr.bf16.mxu0 %v4036
    %4872 = vmatmul.mubr.bf16.gmra.mxu0 %v4035
    %v4873 = vpop.f32.mrf.mxu0
    %v4874 = vadd.f32 0.0, %v4873
    %v4875 = vpop.f32.mrf.mxu0
    %v4876 = vpop.f32.mrf.mxu0
    %v4877 = vadd.f32 0.0, %v4876
    %v4878 = vpop.f32.mrf.mxu0
    %4879 = vmatprep.mubr.bf16.mxu0 %v4038
    %4880 = vmatmul.mubr.bf16.gmra.mxu0 %v4037
    %v4881 = vpop.f32.mrf.mxu0
    %v4882 = vadd.f32 0.0, %v4881
    %v4883 = vpop.f32.mrf.mxu0
    %v4884 = vpop.f32.mrf.mxu0
    %v4885 = vadd.f32 0.0, %v4884
    %v4886 = vpop.f32.mrf.mxu0
    %4887 = vmatprep.mubr.bf16.mxu0 %v4040
    %4888 = vmatmul.mubr.bf16.gmra.mxu0 %v4039
    %v4889 = vpop.f32.mrf.mxu0
    %v4890 = vadd.f32 0.0, %v4889
    %v4891 = vpop.f32.mrf.mxu0
    %v4892 = vpop.f32.mrf.mxu0
    %v4893 = vadd.f32 0.0, %v4892
    %v4894 = vpop.f32.mrf.mxu0
    %4895 = vmatprep.mubr.bf16.mxu0 %v4042
    %4896 = vmatmul.mubr.bf16.gmra.mxu0 %v4041
    %v4897 = vpop.f32.mrf.mxu0
    %v4898 = vadd.f32 0.0, %v4897
    %v4899 = vpop.f32.mrf.mxu0
    %v4900 = vpop.f32.mrf.mxu0
    %v4901 = vadd.f32 0.0, %v4900
    %v4902 = vpop.f32.mrf.mxu0
    %4903 = vmatprep.mubr.bf16.mxu0 %v4044
    %4904 = vmatmul.mubr.bf16.gmra.mxu0 %v4043
    %v4905 = vpop.f32.mrf.mxu0
    %v4906 = vadd.f32 0.0, %v4905
    %v4907 = vpop.f32.mrf.mxu0
    %v4908 = vpop.f32.mrf.mxu0
    %v4909 = vadd.f32 0.0, %v4908
    %v4910 = vpop.f32.mrf.mxu0
    %4911 = vmatprep.mubr.bf16.mxu0 %v4046
    %4912 = vmatmul.mubr.bf16.gmra.mxu0 %v4045
    %v4913 = vpop.f32.mrf.mxu0
    %v4914 = vadd.f32 0.0, %v4913
    %v4915 = vpop.f32.mrf.mxu0
    %v4916 = vpop.f32.mrf.mxu0
    %v4917 = vadd.f32 0.0, %v4916
    %v4918 = vpop.f32.mrf.mxu0
    %4919 = vmatprep.mubr.bf16.mxu0 %v4048
    %4920 = vmatmul.mubr.bf16.gmra.mxu0 %v4047
    %v4921 = vpop.f32.mrf.mxu0
    %v4922 = vadd.f32 0.0, %v4921
    %v4923 = vpop.f32.mrf.mxu0
    %v4924 = vpop.f32.mrf.mxu0
    %v4925 = vadd.f32 0.0, %v4924
    %v4926 = vpop.f32.mrf.mxu0
    %4927 = vmatprep.mubr.bf16.mxu0 %v4050
    %4928 = vmatmul.mubr.bf16.gmra.mxu0 %v4049
    %v4929 = vpop.f32.mrf.mxu0
    %v4930 = vadd.f32 0.0, %v4929
    %v4931 = vpop.f32.mrf.mxu0
    %v4932 = vpop.f32.mrf.mxu0
    %v4933 = vadd.f32 0.0, %v4932
    %v4934 = vpop.f32.mrf.mxu0
    %4935 = vmatprep.mubr.bf16.mxu0 %v4052
    %4936 = vmatmul.mubr.bf16.gmra.mxu0 %v4051
    %v4937 = vpop.f32.mrf.mxu0
    %v4938 = vadd.f32 0.0, %v4937
    %v4939 = vpop.f32.mrf.mxu0
    %v4940 = vpop.f32.mrf.mxu0
    %v4941 = vadd.f32 0.0, %v4940
    %v4942 = vpop.f32.mrf.mxu0
    %4943 = vmatprep.mubr.bf16.mxu0 %v4054
    %4944 = vmatmul.mubr.bf16.gmra.mxu0 %v4053
    %v4945 = vpop.f32.mrf.mxu0
    %v4946 = vadd.f32 0.0, %v4945
    %v4947 = vpop.f32.mrf.mxu0
    %v4948 = vpop.f32.mrf.mxu0
    %v4949 = vadd.f32 0.0, %v4948
    %v4950 = vpop.f32.mrf.mxu0
    %4951 = vmatprep.mubr.bf16.mxu0 %v4056
    %4952 = vmatmul.mubr.bf16.gmra.mxu0 %v4055
    %v4953 = vpop.f32.mrf.mxu0
    %v4954 = vadd.f32 0.0, %v4953
    %v4955 = vpop.f32.mrf.mxu0
    %v4956 = vpop.f32.mrf.mxu0
    %v4957 = vadd.f32 0.0, %v4956
    %v4958 = vpop.f32.mrf.mxu0
    %4959 = vmatprep.mubr.bf16.mxu0 %v4058
    %4960 = vmatmul.mubr.bf16.gmra.mxu0 %v4057
    %v4961 = vpop.f32.mrf.mxu0
    %v4962 = vadd.f32 0.0, %v4961
    %v4963 = vpop.f32.mrf.mxu0
    %v4964 = vpop.f32.mrf.mxu0
    %v4965 = vadd.f32 0.0, %v4964
    %v4966 = vpop.f32.mrf.mxu0
    %4967 = vmatprep.mubr.bf16.mxu0 %v4060
    %4968 = vmatmul.mubr.bf16.gmra.mxu0 %v4059
    %v4969 = vpop.f32.mrf.mxu0
    %v4970 = vadd.f32 0.0, %v4969
    %v4971 = vpop.f32.mrf.mxu0
    %v4972 = vpop.f32.mrf.mxu0
    %v4973 = vadd.f32 0.0, %v4972
    %v4974 = vpop.f32.mrf.mxu0
    %4975 = vmatprep.mubr.bf16.mxu0 %v4062
    %4976 = vmatmul.mubr.bf16.gmra.mxu0 %v4061
    %v4977 = vpop.f32.mrf.mxu0
    %v4978 = vadd.f32 0.0, %v4977
    %v4979 = vpop.f32.mrf.mxu0
    %v4980 = vpop.f32.mrf.mxu0
    %v4981 = vadd.f32 0.0, %v4980
    %v4982 = vpop.f32.mrf.mxu0
    %4983 = vmatprep.mubr.bf16.mxu0 %v4064
    %4984 = vmatmul.mubr.bf16.gmra.mxu0 %v4063
    %v4985 = vpop.f32.mrf.mxu0
    %v4986 = vadd.f32 0.0, %v4985
    %v4987 = vpop.f32.mrf.mxu0
    %v4988 = vpop.f32.mrf.mxu0
    %v4989 = vadd.f32 0.0, %v4988
    %v4990 = vpop.f32.mrf.mxu0
    %4991 = vmatprep.mubr.bf16.mxu0 %v4066
    %4992 = vmatmul.mubr.bf16.gmra.mxu0 %v4065
    %v4993 = vpop.f32.mrf.mxu0
    %v4994 = vadd.f32 0.0, %v4993
    %v4995 = vpop.f32.mrf.mxu0
    %v4996 = vpop.f32.mrf.mxu0
    %v4997 = vadd.f32 0.0, %v4996
    %v4998 = vpop.f32.mrf.mxu0
    %4999 = vmatprep.mubr.bf16.mxu0 %v4068
    %5000 = vmatmul.mubr.bf16.gmra.mxu0 %v4067
    %v5001 = vpop.f32.mrf.mxu0
    %v5002 = vadd.f32 0.0, %v5001
    %v5003 = vpop.f32.mrf.mxu0
    %v5004 = vpop.f32.mrf.mxu0
    %v5005 = vadd.f32 0.0, %v5004
    %v5006 = vpop.f32.mrf.mxu0
    %5007 = vmatprep.mubr.bf16.mxu0 %v4070
    %5008 = vmatmul.mubr.bf16.gmra.mxu0 %v4069
    %v5009 = vpop.f32.mrf.mxu0
    %v5010 = vadd.f32 0.0, %v5009
    %v5011 = vpop.f32.mrf.mxu0
    %v5012 = vpop.f32.mrf.mxu0
    %v5013 = vadd.f32 0.0, %v5012
    %v5014 = vpop.f32.mrf.mxu0
    %5015 = vmatprep.mubr.bf16.mxu0 %v4072
    %5016 = vmatmul.mubr.bf16.gmra.mxu0 %v4071
    %v5017 = vpop.f32.mrf.mxu0
    %v5018 = vadd.f32 0.0, %v5017
    %v5019 = vpop.f32.mrf.mxu0
    %v5020 = vpop.f32.mrf.mxu0
    %v5021 = vadd.f32 0.0, %v5020
    %v5022 = vpop.f32.mrf.mxu0
    %5023 = vmatprep.mubr.bf16.mxu0 %v4074
    %5024 = vmatmul.mubr.bf16.gmra.mxu0 %v4073
    %v5025 = vpop.f32.mrf.mxu0
    %v5026 = vadd.f32 0.0, %v5025
    %v5027 = vpop.f32.mrf.mxu0
    %v5028 = vpop.f32.mrf.mxu0
    %v5029 = vadd.f32 0.0, %v5028
    %v5030 = vpop.f32.mrf.mxu0
    %5031 = vmatprep.mubr.bf16.mxu0 %v4076
    %5032 = vmatmul.mubr.bf16.gmra.mxu0 %v4075
    %v5033 = vpop.f32.mrf.mxu0
    %v5034 = vadd.f32 0.0, %v5033
    %v5035 = vpop.f32.mrf.mxu0
    %v5036 = vpop.f32.mrf.mxu0
    %v5037 = vadd.f32 0.0, %v5036
    %v5038 = vpop.f32.mrf.mxu0
    %5039 = vmatprep.mubr.bf16.mxu0 %v4078
    %5040 = vmatmul.mubr.bf16.gmra.mxu0 %v4077
    %v5041 = vpop.f32.mrf.mxu0
    %v5042 = vadd.f32 0.0, %v5041
    %v5043 = vpop.f32.mrf.mxu0
    %v5044 = vpop.f32.mrf.mxu0
    %v5045 = vadd.f32 0.0, %v5044
    %v5046 = vpop.f32.mrf.mxu0
    %5047 = vmatprep.mubr.bf16.mxu0 %v4080
    %5048 = vmatmul.mubr.bf16.gmra.mxu0 %v4079
    %v5049 = vpop.f32.mrf.mxu0
    %v5050 = vadd.f32 0.0, %v5049
    %v5051 = vpop.f32.mrf.mxu0
    %v5052 = vpop.f32.mrf.mxu0
    %v5053 = vadd.f32 0.0, %v5052
    %v5054 = vpop.f32.mrf.mxu0
    %5055 = vmatprep.mubr.bf16.mxu0 %v4082
    %5056 = vmatmul.mubr.bf16.gmra.mxu0 %v4081
    %v5057 = vpop.f32.mrf.mxu0
    %v5058 = vadd.f32 0.0, %v5057
    %v5059 = vpop.f32.mrf.mxu0
    %v5060 = vpop.f32.mrf.mxu0
    %v5061 = vadd.f32 0.0, %v5060
    %v5062 = vpop.f32.mrf.mxu0
    %5063 = vmatprep.mubr.bf16.mxu0 %v4084
    %5064 = vmatmul.mubr.bf16.gmra.mxu0 %v4083
    %v5065 = vpop.f32.mrf.mxu0
    %v5066 = vadd.f32 0.0, %v5065
    %v5067 = vpop.f32.mrf.mxu0
    %v5068 = vpop.f32.mrf.mxu0
    %v5069 = vadd.f32 0.0, %v5068
    %v5070 = vpop.f32.mrf.mxu0
    %5071 = vmatprep.mubr.bf16.mxu0 %v4086
    %5072 = vmatmul.mubr.bf16.gmra.mxu0 %v4085
    %v5073 = vpop.f32.mrf.mxu0
    %v5074 = vadd.f32 0.0, %v5073
    %v5075 = vpop.f32.mrf.mxu0
    %v5076 = vpop.f32.mrf.mxu0
    %v5077 = vadd.f32 0.0, %v5076
    %v5078 = vpop.f32.mrf.mxu0
    %5079 = vmatprep.mubr.bf16.mxu0 %v4088
    %5080 = vmatmul.mubr.bf16.gmra.mxu0 %v4087
    %v5081 = vpop.f32.mrf.mxu0
    %v5082 = vadd.f32 0.0, %v5081
    %v5083 = vpop.f32.mrf.mxu0
    %v5084 = vpop.f32.mrf.mxu0
    %v5085 = vadd.f32 0.0, %v5084
    %v5086 = vpop.f32.mrf.mxu0
    %5087 = vmatprep.mubr.bf16.mxu0 %v4090
    %5088 = vmatmul.mubr.bf16.gmra.mxu0 %v4089
    %v5089 = vpop.f32.mrf.mxu0
    %v5090 = vadd.f32 0.0, %v5089
    %v5091 = vpop.f32.mrf.mxu0
    %v5092 = vpop.f32.mrf.mxu0
    %v5093 = vadd.f32 0.0, %v5092
    %v5094 = vpop.f32.mrf.mxu0
    %5095 = vmatprep.mubr.bf16.mxu0 %v4092
    %5096 = vmatmul.mubr.bf16.gmra.mxu0 %v4091
    %v5097 = vpop.f32.mrf.mxu0
    %v5098 = vadd.f32 0.0, %v5097
    %v5099 = vpop.f32.mrf.mxu0
    %v5100 = vpop.f32.mrf.mxu0
    %v5101 = vadd.f32 0.0, %v5100
    %v5102 = vpop.f32.mrf.mxu0
    %5103 = vmatprep.mubr.bf16.mxu0 %v4094
    %5104 = vmatmul.mubr.bf16.gmra.mxu0 %v4093
    %v5105 = vpop.f32.mrf.mxu0
    %v5106 = vadd.f32 0.0, %v5105
    %v5107 = vpop.f32.mrf.mxu0
    %v5108 = vpop.f32.mrf.mxu0
    %v5109 = vadd.f32 0.0, %v5108
    %v5110 = vpop.f32.mrf.mxu0
    %5111 = vmatprep.mubr.bf16.mxu0 %v4096
    %5112 = vmatmul.mubr.bf16.gmra.mxu0 %v4095
    %v5113 = vpop.f32.mrf.mxu0
    %v5114 = vadd.f32 0.0, %v5113
    %v5115 = vpop.f32.mrf.mxu0
    %v5116 = vpop.f32.mrf.mxu0
    %v5117 = vadd.f32 0.0, %v5116
    %v5118 = vpop.f32.mrf.mxu0
    %5119 = vmatprep.mubr.bf16.mxu0 %v4098
    %5120 = vmatmul.mubr.bf16.gmra.mxu0 %v4097
    %v5121 = vpop.f32.mrf.mxu0
    %v5122 = vadd.f32 0.0, %v5121
    %v5123 = vpop.f32.mrf.mxu0
    %v5124 = vpop.f32.mrf.mxu0
    %v5125 = vadd.f32 0.0, %v5124
    %v5126 = vpop.f32.mrf.mxu0
    %5127 = vmatprep.mubr.bf16.mxu0 %v4100
    %5128 = vmatmul.mubr.bf16.gmra.mxu0 %v4099
    %v5129 = vpop.f32.mrf.mxu0
    %v5130 = vadd.f32 0.0, %v5129
    %v5131 = vpop.f32.mrf.mxu0
    %v5132 = vpop.f32.mrf.mxu0
    %v5133 = vadd.f32 0.0, %v5132
    %v5134 = vpop.f32.mrf.mxu0
    %5135 = vmatprep.mubr.bf16.mxu0 %v4102
    %5136 = vmatmul.mubr.bf16.gmra.mxu0 %v4101
    %v5137 = vpop.f32.mrf.mxu0
    %v5138 = vadd.f32 0.0, %v5137
    %v5139 = vpop.f32.mrf.mxu0
    %v5140 = vpop.f32.mrf.mxu0
    %v5141 = vadd.f32 0.0, %v5140
    %v5142 = vpop.f32.mrf.mxu0
    %5143 = vmatprep.mubr.bf16.mxu0 %v4104
    %5144 = vmatmul.mubr.bf16.gmra.mxu0 %v4103
    %v5145 = vpop.f32.mrf.mxu0
    %v5146 = vadd.f32 0.0, %v5145
    %v5147 = vpop.f32.mrf.mxu0
    %v5148 = vpop.f32.mrf.mxu0
    %v5149 = vadd.f32 0.0, %v5148
    %v5150 = vpop.f32.mrf.mxu0
    %5151 = vmatprep.mubr.bf16.mxu0 %v4106
    %5152 = vmatmul.mubr.bf16.gmra.mxu0 %v4105
    %v5153 = vpop.f32.mrf.mxu0
    %v5154 = vadd.f32 0.0, %v5153
    %v5155 = vpop.f32.mrf.mxu0
    %v5156 = vpop.f32.mrf.mxu0
    %v5157 = vadd.f32 0.0, %v5156
    %v5158 = vpop.f32.mrf.mxu0
    %5159 = vmatprep.mubr.bf16.mxu0 %v4108
    %5160 = vmatmul.mubr.bf16.gmra.mxu0 %v4107
    %v5161 = vpop.f32.mrf.mxu0
    %v5162 = vadd.f32 0.0, %v5161
    %v5163 = vpop.f32.mrf.mxu0
    %v5164 = vpop.f32.mrf.mxu0
    %v5165 = vadd.f32 0.0, %v5164
    %v5166 = vpop.f32.mrf.mxu0
    %5167 = vmatprep.mubr.bf16.mxu0 %v4110
    %5168 = vmatmul.mubr.bf16.gmra.mxu0 %v4109
    %v5169 = vpop.f32.mrf.mxu0
    %v5170 = vadd.f32 0.0, %v5169
    %v5171 = vpop.f32.mrf.mxu0
    %v5172 = vpop.f32.mrf.mxu0
    %v5173 = vadd.f32 0.0, %v5172
    %v5174 = vpop.f32.mrf.mxu0
    %5175 = vmatprep.mubr.bf16.mxu0 %v4112
    %5176 = vmatmul.mubr.bf16.gmra.mxu0 %v4111
    %v5177 = vpop.f32.mrf.mxu0
    %v5178 = vadd.f32 0.0, %v5177
    %v5179 = vpop.f32.mrf.mxu0
    %v5180 = vpop.f32.mrf.mxu0
    %v5181 = vadd.f32 0.0, %v5180
    %v5182 = vpop.f32.mrf.mxu0
    %5183 = vmatprep.mubr.bf16.mxu0 %v4114
    %5184 = vmatmul.mubr.bf16.gmra.mxu0 %v4113
    %v5185 = vpop.f32.mrf.mxu0
    %v5186 = vadd.f32 0.0, %v5185
    %v5187 = vpop.f32.mrf.mxu0
    %v5188 = vpop.f32.mrf.mxu0
    %v5189 = vadd.f32 0.0, %v5188
    %v5190 = vpop.f32.mrf.mxu0
    %5191 = vmatprep.mubr.bf16.mxu0 %v4116
    %5192 = vmatmul.mubr.bf16.gmra.mxu0 %v4115
    %v5193 = vpop.f32.mrf.mxu0
    %v5194 = vadd.f32 0.0, %v5193
    %v5195 = vpop.f32.mrf.mxu0
    %v5196 = vpop.f32.mrf.mxu0
    %v5197 = vadd.f32 0.0, %v5196
    %v5198 = vpop.f32.mrf.mxu0
    %5199 = vmatprep.mubr.bf16.mxu0 %v4118
    %5200 = vmatmul.mubr.bf16.gmra.mxu0 %v4117
    %v5201 = vpop.f32.mrf.mxu0
    %v5202 = vadd.f32 0.0, %v5201
    %v5203 = vpop.f32.mrf.mxu0
    %v5204 = vpop.f32.mrf.mxu0
    %v5205 = vadd.f32 0.0, %v5204
    %v5206 = vpop.f32.mrf.mxu0
    %5207 = vmatprep.mubr.bf16.mxu0 %v4120
    %5208 = vmatmul.mubr.bf16.gmra.mxu0 %v4119
    %v5209 = vpop.f32.mrf.mxu0
    %v5210 = vadd.f32 0.0, %v5209
    %v5211 = vpop.f32.mrf.mxu0
    %v5212 = vpop.f32.mrf.mxu0
    %v5213 = vadd.f32 0.0, %v5212
    %v5214 = vpop.f32.mrf.mxu0
    %5215 = vmatprep.mubr.bf16.mxu0 %v4122
    %5216 = vmatmul.mubr.bf16.gmra.mxu0 %v4121
    %v5217 = vpop.f32.mrf.mxu0
    %v5218 = vadd.f32 0.0, %v5217
    %v5219 = vpop.f32.mrf.mxu0
    %v5220 = vpop.f32.mrf.mxu0
    %v5221 = vadd.f32 0.0, %v5220
    %v5222 = vpop.f32.mrf.mxu0
    %5223 = vmatprep.mubr.bf16.mxu0 %v4124
    %5224 = vmatmul.mubr.bf16.gmra.mxu0 %v4123
    %v5225 = vpop.f32.mrf.mxu0
    %v5226 = vadd.f32 0.0, %v5225
    %v5227 = vpop.f32.mrf.mxu0
    %v5228 = vpop.f32.mrf.mxu0
    %v5229 = vadd.f32 0.0, %v5228
    %v5230 = vpop.f32.mrf.mxu0
    %5231 = vmatprep.mubr.bf16.mxu0 %v4126
    %5232 = vmatmul.mubr.bf16.gmra.mxu0 %v4125
    %v5233 = vpop.f32.mrf.mxu0
    %v5234 = vadd.f32 0.0, %v5233
    %v5235 = vpop.f32.mrf.mxu0
    %v5236 = vpop.f32.mrf.mxu0
    %v5237 = vadd.f32 0.0, %v5236
    %v5238 = vpop.f32.mrf.mxu0
    %5239 = vmatprep.mubr.bf16.mxu0 %v4128
    %5240 = vmatmul.mubr.bf16.gmra.mxu0 %v4127
    %v5241 = vpop.f32.mrf.mxu0
    %v5242 = vadd.f32 0.0, %v5241
    %v5243 = vpop.f32.mrf.mxu0
    %v5244 = vpop.f32.mrf.mxu0
    %v5245 = vadd.f32 0.0, %v5244
    %v5246 = vpop.f32.mrf.mxu0
    %5247 = vmatprep.mubr.bf16.mxu0 %v4130
    %5248 = vmatmul.mubr.bf16.gmra.mxu0 %v4129
    %v5249 = vpop.f32.mrf.mxu0
    %v5250 = vadd.f32 0.0, %v5249
    %v5251 = vpop.f32.mrf.mxu0
    %v5252 = vpop.f32.mrf.mxu0
    %v5253 = vadd.f32 0.0, %v5252
    %v5254 = vpop.f32.mrf.mxu0
    %5255 = vmatprep.mubr.bf16.mxu0 %v4132
    %5256 = vmatmul.mubr.bf16.gmra.mxu0 %v4131
    %v5257 = vpop.f32.mrf.mxu0
    %v5258 = vadd.f32 0.0, %v5257
    %v5259 = vpop.f32.mrf.mxu0
    %v5260 = vpop.f32.mrf.mxu0
    %v5261 = vadd.f32 0.0, %v5260
    %v5262 = vpop.f32.mrf.mxu0
    %5263 = vmatprep.mubr.bf16.mxu0 %v4134
    %5264 = vmatmul.mubr.bf16.gmra.mxu0 %v4133
    %v5265 = vpop.f32.mrf.mxu0
    %v5266 = vadd.f32 0.0, %v5265
    %v5267 = vpop.f32.mrf.mxu0
    %v5268 = vpop.f32.mrf.mxu0
    %v5269 = vadd.f32 0.0, %v5268
    %v5270 = vpop.f32.mrf.mxu0
    %5271 = vmatprep.mubr.bf16.mxu0 %v4136
    %5272 = vmatmul.mubr.bf16.gmra.mxu0 %v4135
    %v5273 = vpop.f32.mrf.mxu0
    %v5274 = vadd.f32 0.0, %v5273
    %v5275 = vpop.f32.mrf.mxu0
    %v5276 = vpop.f32.mrf.mxu0
    %v5277 = vadd.f32 0.0, %v5276
    %v5278 = vpop.f32.mrf.mxu0
    %5279 = vmatprep.mubr.bf16.mxu0 %v4138
    %5280 = vmatmul.mubr.bf16.gmra.mxu0 %v4137
    %v5281 = vpop.f32.mrf.mxu0
    %v5282 = vadd.f32 0.0, %v5281
    %v5283 = vpop.f32.mrf.mxu0
    %v5284 = vpop.f32.mrf.mxu0
    %v5285 = vadd.f32 0.0, %v5284
    %v5286 = vpop.f32.mrf.mxu0
    %5287 = vmatprep.mubr.bf16.mxu0 %v4140
    %5288 = vmatmul.mubr.bf16.gmra.mxu0 %v4139
    %v5289 = vpop.f32.mrf.mxu0
    %v5290 = vadd.f32 0.0, %v5289
    %v5291 = vpop.f32.mrf.mxu0
    %v5292 = vpop.f32.mrf.mxu0
    %v5293 = vadd.f32 0.0, %v5292
    %v5294 = vpop.f32.mrf.mxu0
    %5295 = vmatprep.mubr.bf16.mxu0 %v4142
    %5296 = vmatmul.mubr.bf16.gmra.mxu0 %v4141
    %v5297 = vpop.f32.mrf.mxu0
    %v5298 = vadd.f32 0.0, %v5297
    %v5299 = vpop.f32.mrf.mxu0
    %v5300 = vpop.f32.mrf.mxu0
    %v5301 = vadd.f32 0.0, %v5300
    %v5302 = vpop.f32.mrf.mxu0
    %5303 = vmatprep.mubr.bf16.mxu0 %v4144
    %5304 = vmatmul.mubr.bf16.gmra.mxu0 %v4143
    %v5305 = vpop.f32.mrf.mxu0
    %v5306 = vadd.f32 0.0, %v5305
    %v5307 = vpop.f32.mrf.mxu0
    %v5308 = vpop.f32.mrf.mxu0
    %v5309 = vadd.f32 0.0, %v5308
    %v5310 = vpop.f32.mrf.mxu0
    %5311 = vmatprep.mubr.bf16.mxu0 %v4146
    %5312 = vmatmul.mubr.bf16.gmra.mxu0 %v4145
    %v5313 = vpop.f32.mrf.mxu0
    %v5314 = vadd.f32 0.0, %v5313
    %v5315 = vpop.f32.mrf.mxu0
    %v5316 = vpop.f32.mrf.mxu0
    %v5317 = vadd.f32 0.0, %v5316
    %v5318 = vpop.f32.mrf.mxu0
    %5319 = vmatprep.mubr.bf16.mxu0 %v4148
    %5320 = vmatmul.mubr.bf16.gmra.mxu0 %v4147
    %v5321 = vpop.f32.mrf.mxu0
    %v5322 = vadd.f32 0.0, %v5321
    %v5323 = vpop.f32.mrf.mxu0
    %v5324 = vpop.f32.mrf.mxu0
    %v5325 = vadd.f32 0.0, %v5324
    %v5326 = vpop.f32.mrf.mxu0
    %5327 = vmatprep.mubr.bf16.mxu0 %v4150
    %5328 = vmatmul.mubr.bf16.gmra.mxu0 %v4149
    %v5329 = vpop.f32.mrf.mxu0
    %v5330 = vadd.f32 0.0, %v5329
    %v5331 = vpop.f32.mrf.mxu0
    %v5332 = vpop.f32.mrf.mxu0
    %v5333 = vadd.f32 0.0, %v5332
    %v5334 = vpop.f32.mrf.mxu0
    %5335 = vmatprep.mubr.bf16.mxu0 %v4152
    %5336 = vmatmul.mubr.bf16.gmra.mxu0 %v4151
    %v5337 = vpop.f32.mrf.mxu0
    %v5338 = vadd.f32 0.0, %v5337
    %v5339 = vpop.f32.mrf.mxu0
    %v5340 = vpop.f32.mrf.mxu0
    %v5341 = vadd.f32 0.0, %v5340
    %v5342 = vpop.f32.mrf.mxu0
    %5343 = vmatprep.mubr.bf16.mxu0 %v4154
    %5344 = vmatmul.mubr.bf16.gmra.mxu0 %v4153
    %v5345 = vpop.f32.mrf.mxu0
    %v5346 = vadd.f32 0.0, %v5345
    %v5347 = vpop.f32.mrf.mxu0
    %v5348 = vpop.f32.mrf.mxu0
    %v5349 = vadd.f32 0.0, %v5348
    %v5350 = vpop.f32.mrf.mxu0
    %5351 = vmatprep.mubr.bf16.mxu0 %v4156
    %5352 = vmatmul.mubr.bf16.gmra.mxu0 %v4155
    %v5353 = vpop.f32.mrf.mxu0
    %v5354 = vadd.f32 0.0, %v5353
    %v5355 = vpop.f32.mrf.mxu0
    %v5356 = vpop.f32.mrf.mxu0
    %v5357 = vadd.f32 0.0, %v5356
    %v5358 = vpop.f32.mrf.mxu0
    %5359 = vmatprep.mubr.bf16.mxu0 %v4158
    %5360 = vmatmul.mubr.bf16.gmra.mxu0 %v4157
    %v5361 = vpop.f32.mrf.mxu0
    %v5362 = vadd.f32 0.0, %v5361
    %v5363 = vpop.f32.mrf.mxu0
    %v5364 = vpop.f32.mrf.mxu0
    %v5365 = vadd.f32 0.0, %v5364
    %v5366 = vpop.f32.mrf.mxu0
    %5367 = vmatprep.mubr.bf16.mxu0 %v4160
    %5368 = vmatmul.mubr.bf16.gmra.mxu0 %v4159
    %v5369 = vpop.f32.mrf.mxu0
    %v5370 = vadd.f32 0.0, %v5369
    %v5371 = vpop.f32.mrf.mxu0
    %v5372 = vpop.f32.mrf.mxu0
    %v5373 = vadd.f32 0.0, %v5372
    %v5374 = vpop.f32.mrf.mxu0
    %5375 = vmatprep.mubr.bf16.mxu0 %v4162
    %5376 = vmatmul.mubr.bf16.gmra.mxu0 %v4161
    %v5377 = vpop.f32.mrf.mxu0
    %v5378 = vadd.f32 0.0, %v5377
    %v5379 = vpop.f32.mrf.mxu0
    %v5380 = vpop.f32.mrf.mxu0
    %v5381 = vadd.f32 0.0, %v5380
    %v5382 = vpop.f32.mrf.mxu0
    %5383 = vmatprep.mubr.bf16.mxu0 %v4164
    %5384 = vmatmul.mubr.bf16.gmra.mxu0 %v4163
    %v5385 = vpop.f32.mrf.mxu0
    %v5386 = vadd.f32 0.0, %v5385
    %v5387 = vpop.f32.mrf.mxu0
    %v5388 = vpop.f32.mrf.mxu0
    %v5389 = vadd.f32 0.0, %v5388
    %v5390 = vpop.f32.mrf.mxu0
    %5391 = vmatprep.mubr.bf16.mxu0 %v4166
    %5392 = vmatmul.mubr.bf16.gmra.mxu0 %v4165
    %v5393 = vpop.f32.mrf.mxu0
    %v5394 = vadd.f32 0.0, %v5393
    %v5395 = vpop.f32.mrf.mxu0
    %v5396 = vpop.f32.mrf.mxu0
    %v5397 = vadd.f32 0.0, %v5396
    %v5398 = vpop.f32.mrf.mxu0
    %5399 = vmatprep.mubr.bf16.mxu0 %v4168
    %5400 = vmatmul.mubr.bf16.gmra.mxu0 %v4167
    %v5401 = vpop.f32.mrf.mxu0
    %v5402 = vadd.f32 0.0, %v5401
    %v5403 = vpop.f32.mrf.mxu0
    %v5404 = vpop.f32.mrf.mxu0
    %v5405 = vadd.f32 0.0, %v5404
    %v5406 = vpop.f32.mrf.mxu0
    %5407 = vmatprep.mubr.bf16.mxu0 %v4170
    %5408 = vmatmul.mubr.bf16.gmra.mxu0 %v4169
    %v5409 = vpop.f32.mrf.mxu0
    %v5410 = vadd.f32 0.0, %v5409
    %v5411 = vpop.f32.mrf.mxu0
    %v5412 = vpop.f32.mrf.mxu0
    %v5413 = vadd.f32 0.0, %v5412
    %v5414 = vpop.f32.mrf.mxu0
    %5415 = vmatprep.mubr.bf16.mxu0 %v4172
    %5416 = vmatmul.mubr.bf16.gmra.mxu0 %v4171
    %v5417 = vpop.f32.mrf.mxu0
    %v5418 = vadd.f32 0.0, %v5417
    %v5419 = vpop.f32.mrf.mxu0
    %v5420 = vpop.f32.mrf.mxu0
    %v5421 = vadd.f32 0.0, %v5420
    %v5422 = vpop.f32.mrf.mxu0
    %5423 = vmatprep.mubr.bf16.mxu0 %v4174
    %5424 = vmatmul.mubr.bf16.gmra.mxu0 %v4173
    %v5425 = vpop.f32.mrf.mxu0
    %v5426 = vadd.f32 0.0, %v5425
    %v5427 = vpop.f32.mrf.mxu0
    %v5428 = vpop.f32.mrf.mxu0
    %v5429 = vadd.f32 0.0, %v5428
    %v5430 = vpop.f32.mrf.mxu0
    %5431 = vmatprep.mubr.bf16.mxu0 %v4176
    %5432 = vmatmul.mubr.bf16.gmra.mxu0 %v4175
    %v5433 = vpop.f32.mrf.mxu0
    %v5434 = vadd.f32 0.0, %v5433
    %v5435 = vpop.f32.mrf.mxu0
    %v5436 = vpop.f32.mrf.mxu0
    %v5437 = vadd.f32 0.0, %v5436
    %v5438 = vpop.f32.mrf.mxu0
    %5439 = vmatprep.mubr.bf16.mxu0 %v4178
    %5440 = vmatmul.mubr.bf16.gmra.mxu0 %v4177
    %v5441 = vpop.f32.mrf.mxu0
    %v5442 = vadd.f32 0.0, %v5441
    %v5443 = vpop.f32.mrf.mxu0
    %v5444 = vpop.f32.mrf.mxu0
    %v5445 = vadd.f32 0.0, %v5444
    %v5446 = vpop.f32.mrf.mxu0
    %5447 = vmatprep.mubr.bf16.mxu0 %v4180
    %5448 = vmatmul.mubr.bf16.gmra.mxu0 %v4179
    %v5449 = vpop.f32.mrf.mxu0
    %v5450 = vadd.f32 0.0, %v5449
    %v5451 = vpop.f32.mrf.mxu0
    %v5452 = vpop.f32.mrf.mxu0
    %v5453 = vadd.f32 0.0, %v5452
    %v5454 = vpop.f32.mrf.mxu0
    %5455 = vmatprep.mubr.bf16.mxu0 %v4182
    %5456 = vmatmul.mubr.bf16.gmra.mxu0 %v4181
    %v5457 = vpop.f32.mrf.mxu0
    %v5458 = vadd.f32 0.0, %v5457
    %v5459 = vpop.f32.mrf.mxu0
    %v5460 = vpop.f32.mrf.mxu0
    %v5461 = vadd.f32 0.0, %v5460
    %v5462 = vpop.f32.mrf.mxu0
    %5463 = vmatprep.mubr.bf16.mxu0 %v4184
    %5464 = vmatmul.mubr.bf16.gmra.mxu0 %v4183
    %v5465 = vpop.f32.mrf.mxu0
    %v5466 = vadd.f32 0.0, %v5465
    %v5467 = vpop.f32.mrf.mxu0
    %v5468 = vpop.f32.mrf.mxu0
    %v5469 = vadd.f32 0.0, %v5468
    %v5470 = vpop.f32.mrf.mxu0
    %5471 = vmatprep.mubr.bf16.mxu0 %v4186
    %5472 = vmatmul.mubr.bf16.gmra.mxu0 %v4185
    %v5473 = vpop.f32.mrf.mxu0
    %v5474 = vadd.f32 0.0, %v5473
    %v5475 = vpop.f32.mrf.mxu0
    %v5476 = vpop.f32.mrf.mxu0
    %v5477 = vadd.f32 0.0, %v5476
    %v5478 = vpop.f32.mrf.mxu0
    %5479 = vmatprep.mubr.bf16.mxu0 %v4188
    %5480 = vmatmul.mubr.bf16.gmra.mxu0 %v4187
    %v5481 = vpop.f32.mrf.mxu0
    %v5482 = vadd.f32 0.0, %v5481
    %v5483 = vpop.f32.mrf.mxu0
    %v5484 = vpop.f32.mrf.mxu0
    %v5485 = vadd.f32 0.0, %v5484
    %v5486 = vpop.f32.mrf.mxu0
    %5487 = vmatprep.mubr.bf16.mxu0 %v4190
    %5488 = vmatmul.mubr.bf16.gmra.mxu0 %v4189
    %v5489 = vpop.f32.mrf.mxu0
    %v5490 = vadd.f32 0.0, %v5489
    %v5491 = vpop.f32.mrf.mxu0
    %v5492 = vpop.f32.mrf.mxu0
    %v5493 = vadd.f32 0.0, %v5492
    %v5494 = vpop.f32.mrf.mxu0
    %5495 = vmatprep.mubr.bf16.mxu0 %v4192
    %5496 = vmatmul.mubr.bf16.gmra.mxu0 %v4191
    %v5497 = vpop.f32.mrf.mxu0
    %v5498 = vadd.f32 0.0, %v5497
    %v5499 = vpop.f32.mrf.mxu0
    %v5500 = vpop.f32.mrf.mxu0
    %v5501 = vadd.f32 0.0, %v5500
    %v5502 = vpop.f32.mrf.mxu0
    %5503 = vmatprep.mubr.bf16.mxu0 %v4194
    %5504 = vmatmul.mubr.bf16.gmra.mxu0 %v4193
    %v5505 = vpop.f32.mrf.mxu0
    %v5506 = vadd.f32 0.0, %v5505
    %v5507 = vpop.f32.mrf.mxu0
    %v5508 = vpop.f32.mrf.mxu0
    %v5509 = vadd.f32 0.0, %v5508
    %v5510 = vpop.f32.mrf.mxu0
    %5511 = vmatprep.mubr.bf16.mxu0 %v4196
    %5512 = vmatmul.mubr.bf16.gmra.mxu0 %v4195
    %v5513 = vpop.f32.mrf.mxu0
    %v5514 = vadd.f32 0.0, %v5513
    %v5515 = vpop.f32.mrf.mxu0
    %v5516 = vpop.f32.mrf.mxu0
    %v5517 = vadd.f32 0.0, %v5516
    %v5518 = vpop.f32.mrf.mxu0
    %5519 = vmatprep.mubr.bf16.mxu0 %v4198
    %5520 = vmatmul.mubr.bf16.gmra.mxu0 %v4197
    %v5521 = vpop.f32.mrf.mxu0
    %v5522 = vadd.f32 0.0, %v5521
    %v5523 = vpop.f32.mrf.mxu0
    %v5524 = vpop.f32.mrf.mxu0
    %v5525 = vadd.f32 0.0, %v5524
    %v5526 = vpop.f32.mrf.mxu0
    %5527 = vmatprep.mubr.bf16.mxu0 %v4200
    %5528 = vmatmul.mubr.bf16.gmra.mxu0 %v4199
    %v5529 = vpop.f32.mrf.mxu0
    %v5530 = vadd.f32 0.0, %v5529
    %v5531 = vpop.f32.mrf.mxu0
    %v5532 = vpop.f32.mrf.mxu0
    %v5533 = vadd.f32 0.0, %v5532
    %v5534 = vpop.f32.mrf.mxu0
    %5535 = vmatprep.mubr.bf16.mxu0 %v4202
    %5536 = vmatmul.mubr.bf16.gmra.mxu0 %v4201
    %v5537 = vpop.f32.mrf.mxu0
    %v5538 = vadd.f32 0.0, %v5537
    %v5539 = vpop.f32.mrf.mxu0
    %v5540 = vpop.f32.mrf.mxu0
    %v5541 = vadd.f32 0.0, %v5540
    %v5542 = vpop.f32.mrf.mxu0
    %5543 = vmatprep.mubr.bf16.mxu0 %v4204
    %5544 = vmatmul.mubr.bf16.gmra.mxu0 %v4203
    %v5545 = vpop.f32.mrf.mxu0
    %v5546 = vadd.f32 0.0, %v5545
    %v5547 = vpop.f32.mrf.mxu0
    %v5548 = vpop.f32.mrf.mxu0
    %v5549 = vadd.f32 0.0, %v5548
    %v5550 = vpop.f32.mrf.mxu0
    %5551 = vmatprep.mubr.bf16.mxu0 %v4206
    %5552 = vmatmul.mubr.bf16.gmra.mxu0 %v4205
    %v5553 = vpop.f32.mrf.mxu0
    %v5554 = vadd.f32 0.0, %v5553
    %v5555 = vpop.f32.mrf.mxu0
    %v5556 = vpop.f32.mrf.mxu0
    %v5557 = vadd.f32 0.0, %v5556
    %v5558 = vpop.f32.mrf.mxu0
    %5559 = vmatprep.mubr.bf16.mxu0 %v4208
    %5560 = vmatmul.mubr.bf16.gmra.mxu0 %v4207
    %v5561 = vpop.f32.mrf.mxu0
    %v5562 = vadd.f32 0.0, %v5561
    %v5563 = vpop.f32.mrf.mxu0
    %v5564 = vpop.f32.mrf.mxu0
    %v5565 = vadd.f32 0.0, %v5564
    %v5566 = vpop.f32.mrf.mxu0
    %5567 = vmatprep.mubr.bf16.mxu0 %v4210
    %5568 = vmatmul.mubr.bf16.gmra.mxu0 %v4209
    %v5569 = vpop.f32.mrf.mxu0
    %v5570 = vadd.f32 0.0, %v5569
    %v5571 = vpop.f32.mrf.mxu0
    %v5572 = vpop.f32.mrf.mxu0
    %v5573 = vadd.f32 0.0, %v5572
    %v5574 = vpop.f32.mrf.mxu0
    %5575 = vmatprep.mubr.bf16.mxu0 %v4212
    %5576 = vmatmul.mubr.bf16.gmra.mxu0 %v4211
    %v5577 = vpop.f32.mrf.mxu0
    %v5578 = vadd.f32 0.0, %v5577
    %v5579 = vpop.f32.mrf.mxu0
    %v5580 = vpop.f32.mrf.mxu0
    %v5581 = vadd.f32 0.0, %v5580
    %v5582 = vpop.f32.mrf.mxu0
    %5583 = vmatprep.mubr.bf16.mxu0 %v4214
    %5584 = vmatmul.mubr.bf16.gmra.mxu0 %v4213
    %v5585 = vpop.f32.mrf.mxu0
    %v5586 = vadd.f32 0.0, %v5585
    %v5587 = vpop.f32.mrf.mxu0
    %v5588 = vpop.f32.mrf.mxu0
    %v5589 = vadd.f32 0.0, %v5588
    %v5590 = vpop.f32.mrf.mxu0
    %5591 = vmatprep.mubr.bf16.mxu0 %v4216
    %5592 = vmatmul.mubr.bf16.gmra.mxu0 %v4215
    %v5593 = vpop.f32.mrf.mxu0
    %v5594 = vadd.f32 0.0, %v5593
    %v5595 = vpop.f32.mrf.mxu0
    %v5596 = vpop.f32.mrf.mxu0
    %v5597 = vadd.f32 0.0, %v5596
    %v5598 = vpop.f32.mrf.mxu0
    %5599 = vmatprep.mubr.bf16.mxu0 %v4218
    %5600 = vmatmul.mubr.bf16.gmra.mxu0 %v4217
    %v5601 = vpop.f32.mrf.mxu0
    %v5602 = vadd.f32 0.0, %v5601
    %v5603 = vpop.f32.mrf.mxu0
    %v5604 = vpop.f32.mrf.mxu0
    %v5605 = vadd.f32 0.0, %v5604
    %v5606 = vpop.f32.mrf.mxu0
    %5607 = vmatprep.mubr.bf16.mxu0 %v4220
    %5608 = vmatmul.mubr.bf16.gmra.mxu0 %v4219
    %v5609 = vpop.f32.mrf.mxu0
    %v5610 = vadd.f32 0.0, %v5609
    %v5611 = vpop.f32.mrf.mxu0
    %v5612 = vpop.f32.mrf.mxu0
    %v5613 = vadd.f32 0.0, %v5612
    %v5614 = vpop.f32.mrf.mxu0
    %5615 = vmatprep.mubr.bf16.mxu0 %v4222
    %5616 = vmatmul.mubr.bf16.gmra.mxu0 %v4221
    %v5617 = vpop.f32.mrf.mxu0
    %v5618 = vadd.f32 0.0, %v5617
    %v5619 = vpop.f32.mrf.mxu0
    %v5620 = vpop.f32.mrf.mxu0
    %v5621 = vadd.f32 0.0, %v5620
    %v5622 = vpop.f32.mrf.mxu0
    %5623 = vmatprep.mubr.bf16.mxu0 %v4224
    %5624 = vmatmul.mubr.bf16.gmra.mxu0 %v4223
    %v5625 = vpop.f32.mrf.mxu0
    %v5626 = vadd.f32 0.0, %v5625
    %v5627 = vpop.f32.mrf.mxu0
    %v5628 = vpop.f32.mrf.mxu0
    %v5629 = vadd.f32 0.0, %v5628
    %v5630 = vpop.f32.mrf.mxu0
    %5631 = vmatprep.mubr.bf16.mxu0 %v4226
    %5632 = vmatmul.mubr.bf16.gmra.mxu0 %v4225
    %v5633 = vpop.f32.mrf.mxu0
    %v5634 = vadd.f32 0.0, %v5633
    %v5635 = vpop.f32.mrf.mxu0
    %v5636 = vpop.f32.mrf.mxu0
    %v5637 = vadd.f32 0.0, %v5636
    %v5638 = vpop.f32.mrf.mxu0
    %5639 = vmatprep.mubr.bf16.mxu0 %v4228
    %5640 = vmatmul.mubr.bf16.gmra.mxu0 %v4227
    %v5641 = vpop.f32.mrf.mxu0
    %v5642 = vadd.f32 0.0, %v5641
    %v5643 = vpop.f32.mrf.mxu0
    %v5644 = vpop.f32.mrf.mxu0
    %v5645 = vadd.f32 0.0, %v5644
    %v5646 = vpop.f32.mrf.mxu0
    %5647 = vmatprep.mubr.bf16.mxu0 %v4230
    %5648 = vmatmul.mubr.bf16.gmra.mxu0 %v4229
    %v5649 = vpop.f32.mrf.mxu0
    %v5650 = vadd.f32 0.0, %v5649
    %v5651 = vpop.f32.mrf.mxu0
    %v5652 = vpop.f32.mrf.mxu0
    %v5653 = vadd.f32 0.0, %v5652
    %v5654 = vpop.f32.mrf.mxu0
    %5655 = vmatprep.mubr.bf16.mxu0 %v4232
    %5656 = vmatmul.mubr.bf16.gmra.mxu0 %v4231
    %v5657 = vpop.f32.mrf.mxu0
    %v5658 = vadd.f32 0.0, %v5657
    %v5659 = vpop.f32.mrf.mxu0
    %v5660 = vpop.f32.mrf.mxu0
    %v5661 = vadd.f32 0.0, %v5660
    %v5662 = vpop.f32.mrf.mxu0
    %5663 = vmatprep.mubr.bf16.mxu0 %v4234
    %5664 = vmatmul.mubr.bf16.gmra.mxu0 %v4233
    %v5665 = vpop.f32.mrf.mxu0
    %v5666 = vadd.f32 0.0, %v5665
    %v5667 = vpop.f32.mrf.mxu0
    %v5668 = vpop.f32.mrf.mxu0
    %v5669 = vadd.f32 0.0, %v5668
    %v5670 = vpop.f32.mrf.mxu0
    %5671 = vmatprep.mubr.bf16.mxu0 %v4236
    %5672 = vmatmul.mubr.bf16.gmra.mxu0 %v4235
    %v5673 = vpop.f32.mrf.mxu0
    %v5674 = vadd.f32 0.0, %v5673
    %v5675 = vpop.f32.mrf.mxu0
    %v5676 = vpop.f32.mrf.mxu0
    %v5677 = vadd.f32 0.0, %v5676
    %v5678 = vpop.f32.mrf.mxu0
    %5679 = vmatprep.mubr.bf16.mxu0 %v4238
    %5680 = vmatmul.mubr.bf16.gmra.mxu0 %v4237
    %v5681 = vpop.f32.mrf.mxu0
    %v5682 = vadd.f32 0.0, %v5681
    %v5683 = vpop.f32.mrf.mxu0
    %v5684 = vpop.f32.mrf.mxu0
    %v5685 = vadd.f32 0.0, %v5684
    %v5686 = vpop.f32.mrf.mxu0
    %5687 = vmatprep.mubr.bf16.mxu0 %v4240
    %5688 = vmatmul.mubr.bf16.gmra.mxu0 %v4239
    %v5689 = vpop.f32.mrf.mxu0
    %v5690 = vadd.f32 0.0, %v5689
    %v5691 = vpop.f32.mrf.mxu0
    %v5692 = vpop.f32.mrf.mxu0
    %v5693 = vadd.f32 0.0, %v5692
    %v5694 = vpop.f32.mrf.mxu0
    %5695 = vmatprep.mubr.bf16.mxu0 %v4242
    %5696 = vmatmul.mubr.bf16.gmra.mxu0 %v4241
    %v5697 = vpop.f32.mrf.mxu0
    %v5698 = vadd.f32 0.0, %v5697
    %v5699 = vpop.f32.mrf.mxu0
    %v5700 = vpop.f32.mrf.mxu0
    %v5701 = vadd.f32 0.0, %v5700
    %v5702 = vpop.f32.mrf.mxu0
    %5703 = vmatprep.mubr.bf16.mxu0 %v4244
    %5704 = vmatmul.mubr.bf16.gmra.mxu0 %v4243
    %v5705 = vpop.f32.mrf.mxu0
    %v5706 = vadd.f32 0.0, %v5705
    %v5707 = vpop.f32.mrf.mxu0
    %v5708 = vpop.f32.mrf.mxu0
    %v5709 = vadd.f32 0.0, %v5708
    %v5710 = vpop.f32.mrf.mxu0
    %5711 = vmatprep.mubr.bf16.mxu0 %v4246
    %5712 = vmatmul.mubr.bf16.gmra.mxu0 %v4245
    %v5713 = vpop.f32.mrf.mxu0
    %v5714 = vadd.f32 0.0, %v5713
    %v5715 = vpop.f32.mrf.mxu0
    %v5716 = vpop.f32.mrf.mxu0
    %v5717 = vadd.f32 0.0, %v5716
    %v5718 = vpop.f32.mrf.mxu0
    %5719 = vdwg.mxu0
    %v5720 = vpack.c.bf16 %v4573, %v4570
    %v5721 = vpack.c.bf16 %v4581, %v4578
    %v5722 = vpack.c.bf16 %v4589, %v4586
    %v5723 = vpack.c.bf16 %v4597, %v4594
    %v5724 = vpack.c.bf16 %v4605, %v4602
    %v5725 = vpack.c.bf16 %v4613, %v4610
    %v5726 = vpack.c.bf16 %v4621, %v4618
    %v5727 = vpack.c.bf16 %v4629, %v4626
    %v5728 = vpack.c.bf16 %v4637, %v4634
    %v5729 = vpack.c.bf16 %v4645, %v4642
    %v5730 = vpack.c.bf16 %v4653, %v4650
    %v5731 = vpack.c.bf16 %v4661, %v4658
    %v5732 = vpack.c.bf16 %v4669, %v4666
    %v5733 = vpack.c.bf16 %v4677, %v4674
    %v5734 = vpack.c.bf16 %v4685, %v4682
    %v5735 = vpack.c.bf16 %v4693, %v4690
    %v5736 = vpack.c.bf16 %v4701, %v4698
    %v5737 = vpack.c.bf16 %v4709, %v4706
    %v5738 = vpack.c.bf16 %v4717, %v4714
    %v5739 = vpack.c.bf16 %v4725, %v4722
    %v5740 = vpack.c.bf16 %v4733, %v4730
    %v5741 = vpack.c.bf16 %v4741, %v4738
    %v5742 = vpack.c.bf16 %v4749, %v4746
    %v5743 = vpack.c.bf16 %v4757, %v4754
    %v5744 = vpack.c.bf16 %v4765, %v4762
    %v5745 = vpack.c.bf16 %v4773, %v4770
    %v5746 = vpack.c.bf16 %v4781, %v4778
    %v5747 = vpack.c.bf16 %v4789, %v4786
    %v5748 = vpack.c.bf16 %v4797, %v4794
    %v5749 = vpack.c.bf16 %v4805, %v4802
    %v5750 = vpack.c.bf16 %v4813, %v4810
    %v5751 = vpack.c.bf16 %v4821, %v4818
    %v5752 = vpack.c.bf16 %v4829, %v4826
    %v5753 = vpack.c.bf16 %v4837, %v4834
    %v5754 = vpack.c.bf16 %v4845, %v4842
    %v5755 = vpack.c.bf16 %v4853, %v4850
    %v5756 = vpack.c.bf16 %v4861, %v4858
    %v5757 = vpack.c.bf16 %v4869, %v4866
    %v5758 = vpack.c.bf16 %v4877, %v4874
    %v5759 = vpack.c.bf16 %v4885, %v4882
    %v5760 = vpack.c.bf16 %v4893, %v4890
    %v5761 = vpack.c.bf16 %v4901, %v4898
    %v5762 = vpack.c.bf16 %v4909, %v4906
    %v5763 = vpack.c.bf16 %v4917, %v4914
    %v5764 = vpack.c.bf16 %v4925, %v4922
    %v5765 = vpack.c.bf16 %v4933, %v4930
    %v5766 = vpack.c.bf16 %v4941, %v4938
    %v5767 = vpack.c.bf16 %v4949, %v4946
    %v5768 = vpack.c.bf16 %v4957, %v4954
    %v5769 = vpack.c.bf16 %v4965, %v4962
    %v5770 = vpack.c.bf16 %v4973, %v4970
    %v5771 = vpack.c.bf16 %v4981, %v4978
    %v5772 = vpack.c.bf16 %v4989, %v4986
    %v5773 = vpack.c.bf16 %v4997, %v4994
    %v5774 = vpack.c.bf16 %v5005, %v5002
    %v5775 = vpack.c.bf16 %v5013, %v5010
    %v5776 = vpack.c.bf16 %v5021, %v5018
    %v5777 = vpack.c.bf16 %v5029, %v5026
    %v5778 = vpack.c.bf16 %v5037, %v5034
    %v5779 = vpack.c.bf16 %v5045, %v5042
    %v5780 = vpack.c.bf16 %v5053, %v5050
    %v5781 = vpack.c.bf16 %v5061, %v5058
    %v5782 = vpack.c.bf16 %v5069, %v5066
    %v5783 = vpack.c.bf16 %v5077, %v5074
    %v5784 = vpack.c.bf16 %v5085, %v5082
    %v5785 = vpack.c.bf16 %v5093, %v5090
    %v5786 = vpack.c.bf16 %v5101, %v5098
    %v5787 = vpack.c.bf16 %v5109, %v5106
    %v5788 = vpack.c.bf16 %v5117, %v5114
    %v5789 = vpack.c.bf16 %v5125, %v5122
    %v5790 = vpack.c.bf16 %v5133, %v5130
    %v5791 = vpack.c.bf16 %v5141, %v5138
    %v5792 = vpack.c.bf16 %v5149, %v5146
    %v5793 = vpack.c.bf16 %v5157, %v5154
    %v5794 = vpack.c.bf16 %v5165, %v5162
    %v5795 = vpack.c.bf16 %v5173, %v5170
    %v5796 = vpack.c.bf16 %v5181, %v5178
    %v5797 = vpack.c.bf16 %v5189, %v5186
    %v5798 = vpack.c.bf16 %v5197, %v5194
    %v5799 = vpack.c.bf16 %v5205, %v5202
    %v5800 = vpack.c.bf16 %v5213, %v5210
    %v5801 = vpack.c.bf16 %v5221, %v5218
    %v5802 = vpack.c.bf16 %v5229, %v5226
    %v5803 = vpack.c.bf16 %v5237, %v5234
    %v5804 = vpack.c.bf16 %v5245, %v5242
    %v5805 = vpack.c.bf16 %v5253, %v5250
    %v5806 = vpack.c.bf16 %v5261, %v5258
    %v5807 = vpack.c.bf16 %v5269, %v5266
    %v5808 = vpack.c.bf16 %v5277, %v5274
    %v5809 = vpack.c.bf16 %v5285, %v5282
    %v5810 = vpack.c.bf16 %v5293, %v5290
    %v5811 = vpack.c.bf16 %v5301, %v5298
    %v5812 = vpack.c.bf16 %v5309, %v5306
    %v5813 = vpack.c.bf16 %v5317, %v5314
    %v5814 = vpack.c.bf16 %v5325, %v5322
    %v5815 = vpack.c.bf16 %v5333, %v5330
    %v5816 = vpack.c.bf16 %v5341, %v5338
    %v5817 = vpack.c.bf16 %v5349, %v5346
    %v5818 = vpack.c.bf16 %v5357, %v5354
    %v5819 = vpack.c.bf16 %v5365, %v5362
    %v5820 = vpack.c.bf16 %v5373, %v5370
    %v5821 = vpack.c.bf16 %v5381, %v5378
    %v5822 = vpack.c.bf16 %v5389, %v5386
    %v5823 = vpack.c.bf16 %v5397, %v5394
    %v5824 = vpack.c.bf16 %v5405, %v5402
    %v5825 = vpack.c.bf16 %v5413, %v5410
    %v5826 = vpack.c.bf16 %v5421, %v5418
    %v5827 = vpack.c.bf16 %v5429, %v5426
    %v5828 = vpack.c.bf16 %v5437, %v5434
    %v5829 = vpack.c.bf16 %v5445, %v5442
    %v5830 = vpack.c.bf16 %v5453, %v5450
    %v5831 = vpack.c.bf16 %v5461, %v5458
    %v5832 = vpack.c.bf16 %v5469, %v5466
    %v5833 = vpack.c.bf16 %v5477, %v5474
    %v5834 = vpack.c.bf16 %v5485, %v5482
    %v5835 = vpack.c.bf16 %v5493, %v5490
    %v5836 = vpack.c.bf16 %v5501, %v5498
    %v5837 = vpack.c.bf16 %v5509, %v5506
    %v5838 = vpack.c.bf16 %v5517, %v5514
    %v5839 = vpack.c.bf16 %v5525, %v5522
    %v5840 = vpack.c.bf16 %v5533, %v5530
    %v5841 = vpack.c.bf16 %v5541, %v5538
    %v5842 = vpack.c.bf16 %v5549, %v5546
    %v5843 = vpack.c.bf16 %v5557, %v5554
    %v5844 = vpack.c.bf16 %v5565, %v5562
    %v5845 = vpack.c.bf16 %v5573, %v5570
    %v5846 = vpack.c.bf16 %v5581, %v5578
    %v5847 = vpack.c.bf16 %v5589, %v5586
    %v5848 = vpack.c.bf16 %v5597, %v5594
    %v5849 = vpack.c.bf16 %v5605, %v5602
    %v5850 = vpack.c.bf16 %v5613, %v5610
    %v5851 = vpack.c.bf16 %v5621, %v5618
    %v5852 = vpack.c.bf16 %v5629, %v5626
    %v5853 = vpack.c.bf16 %v5637, %v5634
    %v5854 = vpack.c.bf16 %v5645, %v5642
    %v5855 = vpack.c.bf16 %v5653, %v5650
    %v5856 = vpack.c.bf16 %v5661, %v5658
    %v5857 = vpack.c.bf16 %v5669, %v5666
    %v5858 = vpack.c.bf16 %v5677, %v5674
    %v5859 = vpack.c.bf16 %v5685, %v5682
    %v5860 = vpack.c.bf16 %v5693, %v5690
    %v5861 = vpack.c.bf16 %v5701, %v5698
    %v5862 = vpack.c.bf16 %v5709, %v5706
    %v5863 = vpack.c.bf16 %v5717, %v5714
    %v5864 = vld [vmem:[%s5] sm:$0xf]
    %v5865 = vld [vmem:[%s5 + $0x4] sm:$0xf]
    %v5866 = vld [vmem:[%s5 + $0x8] sm:$0xf]
    %v5867 = vld [vmem:[%s5 + $0xc] sm:$0xf]
    %v5868 = vld [vmem:[%s5 + $0x10] sm:$0xf]
    %v5869 = vld [vmem:[%s5 + $0x14] sm:$0xf]
    %v5870 = vld [vmem:[%s5 + $0x18] sm:$0xf]
    %v5871 = vld [vmem:[%s5 + $0x1c] sm:$0xf]
    %v5872 = vld [vmem:[%s5 + $0x20] sm:$0xf]
    %v5873 = vld [vmem:[%s5 + $0x24] sm:$0xf]
    %v5874 = vld [vmem:[%s5 + $0x28] sm:$0xf]
    %v5875 = vld [vmem:[%s5 + $0x2c] sm:$0xf]
    %v5876 = vld [vmem:[%s5 + $0x30] sm:$0xf]
    %v5877 = vld [vmem:[%s5 + $0x34] sm:$0xf]
    %v5878 = vld [vmem:[%s5 + $0x38] sm:$0xf]
    %v5879 = vld [vmem:[%s5 + $0x3c] sm:$0xf]
    %s5880 = scalar_lea.vmem %s5, 64
    %v5881 = vld [vmem:[%s5880] sm:$0xf]
    %v5882 = vld [vmem:[%s5880 + $0x4] sm:$0xf]
    %v5883 = vld [vmem:[%s5880 + $0x8] sm:$0xf]
    %v5884 = vld [vmem:[%s5880 + $0xc] sm:$0xf]
    %v5885 = vld [vmem:[%s5880 + $0x10] sm:$0xf]
    %v5886 = vld [vmem:[%s5880 + $0x14] sm:$0xf]
    %v5887 = vld [vmem:[%s5880 + $0x18] sm:$0xf]
    %v5888 = vld [vmem:[%s5880 + $0x1c] sm:$0xf]
    %v5889 = vld [vmem:[%s5880 + $0x20] sm:$0xf]
    %v5890 = vld [vmem:[%s5880 + $0x24] sm:$0xf]
    %v5891 = vld [vmem:[%s5880 + $0x28] sm:$0xf]
    %v5892 = vld [vmem:[%s5880 + $0x2c] sm:$0xf]
    %v5893 = vld [vmem:[%s5880 + $0x30] sm:$0xf]
    %v5894 = vld [vmem:[%s5880 + $0x34] sm:$0xf]
    %v5895 = vld [vmem:[%s5880 + $0x38] sm:$0xf]
    %v5896 = vld [vmem:[%s5880 + $0x3c] sm:$0xf]
    %v5913 = vunpack.c.l.b16 %v5881
    %v5914 = vunpack.c.l.b16 %v5882
    %v5915 = vunpack.c.l.b16 %v5883
    %v5916 = vunpack.c.l.b16 %v5884
    %v5917 = vunpack.c.l.b16 %v5885
    %v5918 = vunpack.c.l.b16 %v5886
    %v5919 = vunpack.c.l.b16 %v5887
    %v5920 = vunpack.c.l.b16 %v5888
    %v5921 = vunpack.c.l.b16 %v5889
    %v5922 = vunpack.c.l.b16 %v5890
    %v5923 = vunpack.c.l.b16 %v5891
    %v5924 = vunpack.c.l.b16 %v5892
    %v5925 = vunpack.c.l.b16 %v5893
    %v5926 = vunpack.c.l.b16 %v5894
    %v5927 = vunpack.c.l.b16 %v5895
    %v5928 = vunpack.c.l.b16 %v5896
    %v5929 = vpack.c.b16 %v5914, %v5913
    %v5930 = vpack.c.b16 %v5916, %v5915
    %v5931 = vpack.c.b16 %v5918, %v5917
    %v5932 = vpack.c.b16 %v5920, %v5919
    %v5933 = vpack.c.b16 %v5922, %v5921
    %v5934 = vpack.c.b16 %v5924, %v5923
    %v5935 = vpack.c.b16 %v5926, %v5925
    %v5936 = vpack.c.b16 %v5928, %v5927
    %5945 = vmatprep.subr.bf16.mxu0 0
    %5946 = vmatpush1.bf16.msra.mxu0 %v5936
    %5947 = vmatprep.subr.bf16.mxu0 0
    %5948 = vmatpush1.bf16.msra.mxu0 %v5935
    %5949 = vmatprep.subr.bf16.mxu0 0
    %5950 = vmatpush1.bf16.msra.mxu0 %v5934
    %5951 = vmatprep.subr.bf16.mxu0 0
    %5952 = vmatpush1.bf16.msra.mxu0 %v5933
    %5953 = vmatprep.subr.bf16.mxu0 0
    %5954 = vmatpush1.bf16.msra.mxu0 %v5932
    %5955 = vmatprep.subr.bf16.mxu0 0
    %5956 = vmatpush1.bf16.msra.mxu0 %v5931
    %5957 = vmatprep.subr.bf16.mxu0 0
    %5958 = vmatpush1.bf16.msra.mxu0 %v5930
    %5959 = vmatprep.subr.bf16.mxu0 0
    %5960 = vmatpush1.bf16.msra.mxu0 %v5929
    %5961 = vmatprep.subr.bf16.mxu0 0
    %5962 = vmatpush2.bf16.msra.mxu0 0
    %5963 = vmatprep.subr.bf16.mxu0 0
    %5964 = vmatpush2.bf16.msra.mxu0 0
    %5965 = vmatprep.subr.bf16.mxu0 0
    %5966 = vmatpush2.bf16.msra.mxu0 0
    %5967 = vmatprep.subr.bf16.mxu0 0
    %5968 = vmatpush2.bf16.msra.mxu0 0
    %5969 = vmatprep.subr.bf16.mxu0 0
    %5970 = vmatpush2.bf16.msra.mxu0 0
    %5971 = vmatprep.subr.bf16.mxu0 0
    %5972 = vmatpush2.bf16.msra.mxu0 0
    %5973 = vmatprep.subr.bf16.mxu0 0
    %5974 = vmatpush2.bf16.msra.mxu0 0
    %5975 = vmatprep.subr.bf16.mxu0 0
    %5976 = vmatpush2.bf16.msra.mxu0 0
    %5977 = vmatprep.mubr.bf16.mxu0 0
    %5978 = vmatmul.mubr.bf16.gmra.mxu0 %v5736
    %v5979 = vpop.f32.mrf.mxu0
    %v5980 = vadd.f32 0.0, %v5979
    %v5981 = vpop.f32.mrf.mxu0
    %v5982 = vpop.f32.mrf.mxu0
    %v5983 = vadd.f32 0.0, %v5982
    %v5984 = vpop.f32.mrf.mxu0
    %5985 = vmatprep.mubr.bf16.mxu0 0
    %5986 = vmatmul.mubr.bf16.gmra.mxu0 %v5737
    %v5987 = vpop.f32.mrf.mxu0
    %v5988 = vadd.f32 0.0, %v5987
    %v5989 = vpop.f32.mrf.mxu0
    %v5990 = vpop.f32.mrf.mxu0
    %v5991 = vadd.f32 0.0, %v5990
    %v5992 = vpop.f32.mrf.mxu0
    %5993 = vmatprep.mubr.bf16.mxu0 0
    %5994 = vmatmul.mubr.bf16.gmra.mxu0 %v5738
    %v5995 = vpop.f32.mrf.mxu0
    %v5996 = vadd.f32 0.0, %v5995
    %v5997 = vpop.f32.mrf.mxu0
    %v5998 = vpop.f32.mrf.mxu0
    %v5999 = vadd.f32 0.0, %v5998
    %v6000 = vpop.f32.mrf.mxu0
    %6001 = vmatprep.mubr.bf16.mxu0 0
    %6002 = vmatmul.mubr.bf16.gmra.mxu0 %v5739
    %v6003 = vpop.f32.mrf.mxu0
    %v6004 = vadd.f32 0.0, %v6003
    %v6005 = vpop.f32.mrf.mxu0
    %v6006 = vpop.f32.mrf.mxu0
    %v6007 = vadd.f32 0.0, %v6006
    %v6008 = vpop.f32.mrf.mxu0
    %6009 = vmatprep.mubr.bf16.mxu0 0
    %6010 = vmatmul.mubr.bf16.gmra.mxu0 %v5740
    %v6011 = vpop.f32.mrf.mxu0
    %v6012 = vadd.f32 0.0, %v6011
    %v6013 = vpop.f32.mrf.mxu0
    %v6014 = vpop.f32.mrf.mxu0
    %v6015 = vadd.f32 0.0, %v6014
    %v6016 = vpop.f32.mrf.mxu0
    %6017 = vmatprep.mubr.bf16.mxu0 0
    %6018 = vmatmul.mubr.bf16.gmra.mxu0 %v5741
    %v6019 = vpop.f32.mrf.mxu0
    %v6020 = vadd.f32 0.0, %v6019
    %v6021 = vpop.f32.mrf.mxu0
    %v6022 = vpop.f32.mrf.mxu0
    %v6023 = vadd.f32 0.0, %v6022
    %v6024 = vpop.f32.mrf.mxu0
    %6025 = vmatprep.mubr.bf16.mxu0 0
    %6026 = vmatmul.mubr.bf16.gmra.mxu0 %v5742
    %v6027 = vpop.f32.mrf.mxu0
    %v6028 = vadd.f32 0.0, %v6027
    %v6029 = vpop.f32.mrf.mxu0
    %v6030 = vpop.f32.mrf.mxu0
    %v6031 = vadd.f32 0.0, %v6030
    %v6032 = vpop.f32.mrf.mxu0
    %6033 = vmatprep.mubr.bf16.mxu0 0
    %6034 = vmatmul.mubr.bf16.gmra.mxu0 %v5743
    %v6035 = vpop.f32.mrf.mxu0
    %v6036 = vadd.f32 0.0, %v6035
    %v6037 = vpop.f32.mrf.mxu0
    %v6038 = vpop.f32.mrf.mxu0
    %v6039 = vadd.f32 0.0, %v6038
    %v6040 = vpop.f32.mrf.mxu0
    %6041 = vmatprep.mubr.bf16.mxu0 0
    %6042 = vmatmul.mubr.bf16.gmra.mxu0 %v5744
    %v6043 = vpop.f32.mrf.mxu0
    %v6044 = vadd.f32 0.0, %v6043
    %v6045 = vpop.f32.mrf.mxu0
    %v6046 = vpop.f32.mrf.mxu0
    %v6047 = vadd.f32 0.0, %v6046
    %v6048 = vpop.f32.mrf.mxu0
    %6049 = vmatprep.mubr.bf16.mxu0 0
    %6050 = vmatmul.mubr.bf16.gmra.mxu0 %v5745
    %v6051 = vpop.f32.mrf.mxu0
    %v6052 = vadd.f32 0.0, %v6051
    %v6053 = vpop.f32.mrf.mxu0
    %v6054 = vpop.f32.mrf.mxu0
    %v6055 = vadd.f32 0.0, %v6054
    %v6056 = vpop.f32.mrf.mxu0
    %6057 = vmatprep.mubr.bf16.mxu0 0
    %6058 = vmatmul.mubr.bf16.gmra.mxu0 %v5746
    %v6059 = vpop.f32.mrf.mxu0
    %v6060 = vadd.f32 0.0, %v6059
    %v6061 = vpop.f32.mrf.mxu0
    %v6062 = vpop.f32.mrf.mxu0
    %v6063 = vadd.f32 0.0, %v6062
    %v6064 = vpop.f32.mrf.mxu0
    %6065 = vmatprep.mubr.bf16.mxu0 0
    %6066 = vmatmul.mubr.bf16.gmra.mxu0 %v5747
    %v6067 = vpop.f32.mrf.mxu0
    %v6068 = vadd.f32 0.0, %v6067
    %v6069 = vpop.f32.mrf.mxu0
    %v6070 = vpop.f32.mrf.mxu0
    %v6071 = vadd.f32 0.0, %v6070
    %v6072 = vpop.f32.mrf.mxu0
    %6073 = vmatprep.mubr.bf16.mxu0 0
    %6074 = vmatmul.mubr.bf16.gmra.mxu0 %v5748
    %v6075 = vpop.f32.mrf.mxu0
    %v6076 = vadd.f32 0.0, %v6075
    %v6077 = vpop.f32.mrf.mxu0
    %v6078 = vpop.f32.mrf.mxu0
    %v6079 = vadd.f32 0.0, %v6078
    %v6080 = vpop.f32.mrf.mxu0
    %6081 = vmatprep.mubr.bf16.mxu0 0
    %6082 = vmatmul.mubr.bf16.gmra.mxu0 %v5749
    %v6083 = vpop.f32.mrf.mxu0
    %v6084 = vadd.f32 0.0, %v6083
    %v6085 = vpop.f32.mrf.mxu0
    %v6086 = vpop.f32.mrf.mxu0
    %v6087 = vadd.f32 0.0, %v6086
    %v6088 = vpop.f32.mrf.mxu0
    %6089 = vmatprep.mubr.bf16.mxu0 0
    %6090 = vmatmul.mubr.bf16.gmra.mxu0 %v5750
    %v6091 = vpop.f32.mrf.mxu0
    %v6092 = vadd.f32 0.0, %v6091
    %v6093 = vpop.f32.mrf.mxu0
    %v6094 = vpop.f32.mrf.mxu0
    %v6095 = vadd.f32 0.0, %v6094
    %v6096 = vpop.f32.mrf.mxu0
    %6097 = vmatprep.mubr.bf16.mxu0 0
    %6098 = vmatmul.mubr.bf16.gmra.mxu0 %v5751
    %v6099 = vpop.f32.mrf.mxu0
    %v6100 = vadd.f32 0.0, %v6099
    %v6101 = vpop.f32.mrf.mxu0
    %v6102 = vpop.f32.mrf.mxu0
    %v6103 = vadd.f32 0.0, %v6102
    %v6104 = vpop.f32.mrf.mxu0
    %6105 = vdwg.mxu0
    %v6122 = vunpack.c.l.b16 %v5864
    %v6123 = vunpack.c.l.b16 %v5865
    %v6124 = vunpack.c.l.b16 %v5866
    %v6125 = vunpack.c.l.b16 %v5867
    %v6126 = vunpack.c.l.b16 %v5868
    %v6127 = vunpack.c.l.b16 %v5869
    %v6128 = vunpack.c.l.b16 %v5870
    %v6129 = vunpack.c.l.b16 %v5871
    %v6130 = vunpack.c.l.b16 %v5872
    %v6131 = vunpack.c.l.b16 %v5873
    %v6132 = vunpack.c.l.b16 %v5874
    %v6133 = vunpack.c.l.b16 %v5875
    %v6134 = vunpack.c.l.b16 %v5876
    %v6135 = vunpack.c.l.b16 %v5877
    %v6136 = vunpack.c.l.b16 %v5878
    %v6137 = vunpack.c.l.b16 %v5879
    %v6138 = vpack.c.b16 %v6123, %v6122
    %v6139 = vpack.c.b16 %v6125, %v6124
    %v6140 = vpack.c.b16 %v6127, %v6126
    %v6141 = vpack.c.b16 %v6129, %v6128
    %v6142 = vpack.c.b16 %v6131, %v6130
    %v6143 = vpack.c.b16 %v6133, %v6132
    %v6144 = vpack.c.b16 %v6135, %v6134
    %v6145 = vpack.c.b16 %v6137, %v6136
    %6154 = vmatprep.subr.bf16.mxu0 0
    %6155 = vmatpush1.bf16.msra.mxu0 %v6145
    %6156 = vmatprep.subr.bf16.mxu0 0
    %6157 = vmatpush1.bf16.msra.mxu0 %v6144
    %6158 = vmatprep.subr.bf16.mxu0 0
    %6159 = vmatpush1.bf16.msra.mxu0 %v6143
    %6160 = vmatprep.subr.bf16.mxu0 0
    %6161 = vmatpush1.bf16.msra.mxu0 %v6142
    %6162 = vmatprep.subr.bf16.mxu0 0
    %6163 = vmatpush1.bf16.msra.mxu0 %v6141
    %6164 = vmatprep.subr.bf16.mxu0 0
    %6165 = vmatpush1.bf16.msra.mxu0 %v6140
    %6166 = vmatprep.subr.bf16.mxu0 0
    %6167 = vmatpush1.bf16.msra.mxu0 %v6139
    %6168 = vmatprep.subr.bf16.mxu0 0
    %6169 = vmatpush1.bf16.msra.mxu0 %v6138
    %6170 = vmatprep.subr.bf16.mxu0 0
    %6171 = vmatpush2.bf16.msra.mxu0 0
    %6172 = vmatprep.subr.bf16.mxu0 0
    %6173 = vmatpush2.bf16.msra.mxu0 0
    %6174 = vmatprep.subr.bf16.mxu0 0
    %6175 = vmatpush2.bf16.msra.mxu0 0
    %6176 = vmatprep.subr.bf16.mxu0 0
    %6177 = vmatpush2.bf16.msra.mxu0 0
    %6178 = vmatprep.subr.bf16.mxu0 0
    %6179 = vmatpush2.bf16.msra.mxu0 0
    %6180 = vmatprep.subr.bf16.mxu0 0
    %6181 = vmatpush2.bf16.msra.mxu0 0
    %6182 = vmatprep.subr.bf16.mxu0 0
    %6183 = vmatpush2.bf16.msra.mxu0 0
    %6184 = vmatprep.subr.bf16.mxu0 0
    %6185 = vmatpush2.bf16.msra.mxu0 0
    %6186 = vmatprep.mubr.bf16.mxu0 0
    %6187 = vmatmul.mubr.bf16.gmra.mxu0 %v5720
    %v6188 = vpop.f32.mrf.mxu0
    %v6189 = vadd.f32 %v5980, %v6188
    %v6190 = vpop.f32.mrf.mxu0
    %v6191 = vpop.f32.mrf.mxu0
    %v6192 = vadd.f32 %v5983, %v6191
    %v6193 = vpop.f32.mrf.mxu0
    %6194 = vmatprep.mubr.bf16.mxu0 0
    %6195 = vmatmul.mubr.bf16.gmra.mxu0 %v5721
    %v6196 = vpop.f32.mrf.mxu0
    %v6197 = vadd.f32 %v5988, %v6196
    %v6198 = vpop.f32.mrf.mxu0
    %v6199 = vpop.f32.mrf.mxu0
    %v6200 = vadd.f32 %v5991, %v6199
    %v6201 = vpop.f32.mrf.mxu0
    %6202 = vmatprep.mubr.bf16.mxu0 0
    %6203 = vmatmul.mubr.bf16.gmra.mxu0 %v5722
    %v6204 = vpop.f32.mrf.mxu0
    %v6205 = vadd.f32 %v5996, %v6204
    %v6206 = vpop.f32.mrf.mxu0
    %v6207 = vpop.f32.mrf.mxu0
    %v6208 = vadd.f32 %v5999, %v6207
    %v6209 = vpop.f32.mrf.mxu0
    %6210 = vmatprep.mubr.bf16.mxu0 0
    %6211 = vmatmul.mubr.bf16.gmra.mxu0 %v5723
    %v6212 = vpop.f32.mrf.mxu0
    %v6213 = vadd.f32 %v6004, %v6212
    %v6214 = vpop.f32.mrf.mxu0
    %v6215 = vpop.f32.mrf.mxu0
    %v6216 = vadd.f32 %v6007, %v6215
    %v6217 = vpop.f32.mrf.mxu0
    %6218 = vmatprep.mubr.bf16.mxu0 0
    %6219 = vmatmul.mubr.bf16.gmra.mxu0 %v5724
    %v6220 = vpop.f32.mrf.mxu0
    %v6221 = vadd.f32 %v6012, %v6220
    %v6222 = vpop.f32.mrf.mxu0
    %v6223 = vpop.f32.mrf.mxu0
    %v6224 = vadd.f32 %v6015, %v6223
    %v6225 = vpop.f32.mrf.mxu0
    %6226 = vmatprep.mubr.bf16.mxu0 0
    %6227 = vmatmul.mubr.bf16.gmra.mxu0 %v5725
    %v6228 = vpop.f32.mrf.mxu0
    %v6229 = vadd.f32 %v6020, %v6228
    %v6230 = vpop.f32.mrf.mxu0
    %v6231 = vpop.f32.mrf.mxu0
    %v6232 = vadd.f32 %v6023, %v6231
    %v6233 = vpop.f32.mrf.mxu0
    %6234 = vmatprep.mubr.bf16.mxu0 0
    %6235 = vmatmul.mubr.bf16.gmra.mxu0 %v5726
    %v6236 = vpop.f32.mrf.mxu0
    %v6237 = vadd.f32 %v6028, %v6236
    %v6238 = vpop.f32.mrf.mxu0
    %v6239 = vpop.f32.mrf.mxu0
    %v6240 = vadd.f32 %v6031, %v6239
    %v6241 = vpop.f32.mrf.mxu0
    %6242 = vmatprep.mubr.bf16.mxu0 0
    %6243 = vmatmul.mubr.bf16.gmra.mxu0 %v5727
    %v6244 = vpop.f32.mrf.mxu0
    %v6245 = vadd.f32 %v6036, %v6244
    %v6246 = vpop.f32.mrf.mxu0
    %v6247 = vpop.f32.mrf.mxu0
    %v6248 = vadd.f32 %v6039, %v6247
    %v6249 = vpop.f32.mrf.mxu0
    %6250 = vmatprep.mubr.bf16.mxu0 0
    %6251 = vmatmul.mubr.bf16.gmra.mxu0 %v5728
    %v6252 = vpop.f32.mrf.mxu0
    %v6253 = vadd.f32 %v6044, %v6252
    %v6254 = vpop.f32.mrf.mxu0
    %v6255 = vpop.f32.mrf.mxu0
    %v6256 = vadd.f32 %v6047, %v6255
    %v6257 = vpop.f32.mrf.mxu0
    %6258 = vmatprep.mubr.bf16.mxu0 0
    %6259 = vmatmul.mubr.bf16.gmra.mxu0 %v5729
    %v6260 = vpop.f32.mrf.mxu0
    %v6261 = vadd.f32 %v6052, %v6260
    %v6262 = vpop.f32.mrf.mxu0
    %v6263 = vpop.f32.mrf.mxu0
    %v6264 = vadd.f32 %v6055, %v6263
    %v6265 = vpop.f32.mrf.mxu0
    %6266 = vmatprep.mubr.bf16.mxu0 0
    %6267 = vmatmul.mubr.bf16.gmra.mxu0 %v5730
    %v6268 = vpop.f32.mrf.mxu0
    %v6269 = vadd.f32 %v6060, %v6268
    %v6270 = vpop.f32.mrf.mxu0
    %v6271 = vpop.f32.mrf.mxu0
    %v6272 = vadd.f32 %v6063, %v6271
    %v6273 = vpop.f32.mrf.mxu0
    %6274 = vmatprep.mubr.bf16.mxu0 0
    %6275 = vmatmul.mubr.bf16.gmra.mxu0 %v5731
    %v6276 = vpop.f32.mrf.mxu0
    %v6277 = vadd.f32 %v6068, %v6276
    %v6278 = vpop.f32.mrf.mxu0
    %v6279 = vpop.f32.mrf.mxu0
    %v6280 = vadd.f32 %v6071, %v6279
    %v6281 = vpop.f32.mrf.mxu0
    %6282 = vmatprep.mubr.bf16.mxu0 0
    %6283 = vmatmul.mubr.bf16.gmra.mxu0 %v5732
    %v6284 = vpop.f32.mrf.mxu0
    %v6285 = vadd.f32 %v6076, %v6284
    %v6286 = vpop.f32.mrf.mxu0
    %v6287 = vpop.f32.mrf.mxu0
    %v6288 = vadd.f32 %v6079, %v6287
    %v6289 = vpop.f32.mrf.mxu0
    %6290 = vmatprep.mubr.bf16.mxu0 0
    %6291 = vmatmul.mubr.bf16.gmra.mxu0 %v5733
    %v6292 = vpop.f32.mrf.mxu0
    %v6293 = vadd.f32 %v6084, %v6292
    %v6294 = vpop.f32.mrf.mxu0
    %v6295 = vpop.f32.mrf.mxu0
    %v6296 = vadd.f32 %v6087, %v6295
    %v6297 = vpop.f32.mrf.mxu0
    %6298 = vmatprep.mubr.bf16.mxu0 0
    %6299 = vmatmul.mubr.bf16.gmra.mxu0 %v5734
    %v6300 = vpop.f32.mrf.mxu0
    %v6301 = vadd.f32 %v6092, %v6300
    %v6302 = vpop.f32.mrf.mxu0
    %v6303 = vpop.f32.mrf.mxu0
    %v6304 = vadd.f32 %v6095, %v6303
    %v6305 = vpop.f32.mrf.mxu0
    %6306 = vmatprep.mubr.bf16.mxu0 0
    %6307 = vmatmul.mubr.bf16.gmra.mxu0 %v5735
    %v6308 = vpop.f32.mrf.mxu0
    %v6309 = vadd.f32 %v6100, %v6308
    %v6310 = vpop.f32.mrf.mxu0
    %v6311 = vpop.f32.mrf.mxu0
    %v6312 = vadd.f32 %v6103, %v6311
    %v6313 = vpop.f32.mrf.mxu0
    %6314 = vdwg.mxu0
    %s6315 = scalar_lea.vmem %s5, 128
    %v6316 = vld [vmem:[%s6315] sm:$0xf]
    %v6317 = vld [vmem:[%s6315 + $0x4] sm:$0xf]
    %v6318 = vld [vmem:[%s6315 + $0x8] sm:$0xf]
    %v6319 = vld [vmem:[%s6315 + $0xc] sm:$0xf]
    %v6320 = vld [vmem:[%s6315 + $0x10] sm:$0xf]
    %v6321 = vld [vmem:[%s6315 + $0x14] sm:$0xf]
    %v6322 = vld [vmem:[%s6315 + $0x18] sm:$0xf]
    %v6323 = vld [vmem:[%s6315 + $0x1c] sm:$0xf]
    %v6324 = vld [vmem:[%s6315 + $0x20] sm:$0xf]
    %v6325 = vld [vmem:[%s6315 + $0x24] sm:$0xf]
    %v6326 = vld [vmem:[%s6315 + $0x28] sm:$0xf]
    %v6327 = vld [vmem:[%s6315 + $0x2c] sm:$0xf]
    %v6328 = vld [vmem:[%s6315 + $0x30] sm:$0xf]
    %v6329 = vld [vmem:[%s6315 + $0x34] sm:$0xf]
    %v6330 = vld [vmem:[%s6315 + $0x38] sm:$0xf]
    %v6331 = vld [vmem:[%s6315 + $0x3c] sm:$0xf]
    %v6348 = vunpack.c.l.b16 %v6316
    %v6349 = vunpack.c.l.b16 %v6317
    %v6350 = vunpack.c.l.b16 %v6318
    %v6351 = vunpack.c.l.b16 %v6319
    %v6352 = vunpack.c.l.b16 %v6320
    %v6353 = vunpack.c.l.b16 %v6321
    %v6354 = vunpack.c.l.b16 %v6322
    %v6355 = vunpack.c.l.b16 %v6323
    %v6356 = vunpack.c.l.b16 %v6324
    %v6357 = vunpack.c.l.b16 %v6325
    %v6358 = vunpack.c.l.b16 %v6326
    %v6359 = vunpack.c.l.b16 %v6327
    %v6360 = vunpack.c.l.b16 %v6328
    %v6361 = vunpack.c.l.b16 %v6329
    %v6362 = vunpack.c.l.b16 %v6330
    %v6363 = vunpack.c.l.b16 %v6331
    %v6364 = vpack.c.b16 %v6349, %v6348
    %v6365 = vpack.c.b16 %v6351, %v6350
    %v6366 = vpack.c.b16 %v6353, %v6352
    %v6367 = vpack.c.b16 %v6355, %v6354
    %v6368 = vpack.c.b16 %v6357, %v6356
    %v6369 = vpack.c.b16 %v6359, %v6358
    %v6370 = vpack.c.b16 %v6361, %v6360
    %v6371 = vpack.c.b16 %v6363, %v6362
    %6380 = vmatprep.subr.bf16.mxu0 0
    %6381 = vmatpush1.bf16.msra.mxu0 %v6371
    %6382 = vmatprep.subr.bf16.mxu0 0
    %6383 = vmatpush1.bf16.msra.mxu0 %v6370
    %6384 = vmatprep.subr.bf16.mxu0 0
    %6385 = vmatpush1.bf16.msra.mxu0 %v6369
    %6386 = vmatprep.subr.bf16.mxu0 0
    %6387 = vmatpush1.bf16.msra.mxu0 %v6368
    %6388 = vmatprep.subr.bf16.mxu0 0
    %6389 = vmatpush1.bf16.msra.mxu0 %v6367
    %6390 = vmatprep.subr.bf16.mxu0 0
    %6391 = vmatpush1.bf16.msra.mxu0 %v6366
    %6392 = vmatprep.subr.bf16.mxu0 0
    %6393 = vmatpush1.bf16.msra.mxu0 %v6365
    %6394 = vmatprep.subr.bf16.mxu0 0
    %6395 = vmatpush1.bf16.msra.mxu0 %v6364
    %6396 = vmatprep.subr.bf16.mxu0 0
    %6397 = vmatpush2.bf16.msra.mxu0 0
    %6398 = vmatprep.subr.bf16.mxu0 0
    %6399 = vmatpush2.bf16.msra.mxu0 0
    %6400 = vmatprep.subr.bf16.mxu0 0
    %6401 = vmatpush2.bf16.msra.mxu0 0
    %6402 = vmatprep.subr.bf16.mxu0 0
    %6403 = vmatpush2.bf16.msra.mxu0 0
    %6404 = vmatprep.subr.bf16.mxu0 0
    %6405 = vmatpush2.bf16.msra.mxu0 0
    %6406 = vmatprep.subr.bf16.mxu0 0
    %6407 = vmatpush2.bf16.msra.mxu0 0
    %6408 = vmatprep.subr.bf16.mxu0 0
    %6409 = vmatpush2.bf16.msra.mxu0 0
    %6410 = vmatprep.subr.bf16.mxu0 0
    %6411 = vmatpush2.bf16.msra.mxu0 0
    %6412 = vmatprep.mubr.bf16.mxu0 0
    %6413 = vmatmul.mubr.bf16.gmra.mxu0 %v5752
    %v6414 = vpop.f32.mrf.mxu0
    %v6415 = vadd.f32 0.0, %v6414
    %v6416 = vpop.f32.mrf.mxu0
    %v6417 = vpop.f32.mrf.mxu0
    %v6418 = vadd.f32 0.0, %v6417
    %v6419 = vpop.f32.mrf.mxu0
    %6420 = vmatprep.mubr.bf16.mxu0 0
    %6421 = vmatmul.mubr.bf16.gmra.mxu0 %v5753
    %v6422 = vpop.f32.mrf.mxu0
    %v6423 = vadd.f32 0.0, %v6422
    %v6424 = vpop.f32.mrf.mxu0
    %v6425 = vpop.f32.mrf.mxu0
    %v6426 = vadd.f32 0.0, %v6425
    %v6427 = vpop.f32.mrf.mxu0
    %6428 = vmatprep.mubr.bf16.mxu0 0
    %6429 = vmatmul.mubr.bf16.gmra.mxu0 %v5754
    %v6430 = vpop.f32.mrf.mxu0
    %v6431 = vadd.f32 0.0, %v6430
    %v6432 = vpop.f32.mrf.mxu0
    %v6433 = vpop.f32.mrf.mxu0
    %v6434 = vadd.f32 0.0, %v6433
    %v6435 = vpop.f32.mrf.mxu0
    %6436 = vmatprep.mubr.bf16.mxu0 0
    %6437 = vmatmul.mubr.bf16.gmra.mxu0 %v5755
    %v6438 = vpop.f32.mrf.mxu0
    %v6439 = vadd.f32 0.0, %v6438
    %v6440 = vpop.f32.mrf.mxu0
    %v6441 = vpop.f32.mrf.mxu0
    %v6442 = vadd.f32 0.0, %v6441
    %v6443 = vpop.f32.mrf.mxu0
    %6444 = vmatprep.mubr.bf16.mxu0 0
    %6445 = vmatmul.mubr.bf16.gmra.mxu0 %v5756
    %v6446 = vpop.f32.mrf.mxu0
    %v6447 = vadd.f32 0.0, %v6446
    %v6448 = vpop.f32.mrf.mxu0
    %v6449 = vpop.f32.mrf.mxu0
    %v6450 = vadd.f32 0.0, %v6449
    %v6451 = vpop.f32.mrf.mxu0
    %6452 = vmatprep.mubr.bf16.mxu0 0
    %6453 = vmatmul.mubr.bf16.gmra.mxu0 %v5757
    %v6454 = vpop.f32.mrf.mxu0
    %v6455 = vadd.f32 0.0, %v6454
    %v6456 = vpop.f32.mrf.mxu0
    %v6457 = vpop.f32.mrf.mxu0
    %v6458 = vadd.f32 0.0, %v6457
    %v6459 = vpop.f32.mrf.mxu0
    %6460 = vmatprep.mubr.bf16.mxu0 0
    %6461 = vmatmul.mubr.bf16.gmra.mxu0 %v5758
    %v6462 = vpop.f32.mrf.mxu0
    %v6463 = vadd.f32 0.0, %v6462
    %v6464 = vpop.f32.mrf.mxu0
    %v6465 = vpop.f32.mrf.mxu0
    %v6466 = vadd.f32 0.0, %v6465
    %v6467 = vpop.f32.mrf.mxu0
    %6468 = vmatprep.mubr.bf16.mxu0 0
    %6469 = vmatmul.mubr.bf16.gmra.mxu0 %v5759
    %v6470 = vpop.f32.mrf.mxu0
    %v6471 = vadd.f32 0.0, %v6470
    %v6472 = vpop.f32.mrf.mxu0
    %v6473 = vpop.f32.mrf.mxu0
    %v6474 = vadd.f32 0.0, %v6473
    %v6475 = vpop.f32.mrf.mxu0
    %6476 = vmatprep.mubr.bf16.mxu0 0
    %6477 = vmatmul.mubr.bf16.gmra.mxu0 %v5760
    %v6478 = vpop.f32.mrf.mxu0
    %v6479 = vadd.f32 0.0, %v6478
    %v6480 = vpop.f32.mrf.mxu0
    %v6481 = vpop.f32.mrf.mxu0
    %v6482 = vadd.f32 0.0, %v6481
    %v6483 = vpop.f32.mrf.mxu0
    %6484 = vmatprep.mubr.bf16.mxu0 0
    %6485 = vmatmul.mubr.bf16.gmra.mxu0 %v5761
    %v6486 = vpop.f32.mrf.mxu0
    %v6487 = vadd.f32 0.0, %v6486
    %v6488 = vpop.f32.mrf.mxu0
    %v6489 = vpop.f32.mrf.mxu0
    %v6490 = vadd.f32 0.0, %v6489
    %v6491 = vpop.f32.mrf.mxu0
    %6492 = vmatprep.mubr.bf16.mxu0 0
    %6493 = vmatmul.mubr.bf16.gmra.mxu0 %v5762
    %v6494 = vpop.f32.mrf.mxu0
    %v6495 = vadd.f32 0.0, %v6494
    %v6496 = vpop.f32.mrf.mxu0
    %v6497 = vpop.f32.mrf.mxu0
    %v6498 = vadd.f32 0.0, %v6497
    %v6499 = vpop.f32.mrf.mxu0
    %6500 = vmatprep.mubr.bf16.mxu0 0
    %6501 = vmatmul.mubr.bf16.gmra.mxu0 %v5763
    %v6502 = vpop.f32.mrf.mxu0
    %v6503 = vadd.f32 0.0, %v6502
    %v6504 = vpop.f32.mrf.mxu0
    %v6505 = vpop.f32.mrf.mxu0
    %v6506 = vadd.f32 0.0, %v6505
    %v6507 = vpop.f32.mrf.mxu0
    %6508 = vmatprep.mubr.bf16.mxu0 0
    %6509 = vmatmul.mubr.bf16.gmra.mxu0 %v5764
    %v6510 = vpop.f32.mrf.mxu0
    %v6511 = vadd.f32 0.0, %v6510
    %v6512 = vpop.f32.mrf.mxu0
    %v6513 = vpop.f32.mrf.mxu0
    %v6514 = vadd.f32 0.0, %v6513
    %v6515 = vpop.f32.mrf.mxu0
    %6516 = vmatprep.mubr.bf16.mxu0 0
    %6517 = vmatmul.mubr.bf16.gmra.mxu0 %v5765
    %v6518 = vpop.f32.mrf.mxu0
    %v6519 = vadd.f32 0.0, %v6518
    %v6520 = vpop.f32.mrf.mxu0
    %v6521 = vpop.f32.mrf.mxu0
    %v6522 = vadd.f32 0.0, %v6521
    %v6523 = vpop.f32.mrf.mxu0
    %6524 = vmatprep.mubr.bf16.mxu0 0
    %6525 = vmatmul.mubr.bf16.gmra.mxu0 %v5766
    %v6526 = vpop.f32.mrf.mxu0
    %v6527 = vadd.f32 0.0, %v6526
    %v6528 = vpop.f32.mrf.mxu0
    %v6529 = vpop.f32.mrf.mxu0
    %v6530 = vadd.f32 0.0, %v6529
    %v6531 = vpop.f32.mrf.mxu0
    %6532 = vmatprep.mubr.bf16.mxu0 0
    %6533 = vmatmul.mubr.bf16.gmra.mxu0 %v5767
    %v6534 = vpop.f32.mrf.mxu0
    %v6535 = vadd.f32 0.0, %v6534
    %v6536 = vpop.f32.mrf.mxu0
    %v6537 = vpop.f32.mrf.mxu0
    %v6538 = vadd.f32 0.0, %v6537
    %v6539 = vpop.f32.mrf.mxu0
    %6540 = vdwg.mxu0
    %v6541 = vadd.f32 %v6189, %v6415
    %v6542 = vadd.f32 %v6192, %v6418
    %v6543 = vadd.f32 %v6197, %v6423
    %v6544 = vadd.f32 %v6200, %v6426
    %v6545 = vadd.f32 %v6205, %v6431
    %v6546 = vadd.f32 %v6208, %v6434
    %v6547 = vadd.f32 %v6213, %v6439
    %v6548 = vadd.f32 %v6216, %v6442
    %v6549 = vadd.f32 %v6221, %v6447
    %v6550 = vadd.f32 %v6224, %v6450
    %v6551 = vadd.f32 %v6229, %v6455
    %v6552 = vadd.f32 %v6232, %v6458
    %v6553 = vadd.f32 %v6237, %v6463
    %v6554 = vadd.f32 %v6240, %v6466
    %v6555 = vadd.f32 %v6245, %v6471
    %v6556 = vadd.f32 %v6248, %v6474
    %v6557 = vadd.f32 %v6253, %v6479
    %v6558 = vadd.f32 %v6256, %v6482
    %v6559 = vadd.f32 %v6261, %v6487
    %v6560 = vadd.f32 %v6264, %v6490
    %v6561 = vadd.f32 %v6269, %v6495
    %v6562 = vadd.f32 %v6272, %v6498
    %v6563 = vadd.f32 %v6277, %v6503
    %v6564 = vadd.f32 %v6280, %v6506
    %v6565 = vadd.f32 %v6285, %v6511
    %v6566 = vadd.f32 %v6288, %v6514
    %v6567 = vadd.f32 %v6293, %v6519
    %v6568 = vadd.f32 %v6296, %v6522
    %v6569 = vadd.f32 %v6301, %v6527
    %v6570 = vadd.f32 %v6304, %v6530
    %v6571 = vadd.f32 %v6309, %v6535
    %v6572 = vadd.f32 %v6312, %v6538
    %s6573 = scalar_lea.vmem %s5, 192
    %v6574 = vld [vmem:[%s6573] sm:$0xf]
    %v6575 = vld [vmem:[%s6573 + $0x4] sm:$0xf]
    %v6576 = vld [vmem:[%s6573 + $0x8] sm:$0xf]
    %v6577 = vld [vmem:[%s6573 + $0xc] sm:$0xf]
    %v6578 = vld [vmem:[%s6573 + $0x10] sm:$0xf]
    %v6579 = vld [vmem:[%s6573 + $0x14] sm:$0xf]
    %v6580 = vld [vmem:[%s6573 + $0x18] sm:$0xf]
    %v6581 = vld [vmem:[%s6573 + $0x1c] sm:$0xf]
    %v6582 = vld [vmem:[%s6573 + $0x20] sm:$0xf]
    %v6583 = vld [vmem:[%s6573 + $0x24] sm:$0xf]
    %v6584 = vld [vmem:[%s6573 + $0x28] sm:$0xf]
    %v6585 = vld [vmem:[%s6573 + $0x2c] sm:$0xf]
    %v6586 = vld [vmem:[%s6573 + $0x30] sm:$0xf]
    %v6587 = vld [vmem:[%s6573 + $0x34] sm:$0xf]
    %v6588 = vld [vmem:[%s6573 + $0x38] sm:$0xf]
    %v6589 = vld [vmem:[%s6573 + $0x3c] sm:$0xf]
    %v6606 = vunpack.c.l.b16 %v6574
    %v6607 = vunpack.c.l.b16 %v6575
    %v6608 = vunpack.c.l.b16 %v6576
    %v6609 = vunpack.c.l.b16 %v6577
    %v6610 = vunpack.c.l.b16 %v6578
    %v6611 = vunpack.c.l.b16 %v6579
    %v6612 = vunpack.c.l.b16 %v6580
    %v6613 = vunpack.c.l.b16 %v6581
    %v6614 = vunpack.c.l.b16 %v6582
    %v6615 = vunpack.c.l.b16 %v6583
    %v6616 = vunpack.c.l.b16 %v6584
    %v6617 = vunpack.c.l.b16 %v6585
    %v6618 = vunpack.c.l.b16 %v6586
    %v6619 = vunpack.c.l.b16 %v6587
    %v6620 = vunpack.c.l.b16 %v6588
    %v6621 = vunpack.c.l.b16 %v6589
    %v6622 = vpack.c.b16 %v6607, %v6606
    %v6623 = vpack.c.b16 %v6609, %v6608
    %v6624 = vpack.c.b16 %v6611, %v6610
    %v6625 = vpack.c.b16 %v6613, %v6612
    %v6626 = vpack.c.b16 %v6615, %v6614
    %v6627 = vpack.c.b16 %v6617, %v6616
    %v6628 = vpack.c.b16 %v6619, %v6618
    %v6629 = vpack.c.b16 %v6621, %v6620
    %6638 = vmatprep.subr.bf16.mxu0 0
    %6639 = vmatpush1.bf16.msra.mxu0 %v6629
    %6640 = vmatprep.subr.bf16.mxu0 0
    %6641 = vmatpush1.bf16.msra.mxu0 %v6628
    %6642 = vmatprep.subr.bf16.mxu0 0
    %6643 = vmatpush1.bf16.msra.mxu0 %v6627
    %6644 = vmatprep.subr.bf16.mxu0 0
    %6645 = vmatpush1.bf16.msra.mxu0 %v6626
    %6646 = vmatprep.subr.bf16.mxu0 0
    %6647 = vmatpush1.bf16.msra.mxu0 %v6625
    %6648 = vmatprep.subr.bf16.mxu0 0
    %6649 = vmatpush1.bf16.msra.mxu0 %v6624
    %6650 = vmatprep.subr.bf16.mxu0 0
    %6651 = vmatpush1.bf16.msra.mxu0 %v6623
    %6652 = vmatprep.subr.bf16.mxu0 0
    %6653 = vmatpush1.bf16.msra.mxu0 %v6622
    %6654 = vmatprep.subr.bf16.mxu0 0
    %6655 = vmatpush2.bf16.msra.mxu0 0
    %6656 = vmatprep.subr.bf16.mxu0 0
    %6657 = vmatpush2.bf16.msra.mxu0 0
    %6658 = vmatprep.subr.bf16.mxu0 0
    %6659 = vmatpush2.bf16.msra.mxu0 0
    %6660 = vmatprep.subr.bf16.mxu0 0
    %6661 = vmatpush2.bf16.msra.mxu0 0
    %6662 = vmatprep.subr.bf16.mxu0 0
    %6663 = vmatpush2.bf16.msra.mxu0 0
    %6664 = vmatprep.subr.bf16.mxu0 0
    %6665 = vmatpush2.bf16.msra.mxu0 0
    %6666 = vmatprep.subr.bf16.mxu0 0
    %6667 = vmatpush2.bf16.msra.mxu0 0
    %6668 = vmatprep.subr.bf16.mxu0 0
    %6669 = vmatpush2.bf16.msra.mxu0 0
    %6670 = vmatprep.mubr.bf16.mxu0 0
    %6671 = vmatmul.mubr.bf16.gmra.mxu0 %v5768
    %v6672 = vpop.f32.mrf.mxu0
    %v6673 = vadd.f32 0.0, %v6672
    %v6674 = vpop.f32.mrf.mxu0
    %v6675 = vpop.f32.mrf.mxu0
    %v6676 = vadd.f32 0.0, %v6675
    %v6677 = vpop.f32.mrf.mxu0
    %6678 = vmatprep.mubr.bf16.mxu0 0
    %6679 = vmatmul.mubr.bf16.gmra.mxu0 %v5769
    %v6680 = vpop.f32.mrf.mxu0
    %v6681 = vadd.f32 0.0, %v6680
    %v6682 = vpop.f32.mrf.mxu0
    %v6683 = vpop.f32.mrf.mxu0
    %v6684 = vadd.f32 0.0, %v6683
    %v6685 = vpop.f32.mrf.mxu0
    %6686 = vmatprep.mubr.bf16.mxu0 0
    %6687 = vmatmul.mubr.bf16.gmra.mxu0 %v5770
    %v6688 = vpop.f32.mrf.mxu0
    %v6689 = vadd.f32 0.0, %v6688
    %v6690 = vpop.f32.mrf.mxu0
    %v6691 = vpop.f32.mrf.mxu0
    %v6692 = vadd.f32 0.0, %v6691
    %v6693 = vpop.f32.mrf.mxu0
    %6694 = vmatprep.mubr.bf16.mxu0 0
    %6695 = vmatmul.mubr.bf16.gmra.mxu0 %v5771
    %v6696 = vpop.f32.mrf.mxu0
    %v6697 = vadd.f32 0.0, %v6696
    %v6698 = vpop.f32.mrf.mxu0
    %v6699 = vpop.f32.mrf.mxu0
    %v6700 = vadd.f32 0.0, %v6699
    %v6701 = vpop.f32.mrf.mxu0
    %6702 = vmatprep.mubr.bf16.mxu0 0
    %6703 = vmatmul.mubr.bf16.gmra.mxu0 %v5772
    %v6704 = vpop.f32.mrf.mxu0
    %v6705 = vadd.f32 0.0, %v6704
    %v6706 = vpop.f32.mrf.mxu0
    %v6707 = vpop.f32.mrf.mxu0
    %v6708 = vadd.f32 0.0, %v6707
    %v6709 = vpop.f32.mrf.mxu0
    %6710 = vmatprep.mubr.bf16.mxu0 0
    %6711 = vmatmul.mubr.bf16.gmra.mxu0 %v5773
    %v6712 = vpop.f32.mrf.mxu0
    %v6713 = vadd.f32 0.0, %v6712
    %v6714 = vpop.f32.mrf.mxu0
    %v6715 = vpop.f32.mrf.mxu0
    %v6716 = vadd.f32 0.0, %v6715
    %v6717 = vpop.f32.mrf.mxu0
    %6718 = vmatprep.mubr.bf16.mxu0 0
    %6719 = vmatmul.mubr.bf16.gmra.mxu0 %v5774
    %v6720 = vpop.f32.mrf.mxu0
    %v6721 = vadd.f32 0.0, %v6720
    %v6722 = vpop.f32.mrf.mxu0
    %v6723 = vpop.f32.mrf.mxu0
    %v6724 = vadd.f32 0.0, %v6723
    %v6725 = vpop.f32.mrf.mxu0
    %6726 = vmatprep.mubr.bf16.mxu0 0
    %6727 = vmatmul.mubr.bf16.gmra.mxu0 %v5775
    %v6728 = vpop.f32.mrf.mxu0
    %v6729 = vadd.f32 0.0, %v6728
    %v6730 = vpop.f32.mrf.mxu0
    %v6731 = vpop.f32.mrf.mxu0
    %v6732 = vadd.f32 0.0, %v6731
    %v6733 = vpop.f32.mrf.mxu0
    %6734 = vmatprep.mubr.bf16.mxu0 0
    %6735 = vmatmul.mubr.bf16.gmra.mxu0 %v5776
    %v6736 = vpop.f32.mrf.mxu0
    %v6737 = vadd.f32 0.0, %v6736
    %v6738 = vpop.f32.mrf.mxu0
    %v6739 = vpop.f32.mrf.mxu0
    %v6740 = vadd.f32 0.0, %v6739
    %v6741 = vpop.f32.mrf.mxu0
    %6742 = vmatprep.mubr.bf16.mxu0 0
    %6743 = vmatmul.mubr.bf16.gmra.mxu0 %v5777
    %v6744 = vpop.f32.mrf.mxu0
    %v6745 = vadd.f32 0.0, %v6744
    %v6746 = vpop.f32.mrf.mxu0
    %v6747 = vpop.f32.mrf.mxu0
    %v6748 = vadd.f32 0.0, %v6747
    %v6749 = vpop.f32.mrf.mxu0
    %6750 = vmatprep.mubr.bf16.mxu0 0
    %6751 = vmatmul.mubr.bf16.gmra.mxu0 %v5778
    %v6752 = vpop.f32.mrf.mxu0
    %v6753 = vadd.f32 0.0, %v6752
    %v6754 = vpop.f32.mrf.mxu0
    %v6755 = vpop.f32.mrf.mxu0
    %v6756 = vadd.f32 0.0, %v6755
    %v6757 = vpop.f32.mrf.mxu0
    %6758 = vmatprep.mubr.bf16.mxu0 0
    %6759 = vmatmul.mubr.bf16.gmra.mxu0 %v5779
    %v6760 = vpop.f32.mrf.mxu0
    %v6761 = vadd.f32 0.0, %v6760
    %v6762 = vpop.f32.mrf.mxu0
    %v6763 = vpop.f32.mrf.mxu0
    %v6764 = vadd.f32 0.0, %v6763
    %v6765 = vpop.f32.mrf.mxu0
    %6766 = vmatprep.mubr.bf16.mxu0 0
    %6767 = vmatmul.mubr.bf16.gmra.mxu0 %v5780
    %v6768 = vpop.f32.mrf.mxu0
    %v6769 = vadd.f32 0.0, %v6768
    %v6770 = vpop.f32.mrf.mxu0
    %v6771 = vpop.f32.mrf.mxu0
    %v6772 = vadd.f32 0.0, %v6771
    %v6773 = vpop.f32.mrf.mxu0
    %6774 = vmatprep.mubr.bf16.mxu0 0
    %6775 = vmatmul.mubr.bf16.gmra.mxu0 %v5781
    %v6776 = vpop.f32.mrf.mxu0
    %v6777 = vadd.f32 0.0, %v6776
    %v6778 = vpop.f32.mrf.mxu0
    %v6779 = vpop.f32.mrf.mxu0
    %v6780 = vadd.f32 0.0, %v6779
    %v6781 = vpop.f32.mrf.mxu0
    %6782 = vmatprep.mubr.bf16.mxu0 0
    %6783 = vmatmul.mubr.bf16.gmra.mxu0 %v5782
    %v6784 = vpop.f32.mrf.mxu0
    %v6785 = vadd.f32 0.0, %v6784
    %v6786 = vpop.f32.mrf.mxu0
    %v6787 = vpop.f32.mrf.mxu0
    %v6788 = vadd.f32 0.0, %v6787
    %v6789 = vpop.f32.mrf.mxu0
    %6790 = vmatprep.mubr.bf16.mxu0 0
    %6791 = vmatmul.mubr.bf16.gmra.mxu0 %v5783
    %v6792 = vpop.f32.mrf.mxu0
    %v6793 = vadd.f32 0.0, %v6792
    %v6794 = vpop.f32.mrf.mxu0
    %v6795 = vpop.f32.mrf.mxu0
    %v6796 = vadd.f32 0.0, %v6795
    %v6797 = vpop.f32.mrf.mxu0
    %6798 = vdwg.mxu0
    %v6799 = vadd.f32 %v6541, %v6673
    %v6800 = vadd.f32 %v6542, %v6676
    %v6801 = vadd.f32 %v6543, %v6681
    %v6802 = vadd.f32 %v6544, %v6684
    %v6803 = vadd.f32 %v6545, %v6689
    %v6804 = vadd.f32 %v6546, %v6692
    %v6805 = vadd.f32 %v6547, %v6697
    %v6806 = vadd.f32 %v6548, %v6700
    %v6807 = vadd.f32 %v6549, %v6705
    %v6808 = vadd.f32 %v6550, %v6708
    %v6809 = vadd.f32 %v6551, %v6713
    %v6810 = vadd.f32 %v6552, %v6716
    %v6811 = vadd.f32 %v6553, %v6721
    %v6812 = vadd.f32 %v6554, %v6724
    %v6813 = vadd.f32 %v6555, %v6729
    %v6814 = vadd.f32 %v6556, %v6732
    %v6815 = vadd.f32 %v6557, %v6737
    %v6816 = vadd.f32 %v6558, %v6740
    %v6817 = vadd.f32 %v6559, %v6745
    %v6818 = vadd.f32 %v6560, %v6748
    %v6819 = vadd.f32 %v6561, %v6753
    %v6820 = vadd.f32 %v6562, %v6756
    %v6821 = vadd.f32 %v6563, %v6761
    %v6822 = vadd.f32 %v6564, %v6764
    %v6823 = vadd.f32 %v6565, %v6769
    %v6824 = vadd.f32 %v6566, %v6772
    %v6825 = vadd.f32 %v6567, %v6777
    %v6826 = vadd.f32 %v6568, %v6780
    %v6827 = vadd.f32 %v6569, %v6785
    %v6828 = vadd.f32 %v6570, %v6788
    %v6829 = vadd.f32 %v6571, %v6793
    %v6830 = vadd.f32 %v6572, %v6796
    %s6831 = scalar_lea.vmem %s5, 256
    %v6832 = vld [vmem:[%s6831] sm:$0xf]
    %v6833 = vld [vmem:[%s6831 + $0x4] sm:$0xf]
    %v6834 = vld [vmem:[%s6831 + $0x8] sm:$0xf]
    %v6835 = vld [vmem:[%s6831 + $0xc] sm:$0xf]
    %v6836 = vld [vmem:[%s6831 + $0x10] sm:$0xf]
    %v6837 = vld [vmem:[%s6831 + $0x14] sm:$0xf]
    %v6838 = vld [vmem:[%s6831 + $0x18] sm:$0xf]
    %v6839 = vld [vmem:[%s6831 + $0x1c] sm:$0xf]
    %v6840 = vld [vmem:[%s6831 + $0x20] sm:$0xf]
    %v6841 = vld [vmem:[%s6831 + $0x24] sm:$0xf]
    %v6842 = vld [vmem:[%s6831 + $0x28] sm:$0xf]
    %v6843 = vld [vmem:[%s6831 + $0x2c] sm:$0xf]
    %v6844 = vld [vmem:[%s6831 + $0x30] sm:$0xf]
    %v6845 = vld [vmem:[%s6831 + $0x34] sm:$0xf]
    %v6846 = vld [vmem:[%s6831 + $0x38] sm:$0xf]
    %v6847 = vld [vmem:[%s6831 + $0x3c] sm:$0xf]
    %v6864 = vunpack.c.l.b16 %v6832
    %v6865 = vunpack.c.l.b16 %v6833
    %v6866 = vunpack.c.l.b16 %v6834
    %v6867 = vunpack.c.l.b16 %v6835
    %v6868 = vunpack.c.l.b16 %v6836
    %v6869 = vunpack.c.l.b16 %v6837
    %v6870 = vunpack.c.l.b16 %v6838
    %v6871 = vunpack.c.l.b16 %v6839
    %v6872 = vunpack.c.l.b16 %v6840
    %v6873 = vunpack.c.l.b16 %v6841
    %v6874 = vunpack.c.l.b16 %v6842
    %v6875 = vunpack.c.l.b16 %v6843
    %v6876 = vunpack.c.l.b16 %v6844
    %v6877 = vunpack.c.l.b16 %v6845
    %v6878 = vunpack.c.l.b16 %v6846
    %v6879 = vunpack.c.l.b16 %v6847
    %v6880 = vpack.c.b16 %v6865, %v6864
    %v6881 = vpack.c.b16 %v6867, %v6866
    %v6882 = vpack.c.b16 %v6869, %v6868
    %v6883 = vpack.c.b16 %v6871, %v6870
    %v6884 = vpack.c.b16 %v6873, %v6872
    %v6885 = vpack.c.b16 %v6875, %v6874
    %v6886 = vpack.c.b16 %v6877, %v6876
    %v6887 = vpack.c.b16 %v6879, %v6878
    %6896 = vmatprep.subr.bf16.mxu0 0
    %6897 = vmatpush1.bf16.msra.mxu0 %v6887
    %6898 = vmatprep.subr.bf16.mxu0 0
    %6899 = vmatpush1.bf16.msra.mxu0 %v6886
    %6900 = vmatprep.subr.bf16.mxu0 0
    %6901 = vmatpush1.bf16.msra.mxu0 %v6885
    %6902 = vmatprep.subr.bf16.mxu0 0
    %6903 = vmatpush1.bf16.msra.mxu0 %v6884
    %6904 = vmatprep.subr.bf16.mxu0 0
    %6905 = vmatpush1.bf16.msra.mxu0 %v6883
    %6906 = vmatprep.subr.bf16.mxu0 0
    %6907 = vmatpush1.bf16.msra.mxu0 %v6882
    %6908 = vmatprep.subr.bf16.mxu0 0
    %6909 = vmatpush1.bf16.msra.mxu0 %v6881
    %6910 = vmatprep.subr.bf16.mxu0 0
    %6911 = vmatpush1.bf16.msra.mxu0 %v6880
    %6912 = vmatprep.subr.bf16.mxu0 0
    %6913 = vmatpush2.bf16.msra.mxu0 0
    %6914 = vmatprep.subr.bf16.mxu0 0
    %6915 = vmatpush2.bf16.msra.mxu0 0
    %6916 = vmatprep.subr.bf16.mxu0 0
    %6917 = vmatpush2.bf16.msra.mxu0 0
    %6918 = vmatprep.subr.bf16.mxu0 0
    %6919 = vmatpush2.bf16.msra.mxu0 0
    %6920 = vmatprep.subr.bf16.mxu0 0
    %6921 = vmatpush2.bf16.msra.mxu0 0
    %6922 = vmatprep.subr.bf16.mxu0 0
    %6923 = vmatpush2.bf16.msra.mxu0 0
    %6924 = vmatprep.subr.bf16.mxu0 0
    %6925 = vmatpush2.bf16.msra.mxu0 0
    %6926 = vmatprep.subr.bf16.mxu0 0
    %6927 = vmatpush2.bf16.msra.mxu0 0
    %6928 = vmatprep.mubr.bf16.mxu0 0
    %6929 = vmatmul.mubr.bf16.gmra.mxu0 %v5784
    %v6930 = vpop.f32.mrf.mxu0
    %v6931 = vadd.f32 0.0, %v6930
    %v6932 = vpop.f32.mrf.mxu0
    %v6933 = vpop.f32.mrf.mxu0
    %v6934 = vadd.f32 0.0, %v6933
    %v6935 = vpop.f32.mrf.mxu0
    %6936 = vmatprep.mubr.bf16.mxu0 0
    %6937 = vmatmul.mubr.bf16.gmra.mxu0 %v5785
    %v6938 = vpop.f32.mrf.mxu0
    %v6939 = vadd.f32 0.0, %v6938
    %v6940 = vpop.f32.mrf.mxu0
    %v6941 = vpop.f32.mrf.mxu0
    %v6942 = vadd.f32 0.0, %v6941
    %v6943 = vpop.f32.mrf.mxu0
    %6944 = vmatprep.mubr.bf16.mxu0 0
    %6945 = vmatmul.mubr.bf16.gmra.mxu0 %v5786
    %v6946 = vpop.f32.mrf.mxu0
    %v6947 = vadd.f32 0.0, %v6946
    %v6948 = vpop.f32.mrf.mxu0
    %v6949 = vpop.f32.mrf.mxu0
    %v6950 = vadd.f32 0.0, %v6949
    %v6951 = vpop.f32.mrf.mxu0
    %6952 = vmatprep.mubr.bf16.mxu0 0
    %6953 = vmatmul.mubr.bf16.gmra.mxu0 %v5787
    %v6954 = vpop.f32.mrf.mxu0
    %v6955 = vadd.f32 0.0, %v6954
    %v6956 = vpop.f32.mrf.mxu0
    %v6957 = vpop.f32.mrf.mxu0
    %v6958 = vadd.f32 0.0, %v6957
    %v6959 = vpop.f32.mrf.mxu0
    %6960 = vmatprep.mubr.bf16.mxu0 0
    %6961 = vmatmul.mubr.bf16.gmra.mxu0 %v5788
    %v6962 = vpop.f32.mrf.mxu0
    %v6963 = vadd.f32 0.0, %v6962
    %v6964 = vpop.f32.mrf.mxu0
    %v6965 = vpop.f32.mrf.mxu0
    %v6966 = vadd.f32 0.0, %v6965
    %v6967 = vpop.f32.mrf.mxu0
    %6968 = vmatprep.mubr.bf16.mxu0 0
    %6969 = vmatmul.mubr.bf16.gmra.mxu0 %v5789
    %v6970 = vpop.f32.mrf.mxu0
    %v6971 = vadd.f32 0.0, %v6970
    %v6972 = vpop.f32.mrf.mxu0
    %v6973 = vpop.f32.mrf.mxu0
    %v6974 = vadd.f32 0.0, %v6973
    %v6975 = vpop.f32.mrf.mxu0
    %6976 = vmatprep.mubr.bf16.mxu0 0
    %6977 = vmatmul.mubr.bf16.gmra.mxu0 %v5790
    %v6978 = vpop.f32.mrf.mxu0
    %v6979 = vadd.f32 0.0, %v6978
    %v6980 = vpop.f32.mrf.mxu0
    %v6981 = vpop.f32.mrf.mxu0
    %v6982 = vadd.f32 0.0, %v6981
    %v6983 = vpop.f32.mrf.mxu0
    %6984 = vmatprep.mubr.bf16.mxu0 0
    %6985 = vmatmul.mubr.bf16.gmra.mxu0 %v5791
    %v6986 = vpop.f32.mrf.mxu0
    %v6987 = vadd.f32 0.0, %v6986
    %v6988 = vpop.f32.mrf.mxu0
    %v6989 = vpop.f32.mrf.mxu0
    %v6990 = vadd.f32 0.0, %v6989
    %v6991 = vpop.f32.mrf.mxu0
    %6992 = vmatprep.mubr.bf16.mxu0 0
    %6993 = vmatmul.mubr.bf16.gmra.mxu0 %v5792
    %v6994 = vpop.f32.mrf.mxu0
    %v6995 = vadd.f32 0.0, %v6994
    %v6996 = vpop.f32.mrf.mxu0
    %v6997 = vpop.f32.mrf.mxu0
    %v6998 = vadd.f32 0.0, %v6997
    %v6999 = vpop.f32.mrf.mxu0
    %7000 = vmatprep.mubr.bf16.mxu0 0
    %7001 = vmatmul.mubr.bf16.gmra.mxu0 %v5793
    %v7002 = vpop.f32.mrf.mxu0
    %v7003 = vadd.f32 0.0, %v7002
    %v7004 = vpop.f32.mrf.mxu0
    %v7005 = vpop.f32.mrf.mxu0
    %v7006 = vadd.f32 0.0, %v7005
    %v7007 = vpop.f32.mrf.mxu0
    %7008 = vmatprep.mubr.bf16.mxu0 0
    %7009 = vmatmul.mubr.bf16.gmra.mxu0 %v5794
    %v7010 = vpop.f32.mrf.mxu0
    %v7011 = vadd.f32 0.0, %v7010
    %v7012 = vpop.f32.mrf.mxu0
    %v7013 = vpop.f32.mrf.mxu0
    %v7014 = vadd.f32 0.0, %v7013
    %v7015 = vpop.f32.mrf.mxu0
    %7016 = vmatprep.mubr.bf16.mxu0 0
    %7017 = vmatmul.mubr.bf16.gmra.mxu0 %v5795
    %v7018 = vpop.f32.mrf.mxu0
    %v7019 = vadd.f32 0.0, %v7018
    %v7020 = vpop.f32.mrf.mxu0
    %v7021 = vpop.f32.mrf.mxu0
    %v7022 = vadd.f32 0.0, %v7021
    %v7023 = vpop.f32.mrf.mxu0
    %7024 = vmatprep.mubr.bf16.mxu0 0
    %7025 = vmatmul.mubr.bf16.gmra.mxu0 %v5796
    %v7026 = vpop.f32.mrf.mxu0
    %v7027 = vadd.f32 0.0, %v7026
    %v7028 = vpop.f32.mrf.mxu0
    %v7029 = vpop.f32.mrf.mxu0
    %v7030 = vadd.f32 0.0, %v7029
    %v7031 = vpop.f32.mrf.mxu0
    %7032 = vmatprep.mubr.bf16.mxu0 0
    %7033 = vmatmul.mubr.bf16.gmra.mxu0 %v5797
    %v7034 = vpop.f32.mrf.mxu0
    %v7035 = vadd.f32 0.0, %v7034
    %v7036 = vpop.f32.mrf.mxu0
    %v7037 = vpop.f32.mrf.mxu0
    %v7038 = vadd.f32 0.0, %v7037
    %v7039 = vpop.f32.mrf.mxu0
    %7040 = vmatprep.mubr.bf16.mxu0 0
    %7041 = vmatmul.mubr.bf16.gmra.mxu0 %v5798
    %v7042 = vpop.f32.mrf.mxu0
    %v7043 = vadd.f32 0.0, %v7042
    %v7044 = vpop.f32.mrf.mxu0
    %v7045 = vpop.f32.mrf.mxu0
    %v7046 = vadd.f32 0.0, %v7045
    %v7047 = vpop.f32.mrf.mxu0
    %7048 = vmatprep.mubr.bf16.mxu0 0
    %7049 = vmatmul.mubr.bf16.gmra.mxu0 %v5799
    %v7050 = vpop.f32.mrf.mxu0
    %v7051 = vadd.f32 0.0, %v7050
    %v7052 = vpop.f32.mrf.mxu0
    %v7053 = vpop.f32.mrf.mxu0
    %v7054 = vadd.f32 0.0, %v7053
    %v7055 = vpop.f32.mrf.mxu0
    %7056 = vdwg.mxu0
    %v7057 = vadd.f32 %v6799, %v6931
    %v7058 = vadd.f32 %v6800, %v6934
    %v7059 = vadd.f32 %v6801, %v6939
    %v7060 = vadd.f32 %v6802, %v6942
    %v7061 = vadd.f32 %v6803, %v6947
    %v7062 = vadd.f32 %v6804, %v6950
    %v7063 = vadd.f32 %v6805, %v6955
    %v7064 = vadd.f32 %v6806, %v6958
    %v7065 = vadd.f32 %v6807, %v6963
    %v7066 = vadd.f32 %v6808, %v6966
    %v7067 = vadd.f32 %v6809, %v6971
    %v7068 = vadd.f32 %v6810, %v6974
    %v7069 = vadd.f32 %v6811, %v6979
    %v7070 = vadd.f32 %v6812, %v6982
    %v7071 = vadd.f32 %v6813, %v6987
    %v7072 = vadd.f32 %v6814, %v6990
    %v7073 = vadd.f32 %v6815, %v6995
    %v7074 = vadd.f32 %v6816, %v6998
    %v7075 = vadd.f32 %v6817, %v7003
    %v7076 = vadd.f32 %v6818, %v7006
    %v7077 = vadd.f32 %v6819, %v7011
    %v7078 = vadd.f32 %v6820, %v7014
    %v7079 = vadd.f32 %v6821, %v7019
    %v7080 = vadd.f32 %v6822, %v7022
    %v7081 = vadd.f32 %v6823, %v7027
    %v7082 = vadd.f32 %v6824, %v7030
    %v7083 = vadd.f32 %v6825, %v7035
    %v7084 = vadd.f32 %v6826, %v7038
    %v7085 = vadd.f32 %v6827, %v7043
    %v7086 = vadd.f32 %v6828, %v7046
    %v7087 = vadd.f32 %v6829, %v7051
    %v7088 = vadd.f32 %v6830, %v7054
    %s7089 = scalar_lea.vmem %s5, 320
    %v7090 = vld [vmem:[%s7089] sm:$0xf]
    %v7091 = vld [vmem:[%s7089 + $0x4] sm:$0xf]
    %v7092 = vld [vmem:[%s7089 + $0x8] sm:$0xf]
    %v7093 = vld [vmem:[%s7089 + $0xc] sm:$0xf]
    %v7094 = vld [vmem:[%s7089 + $0x10] sm:$0xf]
    %v7095 = vld [vmem:[%s7089 + $0x14] sm:$0xf]
    %v7096 = vld [vmem:[%s7089 + $0x18] sm:$0xf]
    %v7097 = vld [vmem:[%s7089 + $0x1c] sm:$0xf]
    %v7098 = vld [vmem:[%s7089 + $0x20] sm:$0xf]
    %v7099 = vld [vmem:[%s7089 + $0x24] sm:$0xf]
    %v7100 = vld [vmem:[%s7089 + $0x28] sm:$0xf]
    %v7101 = vld [vmem:[%s7089 + $0x2c] sm:$0xf]
    %v7102 = vld [vmem:[%s7089 + $0x30] sm:$0xf]
    %v7103 = vld [vmem:[%s7089 + $0x34] sm:$0xf]
    %v7104 = vld [vmem:[%s7089 + $0x38] sm:$0xf]
    %v7105 = vld [vmem:[%s7089 + $0x3c] sm:$0xf]
    %v7122 = vunpack.c.l.b16 %v7090
    %v7123 = vunpack.c.l.b16 %v7091
    %v7124 = vunpack.c.l.b16 %v7092
    %v7125 = vunpack.c.l.b16 %v7093
    %v7126 = vunpack.c.l.b16 %v7094
    %v7127 = vunpack.c.l.b16 %v7095
    %v7128 = vunpack.c.l.b16 %v7096
    %v7129 = vunpack.c.l.b16 %v7097
    %v7130 = vunpack.c.l.b16 %v7098
    %v7131 = vunpack.c.l.b16 %v7099
    %v7132 = vunpack.c.l.b16 %v7100
    %v7133 = vunpack.c.l.b16 %v7101
    %v7134 = vunpack.c.l.b16 %v7102
    %v7135 = vunpack.c.l.b16 %v7103
    %v7136 = vunpack.c.l.b16 %v7104
    %v7137 = vunpack.c.l.b16 %v7105
    %v7138 = vpack.c.b16 %v7123, %v7122
    %v7139 = vpack.c.b16 %v7125, %v7124
    %v7140 = vpack.c.b16 %v7127, %v7126
    %v7141 = vpack.c.b16 %v7129, %v7128
    %v7142 = vpack.c.b16 %v7131, %v7130
    %v7143 = vpack.c.b16 %v7133, %v7132
    %v7144 = vpack.c.b16 %v7135, %v7134
    %v7145 = vpack.c.b16 %v7137, %v7136
    %7154 = vmatprep.subr.bf16.mxu0 0
    %7155 = vmatpush1.bf16.msra.mxu0 %v7145
    %7156 = vmatprep.subr.bf16.mxu0 0
    %7157 = vmatpush1.bf16.msra.mxu0 %v7144
    %7158 = vmatprep.subr.bf16.mxu0 0
    %7159 = vmatpush1.bf16.msra.mxu0 %v7143
    %7160 = vmatprep.subr.bf16.mxu0 0
    %7161 = vmatpush1.bf16.msra.mxu0 %v7142
    %7162 = vmatprep.subr.bf16.mxu0 0
    %7163 = vmatpush1.bf16.msra.mxu0 %v7141
    %7164 = vmatprep.subr.bf16.mxu0 0
    %7165 = vmatpush1.bf16.msra.mxu0 %v7140
    %7166 = vmatprep.subr.bf16.mxu0 0
    %7167 = vmatpush1.bf16.msra.mxu0 %v7139
    %7168 = vmatprep.subr.bf16.mxu0 0
    %7169 = vmatpush1.bf16.msra.mxu0 %v7138
    %7170 = vmatprep.subr.bf16.mxu0 0
    %7171 = vmatpush2.bf16.msra.mxu0 0
    %7172 = vmatprep.subr.bf16.mxu0 0
    %7173 = vmatpush2.bf16.msra.mxu0 0
    %7174 = vmatprep.subr.bf16.mxu0 0
    %7175 = vmatpush2.bf16.msra.mxu0 0
    %7176 = vmatprep.subr.bf16.mxu0 0
    %7177 = vmatpush2.bf16.msra.mxu0 0
    %7178 = vmatprep.subr.bf16.mxu0 0
    %7179 = vmatpush2.bf16.msra.mxu0 0
    %7180 = vmatprep.subr.bf16.mxu0 0
    %7181 = vmatpush2.bf16.msra.mxu0 0
    %7182 = vmatprep.subr.bf16.mxu0 0
    %7183 = vmatpush2.bf16.msra.mxu0 0
    %7184 = vmatprep.subr.bf16.mxu0 0
    %7185 = vmatpush2.bf16.msra.mxu0 0
    %7186 = vmatprep.mubr.bf16.mxu0 0
    %7187 = vmatmul.mubr.bf16.gmra.mxu0 %v5800
    %v7188 = vpop.f32.mrf.mxu0
    %v7189 = vadd.f32 0.0, %v7188
    %v7190 = vpop.f32.mrf.mxu0
    %v7191 = vpop.f32.mrf.mxu0
    %v7192 = vadd.f32 0.0, %v7191
    %v7193 = vpop.f32.mrf.mxu0
    %7194 = vmatprep.mubr.bf16.mxu0 0
    %7195 = vmatmul.mubr.bf16.gmra.mxu0 %v5801
    %v7196 = vpop.f32.mrf.mxu0
    %v7197 = vadd.f32 0.0, %v7196
    %v7198 = vpop.f32.mrf.mxu0
    %v7199 = vpop.f32.mrf.mxu0
    %v7200 = vadd.f32 0.0, %v7199
    %v7201 = vpop.f32.mrf.mxu0
    %7202 = vmatprep.mubr.bf16.mxu0 0
    %7203 = vmatmul.mubr.bf16.gmra.mxu0 %v5802
    %v7204 = vpop.f32.mrf.mxu0
    %v7205 = vadd.f32 0.0, %v7204
    %v7206 = vpop.f32.mrf.mxu0
    %v7207 = vpop.f32.mrf.mxu0
    %v7208 = vadd.f32 0.0, %v7207
    %v7209 = vpop.f32.mrf.mxu0
    %7210 = vmatprep.mubr.bf16.mxu0 0
    %7211 = vmatmul.mubr.bf16.gmra.mxu0 %v5803
    %v7212 = vpop.f32.mrf.mxu0
    %v7213 = vadd.f32 0.0, %v7212
    %v7214 = vpop.f32.mrf.mxu0
    %v7215 = vpop.f32.mrf.mxu0
    %v7216 = vadd.f32 0.0, %v7215
    %v7217 = vpop.f32.mrf.mxu0
    %7218 = vmatprep.mubr.bf16.mxu0 0
    %7219 = vmatmul.mubr.bf16.gmra.mxu0 %v5804
    %v7220 = vpop.f32.mrf.mxu0
    %v7221 = vadd.f32 0.0, %v7220
    %v7222 = vpop.f32.mrf.mxu0
    %v7223 = vpop.f32.mrf.mxu0
    %v7224 = vadd.f32 0.0, %v7223
    %v7225 = vpop.f32.mrf.mxu0
    %7226 = vmatprep.mubr.bf16.mxu0 0
    %7227 = vmatmul.mubr.bf16.gmra.mxu0 %v5805
    %v7228 = vpop.f32.mrf.mxu0
    %v7229 = vadd.f32 0.0, %v7228
    %v7230 = vpop.f32.mrf.mxu0
    %v7231 = vpop.f32.mrf.mxu0
    %v7232 = vadd.f32 0.0, %v7231
    %v7233 = vpop.f32.mrf.mxu0
    %7234 = vmatprep.mubr.bf16.mxu0 0
    %7235 = vmatmul.mubr.bf16.gmra.mxu0 %v5806
    %v7236 = vpop.f32.mrf.mxu0
    %v7237 = vadd.f32 0.0, %v7236
    %v7238 = vpop.f32.mrf.mxu0
    %v7239 = vpop.f32.mrf.mxu0
    %v7240 = vadd.f32 0.0, %v7239
    %v7241 = vpop.f32.mrf.mxu0
    %7242 = vmatprep.mubr.bf16.mxu0 0
    %7243 = vmatmul.mubr.bf16.gmra.mxu0 %v5807
    %v7244 = vpop.f32.mrf.mxu0
    %v7245 = vadd.f32 0.0, %v7244
    %v7246 = vpop.f32.mrf.mxu0
    %v7247 = vpop.f32.mrf.mxu0
    %v7248 = vadd.f32 0.0, %v7247
    %v7249 = vpop.f32.mrf.mxu0
    %7250 = vmatprep.mubr.bf16.mxu0 0
    %7251 = vmatmul.mubr.bf16.gmra.mxu0 %v5808
    %v7252 = vpop.f32.mrf.mxu0
    %v7253 = vadd.f32 0.0, %v7252
    %v7254 = vpop.f32.mrf.mxu0
    %v7255 = vpop.f32.mrf.mxu0
    %v7256 = vadd.f32 0.0, %v7255
    %v7257 = vpop.f32.mrf.mxu0
    %7258 = vmatprep.mubr.bf16.mxu0 0
    %7259 = vmatmul.mubr.bf16.gmra.mxu0 %v5809
    %v7260 = vpop.f32.mrf.mxu0
    %v7261 = vadd.f32 0.0, %v7260
    %v7262 = vpop.f32.mrf.mxu0
    %v7263 = vpop.f32.mrf.mxu0
    %v7264 = vadd.f32 0.0, %v7263
    %v7265 = vpop.f32.mrf.mxu0
    %7266 = vmatprep.mubr.bf16.mxu0 0
    %7267 = vmatmul.mubr.bf16.gmra.mxu0 %v5810
    %v7268 = vpop.f32.mrf.mxu0
    %v7269 = vadd.f32 0.0, %v7268
    %v7270 = vpop.f32.mrf.mxu0
    %v7271 = vpop.f32.mrf.mxu0
    %v7272 = vadd.f32 0.0, %v7271
    %v7273 = vpop.f32.mrf.mxu0
    %7274 = vmatprep.mubr.bf16.mxu0 0
    %7275 = vmatmul.mubr.bf16.gmra.mxu0 %v5811
    %v7276 = vpop.f32.mrf.mxu0
    %v7277 = vadd.f32 0.0, %v7276
    %v7278 = vpop.f32.mrf.mxu0
    %v7279 = vpop.f32.mrf.mxu0
    %v7280 = vadd.f32 0.0, %v7279
    %v7281 = vpop.f32.mrf.mxu0
    %7282 = vmatprep.mubr.bf16.mxu0 0
    %7283 = vmatmul.mubr.bf16.gmra.mxu0 %v5812
    %v7284 = vpop.f32.mrf.mxu0
    %v7285 = vadd.f32 0.0, %v7284
    %v7286 = vpop.f32.mrf.mxu0
    %v7287 = vpop.f32.mrf.mxu0
    %v7288 = vadd.f32 0.0, %v7287
    %v7289 = vpop.f32.mrf.mxu0
    %7290 = vmatprep.mubr.bf16.mxu0 0
    %7291 = vmatmul.mubr.bf16.gmra.mxu0 %v5813
    %v7292 = vpop.f32.mrf.mxu0
    %v7293 = vadd.f32 0.0, %v7292
    %v7294 = vpop.f32.mrf.mxu0
    %v7295 = vpop.f32.mrf.mxu0
    %v7296 = vadd.f32 0.0, %v7295
    %v7297 = vpop.f32.mrf.mxu0
    %7298 = vmatprep.mubr.bf16.mxu0 0
    %7299 = vmatmul.mubr.bf16.gmra.mxu0 %v5814
    %v7300 = vpop.f32.mrf.mxu0
    %v7301 = vadd.f32 0.0, %v7300
    %v7302 = vpop.f32.mrf.mxu0
    %v7303 = vpop.f32.mrf.mxu0
    %v7304 = vadd.f32 0.0, %v7303
    %v7305 = vpop.f32.mrf.mxu0
    %7306 = vmatprep.mubr.bf16.mxu0 0
    %7307 = vmatmul.mubr.bf16.gmra.mxu0 %v5815
    %v7308 = vpop.f32.mrf.mxu0
    %v7309 = vadd.f32 0.0, %v7308
    %v7310 = vpop.f32.mrf.mxu0
    %v7311 = vpop.f32.mrf.mxu0
    %v7312 = vadd.f32 0.0, %v7311
    %v7313 = vpop.f32.mrf.mxu0
    %7314 = vdwg.mxu0
    %v7315 = vadd.f32 %v7057, %v7189
    %v7316 = vadd.f32 %v7058, %v7192
    %v7317 = vadd.f32 %v7059, %v7197
    %v7318 = vadd.f32 %v7060, %v7200
    %v7319 = vadd.f32 %v7061, %v7205
    %v7320 = vadd.f32 %v7062, %v7208
    %v7321 = vadd.f32 %v7063, %v7213
    %v7322 = vadd.f32 %v7064, %v7216
    %v7323 = vadd.f32 %v7065, %v7221
    %v7324 = vadd.f32 %v7066, %v7224
    %v7325 = vadd.f32 %v7067, %v7229
    %v7326 = vadd.f32 %v7068, %v7232
    %v7327 = vadd.f32 %v7069, %v7237
    %v7328 = vadd.f32 %v7070, %v7240
    %v7329 = vadd.f32 %v7071, %v7245
    %v7330 = vadd.f32 %v7072, %v7248
    %v7331 = vadd.f32 %v7073, %v7253
    %v7332 = vadd.f32 %v7074, %v7256
    %v7333 = vadd.f32 %v7075, %v7261
    %v7334 = vadd.f32 %v7076, %v7264
    %v7335 = vadd.f32 %v7077, %v7269
    %v7336 = vadd.f32 %v7078, %v7272
    %v7337 = vadd.f32 %v7079, %v7277
    %v7338 = vadd.f32 %v7080, %v7280
    %v7339 = vadd.f32 %v7081, %v7285
    %v7340 = vadd.f32 %v7082, %v7288
    %v7341 = vadd.f32 %v7083, %v7293
    %v7342 = vadd.f32 %v7084, %v7296
    %v7343 = vadd.f32 %v7085, %v7301
    %v7344 = vadd.f32 %v7086, %v7304
    %v7345 = vadd.f32 %v7087, %v7309
    %v7346 = vadd.f32 %v7088, %v7312
    %s7347 = scalar_lea.vmem %s5, 384
    %v7348 = vld [vmem:[%s7347] sm:$0xf]
    %v7349 = vld [vmem:[%s7347 + $0x4] sm:$0xf]
    %v7350 = vld [vmem:[%s7347 + $0x8] sm:$0xf]
    %v7351 = vld [vmem:[%s7347 + $0xc] sm:$0xf]
    %v7352 = vld [vmem:[%s7347 + $0x10] sm:$0xf]
    %v7353 = vld [vmem:[%s7347 + $0x14] sm:$0xf]
    %v7354 = vld [vmem:[%s7347 + $0x18] sm:$0xf]
    %v7355 = vld [vmem:[%s7347 + $0x1c] sm:$0xf]
    %v7356 = vld [vmem:[%s7347 + $0x20] sm:$0xf]
    %v7357 = vld [vmem:[%s7347 + $0x24] sm:$0xf]
    %v7358 = vld [vmem:[%s7347 + $0x28] sm:$0xf]
    %v7359 = vld [vmem:[%s7347 + $0x2c] sm:$0xf]
    %v7360 = vld [vmem:[%s7347 + $0x30] sm:$0xf]
    %v7361 = vld [vmem:[%s7347 + $0x34] sm:$0xf]
    %v7362 = vld [vmem:[%s7347 + $0x38] sm:$0xf]
    %v7363 = vld [vmem:[%s7347 + $0x3c] sm:$0xf]
    %v7380 = vunpack.c.l.b16 %v7348
    %v7381 = vunpack.c.l.b16 %v7349
    %v7382 = vunpack.c.l.b16 %v7350
    %v7383 = vunpack.c.l.b16 %v7351
    %v7384 = vunpack.c.l.b16 %v7352
    %v7385 = vunpack.c.l.b16 %v7353
    %v7386 = vunpack.c.l.b16 %v7354
    %v7387 = vunpack.c.l.b16 %v7355
    %v7388 = vunpack.c.l.b16 %v7356
    %v7389 = vunpack.c.l.b16 %v7357
    %v7390 = vunpack.c.l.b16 %v7358
    %v7391 = vunpack.c.l.b16 %v7359
    %v7392 = vunpack.c.l.b16 %v7360
    %v7393 = vunpack.c.l.b16 %v7361
    %v7394 = vunpack.c.l.b16 %v7362
    %v7395 = vunpack.c.l.b16 %v7363
    %v7396 = vpack.c.b16 %v7381, %v7380
    %v7397 = vpack.c.b16 %v7383, %v7382
    %v7398 = vpack.c.b16 %v7385, %v7384
    %v7399 = vpack.c.b16 %v7387, %v7386
    %v7400 = vpack.c.b16 %v7389, %v7388
    %v7401 = vpack.c.b16 %v7391, %v7390
    %v7402 = vpack.c.b16 %v7393, %v7392
    %v7403 = vpack.c.b16 %v7395, %v7394
    %7412 = vmatprep.subr.bf16.mxu0 0
    %7413 = vmatpush1.bf16.msra.mxu0 %v7403
    %7414 = vmatprep.subr.bf16.mxu0 0
    %7415 = vmatpush1.bf16.msra.mxu0 %v7402
    %7416 = vmatprep.subr.bf16.mxu0 0
    %7417 = vmatpush1.bf16.msra.mxu0 %v7401
    %7418 = vmatprep.subr.bf16.mxu0 0
    %7419 = vmatpush1.bf16.msra.mxu0 %v7400
    %7420 = vmatprep.subr.bf16.mxu0 0
    %7421 = vmatpush1.bf16.msra.mxu0 %v7399
    %7422 = vmatprep.subr.bf16.mxu0 0
    %7423 = vmatpush1.bf16.msra.mxu0 %v7398
    %7424 = vmatprep.subr.bf16.mxu0 0
    %7425 = vmatpush1.bf16.msra.mxu0 %v7397
    %7426 = vmatprep.subr.bf16.mxu0 0
    %7427 = vmatpush1.bf16.msra.mxu0 %v7396
    %7428 = vmatprep.subr.bf16.mxu0 0
    %7429 = vmatpush2.bf16.msra.mxu0 0
    %7430 = vmatprep.subr.bf16.mxu0 0
    %7431 = vmatpush2.bf16.msra.mxu0 0
    %7432 = vmatprep.subr.bf16.mxu0 0
    %7433 = vmatpush2.bf16.msra.mxu0 0
    %7434 = vmatprep.subr.bf16.mxu0 0
    %7435 = vmatpush2.bf16.msra.mxu0 0
    %7436 = vmatprep.subr.bf16.mxu0 0
    %7437 = vmatpush2.bf16.msra.mxu0 0
    %7438 = vmatprep.subr.bf16.mxu0 0
    %7439 = vmatpush2.bf16.msra.mxu0 0
    %7440 = vmatprep.subr.bf16.mxu0 0
    %7441 = vmatpush2.bf16.msra.mxu0 0
    %7442 = vmatprep.subr.bf16.mxu0 0
    %7443 = vmatpush2.bf16.msra.mxu0 0
    %7444 = vmatprep.mubr.bf16.mxu0 0
    %7445 = vmatmul.mubr.bf16.gmra.mxu0 %v5816
    %v7446 = vpop.f32.mrf.mxu0
    %v7447 = vadd.f32 0.0, %v7446
    %v7448 = vpop.f32.mrf.mxu0
    %v7449 = vpop.f32.mrf.mxu0
    %v7450 = vadd.f32 0.0, %v7449
    %v7451 = vpop.f32.mrf.mxu0
    %7452 = vmatprep.mubr.bf16.mxu0 0
    %7453 = vmatmul.mubr.bf16.gmra.mxu0 %v5817
    %v7454 = vpop.f32.mrf.mxu0
    %v7455 = vadd.f32 0.0, %v7454
    %v7456 = vpop.f32.mrf.mxu0
    %v7457 = vpop.f32.mrf.mxu0
    %v7458 = vadd.f32 0.0, %v7457
    %v7459 = vpop.f32.mrf.mxu0
    %7460 = vmatprep.mubr.bf16.mxu0 0
    %7461 = vmatmul.mubr.bf16.gmra.mxu0 %v5818
    %v7462 = vpop.f32.mrf.mxu0
    %v7463 = vadd.f32 0.0, %v7462
    %v7464 = vpop.f32.mrf.mxu0
    %v7465 = vpop.f32.mrf.mxu0
    %v7466 = vadd.f32 0.0, %v7465
    %v7467 = vpop.f32.mrf.mxu0
    %7468 = vmatprep.mubr.bf16.mxu0 0
    %7469 = vmatmul.mubr.bf16.gmra.mxu0 %v5819
    %v7470 = vpop.f32.mrf.mxu0
    %v7471 = vadd.f32 0.0, %v7470
    %v7472 = vpop.f32.mrf.mxu0
    %v7473 = vpop.f32.mrf.mxu0
    %v7474 = vadd.f32 0.0, %v7473
    %v7475 = vpop.f32.mrf.mxu0
    %7476 = vmatprep.mubr.bf16.mxu0 0
    %7477 = vmatmul.mubr.bf16.gmra.mxu0 %v5820
    %v7478 = vpop.f32.mrf.mxu0
    %v7479 = vadd.f32 0.0, %v7478
    %v7480 = vpop.f32.mrf.mxu0
    %v7481 = vpop.f32.mrf.mxu0
    %v7482 = vadd.f32 0.0, %v7481
    %v7483 = vpop.f32.mrf.mxu0
    %7484 = vmatprep.mubr.bf16.mxu0 0
    %7485 = vmatmul.mubr.bf16.gmra.mxu0 %v5821
    %v7486 = vpop.f32.mrf.mxu0
    %v7487 = vadd.f32 0.0, %v7486
    %v7488 = vpop.f32.mrf.mxu0
    %v7489 = vpop.f32.mrf.mxu0
    %v7490 = vadd.f32 0.0, %v7489
    %v7491 = vpop.f32.mrf.mxu0
    %7492 = vmatprep.mubr.bf16.mxu0 0
    %7493 = vmatmul.mubr.bf16.gmra.mxu0 %v5822
    %v7494 = vpop.f32.mrf.mxu0
    %v7495 = vadd.f32 0.0, %v7494
    %v7496 = vpop.f32.mrf.mxu0
    %v7497 = vpop.f32.mrf.mxu0
    %v7498 = vadd.f32 0.0, %v7497
    %v7499 = vpop.f32.mrf.mxu0
    %7500 = vmatprep.mubr.bf16.mxu0 0
    %7501 = vmatmul.mubr.bf16.gmra.mxu0 %v5823
    %v7502 = vpop.f32.mrf.mxu0
    %v7503 = vadd.f32 0.0, %v7502
    %v7504 = vpop.f32.mrf.mxu0
    %v7505 = vpop.f32.mrf.mxu0
    %v7506 = vadd.f32 0.0, %v7505
    %v7507 = vpop.f32.mrf.mxu0
    %7508 = vmatprep.mubr.bf16.mxu0 0
    %7509 = vmatmul.mubr.bf16.gmra.mxu0 %v5824
    %v7510 = vpop.f32.mrf.mxu0
    %v7511 = vadd.f32 0.0, %v7510
    %v7512 = vpop.f32.mrf.mxu0
    %v7513 = vpop.f32.mrf.mxu0
    %v7514 = vadd.f32 0.0, %v7513
    %v7515 = vpop.f32.mrf.mxu0
    %7516 = vmatprep.mubr.bf16.mxu0 0
    %7517 = vmatmul.mubr.bf16.gmra.mxu0 %v5825
    %v7518 = vpop.f32.mrf.mxu0
    %v7519 = vadd.f32 0.0, %v7518
    %v7520 = vpop.f32.mrf.mxu0
    %v7521 = vpop.f32.mrf.mxu0
    %v7522 = vadd.f32 0.0, %v7521
    %v7523 = vpop.f32.mrf.mxu0
    %7524 = vmatprep.mubr.bf16.mxu0 0
    %7525 = vmatmul.mubr.bf16.gmra.mxu0 %v5826
    %v7526 = vpop.f32.mrf.mxu0
    %v7527 = vadd.f32 0.0, %v7526
    %v7528 = vpop.f32.mrf.mxu0
    %v7529 = vpop.f32.mrf.mxu0
    %v7530 = vadd.f32 0.0, %v7529
    %v7531 = vpop.f32.mrf.mxu0
    %7532 = vmatprep.mubr.bf16.mxu0 0
    %7533 = vmatmul.mubr.bf16.gmra.mxu0 %v5827
    %v7534 = vpop.f32.mrf.mxu0
    %v7535 = vadd.f32 0.0, %v7534
    %v7536 = vpop.f32.mrf.mxu0
    %v7537 = vpop.f32.mrf.mxu0
    %v7538 = vadd.f32 0.0, %v7537
    %v7539 = vpop.f32.mrf.mxu0
    %7540 = vmatprep.mubr.bf16.mxu0 0
    %7541 = vmatmul.mubr.bf16.gmra.mxu0 %v5828
    %v7542 = vpop.f32.mrf.mxu0
    %v7543 = vadd.f32 0.0, %v7542
    %v7544 = vpop.f32.mrf.mxu0
    %v7545 = vpop.f32.mrf.mxu0
    %v7546 = vadd.f32 0.0, %v7545
    %v7547 = vpop.f32.mrf.mxu0
    %7548 = vmatprep.mubr.bf16.mxu0 0
    %7549 = vmatmul.mubr.bf16.gmra.mxu0 %v5829
    %v7550 = vpop.f32.mrf.mxu0
    %v7551 = vadd.f32 0.0, %v7550
    %v7552 = vpop.f32.mrf.mxu0
    %v7553 = vpop.f32.mrf.mxu0
    %v7554 = vadd.f32 0.0, %v7553
    %v7555 = vpop.f32.mrf.mxu0
    %7556 = vmatprep.mubr.bf16.mxu0 0
    %7557 = vmatmul.mubr.bf16.gmra.mxu0 %v5830
    %v7558 = vpop.f32.mrf.mxu0
    %v7559 = vadd.f32 0.0, %v7558
    %v7560 = vpop.f32.mrf.mxu0
    %v7561 = vpop.f32.mrf.mxu0
    %v7562 = vadd.f32 0.0, %v7561
    %v7563 = vpop.f32.mrf.mxu0
    %7564 = vmatprep.mubr.bf16.mxu0 0
    %7565 = vmatmul.mubr.bf16.gmra.mxu0 %v5831
    %v7566 = vpop.f32.mrf.mxu0
    %v7567 = vadd.f32 0.0, %v7566
    %v7568 = vpop.f32.mrf.mxu0
    %v7569 = vpop.f32.mrf.mxu0
    %v7570 = vadd.f32 0.0, %v7569
    %v7571 = vpop.f32.mrf.mxu0
    %7572 = vdwg.mxu0
    %v7573 = vadd.f32 %v7315, %v7447
    %v7574 = vadd.f32 %v7316, %v7450
    %v7575 = vadd.f32 %v7317, %v7455
    %v7576 = vadd.f32 %v7318, %v7458
    %v7577 = vadd.f32 %v7319, %v7463
    %v7578 = vadd.f32 %v7320, %v7466
    %v7579 = vadd.f32 %v7321, %v7471
    %v7580 = vadd.f32 %v7322, %v7474
    %v7581 = vadd.f32 %v7323, %v7479
    %v7582 = vadd.f32 %v7324, %v7482
    %v7583 = vadd.f32 %v7325, %v7487
    %v7584 = vadd.f32 %v7326, %v7490
    %v7585 = vadd.f32 %v7327, %v7495
    %v7586 = vadd.f32 %v7328, %v7498
    %v7587 = vadd.f32 %v7329, %v7503
    %v7588 = vadd.f32 %v7330, %v7506
    %v7589 = vadd.f32 %v7331, %v7511
    %v7590 = vadd.f32 %v7332, %v7514
    %v7591 = vadd.f32 %v7333, %v7519
    %v7592 = vadd.f32 %v7334, %v7522
    %v7593 = vadd.f32 %v7335, %v7527
    %v7594 = vadd.f32 %v7336, %v7530
    %v7595 = vadd.f32 %v7337, %v7535
    %v7596 = vadd.f32 %v7338, %v7538
    %v7597 = vadd.f32 %v7339, %v7543
    %v7598 = vadd.f32 %v7340, %v7546
    %v7599 = vadd.f32 %v7341, %v7551
    %v7600 = vadd.f32 %v7342, %v7554
    %v7601 = vadd.f32 %v7343, %v7559
    %v7602 = vadd.f32 %v7344, %v7562
    %v7603 = vadd.f32 %v7345, %v7567
    %v7604 = vadd.f32 %v7346, %v7570
    %s7605 = scalar_lea.vmem %s5, 448
    %v7606 = vld [vmem:[%s7605] sm:$0xf]
    %v7607 = vld [vmem:[%s7605 + $0x4] sm:$0xf]
    %v7608 = vld [vmem:[%s7605 + $0x8] sm:$0xf]
    %v7609 = vld [vmem:[%s7605 + $0xc] sm:$0xf]
    %v7610 = vld [vmem:[%s7605 + $0x10] sm:$0xf]
    %v7611 = vld [vmem:[%s7605 + $0x14] sm:$0xf]
    %v7612 = vld [vmem:[%s7605 + $0x18] sm:$0xf]
    %v7613 = vld [vmem:[%s7605 + $0x1c] sm:$0xf]
    %v7614 = vld [vmem:[%s7605 + $0x20] sm:$0xf]
    %v7615 = vld [vmem:[%s7605 + $0x24] sm:$0xf]
    %v7616 = vld [vmem:[%s7605 + $0x28] sm:$0xf]
    %v7617 = vld [vmem:[%s7605 + $0x2c] sm:$0xf]
    %v7618 = vld [vmem:[%s7605 + $0x30] sm:$0xf]
    %v7619 = vld [vmem:[%s7605 + $0x34] sm:$0xf]
    %v7620 = vld [vmem:[%s7605 + $0x38] sm:$0xf]
    %v7621 = vld [vmem:[%s7605 + $0x3c] sm:$0xf]
    %v7638 = vunpack.c.l.b16 %v7606
    %v7639 = vunpack.c.l.b16 %v7607
    %v7640 = vunpack.c.l.b16 %v7608
    %v7641 = vunpack.c.l.b16 %v7609
    %v7642 = vunpack.c.l.b16 %v7610
    %v7643 = vunpack.c.l.b16 %v7611
    %v7644 = vunpack.c.l.b16 %v7612
    %v7645 = vunpack.c.l.b16 %v7613
    %v7646 = vunpack.c.l.b16 %v7614
    %v7647 = vunpack.c.l.b16 %v7615
    %v7648 = vunpack.c.l.b16 %v7616
    %v7649 = vunpack.c.l.b16 %v7617
    %v7650 = vunpack.c.l.b16 %v7618
    %v7651 = vunpack.c.l.b16 %v7619
    %v7652 = vunpack.c.l.b16 %v7620
    %v7653 = vunpack.c.l.b16 %v7621
    %v7654 = vpack.c.b16 %v7639, %v7638
    %v7655 = vpack.c.b16 %v7641, %v7640
    %v7656 = vpack.c.b16 %v7643, %v7642
    %v7657 = vpack.c.b16 %v7645, %v7644
    %v7658 = vpack.c.b16 %v7647, %v7646
    %v7659 = vpack.c.b16 %v7649, %v7648
    %v7660 = vpack.c.b16 %v7651, %v7650
    %v7661 = vpack.c.b16 %v7653, %v7652
    %7670 = vmatprep.subr.bf16.mxu0 0
    %7671 = vmatpush1.bf16.msra.mxu0 %v7661
    %7672 = vmatprep.subr.bf16.mxu0 0
    %7673 = vmatpush1.bf16.msra.mxu0 %v7660
    %7674 = vmatprep.subr.bf16.mxu0 0
    %7675 = vmatpush1.bf16.msra.mxu0 %v7659
    %7676 = vmatprep.subr.bf16.mxu0 0
    %7677 = vmatpush1.bf16.msra.mxu0 %v7658
    %7678 = vmatprep.subr.bf16.mxu0 0
    %7679 = vmatpush1.bf16.msra.mxu0 %v7657
    %7680 = vmatprep.subr.bf16.mxu0 0
    %7681 = vmatpush1.bf16.msra.mxu0 %v7656
    %7682 = vmatprep.subr.bf16.mxu0 0
    %7683 = vmatpush1.bf16.msra.mxu0 %v7655
    %7684 = vmatprep.subr.bf16.mxu0 0
    %7685 = vmatpush1.bf16.msra.mxu0 %v7654
    %7686 = vmatprep.subr.bf16.mxu0 0
    %7687 = vmatpush2.bf16.msra.mxu0 0
    %7688 = vmatprep.subr.bf16.mxu0 0
    %7689 = vmatpush2.bf16.msra.mxu0 0
    %7690 = vmatprep.subr.bf16.mxu0 0
    %7691 = vmatpush2.bf16.msra.mxu0 0
    %7692 = vmatprep.subr.bf16.mxu0 0
    %7693 = vmatpush2.bf16.msra.mxu0 0
    %7694 = vmatprep.subr.bf16.mxu0 0
    %7695 = vmatpush2.bf16.msra.mxu0 0
    %7696 = vmatprep.subr.bf16.mxu0 0
    %7697 = vmatpush2.bf16.msra.mxu0 0
    %7698 = vmatprep.subr.bf16.mxu0 0
    %7699 = vmatpush2.bf16.msra.mxu0 0
    %7700 = vmatprep.subr.bf16.mxu0 0
    %7701 = vmatpush2.bf16.msra.mxu0 0
    %7702 = vmatprep.mubr.bf16.mxu0 0
    %7703 = vmatmul.mubr.bf16.gmra.mxu0 %v5832
    %v7704 = vpop.f32.mrf.mxu0
    %v7705 = vadd.f32 0.0, %v7704
    %v7706 = vpop.f32.mrf.mxu0
    %v7707 = vpop.f32.mrf.mxu0
    %v7708 = vadd.f32 0.0, %v7707
    %v7709 = vpop.f32.mrf.mxu0
    %7710 = vmatprep.mubr.bf16.mxu0 0
    %7711 = vmatmul.mubr.bf16.gmra.mxu0 %v5833
    %v7712 = vpop.f32.mrf.mxu0
    %v7713 = vadd.f32 0.0, %v7712
    %v7714 = vpop.f32.mrf.mxu0
    %v7715 = vpop.f32.mrf.mxu0
    %v7716 = vadd.f32 0.0, %v7715
    %v7717 = vpop.f32.mrf.mxu0
    %7718 = vmatprep.mubr.bf16.mxu0 0
    %7719 = vmatmul.mubr.bf16.gmra.mxu0 %v5834
    %v7720 = vpop.f32.mrf.mxu0
    %v7721 = vadd.f32 0.0, %v7720
    %v7722 = vpop.f32.mrf.mxu0
    %v7723 = vpop.f32.mrf.mxu0
    %v7724 = vadd.f32 0.0, %v7723
    %v7725 = vpop.f32.mrf.mxu0
    %7726 = vmatprep.mubr.bf16.mxu0 0
    %7727 = vmatmul.mubr.bf16.gmra.mxu0 %v5835
    %v7728 = vpop.f32.mrf.mxu0
    %v7729 = vadd.f32 0.0, %v7728
    %v7730 = vpop.f32.mrf.mxu0
    %v7731 = vpop.f32.mrf.mxu0
    %v7732 = vadd.f32 0.0, %v7731
    %v7733 = vpop.f32.mrf.mxu0
    %7734 = vmatprep.mubr.bf16.mxu0 0
    %7735 = vmatmul.mubr.bf16.gmra.mxu0 %v5836
    %v7736 = vpop.f32.mrf.mxu0
    %v7737 = vadd.f32 0.0, %v7736
    %v7738 = vpop.f32.mrf.mxu0
    %v7739 = vpop.f32.mrf.mxu0
    %v7740 = vadd.f32 0.0, %v7739
    %v7741 = vpop.f32.mrf.mxu0
    %7742 = vmatprep.mubr.bf16.mxu0 0
    %7743 = vmatmul.mubr.bf16.gmra.mxu0 %v5837
    %v7744 = vpop.f32.mrf.mxu0
    %v7745 = vadd.f32 0.0, %v7744
    %v7746 = vpop.f32.mrf.mxu0
    %v7747 = vpop.f32.mrf.mxu0
    %v7748 = vadd.f32 0.0, %v7747
    %v7749 = vpop.f32.mrf.mxu0
    %7750 = vmatprep.mubr.bf16.mxu0 0
    %7751 = vmatmul.mubr.bf16.gmra.mxu0 %v5838
    %v7752 = vpop.f32.mrf.mxu0
    %v7753 = vadd.f32 0.0, %v7752
    %v7754 = vpop.f32.mrf.mxu0
    %v7755 = vpop.f32.mrf.mxu0
    %v7756 = vadd.f32 0.0, %v7755
    %v7757 = vpop.f32.mrf.mxu0
    %7758 = vmatprep.mubr.bf16.mxu0 0
    %7759 = vmatmul.mubr.bf16.gmra.mxu0 %v5839
    %v7760 = vpop.f32.mrf.mxu0
    %v7761 = vadd.f32 0.0, %v7760
    %v7762 = vpop.f32.mrf.mxu0
    %v7763 = vpop.f32.mrf.mxu0
    %v7764 = vadd.f32 0.0, %v7763
    %v7765 = vpop.f32.mrf.mxu0
    %7766 = vmatprep.mubr.bf16.mxu0 0
    %7767 = vmatmul.mubr.bf16.gmra.mxu0 %v5840
    %v7768 = vpop.f32.mrf.mxu0
    %v7769 = vadd.f32 0.0, %v7768
    %v7770 = vpop.f32.mrf.mxu0
    %v7771 = vpop.f32.mrf.mxu0
    %v7772 = vadd.f32 0.0, %v7771
    %v7773 = vpop.f32.mrf.mxu0
    %7774 = vmatprep.mubr.bf16.mxu0 0
    %7775 = vmatmul.mubr.bf16.gmra.mxu0 %v5841
    %v7776 = vpop.f32.mrf.mxu0
    %v7777 = vadd.f32 0.0, %v7776
    %v7778 = vpop.f32.mrf.mxu0
    %v7779 = vpop.f32.mrf.mxu0
    %v7780 = vadd.f32 0.0, %v7779
    %v7781 = vpop.f32.mrf.mxu0
    %7782 = vmatprep.mubr.bf16.mxu0 0
    %7783 = vmatmul.mubr.bf16.gmra.mxu0 %v5842
    %v7784 = vpop.f32.mrf.mxu0
    %v7785 = vadd.f32 0.0, %v7784
    %v7786 = vpop.f32.mrf.mxu0
    %v7787 = vpop.f32.mrf.mxu0
    %v7788 = vadd.f32 0.0, %v7787
    %v7789 = vpop.f32.mrf.mxu0
    %7790 = vmatprep.mubr.bf16.mxu0 0
    %7791 = vmatmul.mubr.bf16.gmra.mxu0 %v5843
    %v7792 = vpop.f32.mrf.mxu0
    %v7793 = vadd.f32 0.0, %v7792
    %v7794 = vpop.f32.mrf.mxu0
    %v7795 = vpop.f32.mrf.mxu0
    %v7796 = vadd.f32 0.0, %v7795
    %v7797 = vpop.f32.mrf.mxu0
    %7798 = vmatprep.mubr.bf16.mxu0 0
    %7799 = vmatmul.mubr.bf16.gmra.mxu0 %v5844
    %v7800 = vpop.f32.mrf.mxu0
    %v7801 = vadd.f32 0.0, %v7800
    %v7802 = vpop.f32.mrf.mxu0
    %v7803 = vpop.f32.mrf.mxu0
    %v7804 = vadd.f32 0.0, %v7803
    %v7805 = vpop.f32.mrf.mxu0
    %7806 = vmatprep.mubr.bf16.mxu0 0
    %7807 = vmatmul.mubr.bf16.gmra.mxu0 %v5845
    %v7808 = vpop.f32.mrf.mxu0
    %v7809 = vadd.f32 0.0, %v7808
    %v7810 = vpop.f32.mrf.mxu0
    %v7811 = vpop.f32.mrf.mxu0
    %v7812 = vadd.f32 0.0, %v7811
    %v7813 = vpop.f32.mrf.mxu0
    %7814 = vmatprep.mubr.bf16.mxu0 0
    %7815 = vmatmul.mubr.bf16.gmra.mxu0 %v5846
    %v7816 = vpop.f32.mrf.mxu0
    %v7817 = vadd.f32 0.0, %v7816
    %v7818 = vpop.f32.mrf.mxu0
    %v7819 = vpop.f32.mrf.mxu0
    %v7820 = vadd.f32 0.0, %v7819
    %v7821 = vpop.f32.mrf.mxu0
    %7822 = vmatprep.mubr.bf16.mxu0 0
    %7823 = vmatmul.mubr.bf16.gmra.mxu0 %v5847
    %v7824 = vpop.f32.mrf.mxu0
    %v7825 = vadd.f32 0.0, %v7824
    %v7826 = vpop.f32.mrf.mxu0
    %v7827 = vpop.f32.mrf.mxu0
    %v7828 = vadd.f32 0.0, %v7827
    %v7829 = vpop.f32.mrf.mxu0
    %7830 = vdwg.mxu0
    %v7831 = vadd.f32 %v7573, %v7705
    %v7832 = vadd.f32 %v7574, %v7708
    %v7833 = vadd.f32 %v7575, %v7713
    %v7834 = vadd.f32 %v7576, %v7716
    %v7835 = vadd.f32 %v7577, %v7721
    %v7836 = vadd.f32 %v7578, %v7724
    %v7837 = vadd.f32 %v7579, %v7729
    %v7838 = vadd.f32 %v7580, %v7732
    %v7839 = vadd.f32 %v7581, %v7737
    %v7840 = vadd.f32 %v7582, %v7740
    %v7841 = vadd.f32 %v7583, %v7745
    %v7842 = vadd.f32 %v7584, %v7748
    %v7843 = vadd.f32 %v7585, %v7753
    %v7844 = vadd.f32 %v7586, %v7756
    %v7845 = vadd.f32 %v7587, %v7761
    %v7846 = vadd.f32 %v7588, %v7764
    %v7847 = vadd.f32 %v7589, %v7769
    %v7848 = vadd.f32 %v7590, %v7772
    %v7849 = vadd.f32 %v7591, %v7777
    %v7850 = vadd.f32 %v7592, %v7780
    %v7851 = vadd.f32 %v7593, %v7785
    %v7852 = vadd.f32 %v7594, %v7788
    %v7853 = vadd.f32 %v7595, %v7793
    %v7854 = vadd.f32 %v7596, %v7796
    %v7855 = vadd.f32 %v7597, %v7801
    %v7856 = vadd.f32 %v7598, %v7804
    %v7857 = vadd.f32 %v7599, %v7809
    %v7858 = vadd.f32 %v7600, %v7812
    %v7859 = vadd.f32 %v7601, %v7817
    %v7860 = vadd.f32 %v7602, %v7820
    %v7861 = vadd.f32 %v7603, %v7825
    %v7862 = vadd.f32 %v7604, %v7828
    %s7863 = scalar_lea.vmem %s5, 512
    %v7864 = vld [vmem:[%s7863] sm:$0xf]
    %v7865 = vld [vmem:[%s7863 + $0x4] sm:$0xf]
    %v7866 = vld [vmem:[%s7863 + $0x8] sm:$0xf]
    %v7867 = vld [vmem:[%s7863 + $0xc] sm:$0xf]
    %v7868 = vld [vmem:[%s7863 + $0x10] sm:$0xf]
    %v7869 = vld [vmem:[%s7863 + $0x14] sm:$0xf]
    %v7870 = vld [vmem:[%s7863 + $0x18] sm:$0xf]
    %v7871 = vld [vmem:[%s7863 + $0x1c] sm:$0xf]
    %v7872 = vld [vmem:[%s7863 + $0x20] sm:$0xf]
    %v7873 = vld [vmem:[%s7863 + $0x24] sm:$0xf]
    %v7874 = vld [vmem:[%s7863 + $0x28] sm:$0xf]
    %v7875 = vld [vmem:[%s7863 + $0x2c] sm:$0xf]
    %v7876 = vld [vmem:[%s7863 + $0x30] sm:$0xf]
    %v7877 = vld [vmem:[%s7863 + $0x34] sm:$0xf]
    %v7878 = vld [vmem:[%s7863 + $0x38] sm:$0xf]
    %v7879 = vld [vmem:[%s7863 + $0x3c] sm:$0xf]
    %v7896 = vunpack.c.l.b16 %v7864
    %v7897 = vunpack.c.l.b16 %v7865
    %v7898 = vunpack.c.l.b16 %v7866
    %v7899 = vunpack.c.l.b16 %v7867
    %v7900 = vunpack.c.l.b16 %v7868
    %v7901 = vunpack.c.l.b16 %v7869
    %v7902 = vunpack.c.l.b16 %v7870
    %v7903 = vunpack.c.l.b16 %v7871
    %v7904 = vunpack.c.l.b16 %v7872
    %v7905 = vunpack.c.l.b16 %v7873
    %v7906 = vunpack.c.l.b16 %v7874
    %v7907 = vunpack.c.l.b16 %v7875
    %v7908 = vunpack.c.l.b16 %v7876
    %v7909 = vunpack.c.l.b16 %v7877
    %v7910 = vunpack.c.l.b16 %v7878
    %v7911 = vunpack.c.l.b16 %v7879
    %v7912 = vpack.c.b16 %v7897, %v7896
    %v7913 = vpack.c.b16 %v7899, %v7898
    %v7914 = vpack.c.b16 %v7901, %v7900
    %v7915 = vpack.c.b16 %v7903, %v7902
    %v7916 = vpack.c.b16 %v7905, %v7904
    %v7917 = vpack.c.b16 %v7907, %v7906
    %v7918 = vpack.c.b16 %v7909, %v7908
    %v7919 = vpack.c.b16 %v7911, %v7910
    %7928 = vmatprep.subr.bf16.mxu0 0
    %7929 = vmatpush1.bf16.msra.mxu0 %v7919
    %7930 = vmatprep.subr.bf16.mxu0 0
    %7931 = vmatpush1.bf16.msra.mxu0 %v7918
    %7932 = vmatprep.subr.bf16.mxu0 0
    %7933 = vmatpush1.bf16.msra.mxu0 %v7917
    %7934 = vmatprep.subr.bf16.mxu0 0
    %7935 = vmatpush1.bf16.msra.mxu0 %v7916
    %7936 = vmatprep.subr.bf16.mxu0 0
    %7937 = vmatpush1.bf16.msra.mxu0 %v7915
    %7938 = vmatprep.subr.bf16.mxu0 0
    %7939 = vmatpush1.bf16.msra.mxu0 %v7914
    %7940 = vmatprep.subr.bf16.mxu0 0
    %7941 = vmatpush1.bf16.msra.mxu0 %v7913
    %7942 = vmatprep.subr.bf16.mxu0 0
    %7943 = vmatpush1.bf16.msra.mxu0 %v7912
    %7944 = vmatprep.subr.bf16.mxu0 0
    %7945 = vmatpush2.bf16.msra.mxu0 0
    %7946 = vmatprep.subr.bf16.mxu0 0
    %7947 = vmatpush2.bf16.msra.mxu0 0
    %7948 = vmatprep.subr.bf16.mxu0 0
    %7949 = vmatpush2.bf16.msra.mxu0 0
    %7950 = vmatprep.subr.bf16.mxu0 0
    %7951 = vmatpush2.bf16.msra.mxu0 0
    %7952 = vmatprep.subr.bf16.mxu0 0
    %7953 = vmatpush2.bf16.msra.mxu0 0
    %7954 = vmatprep.subr.bf16.mxu0 0
    %7955 = vmatpush2.bf16.msra.mxu0 0
    %7956 = vmatprep.subr.bf16.mxu0 0
    %7957 = vmatpush2.bf16.msra.mxu0 0
    %7958 = vmatprep.subr.bf16.mxu0 0
    %7959 = vmatpush2.bf16.msra.mxu0 0
    %7960 = vmatprep.mubr.bf16.mxu0 0
    %7961 = vmatmul.mubr.bf16.gmra.mxu0 %v5848
    %v7962 = vpop.f32.mrf.mxu0
    %v7963 = vadd.f32 0.0, %v7962
    %v7964 = vpop.f32.mrf.mxu0
    %v7965 = vpop.f32.mrf.mxu0
    %v7966 = vadd.f32 0.0, %v7965
    %v7967 = vpop.f32.mrf.mxu0
    %7968 = vmatprep.mubr.bf16.mxu0 0
    %7969 = vmatmul.mubr.bf16.gmra.mxu0 %v5849
    %v7970 = vpop.f32.mrf.mxu0
    %v7971 = vadd.f32 0.0, %v7970
    %v7972 = vpop.f32.mrf.mxu0
    %v7973 = vpop.f32.mrf.mxu0
    %v7974 = vadd.f32 0.0, %v7973
    %v7975 = vpop.f32.mrf.mxu0
    %7976 = vmatprep.mubr.bf16.mxu0 0
    %7977 = vmatmul.mubr.bf16.gmra.mxu0 %v5850
    %v7978 = vpop.f32.mrf.mxu0
    %v7979 = vadd.f32 0.0, %v7978
    %v7980 = vpop.f32.mrf.mxu0
    %v7981 = vpop.f32.mrf.mxu0
    %v7982 = vadd.f32 0.0, %v7981
    %v7983 = vpop.f32.mrf.mxu0
    %7984 = vmatprep.mubr.bf16.mxu0 0
    %7985 = vmatmul.mubr.bf16.gmra.mxu0 %v5851
    %v7986 = vpop.f32.mrf.mxu0
    %v7987 = vadd.f32 0.0, %v7986
    %v7988 = vpop.f32.mrf.mxu0
    %v7989 = vpop.f32.mrf.mxu0
    %v7990 = vadd.f32 0.0, %v7989
    %v7991 = vpop.f32.mrf.mxu0
    %7992 = vmatprep.mubr.bf16.mxu0 0
    %7993 = vmatmul.mubr.bf16.gmra.mxu0 %v5852
    %v7994 = vpop.f32.mrf.mxu0
    %v7995 = vadd.f32 0.0, %v7994
    %v7996 = vpop.f32.mrf.mxu0
    %v7997 = vpop.f32.mrf.mxu0
    %v7998 = vadd.f32 0.0, %v7997
    %v7999 = vpop.f32.mrf.mxu0
    %8000 = vmatprep.mubr.bf16.mxu0 0
    %8001 = vmatmul.mubr.bf16.gmra.mxu0 %v5853
    %v8002 = vpop.f32.mrf.mxu0
    %v8003 = vadd.f32 0.0, %v8002
    %v8004 = vpop.f32.mrf.mxu0
    %v8005 = vpop.f32.mrf.mxu0
    %v8006 = vadd.f32 0.0, %v8005
    %v8007 = vpop.f32.mrf.mxu0
    %8008 = vmatprep.mubr.bf16.mxu0 0
    %8009 = vmatmul.mubr.bf16.gmra.mxu0 %v5854
    %v8010 = vpop.f32.mrf.mxu0
    %v8011 = vadd.f32 0.0, %v8010
    %v8012 = vpop.f32.mrf.mxu0
    %v8013 = vpop.f32.mrf.mxu0
    %v8014 = vadd.f32 0.0, %v8013
    %v8015 = vpop.f32.mrf.mxu0
    %8016 = vmatprep.mubr.bf16.mxu0 0
    %8017 = vmatmul.mubr.bf16.gmra.mxu0 %v5855
    %v8018 = vpop.f32.mrf.mxu0
    %v8019 = vadd.f32 0.0, %v8018
    %v8020 = vpop.f32.mrf.mxu0
    %v8021 = vpop.f32.mrf.mxu0
    %v8022 = vadd.f32 0.0, %v8021
    %v8023 = vpop.f32.mrf.mxu0
    %8024 = vmatprep.mubr.bf16.mxu0 0
    %8025 = vmatmul.mubr.bf16.gmra.mxu0 %v5856
    %v8026 = vpop.f32.mrf.mxu0
    %v8027 = vadd.f32 0.0, %v8026
    %v8028 = vpop.f32.mrf.mxu0
    %v8029 = vpop.f32.mrf.mxu0
    %v8030 = vadd.f32 0.0, %v8029
    %v8031 = vpop.f32.mrf.mxu0
    %8032 = vmatprep.mubr.bf16.mxu0 0
    %8033 = vmatmul.mubr.bf16.gmra.mxu0 %v5857
    %v8034 = vpop.f32.mrf.mxu0
    %v8035 = vadd.f32 0.0, %v8034
    %v8036 = vpop.f32.mrf.mxu0
    %v8037 = vpop.f32.mrf.mxu0
    %v8038 = vadd.f32 0.0, %v8037
    %v8039 = vpop.f32.mrf.mxu0
    %8040 = vmatprep.mubr.bf16.mxu0 0
    %8041 = vmatmul.mubr.bf16.gmra.mxu0 %v5858
    %v8042 = vpop.f32.mrf.mxu0
    %v8043 = vadd.f32 0.0, %v8042
    %v8044 = vpop.f32.mrf.mxu0
    %v8045 = vpop.f32.mrf.mxu0
    %v8046 = vadd.f32 0.0, %v8045
    %v8047 = vpop.f32.mrf.mxu0
    %8048 = vmatprep.mubr.bf16.mxu0 0
    %8049 = vmatmul.mubr.bf16.gmra.mxu0 %v5859
    %v8050 = vpop.f32.mrf.mxu0
    %v8051 = vadd.f32 0.0, %v8050
    %v8052 = vpop.f32.mrf.mxu0
    %v8053 = vpop.f32.mrf.mxu0
    %v8054 = vadd.f32 0.0, %v8053
    %v8055 = vpop.f32.mrf.mxu0
    %8056 = vmatprep.mubr.bf16.mxu0 0
    %8057 = vmatmul.mubr.bf16.gmra.mxu0 %v5860
    %v8058 = vpop.f32.mrf.mxu0
    %v8059 = vadd.f32 0.0, %v8058
    %v8060 = vpop.f32.mrf.mxu0
    %v8061 = vpop.f32.mrf.mxu0
    %v8062 = vadd.f32 0.0, %v8061
    %v8063 = vpop.f32.mrf.mxu0
    %8064 = vmatprep.mubr.bf16.mxu0 0
    %8065 = vmatmul.mubr.bf16.gmra.mxu0 %v5861
    %v8066 = vpop.f32.mrf.mxu0
    %v8067 = vadd.f32 0.0, %v8066
    %v8068 = vpop.f32.mrf.mxu0
    %v8069 = vpop.f32.mrf.mxu0
    %v8070 = vadd.f32 0.0, %v8069
    %v8071 = vpop.f32.mrf.mxu0
    %8072 = vmatprep.mubr.bf16.mxu0 0
    %8073 = vmatmul.mubr.bf16.gmra.mxu0 %v5862
    %v8074 = vpop.f32.mrf.mxu0
    %v8075 = vadd.f32 0.0, %v8074
    %v8076 = vpop.f32.mrf.mxu0
    %v8077 = vpop.f32.mrf.mxu0
    %v8078 = vadd.f32 0.0, %v8077
    %v8079 = vpop.f32.mrf.mxu0
    %8080 = vmatprep.mubr.bf16.mxu0 0
    %8081 = vmatmul.mubr.bf16.gmra.mxu0 %v5863
    %v8082 = vpop.f32.mrf.mxu0
    %v8083 = vadd.f32 0.0, %v8082
    %v8084 = vpop.f32.mrf.mxu0
    %v8085 = vpop.f32.mrf.mxu0
    %v8086 = vadd.f32 0.0, %v8085
    %v8087 = vpop.f32.mrf.mxu0
    %8088 = vdwg.mxu0
    %v8089 = vadd.f32 %v7831, %v7963
    %v8090 = vadd.f32 %v7832, %v7966
    %v8091 = vadd.f32 %v7833, %v7971
    %v8092 = vadd.f32 %v7834, %v7974
    %v8093 = vadd.f32 %v7835, %v7979
    %v8094 = vadd.f32 %v7836, %v7982
    %v8095 = vadd.f32 %v7837, %v7987
    %v8096 = vadd.f32 %v7838, %v7990
    %v8097 = vadd.f32 %v7839, %v7995
    %v8098 = vadd.f32 %v7840, %v7998
    %v8099 = vadd.f32 %v7841, %v8003
    %v8100 = vadd.f32 %v7842, %v8006
    %v8101 = vadd.f32 %v7843, %v8011
    %v8102 = vadd.f32 %v7844, %v8014
    %v8103 = vadd.f32 %v7845, %v8019
    %v8104 = vadd.f32 %v7846, %v8022
    %v8105 = vadd.f32 %v7847, %v8027
    %v8106 = vadd.f32 %v7848, %v8030
    %v8107 = vadd.f32 %v7849, %v8035
    %v8108 = vadd.f32 %v7850, %v8038
    %v8109 = vadd.f32 %v7851, %v8043
    %v8110 = vadd.f32 %v7852, %v8046
    %v8111 = vadd.f32 %v7853, %v8051
    %v8112 = vadd.f32 %v7854, %v8054
    %v8113 = vadd.f32 %v7855, %v8059
    %v8114 = vadd.f32 %v7856, %v8062
    %v8115 = vadd.f32 %v7857, %v8067
    %v8116 = vadd.f32 %v7858, %v8070
    %v8117 = vadd.f32 %v7859, %v8075
    %v8118 = vadd.f32 %v7860, %v8078
    %v8119 = vadd.f32 %v7861, %v8083
    %v8120 = vadd.f32 %v7862, %v8086
    %v8121 = vld [vmem:[%s6] sm:$0x1]
    %v8123 = vlaneseq
    %v8124 = vshrl.u32 %v8123, 7
    %v8125 = vsub.s32 0, %v8124
    %v8126 = vrot.slane %v8121, %v8125
    %v8128 = vadd.f32 %v8089, %v8126
    %v8129 = vadd.f32 %v8090, %v8126
    %v8130 = vadd.f32 %v8091, %v8126
    %v8131 = vadd.f32 %v8092, %v8126
    %v8132 = vadd.f32 %v8093, %v8126
    %v8133 = vadd.f32 %v8094, %v8126
    %v8134 = vadd.f32 %v8095, %v8126
    %v8135 = vadd.f32 %v8096, %v8126
    %v8136 = vadd.f32 %v8097, %v8126
    %v8137 = vadd.f32 %v8098, %v8126
    %v8138 = vadd.f32 %v8099, %v8126
    %v8139 = vadd.f32 %v8100, %v8126
    %v8140 = vadd.f32 %v8101, %v8126
    %v8141 = vadd.f32 %v8102, %v8126
    %v8142 = vadd.f32 %v8103, %v8126
    %v8143 = vadd.f32 %v8104, %v8126
    %v8144 = vadd.f32 %v8105, %v8126
    %v8145 = vadd.f32 %v8106, %v8126
    %v8146 = vadd.f32 %v8107, %v8126
    %v8147 = vadd.f32 %v8108, %v8126
    %v8148 = vadd.f32 %v8109, %v8126
    %v8149 = vadd.f32 %v8110, %v8126
    %v8150 = vadd.f32 %v8111, %v8126
    %v8151 = vadd.f32 %v8112, %v8126
    %v8152 = vadd.f32 %v8113, %v8126
    %v8153 = vadd.f32 %v8114, %v8126
    %v8154 = vadd.f32 %v8115, %v8126
    %v8155 = vadd.f32 %v8116, %v8126
    %v8156 = vadd.f32 %v8117, %v8126
    %v8157 = vadd.f32 %v8118, %v8126
    %v8158 = vadd.f32 %v8119, %v8126
    %v8159 = vadd.f32 %v8120, %v8126
    %v8160 = vmax.f32 %v8128, 0.0
    %v8161 = vmax.f32 %v8129, 0.0
    %v8162 = vmax.f32 %v8130, 0.0
    %v8163 = vmax.f32 %v8131, 0.0
    %v8164 = vmax.f32 %v8132, 0.0
    %v8165 = vmax.f32 %v8133, 0.0
    %v8166 = vmax.f32 %v8134, 0.0
    %v8167 = vmax.f32 %v8135, 0.0
    %v8168 = vmax.f32 %v8136, 0.0
    %v8169 = vmax.f32 %v8137, 0.0
    %v8170 = vmax.f32 %v8138, 0.0
    %v8171 = vmax.f32 %v8139, 0.0
    %v8172 = vmax.f32 %v8140, 0.0
    %v8173 = vmax.f32 %v8141, 0.0
    %v8174 = vmax.f32 %v8142, 0.0
    %v8175 = vmax.f32 %v8143, 0.0
    %v8176 = vmax.f32 %v8144, 0.0
    %v8177 = vmax.f32 %v8145, 0.0
    %v8178 = vmax.f32 %v8146, 0.0
    %v8179 = vmax.f32 %v8147, 0.0
    %v8180 = vmax.f32 %v8148, 0.0
    %v8181 = vmax.f32 %v8149, 0.0
    %v8182 = vmax.f32 %v8150, 0.0
    %v8183 = vmax.f32 %v8151, 0.0
    %v8184 = vmax.f32 %v8152, 0.0
    %v8185 = vmax.f32 %v8153, 0.0
    %v8186 = vmax.f32 %v8154, 0.0
    %v8187 = vmax.f32 %v8155, 0.0
    %v8188 = vmax.f32 %v8156, 0.0
    %v8189 = vmax.f32 %v8157, 0.0
    %v8190 = vmax.f32 %v8158, 0.0
    %v8191 = vmax.f32 %v8159, 0.0
    %v8192 = vld [vmem:[%s7] sm:$0xff]
    %v8193 = vld [vmem:[%s7 + $0x8] sm:$0xff]
    %v8194 = vld [vmem:[%s7 + $0x10] sm:$0xff]
    %v8195 = vld [vmem:[%s7 + $0x18] sm:$0xff]
    %v8196 = vld [vmem:[%s7 + $0x20] sm:$0xff]
    %v8197 = vld [vmem:[%s7 + $0x28] sm:$0xff]
    %v8198 = vld [vmem:[%s7 + $0x30] sm:$0xff]
    %v8199 = vld [vmem:[%s7 + $0x38] sm:$0xff]
    %v8200 = vpack.c.bf16 %v8161, %v8160
    %v8201 = vpack.c.bf16 %v8163, %v8162
    %v8202 = vpack.c.bf16 %v8165, %v8164
    %v8203 = vpack.c.bf16 %v8167, %v8166
    %v8204 = vpack.c.bf16 %v8169, %v8168
    %v8205 = vpack.c.bf16 %v8171, %v8170
    %v8206 = vpack.c.bf16 %v8173, %v8172
    %v8207 = vpack.c.bf16 %v8175, %v8174
    %v8208 = vpack.c.bf16 %v8177, %v8176
    %v8209 = vpack.c.bf16 %v8179, %v8178
    %v8210 = vpack.c.bf16 %v8181, %v8180
    %v8211 = vpack.c.bf16 %v8183, %v8182
    %v8212 = vpack.c.bf16 %v8185, %v8184
    %v8213 = vpack.c.bf16 %v8187, %v8186
    %v8214 = vpack.c.bf16 %v8189, %v8188
    %v8215 = vpack.c.bf16 %v8191, %v8190
    %v8224 = vunpack.c.l.b16 %v8192
    %v8225 = vunpack.c.h.b16 %v8192
    %v8226 = vunpack.c.l.b16 %v8193
    %v8227 = vunpack.c.h.b16 %v8193
    %v8228 = vunpack.c.l.b16 %v8194
    %v8229 = vunpack.c.h.b16 %v8194
    %v8230 = vunpack.c.l.b16 %v8195
    %v8231 = vunpack.c.h.b16 %v8195
    %v8232 = vunpack.c.l.b16 %v8196
    %v8233 = vunpack.c.h.b16 %v8196
    %v8234 = vunpack.c.l.b16 %v8197
    %v8235 = vunpack.c.h.b16 %v8197
    %v8236 = vunpack.c.l.b16 %v8198
    %v8237 = vunpack.c.h.b16 %v8198
    %v8238 = vunpack.c.l.b16 %v8199
    %v8239 = vunpack.c.h.b16 %v8199
    %v8240 = vpack.c.b16 %v8226, %v8224
    %v8241 = vpack.c.b16 %v8227, %v8225
    %v8242 = vpack.c.b16 %v8230, %v8228
    %v8243 = vpack.c.b16 %v8231, %v8229
    %v8244 = vpack.c.b16 %v8234, %v8232
    %v8245 = vpack.c.b16 %v8235, %v8233
    %v8246 = vpack.c.b16 %v8238, %v8236
    %v8247 = vpack.c.b16 %v8239, %v8237
    %8256 = vmatprep.subr.bf16.mxu0 0
    %8257 = vmatpush1.bf16.msra.mxu0 %v8207
    %8258 = vmatprep.subr.bf16.mxu0 0
    %8259 = vmatpush1.bf16.msra.mxu0 %v8206
    %8260 = vmatprep.subr.bf16.mxu0 0
    %8261 = vmatpush1.bf16.msra.mxu0 %v8205
    %8262 = vmatprep.subr.bf16.mxu0 0
    %8263 = vmatpush1.bf16.msra.mxu0 %v8204
    %8264 = vmatprep.subr.bf16.mxu0 0
    %8265 = vmatpush1.bf16.msra.mxu0 %v8203
    %8266 = vmatprep.subr.bf16.mxu0 0
    %8267 = vmatpush1.bf16.msra.mxu0 %v8202
    %8268 = vmatprep.subr.bf16.mxu0 0
    %8269 = vmatpush1.bf16.msra.mxu0 %v8201
    %8270 = vmatprep.subr.bf16.mxu0 0
    %8271 = vmatpush1.bf16.msra.mxu0 %v8200
    %8272 = vmatprep.subr.bf16.mxu0 0
    %8273 = vmatpush2.bf16.msra.mxu0 %v8215
    %8274 = vmatprep.subr.bf16.mxu0 0
    %8275 = vmatpush2.bf16.msra.mxu0 %v8214
    %8276 = vmatprep.subr.bf16.mxu0 0
    %8277 = vmatpush2.bf16.msra.mxu0 %v8213
    %8278 = vmatprep.subr.bf16.mxu0 0
    %8279 = vmatpush2.bf16.msra.mxu0 %v8212
    %8280 = vmatprep.subr.bf16.mxu0 0
    %8281 = vmatpush2.bf16.msra.mxu0 %v8211
    %8282 = vmatprep.subr.bf16.mxu0 0
    %8283 = vmatpush2.bf16.msra.mxu0 %v8210
    %8284 = vmatprep.subr.bf16.mxu0 0
    %8285 = vmatpush2.bf16.msra.mxu0 %v8209
    %8286 = vmatprep.subr.bf16.mxu0 0
    %8287 = vmatpush2.bf16.msra.mxu0 %v8208
    %8288 = vmatprep.mubr.bf16.mxu0 %v8241
    %8289 = vmatmul.mubr.bf16.gmra.mxu0 %v8240
    %v8290 = vpop.f32.mrf.mxu0
    %v8291 = vadd.f32 0.0, %v8290
    %v8292 = vpop.f32.mrf.mxu0
    %v8293 = vpop.f32.mrf.mxu0
    %v8294 = vadd.f32 0.0, %v8293
    %v8295 = vpop.f32.mrf.mxu0
    %8296 = vmatprep.mubr.bf16.mxu0 %v8243
    %8297 = vmatmul.mubr.bf16.gmra.mxu0 %v8242
    %v8298 = vpop.f32.mrf.mxu0
    %v8299 = vadd.f32 0.0, %v8298
    %v8300 = vpop.f32.mrf.mxu0
    %v8301 = vpop.f32.mrf.mxu0
    %v8302 = vadd.f32 0.0, %v8301
    %v8303 = vpop.f32.mrf.mxu0
    %8304 = vmatprep.mubr.bf16.mxu0 %v8245
    %8305 = vmatmul.mubr.bf16.gmra.mxu0 %v8244
    %v8306 = vpop.f32.mrf.mxu0
    %v8307 = vadd.f32 0.0, %v8306
    %v8308 = vpop.f32.mrf.mxu0
    %v8309 = vpop.f32.mrf.mxu0
    %v8310 = vadd.f32 0.0, %v8309
    %v8311 = vpop.f32.mrf.mxu0
    %8312 = vmatprep.mubr.bf16.mxu0 %v8247
    %8313 = vmatmul.mubr.bf16.gmra.mxu0 %v8246
    %v8314 = vpop.f32.mrf.mxu0
    %v8315 = vadd.f32 0.0, %v8314
    %v8316 = vpop.f32.mrf.mxu0
    %v8317 = vpop.f32.mrf.mxu0
    %v8318 = vadd.f32 0.0, %v8317
    %v8319 = vpop.f32.mrf.mxu0
    %8320 = vdwg.mxu0
    %v8321 = vsub.f32 %v8291, %v8307
    %v8322 = vsub.f32 %v8294, %v8310
    %v8323 = vsub.f32 %v8299, %v8315
    %v8324 = vsub.f32 %v8302, %v8318
    %v8325 = vld [vmem:[%s8] sm:$0xf]
    %v8326 = vld [vmem:[%s8 + $0x4] sm:$0xf]
    %v8327 = vld [vmem:[%s8 + $0x8] sm:$0xf]
    %v8328 = vld [vmem:[%s8 + $0xc] sm:$0xf]
    %v8329 = vld [vmem:[%s8 + $0x10] sm:$0xf]
    %v8330 = vld [vmem:[%s8 + $0x14] sm:$0xf]
    %v8331 = vld [vmem:[%s8 + $0x18] sm:$0xf]
    %v8332 = vld [vmem:[%s8 + $0x1c] sm:$0xf]
    %v8333 = vld [vmem:[%s8 + $0x20] sm:$0xf]
    %v8334 = vld [vmem:[%s8 + $0x24] sm:$0xf]
    %v8335 = vld [vmem:[%s8 + $0x28] sm:$0xf]
    %v8336 = vld [vmem:[%s8 + $0x2c] sm:$0xf]
    %v8337 = vld [vmem:[%s8 + $0x30] sm:$0xf]
    %v8338 = vld [vmem:[%s8 + $0x34] sm:$0xf]
    %v8339 = vld [vmem:[%s8 + $0x38] sm:$0xf]
    %v8340 = vld [vmem:[%s8 + $0x3c] sm:$0xf]
    %v8341 = vld [vmem:[%s8 + $0x40] sm:$0xf]
    %v8342 = vld [vmem:[%s8 + $0x44] sm:$0xf]
    %v8343 = vld [vmem:[%s8 + $0x48] sm:$0xf]
    %v8344 = vld [vmem:[%s8 + $0x4c] sm:$0xf]
    %v8345 = vld [vmem:[%s8 + $0x50] sm:$0xf]
    %v8346 = vld [vmem:[%s8 + $0x54] sm:$0xf]
    %v8347 = vld [vmem:[%s8 + $0x58] sm:$0xf]
    %v8348 = vld [vmem:[%s8 + $0x5c] sm:$0xf]
    %v8349 = vld [vmem:[%s8 + $0x60] sm:$0xf]
    %v8350 = vld [vmem:[%s8 + $0x64] sm:$0xf]
    %v8351 = vld [vmem:[%s8 + $0x68] sm:$0xf]
    %v8352 = vld [vmem:[%s8 + $0x6c] sm:$0xf]
    %v8353 = vld [vmem:[%s8 + $0x70] sm:$0xf]
    %v8354 = vld [vmem:[%s8 + $0x74] sm:$0xf]
    %v8355 = vld [vmem:[%s8 + $0x78] sm:$0xf]
    %v8356 = vld [vmem:[%s8 + $0x7c] sm:$0xf]
    %v8357 = vld [vmem:[%s8 + $0x80] sm:$0xf]
    %v8358 = vld [vmem:[%s8 + $0x84] sm:$0xf]
    %v8359 = vld [vmem:[%s8 + $0x88] sm:$0xf]
    %v8360 = vld [vmem:[%s8 + $0x8c] sm:$0xf]
    %v8361 = vld [vmem:[%s8 + $0x90] sm:$0xf]
    %v8362 = vld [vmem:[%s8 + $0x94] sm:$0xf]
    %v8363 = vld [vmem:[%s8 + $0x98] sm:$0xf]
    %v8364 = vld [vmem:[%s8 + $0x9c] sm:$0xf]
    %v8365 = vld [vmem:[%s8 + $0xa0] sm:$0xf]
    %v8366 = vld [vmem:[%s8 + $0xa4] sm:$0xf]
    %v8367 = vld [vmem:[%s8 + $0xa8] sm:$0xf]
    %v8368 = vld [vmem:[%s8 + $0xac] sm:$0xf]
    %v8369 = vld [vmem:[%s8 + $0xb0] sm:$0xf]
    %v8370 = vld [vmem:[%s8 + $0xb4] sm:$0xf]
    %v8371 = vld [vmem:[%s8 + $0xb8] sm:$0xf]
    %v8372 = vld [vmem:[%s8 + $0xbc] sm:$0xf]
    %v8373 = vld [vmem:[%s8 + $0xc0] sm:$0xf]
    %v8374 = vld [vmem:[%s8 + $0xc4] sm:$0xf]
    %v8375 = vld [vmem:[%s8 + $0xc8] sm:$0xf]
    %v8376 = vld [vmem:[%s8 + $0xcc] sm:$0xf]
    %v8377 = vld [vmem:[%s8 + $0xd0] sm:$0xf]
    %v8378 = vld [vmem:[%s8 + $0xd4] sm:$0xf]
    %v8379 = vld [vmem:[%s8 + $0xd8] sm:$0xf]
    %v8380 = vld [vmem:[%s8 + $0xdc] sm:$0xf]
    %v8381 = vld [vmem:[%s8 + $0xe0] sm:$0xf]
    %v8382 = vld [vmem:[%s8 + $0xe4] sm:$0xf]
    %v8383 = vld [vmem:[%s8 + $0xe8] sm:$0xf]
    %v8384 = vld [vmem:[%s8 + $0xec] sm:$0xf]
    %v8385 = vld [vmem:[%s8 + $0xf0] sm:$0xf]
    %v8386 = vld [vmem:[%s8 + $0xf4] sm:$0xf]
    %v8387 = vld [vmem:[%s8 + $0xf8] sm:$0xf]
    %v8388 = vld [vmem:[%s8 + $0xfc] sm:$0xf]
    %v8389 = vld [vmem:[%s8 + $0x100] sm:$0xf]
    %v8390 = vld [vmem:[%s8 + $0x104] sm:$0xf]
    %v8391 = vld [vmem:[%s8 + $0x108] sm:$0xf]
    %v8392 = vld [vmem:[%s8 + $0x10c] sm:$0xf]
    %v8393 = vld [vmem:[%s8 + $0x110] sm:$0xf]
    %v8394 = vld [vmem:[%s8 + $0x114] sm:$0xf]
    %v8395 = vld [vmem:[%s8 + $0x118] sm:$0xf]
    %v8396 = vld [vmem:[%s8 + $0x11c] sm:$0xf]
    %v8397 = vpack.c.bf16 %v8294, %v8291
    %v8398 = vpack.c.bf16 %v8302, %v8299
    %v8399 = vpack.c.bf16 %v8310, %v8307
    %v8400 = vpack.c.bf16 %v8318, %v8315
    %v8473 = vunpack.c.l.b16 %v8325
    %v8474 = vunpack.c.l.b16 %v8326
    %v8475 = vunpack.c.l.b16 %v8327
    %v8476 = vunpack.c.l.b16 %v8328
    %v8477 = vunpack.c.l.b16 %v8329
    %v8478 = vunpack.c.l.b16 %v8330
    %v8479 = vunpack.c.l.b16 %v8331
    %v8480 = vunpack.c.l.b16 %v8332
    %v8481 = vunpack.c.l.b16 %v8333
    %v8482 = vunpack.c.l.b16 %v8334
    %v8483 = vunpack.c.l.b16 %v8335
    %v8484 = vunpack.c.l.b16 %v8336
    %v8485 = vunpack.c.l.b16 %v8337
    %v8486 = vunpack.c.l.b16 %v8338
    %v8487 = vunpack.c.l.b16 %v8339
    %v8488 = vunpack.c.l.b16 %v8340
    %v8489 = vunpack.c.l.b16 %v8341
    %v8490 = vunpack.c.l.b16 %v8342
    %v8491 = vunpack.c.l.b16 %v8343
    %v8492 = vunpack.c.l.b16 %v8344
    %v8493 = vunpack.c.l.b16 %v8345
    %v8494 = vunpack.c.l.b16 %v8346
    %v8495 = vunpack.c.l.b16 %v8347
    %v8496 = vunpack.c.l.b16 %v8348
    %v8497 = vunpack.c.l.b16 %v8349
    %v8498 = vunpack.c.l.b16 %v8350
    %v8499 = vunpack.c.l.b16 %v8351
    %v8500 = vunpack.c.l.b16 %v8352
    %v8501 = vunpack.c.l.b16 %v8353
    %v8502 = vunpack.c.l.b16 %v8354
    %v8503 = vunpack.c.l.b16 %v8355
    %v8504 = vunpack.c.l.b16 %v8356
    %v8505 = vunpack.c.l.b16 %v8357
    %v8506 = vunpack.c.l.b16 %v8358
    %v8507 = vunpack.c.l.b16 %v8359
    %v8508 = vunpack.c.l.b16 %v8360
    %v8509 = vunpack.c.l.b16 %v8361
    %v8510 = vunpack.c.l.b16 %v8362
    %v8511 = vunpack.c.l.b16 %v8363
    %v8512 = vunpack.c.l.b16 %v8364
    %v8513 = vunpack.c.l.b16 %v8365
    %v8514 = vunpack.c.l.b16 %v8366
    %v8515 = vunpack.c.l.b16 %v8367
    %v8516 = vunpack.c.l.b16 %v8368
    %v8517 = vunpack.c.l.b16 %v8369
    %v8518 = vunpack.c.l.b16 %v8370
    %v8519 = vunpack.c.l.b16 %v8371
    %v8520 = vunpack.c.l.b16 %v8372
    %v8521 = vunpack.c.l.b16 %v8373
    %v8522 = vunpack.c.l.b16 %v8374
    %v8523 = vunpack.c.l.b16 %v8375
    %v8524 = vunpack.c.l.b16 %v8376
    %v8525 = vunpack.c.l.b16 %v8377
    %v8526 = vunpack.c.l.b16 %v8378
    %v8527 = vunpack.c.l.b16 %v8379
    %v8528 = vunpack.c.l.b16 %v8380
    %v8529 = vunpack.c.l.b16 %v8381
    %v8530 = vunpack.c.l.b16 %v8382
    %v8531 = vunpack.c.l.b16 %v8383
    %v8532 = vunpack.c.l.b16 %v8384
    %v8533 = vunpack.c.l.b16 %v8385
    %v8534 = vunpack.c.l.b16 %v8386
    %v8535 = vunpack.c.l.b16 %v8387
    %v8536 = vunpack.c.l.b16 %v8388
    %v8537 = vunpack.c.l.b16 %v8389
    %v8538 = vunpack.c.l.b16 %v8390
    %v8539 = vunpack.c.l.b16 %v8391
    %v8540 = vunpack.c.l.b16 %v8392
    %v8541 = vunpack.c.l.b16 %v8393
    %v8542 = vunpack.c.l.b16 %v8394
    %v8543 = vunpack.c.l.b16 %v8395
    %v8544 = vunpack.c.l.b16 %v8396
    %v8545 = vpack.c.b16 %v8474, %v8473
    %v8546 = vpack.c.b16 %v8476, %v8475
    %v8547 = vpack.c.b16 %v8478, %v8477
    %v8548 = vpack.c.b16 %v8480, %v8479
    %v8549 = vpack.c.b16 %v8482, %v8481
    %v8550 = vpack.c.b16 %v8484, %v8483
    %v8551 = vpack.c.b16 %v8486, %v8485
    %v8552 = vpack.c.b16 %v8488, %v8487
    %v8553 = vpack.c.b16 %v8490, %v8489
    %v8554 = vpack.c.b16 %v8492, %v8491
    %v8555 = vpack.c.b16 %v8494, %v8493
    %v8556 = vpack.c.b16 %v8496, %v8495
    %v8557 = vpack.c.b16 %v8498, %v8497
    %v8558 = vpack.c.b16 %v8500, %v8499
    %v8559 = vpack.c.b16 %v8502, %v8501
    %v8560 = vpack.c.b16 %v8504, %v8503
    %v8561 = vpack.c.b16 %v8506, %v8505
    %v8562 = vpack.c.b16 %v8508, %v8507
    %v8563 = vpack.c.b16 %v8510, %v8509
    %v8564 = vpack.c.b16 %v8512, %v8511
    %v8565 = vpack.c.b16 %v8514, %v8513
    %v8566 = vpack.c.b16 %v8516, %v8515
    %v8567 = vpack.c.b16 %v8518, %v8517
    %v8568 = vpack.c.b16 %v8520, %v8519
    %v8569 = vpack.c.b16 %v8522, %v8521
    %v8570 = vpack.c.b16 %v8524, %v8523
    %v8571 = vpack.c.b16 %v8526, %v8525
    %v8572 = vpack.c.b16 %v8528, %v8527
    %v8573 = vpack.c.b16 %v8530, %v8529
    %v8574 = vpack.c.b16 %v8532, %v8531
    %v8575 = vpack.c.b16 %v8534, %v8533
    %v8576 = vpack.c.b16 %v8536, %v8535
    %v8577 = vpack.c.b16 %v8538, %v8537
    %v8578 = vpack.c.b16 %v8540, %v8539
    %v8579 = vpack.c.b16 %v8542, %v8541
    %v8580 = vpack.c.b16 %v8544, %v8543
    %vm8581 = vcmask 523264
    %v8583 = vsel %vm8581, %v8545, 0
    %v8586 = vsel %vm8581, %v8546, 0
    %v8589 = vsel %vm8581, %v8547, 0
    %v8592 = vsel %vm8581, %v8548, 0
    %v8595 = vsel %vm8581, %v8549, 0
    %v8598 = vsel %vm8581, %v8550, 0
    %v8601 = vsel %vm8581, %v8551, 0
    %v8604 = vsel %vm8581, %v8552, 0
    %v8607 = vsel %vm8581, %v8553, 0
    %v8610 = vsel %vm8581, %v8554, 0
    %v8613 = vsel %vm8581, %v8555, 0
    %v8616 = vsel %vm8581, %v8556, 0
    %v8619 = vsel %vm8581, %v8557, 0
    %v8622 = vsel %vm8581, %v8558, 0
    %v8625 = vsel %vm8581, %v8559, 0
    %v8628 = vsel %vm8581, %v8560, 0
    %v8631 = vsel %vm8581, %v8561, 0
    %v8634 = vsel %vm8581, %v8562, 0
    %v8637 = vsel %vm8581, %v8563, 0
    %v8640 = vsel %vm8581, %v8564, 0
    %v8643 = vsel %vm8581, %v8565, 0
    %v8646 = vsel %vm8581, %v8566, 0
    %v8649 = vsel %vm8581, %v8567, 0
    %v8652 = vsel %vm8581, %v8568, 0
    %v8655 = vsel %vm8581, %v8569, 0
    %v8658 = vsel %vm8581, %v8570, 0
    %v8661 = vsel %vm8581, %v8571, 0
    %v8664 = vsel %vm8581, %v8572, 0
    %v8667 = vsel %vm8581, %v8573, 0
    %v8670 = vsel %vm8581, %v8574, 0
    %v8673 = vsel %vm8581, %v8575, 0
    %v8676 = vsel %vm8581, %v8576, 0
    %v8679 = vsel %vm8581, %v8577, 0
    %v8682 = vsel %vm8581, %v8578, 0
    %v8685 = vsel %vm8581, %v8579, 0
    %v8688 = vsel %vm8581, %v8580, 0
    %8690 = vmatprep.subr.bf16.mxu0 0
    %8691 = vmatpush1.bf16.msra.mxu0 0
    %8692 = vmatprep.subr.bf16.mxu0 0
    %8693 = vmatpush1.bf16.msra.mxu0 0
    %8694 = vmatprep.subr.bf16.mxu0 0
    %8695 = vmatpush1.bf16.msra.mxu0 0
    %8696 = vmatprep.subr.bf16.mxu0 0
    %8697 = vmatpush1.bf16.msra.mxu0 0
    %8698 = vmatprep.subr.bf16.mxu0 0
    %8699 = vmatpush1.bf16.msra.mxu0 %v8400
    %8700 = vmatprep.subr.bf16.mxu0 0
    %8701 = vmatpush1.bf16.msra.mxu0 %v8399
    %8702 = vmatprep.subr.bf16.mxu0 0
    %8703 = vmatpush1.bf16.msra.mxu0 %v8398
    %8704 = vmatprep.subr.bf16.mxu0 0
    %8705 = vmatpush1.bf16.msra.mxu0 %v8397
    %8706 = vmatprep.subr.bf16.mxu0 0
    %8707 = vmatpush2.bf16.msra.mxu0 0
    %8708 = vmatprep.subr.bf16.mxu0 0
    %8709 = vmatpush2.bf16.msra.mxu0 0
    %8710 = vmatprep.subr.bf16.mxu0 0
    %8711 = vmatpush2.bf16.msra.mxu0 0
    %8712 = vmatprep.subr.bf16.mxu0 0
    %8713 = vmatpush2.bf16.msra.mxu0 0
    %8714 = vmatprep.subr.bf16.mxu0 0
    %8715 = vmatpush2.bf16.msra.mxu0 0
    %8716 = vmatprep.subr.bf16.mxu0 0
    %8717 = vmatpush2.bf16.msra.mxu0 0
    %8718 = vmatprep.subr.bf16.mxu0 0
    %8719 = vmatpush2.bf16.msra.mxu0 0
    %8720 = vmatprep.subr.bf16.mxu0 0
    %8721 = vmatpush2.bf16.msra.mxu0 0
    %8722 = vmatprep.mubr.bf16.mxu0 0
    %8723 = vmatmul.mubr.bf16.gmra.mxu0 %v8583
    %v8724 = vpop.f32.mrf.mxu0
    %v8725 = vadd.f32 0.0, %v8724
    %v8726 = vpop.f32.mrf.mxu0
    %v8727 = vpop.f32.mrf.mxu0
    %v8728 = vadd.f32 0.0, %v8727
    %v8729 = vpop.f32.mrf.mxu0
    %8730 = vmatprep.mubr.bf16.mxu0 0
    %8731 = vmatmul.mubr.bf16.gmra.mxu0 %v8586
    %v8732 = vpop.f32.mrf.mxu0
    %v8733 = vadd.f32 0.0, %v8732
    %v8734 = vpop.f32.mrf.mxu0
    %v8735 = vpop.f32.mrf.mxu0
    %v8736 = vadd.f32 0.0, %v8735
    %v8737 = vpop.f32.mrf.mxu0
    %8738 = vmatprep.mubr.bf16.mxu0 0
    %8739 = vmatmul.mubr.bf16.gmra.mxu0 %v8589
    %v8740 = vpop.f32.mrf.mxu0
    %v8741 = vadd.f32 0.0, %v8740
    %v8742 = vpop.f32.mrf.mxu0
    %v8743 = vpop.f32.mrf.mxu0
    %v8744 = vadd.f32 0.0, %v8743
    %v8745 = vpop.f32.mrf.mxu0
    %8746 = vmatprep.mubr.bf16.mxu0 0
    %8747 = vmatmul.mubr.bf16.gmra.mxu0 %v8592
    %v8748 = vpop.f32.mrf.mxu0
    %v8749 = vadd.f32 0.0, %v8748
    %v8750 = vpop.f32.mrf.mxu0
    %v8751 = vpop.f32.mrf.mxu0
    %v8752 = vadd.f32 0.0, %v8751
    %v8753 = vpop.f32.mrf.mxu0
    %8754 = vmatprep.mubr.bf16.mxu0 0
    %8755 = vmatmul.mubr.bf16.gmra.mxu0 %v8595
    %v8756 = vpop.f32.mrf.mxu0
    %v8757 = vadd.f32 0.0, %v8756
    %v8758 = vpop.f32.mrf.mxu0
    %v8759 = vpop.f32.mrf.mxu0
    %v8760 = vadd.f32 0.0, %v8759
    %v8761 = vpop.f32.mrf.mxu0
    %8762 = vmatprep.mubr.bf16.mxu0 0
    %8763 = vmatmul.mubr.bf16.gmra.mxu0 %v8598
    %v8764 = vpop.f32.mrf.mxu0
    %v8765 = vadd.f32 0.0, %v8764
    %v8766 = vpop.f32.mrf.mxu0
    %v8767 = vpop.f32.mrf.mxu0
    %v8768 = vadd.f32 0.0, %v8767
    %v8769 = vpop.f32.mrf.mxu0
    %8770 = vmatprep.mubr.bf16.mxu0 0
    %8771 = vmatmul.mubr.bf16.gmra.mxu0 %v8601
    %v8772 = vpop.f32.mrf.mxu0
    %v8773 = vadd.f32 0.0, %v8772
    %v8774 = vpop.f32.mrf.mxu0
    %v8775 = vpop.f32.mrf.mxu0
    %v8776 = vadd.f32 0.0, %v8775
    %v8777 = vpop.f32.mrf.mxu0
    %8778 = vmatprep.mubr.bf16.mxu0 0
    %8779 = vmatmul.mubr.bf16.gmra.mxu0 %v8604
    %v8780 = vpop.f32.mrf.mxu0
    %v8781 = vadd.f32 0.0, %v8780
    %v8782 = vpop.f32.mrf.mxu0
    %v8783 = vpop.f32.mrf.mxu0
    %v8784 = vadd.f32 0.0, %v8783
    %v8785 = vpop.f32.mrf.mxu0
    %8786 = vmatprep.mubr.bf16.mxu0 0
    %8787 = vmatmul.mubr.bf16.gmra.mxu0 %v8607
    %v8788 = vpop.f32.mrf.mxu0
    %v8789 = vadd.f32 0.0, %v8788
    %v8790 = vpop.f32.mrf.mxu0
    %v8791 = vpop.f32.mrf.mxu0
    %v8792 = vadd.f32 0.0, %v8791
    %v8793 = vpop.f32.mrf.mxu0
    %8794 = vmatprep.mubr.bf16.mxu0 0
    %8795 = vmatmul.mubr.bf16.gmra.mxu0 %v8610
    %v8796 = vpop.f32.mrf.mxu0
    %v8797 = vadd.f32 0.0, %v8796
    %v8798 = vpop.f32.mrf.mxu0
    %v8799 = vpop.f32.mrf.mxu0
    %v8800 = vadd.f32 0.0, %v8799
    %v8801 = vpop.f32.mrf.mxu0
    %8802 = vmatprep.mubr.bf16.mxu0 0
    %8803 = vmatmul.mubr.bf16.gmra.mxu0 %v8613
    %v8804 = vpop.f32.mrf.mxu0
    %v8805 = vadd.f32 0.0, %v8804
    %v8806 = vpop.f32.mrf.mxu0
    %v8807 = vpop.f32.mrf.mxu0
    %v8808 = vadd.f32 0.0, %v8807
    %v8809 = vpop.f32.mrf.mxu0
    %8810 = vmatprep.mubr.bf16.mxu0 0
    %8811 = vmatmul.mubr.bf16.gmra.mxu0 %v8616
    %v8812 = vpop.f32.mrf.mxu0
    %v8813 = vadd.f32 0.0, %v8812
    %v8814 = vpop.f32.mrf.mxu0
    %v8815 = vpop.f32.mrf.mxu0
    %v8816 = vadd.f32 0.0, %v8815
    %v8817 = vpop.f32.mrf.mxu0
    %8818 = vmatprep.mubr.bf16.mxu0 0
    %8819 = vmatmul.mubr.bf16.gmra.mxu0 %v8619
    %v8820 = vpop.f32.mrf.mxu0
    %v8821 = vadd.f32 0.0, %v8820
    %v8822 = vpop.f32.mrf.mxu0
    %v8823 = vpop.f32.mrf.mxu0
    %v8824 = vadd.f32 0.0, %v8823
    %v8825 = vpop.f32.mrf.mxu0
    %8826 = vmatprep.mubr.bf16.mxu0 0
    %8827 = vmatmul.mubr.bf16.gmra.mxu0 %v8622
    %v8828 = vpop.f32.mrf.mxu0
    %v8829 = vadd.f32 0.0, %v8828
    %v8830 = vpop.f32.mrf.mxu0
    %v8831 = vpop.f32.mrf.mxu0
    %v8832 = vadd.f32 0.0, %v8831
    %v8833 = vpop.f32.mrf.mxu0
    %8834 = vmatprep.mubr.bf16.mxu0 0
    %8835 = vmatmul.mubr.bf16.gmra.mxu0 %v8625
    %v8836 = vpop.f32.mrf.mxu0
    %v8837 = vadd.f32 0.0, %v8836
    %v8838 = vpop.f32.mrf.mxu0
    %v8839 = vpop.f32.mrf.mxu0
    %v8840 = vadd.f32 0.0, %v8839
    %v8841 = vpop.f32.mrf.mxu0
    %8842 = vmatprep.mubr.bf16.mxu0 0
    %8843 = vmatmul.mubr.bf16.gmra.mxu0 %v8628
    %v8844 = vpop.f32.mrf.mxu0
    %v8845 = vadd.f32 0.0, %v8844
    %v8846 = vpop.f32.mrf.mxu0
    %v8847 = vpop.f32.mrf.mxu0
    %v8848 = vadd.f32 0.0, %v8847
    %v8849 = vpop.f32.mrf.mxu0
    %8850 = vmatprep.mubr.bf16.mxu0 0
    %8851 = vmatmul.mubr.bf16.gmra.mxu0 %v8631
    %v8852 = vpop.f32.mrf.mxu0
    %v8853 = vadd.f32 0.0, %v8852
    %v8854 = vpop.f32.mrf.mxu0
    %v8855 = vpop.f32.mrf.mxu0
    %v8856 = vadd.f32 0.0, %v8855
    %v8857 = vpop.f32.mrf.mxu0
    %8858 = vmatprep.mubr.bf16.mxu0 0
    %8859 = vmatmul.mubr.bf16.gmra.mxu0 %v8634
    %v8860 = vpop.f32.mrf.mxu0
    %v8861 = vadd.f32 0.0, %v8860
    %v8862 = vpop.f32.mrf.mxu0
    %v8863 = vpop.f32.mrf.mxu0
    %v8864 = vadd.f32 0.0, %v8863
    %v8865 = vpop.f32.mrf.mxu0
    %8866 = vmatprep.mubr.bf16.mxu0 0
    %8867 = vmatmul.mubr.bf16.gmra.mxu0 %v8637
    %v8868 = vpop.f32.mrf.mxu0
    %v8869 = vadd.f32 0.0, %v8868
    %v8870 = vpop.f32.mrf.mxu0
    %v8871 = vpop.f32.mrf.mxu0
    %v8872 = vadd.f32 0.0, %v8871
    %v8873 = vpop.f32.mrf.mxu0
    %8874 = vmatprep.mubr.bf16.mxu0 0
    %8875 = vmatmul.mubr.bf16.gmra.mxu0 %v8640
    %v8876 = vpop.f32.mrf.mxu0
    %v8877 = vadd.f32 0.0, %v8876
    %v8878 = vpop.f32.mrf.mxu0
    %v8879 = vpop.f32.mrf.mxu0
    %v8880 = vadd.f32 0.0, %v8879
    %v8881 = vpop.f32.mrf.mxu0
    %8882 = vmatprep.mubr.bf16.mxu0 0
    %8883 = vmatmul.mubr.bf16.gmra.mxu0 %v8643
    %v8884 = vpop.f32.mrf.mxu0
    %v8885 = vadd.f32 0.0, %v8884
    %v8886 = vpop.f32.mrf.mxu0
    %v8887 = vpop.f32.mrf.mxu0
    %v8888 = vadd.f32 0.0, %v8887
    %v8889 = vpop.f32.mrf.mxu0
    %8890 = vmatprep.mubr.bf16.mxu0 0
    %8891 = vmatmul.mubr.bf16.gmra.mxu0 %v8646
    %v8892 = vpop.f32.mrf.mxu0
    %v8893 = vadd.f32 0.0, %v8892
    %v8894 = vpop.f32.mrf.mxu0
    %v8895 = vpop.f32.mrf.mxu0
    %v8896 = vadd.f32 0.0, %v8895
    %v8897 = vpop.f32.mrf.mxu0
    %8898 = vmatprep.mubr.bf16.mxu0 0
    %8899 = vmatmul.mubr.bf16.gmra.mxu0 %v8649
    %v8900 = vpop.f32.mrf.mxu0
    %v8901 = vadd.f32 0.0, %v8900
    %v8902 = vpop.f32.mrf.mxu0
    %v8903 = vpop.f32.mrf.mxu0
    %v8904 = vadd.f32 0.0, %v8903
    %v8905 = vpop.f32.mrf.mxu0
    %8906 = vmatprep.mubr.bf16.mxu0 0
    %8907 = vmatmul.mubr.bf16.gmra.mxu0 %v8652
    %v8908 = vpop.f32.mrf.mxu0
    %v8909 = vadd.f32 0.0, %v8908
    %v8910 = vpop.f32.mrf.mxu0
    %v8911 = vpop.f32.mrf.mxu0
    %v8912 = vadd.f32 0.0, %v8911
    %v8913 = vpop.f32.mrf.mxu0
    %8914 = vmatprep.mubr.bf16.mxu0 0
    %8915 = vmatmul.mubr.bf16.gmra.mxu0 %v8655
    %v8916 = vpop.f32.mrf.mxu0
    %v8917 = vadd.f32 0.0, %v8916
    %v8918 = vpop.f32.mrf.mxu0
    %v8919 = vpop.f32.mrf.mxu0
    %v8920 = vadd.f32 0.0, %v8919
    %v8921 = vpop.f32.mrf.mxu0
    %8922 = vmatprep.mubr.bf16.mxu0 0
    %8923 = vmatmul.mubr.bf16.gmra.mxu0 %v8658
    %v8924 = vpop.f32.mrf.mxu0
    %v8925 = vadd.f32 0.0, %v8924
    %v8926 = vpop.f32.mrf.mxu0
    %v8927 = vpop.f32.mrf.mxu0
    %v8928 = vadd.f32 0.0, %v8927
    %v8929 = vpop.f32.mrf.mxu0
    %8930 = vmatprep.mubr.bf16.mxu0 0
    %8931 = vmatmul.mubr.bf16.gmra.mxu0 %v8661
    %v8932 = vpop.f32.mrf.mxu0
    %v8933 = vadd.f32 0.0, %v8932
    %v8934 = vpop.f32.mrf.mxu0
    %v8935 = vpop.f32.mrf.mxu0
    %v8936 = vadd.f32 0.0, %v8935
    %v8937 = vpop.f32.mrf.mxu0
    %8938 = vmatprep.mubr.bf16.mxu0 0
    %8939 = vmatmul.mubr.bf16.gmra.mxu0 %v8664
    %v8940 = vpop.f32.mrf.mxu0
    %v8941 = vadd.f32 0.0, %v8940
    %v8942 = vpop.f32.mrf.mxu0
    %v8943 = vpop.f32.mrf.mxu0
    %v8944 = vadd.f32 0.0, %v8943
    %v8945 = vpop.f32.mrf.mxu0
    %8946 = vmatprep.mubr.bf16.mxu0 0
    %8947 = vmatmul.mubr.bf16.gmra.mxu0 %v8667
    %v8948 = vpop.f32.mrf.mxu0
    %v8949 = vadd.f32 0.0, %v8948
    %v8950 = vpop.f32.mrf.mxu0
    %v8951 = vpop.f32.mrf.mxu0
    %v8952 = vadd.f32 0.0, %v8951
    %v8953 = vpop.f32.mrf.mxu0
    %8954 = vmatprep.mubr.bf16.mxu0 0
    %8955 = vmatmul.mubr.bf16.gmra.mxu0 %v8670
    %v8956 = vpop.f32.mrf.mxu0
    %v8957 = vadd.f32 0.0, %v8956
    %v8958 = vpop.f32.mrf.mxu0
    %v8959 = vpop.f32.mrf.mxu0
    %v8960 = vadd.f32 0.0, %v8959
    %v8961 = vpop.f32.mrf.mxu0
    %8962 = vmatprep.mubr.bf16.mxu0 0
    %8963 = vmatmul.mubr.bf16.gmra.mxu0 %v8673
    %v8964 = vpop.f32.mrf.mxu0
    %v8965 = vadd.f32 0.0, %v8964
    %v8966 = vpop.f32.mrf.mxu0
    %v8967 = vpop.f32.mrf.mxu0
    %v8968 = vadd.f32 0.0, %v8967
    %v8969 = vpop.f32.mrf.mxu0
    %8970 = vmatprep.mubr.bf16.mxu0 0
    %8971 = vmatmul.mubr.bf16.gmra.mxu0 %v8676
    %v8972 = vpop.f32.mrf.mxu0
    %v8973 = vadd.f32 0.0, %v8972
    %v8974 = vpop.f32.mrf.mxu0
    %v8975 = vpop.f32.mrf.mxu0
    %v8976 = vadd.f32 0.0, %v8975
    %v8977 = vpop.f32.mrf.mxu0
    %8978 = vmatprep.mubr.bf16.mxu0 0
    %8979 = vmatmul.mubr.bf16.gmra.mxu0 %v8679
    %v8980 = vpop.f32.mrf.mxu0
    %v8981 = vadd.f32 0.0, %v8980
    %v8982 = vpop.f32.mrf.mxu0
    %v8983 = vpop.f32.mrf.mxu0
    %v8984 = vadd.f32 0.0, %v8983
    %v8985 = vpop.f32.mrf.mxu0
    %8986 = vmatprep.mubr.bf16.mxu0 0
    %8987 = vmatmul.mubr.bf16.gmra.mxu0 %v8682
    %v8988 = vpop.f32.mrf.mxu0
    %v8989 = vadd.f32 0.0, %v8988
    %v8990 = vpop.f32.mrf.mxu0
    %v8991 = vpop.f32.mrf.mxu0
    %v8992 = vadd.f32 0.0, %v8991
    %v8993 = vpop.f32.mrf.mxu0
    %8994 = vmatprep.mubr.bf16.mxu0 0
    %8995 = vmatmul.mubr.bf16.gmra.mxu0 %v8685
    %v8996 = vpop.f32.mrf.mxu0
    %v8997 = vadd.f32 0.0, %v8996
    %v8998 = vpop.f32.mrf.mxu0
    %v8999 = vpop.f32.mrf.mxu0
    %v9000 = vadd.f32 0.0, %v8999
    %v9001 = vpop.f32.mrf.mxu0
    %9002 = vmatprep.mubr.bf16.mxu0 0
    %9003 = vmatmul.mubr.bf16.gmra.mxu0 %v8688
    %v9004 = vpop.f32.mrf.mxu0
    %v9005 = vadd.f32 0.0, %v9004
    %v9006 = vpop.f32.mrf.mxu0
    %v9007 = vpop.f32.mrf.mxu0
    %v9008 = vadd.f32 0.0, %v9007
    %v9009 = vpop.f32.mrf.mxu0
    %9010 = vdwg.mxu0
    %v9011 = vpack.c.bf16 %v8728, %v8725
    %v9012 = vpack.c.bf16 %v8736, %v8733
    %v9013 = vpack.c.bf16 %v8744, %v8741
    %v9014 = vpack.c.bf16 %v8752, %v8749
    %v9015 = vpack.c.bf16 %v8760, %v8757
    %v9016 = vpack.c.bf16 %v8768, %v8765
    %v9017 = vpack.c.bf16 %v8776, %v8773
    %v9018 = vpack.c.bf16 %v8784, %v8781
    %v9019 = vpack.c.bf16 %v8792, %v8789
    %v9020 = vpack.c.bf16 %v8800, %v8797
    %v9021 = vpack.c.bf16 %v8808, %v8805
    %v9022 = vpack.c.bf16 %v8816, %v8813
    %v9023 = vpack.c.bf16 %v8824, %v8821
    %v9024 = vpack.c.bf16 %v8832, %v8829
    %v9025 = vpack.c.bf16 %v8840, %v8837
    %v9026 = vpack.c.bf16 %v8848, %v8845
    %v9027 = vpack.c.bf16 %v8856, %v8853
    %v9028 = vpack.c.bf16 %v8864, %v8861
    %v9029 = vpack.c.bf16 %v8872, %v8869
    %v9030 = vpack.c.bf16 %v8880, %v8877
    %v9031 = vpack.c.bf16 %v8888, %v8885
    %v9032 = vpack.c.bf16 %v8896, %v8893
    %v9033 = vpack.c.bf16 %v8904, %v8901
    %v9034 = vpack.c.bf16 %v8912, %v8909
    %v9035 = vpack.c.bf16 %v8920, %v8917
    %v9036 = vpack.c.bf16 %v8928, %v8925
    %v9037 = vpack.c.bf16 %v8936, %v8933
    %v9038 = vpack.c.bf16 %v8944, %v8941
    %v9039 = vpack.c.bf16 %v8952, %v8949
    %v9040 = vpack.c.bf16 %v8960, %v8957
    %v9041 = vpack.c.bf16 %v8968, %v8965
    %v9042 = vpack.c.bf16 %v8976, %v8973
    %v9043 = vpack.c.bf16 %v8984, %v8981
    %v9044 = vpack.c.bf16 %v8992, %v8989
    %v9045 = vpack.c.bf16 %v9000, %v8997
    %v9046 = vpack.c.bf16 %v9008, %v9005
    %v9047 = vld [vmem:[%s9] sm:$0xf]
    %v9048 = vld [vmem:[%s9 + $0x4] sm:$0xf]
    %v9049 = vld [vmem:[%s9 + $0x8] sm:$0xf]
    %v9050 = vld [vmem:[%s9 + $0xc] sm:$0xf]
    %v9051 = vld [vmem:[%s9 + $0x10] sm:$0xf]
    %v9052 = vld [vmem:[%s9 + $0x14] sm:$0xf]
    %v9053 = vld [vmem:[%s9 + $0x18] sm:$0xf]
    %v9054 = vld [vmem:[%s9 + $0x1c] sm:$0xf]
    %v9055 = vld [vmem:[%s9 + $0x20] sm:$0xf]
    %v9056 = vld [vmem:[%s9 + $0x24] sm:$0xf]
    %v9057 = vld [vmem:[%s9 + $0x28] sm:$0xf]
    %v9058 = vld [vmem:[%s9 + $0x2c] sm:$0xf]
    %v9059 = vld [vmem:[%s9 + $0x30] sm:$0xf]
    %v9060 = vld [vmem:[%s9 + $0x34] sm:$0xf]
    %v9061 = vld [vmem:[%s9 + $0x38] sm:$0xf]
    %v9062 = vld [vmem:[%s9 + $0x3c] sm:$0xf]
    %s9063 = scalar_lea.vmem %s9, 64
    %v9064 = vld [vmem:[%s9063] sm:$0xf]
    %v9065 = vld [vmem:[%s9063 + $0x4] sm:$0xf]
    %v9066 = vld [vmem:[%s9063 + $0x8] sm:$0xf]
    %v9067 = vld [vmem:[%s9063 + $0xc] sm:$0xf]
    %v9068 = vld [vmem:[%s9063 + $0x10] sm:$0xf]
    %v9069 = vld [vmem:[%s9063 + $0x14] sm:$0xf]
    %v9070 = vld [vmem:[%s9063 + $0x18] sm:$0xf]
    %v9071 = vld [vmem:[%s9063 + $0x1c] sm:$0xf]
    %v9072 = vld [vmem:[%s9063 + $0x20] sm:$0xf]
    %v9073 = vld [vmem:[%s9063 + $0x24] sm:$0xf]
    %v9074 = vld [vmem:[%s9063 + $0x28] sm:$0xf]
    %v9075 = vld [vmem:[%s9063 + $0x2c] sm:$0xf]
    %v9076 = vld [vmem:[%s9063 + $0x30] sm:$0xf]
    %v9077 = vld [vmem:[%s9063 + $0x34] sm:$0xf]
    %v9078 = vld [vmem:[%s9063 + $0x38] sm:$0xf]
    %v9079 = vld [vmem:[%s9063 + $0x3c] sm:$0xf]
    %v9096 = vunpack.c.l.b16 %v9064
    %v9097 = vunpack.c.l.b16 %v9065
    %v9098 = vunpack.c.l.b16 %v9066
    %v9099 = vunpack.c.l.b16 %v9067
    %v9100 = vunpack.c.l.b16 %v9068
    %v9101 = vunpack.c.l.b16 %v9069
    %v9102 = vunpack.c.l.b16 %v9070
    %v9103 = vunpack.c.l.b16 %v9071
    %v9104 = vunpack.c.l.b16 %v9072
    %v9105 = vunpack.c.l.b16 %v9073
    %v9106 = vunpack.c.l.b16 %v9074
    %v9107 = vunpack.c.l.b16 %v9075
    %v9108 = vunpack.c.l.b16 %v9076
    %v9109 = vunpack.c.l.b16 %v9077
    %v9110 = vunpack.c.l.b16 %v9078
    %v9111 = vunpack.c.l.b16 %v9079
    %v9112 = vpack.c.b16 %v9097, %v9096
    %v9113 = vpack.c.b16 %v9099, %v9098
    %v9114 = vpack.c.b16 %v9101, %v9100
    %v9115 = vpack.c.b16 %v9103, %v9102
    %v9116 = vpack.c.b16 %v9105, %v9104
    %v9117 = vpack.c.b16 %v9107, %v9106
    %v9118 = vpack.c.b16 %v9109, %v9108
    %v9119 = vpack.c.b16 %v9111, %v9110
    %9128 = vmatprep.subr.bf16.mxu0 0
    %9129 = vmatpush1.bf16.msra.mxu0 %v9119
    %9130 = vmatprep.subr.bf16.mxu0 0
    %9131 = vmatpush1.bf16.msra.mxu0 %v9118
    %9132 = vmatprep.subr.bf16.mxu0 0
    %9133 = vmatpush1.bf16.msra.mxu0 %v9117
    %9134 = vmatprep.subr.bf16.mxu0 0
    %9135 = vmatpush1.bf16.msra.mxu0 %v9116
    %9136 = vmatprep.subr.bf16.mxu0 0
    %9137 = vmatpush1.bf16.msra.mxu0 %v9115
    %9138 = vmatprep.subr.bf16.mxu0 0
    %9139 = vmatpush1.bf16.msra.mxu0 %v9114
    %9140 = vmatprep.subr.bf16.mxu0 0
    %9141 = vmatpush1.bf16.msra.mxu0 %v9113
    %9142 = vmatprep.subr.bf16.mxu0 0
    %9143 = vmatpush1.bf16.msra.mxu0 %v9112
    %9144 = vmatprep.subr.bf16.mxu0 0
    %9145 = vmatpush2.bf16.msra.mxu0 0
    %9146 = vmatprep.subr.bf16.mxu0 0
    %9147 = vmatpush2.bf16.msra.mxu0 0
    %9148 = vmatprep.subr.bf16.mxu0 0
    %9149 = vmatpush2.bf16.msra.mxu0 0
    %9150 = vmatprep.subr.bf16.mxu0 0
    %9151 = vmatpush2.bf16.msra.mxu0 0
    %9152 = vmatprep.subr.bf16.mxu0 0
    %9153 = vmatpush2.bf16.msra.mxu0 0
    %9154 = vmatprep.subr.bf16.mxu0 0
    %9155 = vmatpush2.bf16.msra.mxu0 0
    %9156 = vmatprep.subr.bf16.mxu0 0
    %9157 = vmatpush2.bf16.msra.mxu0 0
    %9158 = vmatprep.subr.bf16.mxu0 0
    %9159 = vmatpush2.bf16.msra.mxu0 0
    %9160 = vmatprep.mubr.bf16.mxu0 0
    %9161 = vmatmul.mubr.bf16.gmra.mxu0 %v9015
    %v9162 = vpop.f32.mrf.mxu0
    %v9163 = vadd.f32 0.0, %v9162
    %v9164 = vpop.f32.mrf.mxu0
    %v9165 = vpop.f32.mrf.mxu0
    %v9166 = vadd.f32 0.0, %v9165
    %v9167 = vpop.f32.mrf.mxu0
    %9168 = vmatprep.mubr.bf16.mxu0 0
    %9169 = vmatmul.mubr.bf16.gmra.mxu0 %v9016
    %v9170 = vpop.f32.mrf.mxu0
    %v9171 = vadd.f32 0.0, %v9170
    %v9172 = vpop.f32.mrf.mxu0
    %v9173 = vpop.f32.mrf.mxu0
    %v9174 = vadd.f32 0.0, %v9173
    %v9175 = vpop.f32.mrf.mxu0
    %9176 = vmatprep.mubr.bf16.mxu0 0
    %9177 = vmatmul.mubr.bf16.gmra.mxu0 %v9017
    %v9178 = vpop.f32.mrf.mxu0
    %v9179 = vadd.f32 0.0, %v9178
    %v9180 = vpop.f32.mrf.mxu0
    %v9181 = vpop.f32.mrf.mxu0
    %v9182 = vadd.f32 0.0, %v9181
    %v9183 = vpop.f32.mrf.mxu0
    %9184 = vmatprep.mubr.bf16.mxu0 0
    %9185 = vmatmul.mubr.bf16.gmra.mxu0 %v9018
    %v9186 = vpop.f32.mrf.mxu0
    %v9187 = vadd.f32 0.0, %v9186
    %v9188 = vpop.f32.mrf.mxu0
    %v9189 = vpop.f32.mrf.mxu0
    %v9190 = vadd.f32 0.0, %v9189
    %v9191 = vpop.f32.mrf.mxu0
    %9192 = vdwg.mxu0
    %v9209 = vunpack.c.l.b16 %v9047
    %v9210 = vunpack.c.l.b16 %v9048
    %v9211 = vunpack.c.l.b16 %v9049
    %v9212 = vunpack.c.l.b16 %v9050
    %v9213 = vunpack.c.l.b16 %v9051
    %v9214 = vunpack.c.l.b16 %v9052
    %v9215 = vunpack.c.l.b16 %v9053
    %v9216 = vunpack.c.l.b16 %v9054
    %v9217 = vunpack.c.l.b16 %v9055
    %v9218 = vunpack.c.l.b16 %v9056
    %v9219 = vunpack.c.l.b16 %v9057
    %v9220 = vunpack.c.l.b16 %v9058
    %v9221 = vunpack.c.l.b16 %v9059
    %v9222 = vunpack.c.l.b16 %v9060
    %v9223 = vunpack.c.l.b16 %v9061
    %v9224 = vunpack.c.l.b16 %v9062
    %v9225 = vpack.c.b16 %v9210, %v9209
    %v9226 = vpack.c.b16 %v9212, %v9211
    %v9227 = vpack.c.b16 %v9214, %v9213
    %v9228 = vpack.c.b16 %v9216, %v9215
    %v9229 = vpack.c.b16 %v9218, %v9217
    %v9230 = vpack.c.b16 %v9220, %v9219
    %v9231 = vpack.c.b16 %v9222, %v9221
    %v9232 = vpack.c.b16 %v9224, %v9223
    %9241 = vmatprep.subr.bf16.mxu0 0
    %9242 = vmatpush1.bf16.msra.mxu0 %v9232
    %9243 = vmatprep.subr.bf16.mxu0 0
    %9244 = vmatpush1.bf16.msra.mxu0 %v9231
    %9245 = vmatprep.subr.bf16.mxu0 0
    %9246 = vmatpush1.bf16.msra.mxu0 %v9230
    %9247 = vmatprep.subr.bf16.mxu0 0
    %9248 = vmatpush1.bf16.msra.mxu0 %v9229
    %9249 = vmatprep.subr.bf16.mxu0 0
    %9250 = vmatpush1.bf16.msra.mxu0 %v9228
    %9251 = vmatprep.subr.bf16.mxu0 0
    %9252 = vmatpush1.bf16.msra.mxu0 %v9227
    %9253 = vmatprep.subr.bf16.mxu0 0
    %9254 = vmatpush1.bf16.msra.mxu0 %v9226
    %9255 = vmatprep.subr.bf16.mxu0 0
    %9256 = vmatpush1.bf16.msra.mxu0 %v9225
    %9257 = vmatprep.subr.bf16.mxu0 0
    %9258 = vmatpush2.bf16.msra.mxu0 0
    %9259 = vmatprep.subr.bf16.mxu0 0
    %9260 = vmatpush2.bf16.msra.mxu0 0
    %9261 = vmatprep.subr.bf16.mxu0 0
    %9262 = vmatpush2.bf16.msra.mxu0 0
    %9263 = vmatprep.subr.bf16.mxu0 0
    %9264 = vmatpush2.bf16.msra.mxu0 0
    %9265 = vmatprep.subr.bf16.mxu0 0
    %9266 = vmatpush2.bf16.msra.mxu0 0
    %9267 = vmatprep.subr.bf16.mxu0 0
    %9268 = vmatpush2.bf16.msra.mxu0 0
    %9269 = vmatprep.subr.bf16.mxu0 0
    %9270 = vmatpush2.bf16.msra.mxu0 0
    %9271 = vmatprep.subr.bf16.mxu0 0
    %9272 = vmatpush2.bf16.msra.mxu0 0
    %9273 = vmatprep.mubr.bf16.mxu0 0
    %9274 = vmatmul.mubr.bf16.gmra.mxu0 %v9011
    %v9275 = vpop.f32.mrf.mxu0
    %v9276 = vadd.f32 %v9163, %v9275
    %v9277 = vpop.f32.mrf.mxu0
    %v9278 = vpop.f32.mrf.mxu0
    %v9279 = vadd.f32 %v9166, %v9278
    %v9280 = vpop.f32.mrf.mxu0
    %9281 = vmatprep.mubr.bf16.mxu0 0
    %9282 = vmatmul.mubr.bf16.gmra.mxu0 %v9012
    %v9283 = vpop.f32.mrf.mxu0
    %v9284 = vadd.f32 %v9171, %v9283
    %v9285 = vpop.f32.mrf.mxu0
    %v9286 = vpop.f32.mrf.mxu0
    %v9287 = vadd.f32 %v9174, %v9286
    %v9288 = vpop.f32.mrf.mxu0
    %9289 = vmatprep.mubr.bf16.mxu0 0
    %9290 = vmatmul.mubr.bf16.gmra.mxu0 %v9013
    %v9291 = vpop.f32.mrf.mxu0
    %v9292 = vadd.f32 %v9179, %v9291
    %v9293 = vpop.f32.mrf.mxu0
    %v9294 = vpop.f32.mrf.mxu0
    %v9295 = vadd.f32 %v9182, %v9294
    %v9296 = vpop.f32.mrf.mxu0
    %9297 = vmatprep.mubr.bf16.mxu0 0
    %9298 = vmatmul.mubr.bf16.gmra.mxu0 %v9014
    %v9299 = vpop.f32.mrf.mxu0
    %v9300 = vadd.f32 %v9187, %v9299
    %v9301 = vpop.f32.mrf.mxu0
    %v9302 = vpop.f32.mrf.mxu0
    %v9303 = vadd.f32 %v9190, %v9302
    %v9304 = vpop.f32.mrf.mxu0
    %9305 = vdwg.mxu0
    %s9306 = scalar_lea.vmem %s9, 128
    %v9307 = vld [vmem:[%s9306] sm:$0xf]
    %v9308 = vld [vmem:[%s9306 + $0x4] sm:$0xf]
    %v9309 = vld [vmem:[%s9306 + $0x8] sm:$0xf]
    %v9310 = vld [vmem:[%s9306 + $0xc] sm:$0xf]
    %v9311 = vld [vmem:[%s9306 + $0x10] sm:$0xf]
    %v9312 = vld [vmem:[%s9306 + $0x14] sm:$0xf]
    %v9313 = vld [vmem:[%s9306 + $0x18] sm:$0xf]
    %v9314 = vld [vmem:[%s9306 + $0x1c] sm:$0xf]
    %v9315 = vld [vmem:[%s9306 + $0x20] sm:$0xf]
    %v9316 = vld [vmem:[%s9306 + $0x24] sm:$0xf]
    %v9317 = vld [vmem:[%s9306 + $0x28] sm:$0xf]
    %v9318 = vld [vmem:[%s9306 + $0x2c] sm:$0xf]
    %v9319 = vld [vmem:[%s9306 + $0x30] sm:$0xf]
    %v9320 = vld [vmem:[%s9306 + $0x34] sm:$0xf]
    %v9321 = vld [vmem:[%s9306 + $0x38] sm:$0xf]
    %v9322 = vld [vmem:[%s9306 + $0x3c] sm:$0xf]
    %v9339 = vunpack.c.l.b16 %v9307
    %v9340 = vunpack.c.l.b16 %v9308
    %v9341 = vunpack.c.l.b16 %v9309
    %v9342 = vunpack.c.l.b16 %v9310
    %v9343 = vunpack.c.l.b16 %v9311
    %v9344 = vunpack.c.l.b16 %v9312
    %v9345 = vunpack.c.l.b16 %v9313
    %v9346 = vunpack.c.l.b16 %v9314
    %v9347 = vunpack.c.l.b16 %v9315
    %v9348 = vunpack.c.l.b16 %v9316
    %v9349 = vunpack.c.l.b16 %v9317
    %v9350 = vunpack.c.l.b16 %v9318
    %v9351 = vunpack.c.l.b16 %v9319
    %v9352 = vunpack.c.l.b16 %v9320
    %v9353 = vunpack.c.l.b16 %v9321
    %v9354 = vunpack.c.l.b16 %v9322
    %v9355 = vpack.c.b16 %v9340, %v9339
    %v9356 = vpack.c.b16 %v9342, %v9341
    %v9357 = vpack.c.b16 %v9344, %v9343
    %v9358 = vpack.c.b16 %v9346, %v9345
    %v9359 = vpack.c.b16 %v9348, %v9347
    %v9360 = vpack.c.b16 %v9350, %v9349
    %v9361 = vpack.c.b16 %v9352, %v9351
    %v9362 = vpack.c.b16 %v9354, %v9353
    %9371 = vmatprep.subr.bf16.mxu0 0
    %9372 = vmatpush1.bf16.msra.mxu0 %v9362
    %9373 = vmatprep.subr.bf16.mxu0 0
    %9374 = vmatpush1.bf16.msra.mxu0 %v9361
    %9375 = vmatprep.subr.bf16.mxu0 0
    %9376 = vmatpush1.bf16.msra.mxu0 %v9360
    %9377 = vmatprep.subr.bf16.mxu0 0
    %9378 = vmatpush1.bf16.msra.mxu0 %v9359
    %9379 = vmatprep.subr.bf16.mxu0 0
    %9380 = vmatpush1.bf16.msra.mxu0 %v9358
    %9381 = vmatprep.subr.bf16.mxu0 0
    %9382 = vmatpush1.bf16.msra.mxu0 %v9357
    %9383 = vmatprep.subr.bf16.mxu0 0
    %9384 = vmatpush1.bf16.msra.mxu0 %v9356
    %9385 = vmatprep.subr.bf16.mxu0 0
    %9386 = vmatpush1.bf16.msra.mxu0 %v9355
    %9387 = vmatprep.subr.bf16.mxu0 0
    %9388 = vmatpush2.bf16.msra.mxu0 0
    %9389 = vmatprep.subr.bf16.mxu0 0
    %9390 = vmatpush2.bf16.msra.mxu0 0
    %9391 = vmatprep.subr.bf16.mxu0 0
    %9392 = vmatpush2.bf16.msra.mxu0 0
    %9393 = vmatprep.subr.bf16.mxu0 0
    %9394 = vmatpush2.bf16.msra.mxu0 0
    %9395 = vmatprep.subr.bf16.mxu0 0
    %9396 = vmatpush2.bf16.msra.mxu0 0
    %9397 = vmatprep.subr.bf16.mxu0 0
    %9398 = vmatpush2.bf16.msra.mxu0 0
    %9399 = vmatprep.subr.bf16.mxu0 0
    %9400 = vmatpush2.bf16.msra.mxu0 0
    %9401 = vmatprep.subr.bf16.mxu0 0
    %9402 = vmatpush2.bf16.msra.mxu0 0
    %9403 = vmatprep.mubr.bf16.mxu0 0
    %9404 = vmatmul.mubr.bf16.gmra.mxu0 %v9019
    %v9405 = vpop.f32.mrf.mxu0
    %v9406 = vadd.f32 0.0, %v9405
    %v9407 = vpop.f32.mrf.mxu0
    %v9408 = vpop.f32.mrf.mxu0
    %v9409 = vadd.f32 0.0, %v9408
    %v9410 = vpop.f32.mrf.mxu0
    %9411 = vmatprep.mubr.bf16.mxu0 0
    %9412 = vmatmul.mubr.bf16.gmra.mxu0 %v9020
    %v9413 = vpop.f32.mrf.mxu0
    %v9414 = vadd.f32 0.0, %v9413
    %v9415 = vpop.f32.mrf.mxu0
    %v9416 = vpop.f32.mrf.mxu0
    %v9417 = vadd.f32 0.0, %v9416
    %v9418 = vpop.f32.mrf.mxu0
    %9419 = vmatprep.mubr.bf16.mxu0 0
    %9420 = vmatmul.mubr.bf16.gmra.mxu0 %v9021
    %v9421 = vpop.f32.mrf.mxu0
    %v9422 = vadd.f32 0.0, %v9421
    %v9423 = vpop.f32.mrf.mxu0
    %v9424 = vpop.f32.mrf.mxu0
    %v9425 = vadd.f32 0.0, %v9424
    %v9426 = vpop.f32.mrf.mxu0
    %9427 = vmatprep.mubr.bf16.mxu0 0
    %9428 = vmatmul.mubr.bf16.gmra.mxu0 %v9022
    %v9429 = vpop.f32.mrf.mxu0
    %v9430 = vadd.f32 0.0, %v9429
    %v9431 = vpop.f32.mrf.mxu0
    %v9432 = vpop.f32.mrf.mxu0
    %v9433 = vadd.f32 0.0, %v9432
    %v9434 = vpop.f32.mrf.mxu0
    %9435 = vdwg.mxu0
    %v9436 = vadd.f32 %v9276, %v9406
    %v9437 = vadd.f32 %v9279, %v9409
    %v9438 = vadd.f32 %v9284, %v9414
    %v9439 = vadd.f32 %v9287, %v9417
    %v9440 = vadd.f32 %v9292, %v9422
    %v9441 = vadd.f32 %v9295, %v9425
    %v9442 = vadd.f32 %v9300, %v9430
    %v9443 = vadd.f32 %v9303, %v9433
    %s9444 = scalar_lea.vmem %s9, 192
    %v9445 = vld [vmem:[%s9444] sm:$0xf]
    %v9446 = vld [vmem:[%s9444 + $0x4] sm:$0xf]
    %v9447 = vld [vmem:[%s9444 + $0x8] sm:$0xf]
    %v9448 = vld [vmem:[%s9444 + $0xc] sm:$0xf]
    %v9449 = vld [vmem:[%s9444 + $0x10] sm:$0xf]
    %v9450 = vld [vmem:[%s9444 + $0x14] sm:$0xf]
    %v9451 = vld [vmem:[%s9444 + $0x18] sm:$0xf]
    %v9452 = vld [vmem:[%s9444 + $0x1c] sm:$0xf]
    %v9453 = vld [vmem:[%s9444 + $0x20] sm:$0xf]
    %v9454 = vld [vmem:[%s9444 + $0x24] sm:$0xf]
    %v9455 = vld [vmem:[%s9444 + $0x28] sm:$0xf]
    %v9456 = vld [vmem:[%s9444 + $0x2c] sm:$0xf]
    %v9457 = vld [vmem:[%s9444 + $0x30] sm:$0xf]
    %v9458 = vld [vmem:[%s9444 + $0x34] sm:$0xf]
    %v9459 = vld [vmem:[%s9444 + $0x38] sm:$0xf]
    %v9460 = vld [vmem:[%s9444 + $0x3c] sm:$0xf]
    %v9477 = vunpack.c.l.b16 %v9445
    %v9478 = vunpack.c.l.b16 %v9446
    %v9479 = vunpack.c.l.b16 %v9447
    %v9480 = vunpack.c.l.b16 %v9448
    %v9481 = vunpack.c.l.b16 %v9449
    %v9482 = vunpack.c.l.b16 %v9450
    %v9483 = vunpack.c.l.b16 %v9451
    %v9484 = vunpack.c.l.b16 %v9452
    %v9485 = vunpack.c.l.b16 %v9453
    %v9486 = vunpack.c.l.b16 %v9454
    %v9487 = vunpack.c.l.b16 %v9455
    %v9488 = vunpack.c.l.b16 %v9456
    %v9489 = vunpack.c.l.b16 %v9457
    %v9490 = vunpack.c.l.b16 %v9458
    %v9491 = vunpack.c.l.b16 %v9459
    %v9492 = vunpack.c.l.b16 %v9460
    %v9493 = vpack.c.b16 %v9478, %v9477
    %v9494 = vpack.c.b16 %v9480, %v9479
    %v9495 = vpack.c.b16 %v9482, %v9481
    %v9496 = vpack.c.b16 %v9484, %v9483
    %v9497 = vpack.c.b16 %v9486, %v9485
    %v9498 = vpack.c.b16 %v9488, %v9487
    %v9499 = vpack.c.b16 %v9490, %v9489
    %v9500 = vpack.c.b16 %v9492, %v9491
    %9509 = vmatprep.subr.bf16.mxu0 0
    %9510 = vmatpush1.bf16.msra.mxu0 %v9500
    %9511 = vmatprep.subr.bf16.mxu0 0
    %9512 = vmatpush1.bf16.msra.mxu0 %v9499
    %9513 = vmatprep.subr.bf16.mxu0 0
    %9514 = vmatpush1.bf16.msra.mxu0 %v9498
    %9515 = vmatprep.subr.bf16.mxu0 0
    %9516 = vmatpush1.bf16.msra.mxu0 %v9497
    %9517 = vmatprep.subr.bf16.mxu0 0
    %9518 = vmatpush1.bf16.msra.mxu0 %v9496
    %9519 = vmatprep.subr.bf16.mxu0 0
    %9520 = vmatpush1.bf16.msra.mxu0 %v9495
    %9521 = vmatprep.subr.bf16.mxu0 0
    %9522 = vmatpush1.bf16.msra.mxu0 %v9494
    %9523 = vmatprep.subr.bf16.mxu0 0
    %9524 = vmatpush1.bf16.msra.mxu0 %v9493
    %9525 = vmatprep.subr.bf16.mxu0 0
    %9526 = vmatpush2.bf16.msra.mxu0 0
    %9527 = vmatprep.subr.bf16.mxu0 0
    %9528 = vmatpush2.bf16.msra.mxu0 0
    %9529 = vmatprep.subr.bf16.mxu0 0
    %9530 = vmatpush2.bf16.msra.mxu0 0
    %9531 = vmatprep.subr.bf16.mxu0 0
    %9532 = vmatpush2.bf16.msra.mxu0 0
    %9533 = vmatprep.subr.bf16.mxu0 0
    %9534 = vmatpush2.bf16.msra.mxu0 0
    %9535 = vmatprep.subr.bf16.mxu0 0
    %9536 = vmatpush2.bf16.msra.mxu0 0
    %9537 = vmatprep.subr.bf16.mxu0 0
    %9538 = vmatpush2.bf16.msra.mxu0 0
    %9539 = vmatprep.subr.bf16.mxu0 0
    %9540 = vmatpush2.bf16.msra.mxu0 0
    %9541 = vmatprep.mubr.bf16.mxu0 0
    %9542 = vmatmul.mubr.bf16.gmra.mxu0 %v9023
    %v9543 = vpop.f32.mrf.mxu0
    %v9544 = vadd.f32 0.0, %v9543
    %v9545 = vpop.f32.mrf.mxu0
    %v9546 = vpop.f32.mrf.mxu0
    %v9547 = vadd.f32 0.0, %v9546
    %v9548 = vpop.f32.mrf.mxu0
    %9549 = vmatprep.mubr.bf16.mxu0 0
    %9550 = vmatmul.mubr.bf16.gmra.mxu0 %v9024
    %v9551 = vpop.f32.mrf.mxu0
    %v9552 = vadd.f32 0.0, %v9551
    %v9553 = vpop.f32.mrf.mxu0
    %v9554 = vpop.f32.mrf.mxu0
    %v9555 = vadd.f32 0.0, %v9554
    %v9556 = vpop.f32.mrf.mxu0
    %9557 = vmatprep.mubr.bf16.mxu0 0
    %9558 = vmatmul.mubr.bf16.gmra.mxu0 %v9025
    %v9559 = vpop.f32.mrf.mxu0
    %v9560 = vadd.f32 0.0, %v9559
    %v9561 = vpop.f32.mrf.mxu0
    %v9562 = vpop.f32.mrf.mxu0
    %v9563 = vadd.f32 0.0, %v9562
    %v9564 = vpop.f32.mrf.mxu0
    %9565 = vmatprep.mubr.bf16.mxu0 0
    %9566 = vmatmul.mubr.bf16.gmra.mxu0 %v9026
    %v9567 = vpop.f32.mrf.mxu0
    %v9568 = vadd.f32 0.0, %v9567
    %v9569 = vpop.f32.mrf.mxu0
    %v9570 = vpop.f32.mrf.mxu0
    %v9571 = vadd.f32 0.0, %v9570
    %v9572 = vpop.f32.mrf.mxu0
    %9573 = vdwg.mxu0
    %v9574 = vadd.f32 %v9436, %v9544
    %v9575 = vadd.f32 %v9437, %v9547
    %v9576 = vadd.f32 %v9438, %v9552
    %v9577 = vadd.f32 %v9439, %v9555
    %v9578 = vadd.f32 %v9440, %v9560
    %v9579 = vadd.f32 %v9441, %v9563
    %v9580 = vadd.f32 %v9442, %v9568
    %v9581 = vadd.f32 %v9443, %v9571
    %s9582 = scalar_lea.vmem %s9, 256
    %v9583 = vld [vmem:[%s9582] sm:$0xf]
    %v9584 = vld [vmem:[%s9582 + $0x4] sm:$0xf]
    %v9585 = vld [vmem:[%s9582 + $0x8] sm:$0xf]
    %v9586 = vld [vmem:[%s9582 + $0xc] sm:$0xf]
    %v9587 = vld [vmem:[%s9582 + $0x10] sm:$0xf]
    %v9588 = vld [vmem:[%s9582 + $0x14] sm:$0xf]
    %v9589 = vld [vmem:[%s9582 + $0x18] sm:$0xf]
    %v9590 = vld [vmem:[%s9582 + $0x1c] sm:$0xf]
    %v9591 = vld [vmem:[%s9582 + $0x20] sm:$0xf]
    %v9592 = vld [vmem:[%s9582 + $0x24] sm:$0xf]
    %v9593 = vld [vmem:[%s9582 + $0x28] sm:$0xf]
    %v9594 = vld [vmem:[%s9582 + $0x2c] sm:$0xf]
    %v9595 = vld [vmem:[%s9582 + $0x30] sm:$0xf]
    %v9596 = vld [vmem:[%s9582 + $0x34] sm:$0xf]
    %v9597 = vld [vmem:[%s9582 + $0x38] sm:$0xf]
    %v9598 = vld [vmem:[%s9582 + $0x3c] sm:$0xf]
    %v9615 = vunpack.c.l.b16 %v9583
    %v9616 = vunpack.c.l.b16 %v9584
    %v9617 = vunpack.c.l.b16 %v9585
    %v9618 = vunpack.c.l.b16 %v9586
    %v9619 = vunpack.c.l.b16 %v9587
    %v9620 = vunpack.c.l.b16 %v9588
    %v9621 = vunpack.c.l.b16 %v9589
    %v9622 = vunpack.c.l.b16 %v9590
    %v9623 = vunpack.c.l.b16 %v9591
    %v9624 = vunpack.c.l.b16 %v9592
    %v9625 = vunpack.c.l.b16 %v9593
    %v9626 = vunpack.c.l.b16 %v9594
    %v9627 = vunpack.c.l.b16 %v9595
    %v9628 = vunpack.c.l.b16 %v9596
    %v9629 = vunpack.c.l.b16 %v9597
    %v9630 = vunpack.c.l.b16 %v9598
    %v9631 = vpack.c.b16 %v9616, %v9615
    %v9632 = vpack.c.b16 %v9618, %v9617
    %v9633 = vpack.c.b16 %v9620, %v9619
    %v9634 = vpack.c.b16 %v9622, %v9621
    %v9635 = vpack.c.b16 %v9624, %v9623
    %v9636 = vpack.c.b16 %v9626, %v9625
    %v9637 = vpack.c.b16 %v9628, %v9627
    %v9638 = vpack.c.b16 %v9630, %v9629
    %9647 = vmatprep.subr.bf16.mxu0 0
    %9648 = vmatpush1.bf16.msra.mxu0 %v9638
    %9649 = vmatprep.subr.bf16.mxu0 0
    %9650 = vmatpush1.bf16.msra.mxu0 %v9637
    %9651 = vmatprep.subr.bf16.mxu0 0
    %9652 = vmatpush1.bf16.msra.mxu0 %v9636
    %9653 = vmatprep.subr.bf16.mxu0 0
    %9654 = vmatpush1.bf16.msra.mxu0 %v9635
    %9655 = vmatprep.subr.bf16.mxu0 0
    %9656 = vmatpush1.bf16.msra.mxu0 %v9634
    %9657 = vmatprep.subr.bf16.mxu0 0
    %9658 = vmatpush1.bf16.msra.mxu0 %v9633
    %9659 = vmatprep.subr.bf16.mxu0 0
    %9660 = vmatpush1.bf16.msra.mxu0 %v9632
    %9661 = vmatprep.subr.bf16.mxu0 0
    %9662 = vmatpush1.bf16.msra.mxu0 %v9631
    %9663 = vmatprep.subr.bf16.mxu0 0
    %9664 = vmatpush2.bf16.msra.mxu0 0
    %9665 = vmatprep.subr.bf16.mxu0 0
    %9666 = vmatpush2.bf16.msra.mxu0 0
    %9667 = vmatprep.subr.bf16.mxu0 0
    %9668 = vmatpush2.bf16.msra.mxu0 0
    %9669 = vmatprep.subr.bf16.mxu0 0
    %9670 = vmatpush2.bf16.msra.mxu0 0
    %9671 = vmatprep.subr.bf16.mxu0 0
    %9672 = vmatpush2.bf16.msra.mxu0 0
    %9673 = vmatprep.subr.bf16.mxu0 0
    %9674 = vmatpush2.bf16.msra.mxu0 0
    %9675 = vmatprep.subr.bf16.mxu0 0
    %9676 = vmatpush2.bf16.msra.mxu0 0
    %9677 = vmatprep.subr.bf16.mxu0 0
    %9678 = vmatpush2.bf16.msra.mxu0 0
    %9679 = vmatprep.mubr.bf16.mxu0 0
    %9680 = vmatmul.mubr.bf16.gmra.mxu0 %v9027
    %v9681 = vpop.f32.mrf.mxu0
    %v9682 = vadd.f32 0.0, %v9681
    %v9683 = vpop.f32.mrf.mxu0
    %v9684 = vpop.f32.mrf.mxu0
    %v9685 = vadd.f32 0.0, %v9684
    %v9686 = vpop.f32.mrf.mxu0
    %9687 = vmatprep.mubr.bf16.mxu0 0
    %9688 = vmatmul.mubr.bf16.gmra.mxu0 %v9028
    %v9689 = vpop.f32.mrf.mxu0
    %v9690 = vadd.f32 0.0, %v9689
    %v9691 = vpop.f32.mrf.mxu0
    %v9692 = vpop.f32.mrf.mxu0
    %v9693 = vadd.f32 0.0, %v9692
    %v9694 = vpop.f32.mrf.mxu0
    %9695 = vmatprep.mubr.bf16.mxu0 0
    %9696 = vmatmul.mubr.bf16.gmra.mxu0 %v9029
    %v9697 = vpop.f32.mrf.mxu0
    %v9698 = vadd.f32 0.0, %v9697
    %v9699 = vpop.f32.mrf.mxu0
    %v9700 = vpop.f32.mrf.mxu0
    %v9701 = vadd.f32 0.0, %v9700
    %v9702 = vpop.f32.mrf.mxu0
    %9703 = vmatprep.mubr.bf16.mxu0 0
    %9704 = vmatmul.mubr.bf16.gmra.mxu0 %v9030
    %v9705 = vpop.f32.mrf.mxu0
    %v9706 = vadd.f32 0.0, %v9705
    %v9707 = vpop.f32.mrf.mxu0
    %v9708 = vpop.f32.mrf.mxu0
    %v9709 = vadd.f32 0.0, %v9708
    %v9710 = vpop.f32.mrf.mxu0
    %9711 = vdwg.mxu0
    %v9712 = vadd.f32 %v9574, %v9682
    %v9713 = vadd.f32 %v9575, %v9685
    %v9714 = vadd.f32 %v9576, %v9690
    %v9715 = vadd.f32 %v9577, %v9693
    %v9716 = vadd.f32 %v9578, %v9698
    %v9717 = vadd.f32 %v9579, %v9701
    %v9718 = vadd.f32 %v9580, %v9706
    %v9719 = vadd.f32 %v9581, %v9709
    %s9720 = scalar_lea.vmem %s9, 320
    %v9721 = vld [vmem:[%s9720] sm:$0xf]
    %v9722 = vld [vmem:[%s9720 + $0x4] sm:$0xf]
    %v9723 = vld [vmem:[%s9720 + $0x8] sm:$0xf]
    %v9724 = vld [vmem:[%s9720 + $0xc] sm:$0xf]
    %v9725 = vld [vmem:[%s9720 + $0x10] sm:$0xf]
    %v9726 = vld [vmem:[%s9720 + $0x14] sm:$0xf]
    %v9727 = vld [vmem:[%s9720 + $0x18] sm:$0xf]
    %v9728 = vld [vmem:[%s9720 + $0x1c] sm:$0xf]
    %v9729 = vld [vmem:[%s9720 + $0x20] sm:$0xf]
    %v9730 = vld [vmem:[%s9720 + $0x24] sm:$0xf]
    %v9731 = vld [vmem:[%s9720 + $0x28] sm:$0xf]
    %v9732 = vld [vmem:[%s9720 + $0x2c] sm:$0xf]
    %v9733 = vld [vmem:[%s9720 + $0x30] sm:$0xf]
    %v9734 = vld [vmem:[%s9720 + $0x34] sm:$0xf]
    %v9735 = vld [vmem:[%s9720 + $0x38] sm:$0xf]
    %v9736 = vld [vmem:[%s9720 + $0x3c] sm:$0xf]
    %v9753 = vunpack.c.l.b16 %v9721
    %v9754 = vunpack.c.l.b16 %v9722
    %v9755 = vunpack.c.l.b16 %v9723
    %v9756 = vunpack.c.l.b16 %v9724
    %v9757 = vunpack.c.l.b16 %v9725
    %v9758 = vunpack.c.l.b16 %v9726
    %v9759 = vunpack.c.l.b16 %v9727
    %v9760 = vunpack.c.l.b16 %v9728
    %v9761 = vunpack.c.l.b16 %v9729
    %v9762 = vunpack.c.l.b16 %v9730
    %v9763 = vunpack.c.l.b16 %v9731
    %v9764 = vunpack.c.l.b16 %v9732
    %v9765 = vunpack.c.l.b16 %v9733
    %v9766 = vunpack.c.l.b16 %v9734
    %v9767 = vunpack.c.l.b16 %v9735
    %v9768 = vunpack.c.l.b16 %v9736
    %v9769 = vpack.c.b16 %v9754, %v9753
    %v9770 = vpack.c.b16 %v9756, %v9755
    %v9771 = vpack.c.b16 %v9758, %v9757
    %v9772 = vpack.c.b16 %v9760, %v9759
    %v9773 = vpack.c.b16 %v9762, %v9761
    %v9774 = vpack.c.b16 %v9764, %v9763
    %v9775 = vpack.c.b16 %v9766, %v9765
    %v9776 = vpack.c.b16 %v9768, %v9767
    %9785 = vmatprep.subr.bf16.mxu0 0
    %9786 = vmatpush1.bf16.msra.mxu0 %v9776
    %9787 = vmatprep.subr.bf16.mxu0 0
    %9788 = vmatpush1.bf16.msra.mxu0 %v9775
    %9789 = vmatprep.subr.bf16.mxu0 0
    %9790 = vmatpush1.bf16.msra.mxu0 %v9774
    %9791 = vmatprep.subr.bf16.mxu0 0
    %9792 = vmatpush1.bf16.msra.mxu0 %v9773
    %9793 = vmatprep.subr.bf16.mxu0 0
    %9794 = vmatpush1.bf16.msra.mxu0 %v9772
    %9795 = vmatprep.subr.bf16.mxu0 0
    %9796 = vmatpush1.bf16.msra.mxu0 %v9771
    %9797 = vmatprep.subr.bf16.mxu0 0
    %9798 = vmatpush1.bf16.msra.mxu0 %v9770
    %9799 = vmatprep.subr.bf16.mxu0 0
    %9800 = vmatpush1.bf16.msra.mxu0 %v9769
    %9801 = vmatprep.subr.bf16.mxu0 0
    %9802 = vmatpush2.bf16.msra.mxu0 0
    %9803 = vmatprep.subr.bf16.mxu0 0
    %9804 = vmatpush2.bf16.msra.mxu0 0
    %9805 = vmatprep.subr.bf16.mxu0 0
    %9806 = vmatpush2.bf16.msra.mxu0 0
    %9807 = vmatprep.subr.bf16.mxu0 0
    %9808 = vmatpush2.bf16.msra.mxu0 0
    %9809 = vmatprep.subr.bf16.mxu0 0
    %9810 = vmatpush2.bf16.msra.mxu0 0
    %9811 = vmatprep.subr.bf16.mxu0 0
    %9812 = vmatpush2.bf16.msra.mxu0 0
    %9813 = vmatprep.subr.bf16.mxu0 0
    %9814 = vmatpush2.bf16.msra.mxu0 0
    %9815 = vmatprep.subr.bf16.mxu0 0
    %9816 = vmatpush2.bf16.msra.mxu0 0
    %9817 = vmatprep.mubr.bf16.mxu0 0
    %9818 = vmatmul.mubr.bf16.gmra.mxu0 %v9031
    %v9819 = vpop.f32.mrf.mxu0
    %v9820 = vadd.f32 0.0, %v9819
    %v9821 = vpop.f32.mrf.mxu0
    %v9822 = vpop.f32.mrf.mxu0
    %v9823 = vadd.f32 0.0, %v9822
    %v9824 = vpop.f32.mrf.mxu0
    %9825 = vmatprep.mubr.bf16.mxu0 0
    %9826 = vmatmul.mubr.bf16.gmra.mxu0 %v9032
    %v9827 = vpop.f32.mrf.mxu0
    %v9828 = vadd.f32 0.0, %v9827
    %v9829 = vpop.f32.mrf.mxu0
    %v9830 = vpop.f32.mrf.mxu0
    %v9831 = vadd.f32 0.0, %v9830
    %v9832 = vpop.f32.mrf.mxu0
    %9833 = vmatprep.mubr.bf16.mxu0 0
    %9834 = vmatmul.mubr.bf16.gmra.mxu0 %v9033
    %v9835 = vpop.f32.mrf.mxu0
    %v9836 = vadd.f32 0.0, %v9835
    %v9837 = vpop.f32.mrf.mxu0
    %v9838 = vpop.f32.mrf.mxu0
    %v9839 = vadd.f32 0.0, %v9838
    %v9840 = vpop.f32.mrf.mxu0
    %9841 = vmatprep.mubr.bf16.mxu0 0
    %9842 = vmatmul.mubr.bf16.gmra.mxu0 %v9034
    %v9843 = vpop.f32.mrf.mxu0
    %v9844 = vadd.f32 0.0, %v9843
    %v9845 = vpop.f32.mrf.mxu0
    %v9846 = vpop.f32.mrf.mxu0
    %v9847 = vadd.f32 0.0, %v9846
    %v9848 = vpop.f32.mrf.mxu0
    %9849 = vdwg.mxu0
    %v9850 = vadd.f32 %v9712, %v9820
    %v9851 = vadd.f32 %v9713, %v9823
    %v9852 = vadd.f32 %v9714, %v9828
    %v9853 = vadd.f32 %v9715, %v9831
    %v9854 = vadd.f32 %v9716, %v9836
    %v9855 = vadd.f32 %v9717, %v9839
    %v9856 = vadd.f32 %v9718, %v9844
    %v9857 = vadd.f32 %v9719, %v9847
    %s9858 = scalar_lea.vmem %s9, 384
    %v9859 = vld [vmem:[%s9858] sm:$0xf]
    %v9860 = vld [vmem:[%s9858 + $0x4] sm:$0xf]
    %v9861 = vld [vmem:[%s9858 + $0x8] sm:$0xf]
    %v9862 = vld [vmem:[%s9858 + $0xc] sm:$0xf]
    %v9863 = vld [vmem:[%s9858 + $0x10] sm:$0xf]
    %v9864 = vld [vmem:[%s9858 + $0x14] sm:$0xf]
    %v9865 = vld [vmem:[%s9858 + $0x18] sm:$0xf]
    %v9866 = vld [vmem:[%s9858 + $0x1c] sm:$0xf]
    %v9867 = vld [vmem:[%s9858 + $0x20] sm:$0xf]
    %v9868 = vld [vmem:[%s9858 + $0x24] sm:$0xf]
    %v9869 = vld [vmem:[%s9858 + $0x28] sm:$0xf]
    %v9870 = vld [vmem:[%s9858 + $0x2c] sm:$0xf]
    %v9871 = vld [vmem:[%s9858 + $0x30] sm:$0xf]
    %v9872 = vld [vmem:[%s9858 + $0x34] sm:$0xf]
    %v9873 = vld [vmem:[%s9858 + $0x38] sm:$0xf]
    %v9874 = vld [vmem:[%s9858 + $0x3c] sm:$0xf]
    %v9891 = vunpack.c.l.b16 %v9859
    %v9892 = vunpack.c.l.b16 %v9860
    %v9893 = vunpack.c.l.b16 %v9861
    %v9894 = vunpack.c.l.b16 %v9862
    %v9895 = vunpack.c.l.b16 %v9863
    %v9896 = vunpack.c.l.b16 %v9864
    %v9897 = vunpack.c.l.b16 %v9865
    %v9898 = vunpack.c.l.b16 %v9866
    %v9899 = vunpack.c.l.b16 %v9867
    %v9900 = vunpack.c.l.b16 %v9868
    %v9901 = vunpack.c.l.b16 %v9869
    %v9902 = vunpack.c.l.b16 %v9870
    %v9903 = vunpack.c.l.b16 %v9871
    %v9904 = vunpack.c.l.b16 %v9872
    %v9905 = vunpack.c.l.b16 %v9873
    %v9906 = vunpack.c.l.b16 %v9874
    %v9907 = vpack.c.b16 %v9892, %v9891
    %v9908 = vpack.c.b16 %v9894, %v9893
    %v9909 = vpack.c.b16 %v9896, %v9895
    %v9910 = vpack.c.b16 %v9898, %v9897
    %v9911 = vpack.c.b16 %v9900, %v9899
    %v9912 = vpack.c.b16 %v9902, %v9901
    %v9913 = vpack.c.b16 %v9904, %v9903
    %v9914 = vpack.c.b16 %v9906, %v9905
    %9923 = vmatprep.subr.bf16.mxu0 0
    %9924 = vmatpush1.bf16.msra.mxu0 %v9914
    %9925 = vmatprep.subr.bf16.mxu0 0
    %9926 = vmatpush1.bf16.msra.mxu0 %v9913
    %9927 = vmatprep.subr.bf16.mxu0 0
    %9928 = vmatpush1.bf16.msra.mxu0 %v9912
    %9929 = vmatprep.subr.bf16.mxu0 0
    %9930 = vmatpush1.bf16.msra.mxu0 %v9911
    %9931 = vmatprep.subr.bf16.mxu0 0
    %9932 = vmatpush1.bf16.msra.mxu0 %v9910
    %9933 = vmatprep.subr.bf16.mxu0 0
    %9934 = vmatpush1.bf16.msra.mxu0 %v9909
    %9935 = vmatprep.subr.bf16.mxu0 0
    %9936 = vmatpush1.bf16.msra.mxu0 %v9908
    %9937 = vmatprep.subr.bf16.mxu0 0
    %9938 = vmatpush1.bf16.msra.mxu0 %v9907
    %9939 = vmatprep.subr.bf16.mxu0 0
    %9940 = vmatpush2.bf16.msra.mxu0 0
    %9941 = vmatprep.subr.bf16.mxu0 0
    %9942 = vmatpush2.bf16.msra.mxu0 0
    %9943 = vmatprep.subr.bf16.mxu0 0
    %9944 = vmatpush2.bf16.msra.mxu0 0
    %9945 = vmatprep.subr.bf16.mxu0 0
    %9946 = vmatpush2.bf16.msra.mxu0 0
    %9947 = vmatprep.subr.bf16.mxu0 0
    %9948 = vmatpush2.bf16.msra.mxu0 0
    %9949 = vmatprep.subr.bf16.mxu0 0
    %9950 = vmatpush2.bf16.msra.mxu0 0
    %9951 = vmatprep.subr.bf16.mxu0 0
    %9952 = vmatpush2.bf16.msra.mxu0 0
    %9953 = vmatprep.subr.bf16.mxu0 0
    %9954 = vmatpush2.bf16.msra.mxu0 0
    %9955 = vmatprep.mubr.bf16.mxu0 0
    %9956 = vmatmul.mubr.bf16.gmra.mxu0 %v9035
    %v9957 = vpop.f32.mrf.mxu0
    %v9958 = vadd.f32 0.0, %v9957
    %v9959 = vpop.f32.mrf.mxu0
    %v9960 = vpop.f32.mrf.mxu0
    %v9961 = vadd.f32 0.0, %v9960
    %v9962 = vpop.f32.mrf.mxu0
    %9963 = vmatprep.mubr.bf16.mxu0 0
    %9964 = vmatmul.mubr.bf16.gmra.mxu0 %v9036
    %v9965 = vpop.f32.mrf.mxu0
    %v9966 = vadd.f32 0.0, %v9965
    %v9967 = vpop.f32.mrf.mxu0
    %v9968 = vpop.f32.mrf.mxu0
    %v9969 = vadd.f32 0.0, %v9968
    %v9970 = vpop.f32.mrf.mxu0
    %9971 = vmatprep.mubr.bf16.mxu0 0
    %9972 = vmatmul.mubr.bf16.gmra.mxu0 %v9037
    %v9973 = vpop.f32.mrf.mxu0
    %v9974 = vadd.f32 0.0, %v9973
    %v9975 = vpop.f32.mrf.mxu0
    %v9976 = vpop.f32.mrf.mxu0
    %v9977 = vadd.f32 0.0, %v9976
    %v9978 = vpop.f32.mrf.mxu0
    %9979 = vmatprep.mubr.bf16.mxu0 0
    %9980 = vmatmul.mubr.bf16.gmra.mxu0 %v9038
    %v9981 = vpop.f32.mrf.mxu0
    %v9982 = vadd.f32 0.0, %v9981
    %v9983 = vpop.f32.mrf.mxu0
    %v9984 = vpop.f32.mrf.mxu0
    %v9985 = vadd.f32 0.0, %v9984
    %v9986 = vpop.f32.mrf.mxu0
    %9987 = vdwg.mxu0
    %v9988 = vadd.f32 %v9850, %v9958
    %v9989 = vadd.f32 %v9851, %v9961
    %v9990 = vadd.f32 %v9852, %v9966
    %v9991 = vadd.f32 %v9853, %v9969
    %v9992 = vadd.f32 %v9854, %v9974
    %v9993 = vadd.f32 %v9855, %v9977
    %v9994 = vadd.f32 %v9856, %v9982
    %v9995 = vadd.f32 %v9857, %v9985
    %s9996 = scalar_lea.vmem %s9, 448
    %v9997 = vld [vmem:[%s9996] sm:$0xf]
    %v9998 = vld [vmem:[%s9996 + $0x4] sm:$0xf]
    %v9999 = vld [vmem:[%s9996 + $0x8] sm:$0xf]
    %v10000 = vld [vmem:[%s9996 + $0xc] sm:$0xf]
    %v10001 = vld [vmem:[%s9996 + $0x10] sm:$0xf]
    %v10002 = vld [vmem:[%s9996 + $0x14] sm:$0xf]
    %v10003 = vld [vmem:[%s9996 + $0x18] sm:$0xf]
    %v10004 = vld [vmem:[%s9996 + $0x1c] sm:$0xf]
    %v10005 = vld [vmem:[%s9996 + $0x20] sm:$0xf]
    %v10006 = vld [vmem:[%s9996 + $0x24] sm:$0xf]
    %v10007 = vld [vmem:[%s9996 + $0x28] sm:$0xf]
    %v10008 = vld [vmem:[%s9996 + $0x2c] sm:$0xf]
    %v10009 = vld [vmem:[%s9996 + $0x30] sm:$0xf]
    %v10010 = vld [vmem:[%s9996 + $0x34] sm:$0xf]
    %v10011 = vld [vmem:[%s9996 + $0x38] sm:$0xf]
    %v10012 = vld [vmem:[%s9996 + $0x3c] sm:$0xf]
    %v10029 = vunpack.c.l.b16 %v9997
    %v10030 = vunpack.c.l.b16 %v9998
    %v10031 = vunpack.c.l.b16 %v9999
    %v10032 = vunpack.c.l.b16 %v10000
    %v10033 = vunpack.c.l.b16 %v10001
    %v10034 = vunpack.c.l.b16 %v10002
    %v10035 = vunpack.c.l.b16 %v10003
    %v10036 = vunpack.c.l.b16 %v10004
    %v10037 = vunpack.c.l.b16 %v10005
    %v10038 = vunpack.c.l.b16 %v10006
    %v10039 = vunpack.c.l.b16 %v10007
    %v10040 = vunpack.c.l.b16 %v10008
    %v10041 = vunpack.c.l.b16 %v10009
    %v10042 = vunpack.c.l.b16 %v10010
    %v10043 = vunpack.c.l.b16 %v10011
    %v10044 = vunpack.c.l.b16 %v10012
    %v10045 = vpack.c.b16 %v10030, %v10029
    %v10046 = vpack.c.b16 %v10032, %v10031
    %v10047 = vpack.c.b16 %v10034, %v10033
    %v10048 = vpack.c.b16 %v10036, %v10035
    %v10049 = vpack.c.b16 %v10038, %v10037
    %v10050 = vpack.c.b16 %v10040, %v10039
    %v10051 = vpack.c.b16 %v10042, %v10041
    %v10052 = vpack.c.b16 %v10044, %v10043
    %10061 = vmatprep.subr.bf16.mxu0 0
    %10062 = vmatpush1.bf16.msra.mxu0 %v10052
    %10063 = vmatprep.subr.bf16.mxu0 0
    %10064 = vmatpush1.bf16.msra.mxu0 %v10051
    %10065 = vmatprep.subr.bf16.mxu0 0
    %10066 = vmatpush1.bf16.msra.mxu0 %v10050
    %10067 = vmatprep.subr.bf16.mxu0 0
    %10068 = vmatpush1.bf16.msra.mxu0 %v10049
    %10069 = vmatprep.subr.bf16.mxu0 0
    %10070 = vmatpush1.bf16.msra.mxu0 %v10048
    %10071 = vmatprep.subr.bf16.mxu0 0
    %10072 = vmatpush1.bf16.msra.mxu0 %v10047
    %10073 = vmatprep.subr.bf16.mxu0 0
    %10074 = vmatpush1.bf16.msra.mxu0 %v10046
    %10075 = vmatprep.subr.bf16.mxu0 0
    %10076 = vmatpush1.bf16.msra.mxu0 %v10045
    %10077 = vmatprep.subr.bf16.mxu0 0
    %10078 = vmatpush2.bf16.msra.mxu0 0
    %10079 = vmatprep.subr.bf16.mxu0 0
    %10080 = vmatpush2.bf16.msra.mxu0 0
    %10081 = vmatprep.subr.bf16.mxu0 0
    %10082 = vmatpush2.bf16.msra.mxu0 0
    %10083 = vmatprep.subr.bf16.mxu0 0
    %10084 = vmatpush2.bf16.msra.mxu0 0
    %10085 = vmatprep.subr.bf16.mxu0 0
    %10086 = vmatpush2.bf16.msra.mxu0 0
    %10087 = vmatprep.subr.bf16.mxu0 0
    %10088 = vmatpush2.bf16.msra.mxu0 0
    %10089 = vmatprep.subr.bf16.mxu0 0
    %10090 = vmatpush2.bf16.msra.mxu0 0
    %10091 = vmatprep.subr.bf16.mxu0 0
    %10092 = vmatpush2.bf16.msra.mxu0 0
    %10093 = vmatprep.mubr.bf16.mxu0 0
    %10094 = vmatmul.mubr.bf16.gmra.mxu0 %v9039
    %v10095 = vpop.f32.mrf.mxu0
    %v10096 = vadd.f32 0.0, %v10095
    %v10097 = vpop.f32.mrf.mxu0
    %v10098 = vpop.f32.mrf.mxu0
    %v10099 = vadd.f32 0.0, %v10098
    %v10100 = vpop.f32.mrf.mxu0
    %10101 = vmatprep.mubr.bf16.mxu0 0
    %10102 = vmatmul.mubr.bf16.gmra.mxu0 %v9040
    %v10103 = vpop.f32.mrf.mxu0
    %v10104 = vadd.f32 0.0, %v10103
    %v10105 = vpop.f32.mrf.mxu0
    %v10106 = vpop.f32.mrf.mxu0
    %v10107 = vadd.f32 0.0, %v10106
    %v10108 = vpop.f32.mrf.mxu0
    %10109 = vmatprep.mubr.bf16.mxu0 0
    %10110 = vmatmul.mubr.bf16.gmra.mxu0 %v9041
    %v10111 = vpop.f32.mrf.mxu0
    %v10112 = vadd.f32 0.0, %v10111
    %v10113 = vpop.f32.mrf.mxu0
    %v10114 = vpop.f32.mrf.mxu0
    %v10115 = vadd.f32 0.0, %v10114
    %v10116 = vpop.f32.mrf.mxu0
    %10117 = vmatprep.mubr.bf16.mxu0 0
    %10118 = vmatmul.mubr.bf16.gmra.mxu0 %v9042
    %v10119 = vpop.f32.mrf.mxu0
    %v10120 = vadd.f32 0.0, %v10119
    %v10121 = vpop.f32.mrf.mxu0
    %v10122 = vpop.f32.mrf.mxu0
    %v10123 = vadd.f32 0.0, %v10122
    %v10124 = vpop.f32.mrf.mxu0
    %10125 = vdwg.mxu0
    %v10126 = vadd.f32 %v9988, %v10096
    %v10127 = vadd.f32 %v9989, %v10099
    %v10128 = vadd.f32 %v9990, %v10104
    %v10129 = vadd.f32 %v9991, %v10107
    %v10130 = vadd.f32 %v9992, %v10112
    %v10131 = vadd.f32 %v9993, %v10115
    %v10132 = vadd.f32 %v9994, %v10120
    %v10133 = vadd.f32 %v9995, %v10123
    %s10134 = scalar_lea.vmem %s9, 512
    %v10135 = vld [vmem:[%s10134] sm:$0xf]
    %v10136 = vld [vmem:[%s10134 + $0x4] sm:$0xf]
    %v10137 = vld [vmem:[%s10134 + $0x8] sm:$0xf]
    %v10138 = vld [vmem:[%s10134 + $0xc] sm:$0xf]
    %v10139 = vld [vmem:[%s10134 + $0x10] sm:$0xf]
    %v10140 = vld [vmem:[%s10134 + $0x14] sm:$0xf]
    %v10141 = vld [vmem:[%s10134 + $0x18] sm:$0xf]
    %v10142 = vld [vmem:[%s10134 + $0x1c] sm:$0xf]
    %v10143 = vld [vmem:[%s10134 + $0x20] sm:$0xf]
    %v10144 = vld [vmem:[%s10134 + $0x24] sm:$0xf]
    %v10145 = vld [vmem:[%s10134 + $0x28] sm:$0xf]
    %v10146 = vld [vmem:[%s10134 + $0x2c] sm:$0xf]
    %v10147 = vld [vmem:[%s10134 + $0x30] sm:$0xf]
    %v10148 = vld [vmem:[%s10134 + $0x34] sm:$0xf]
    %v10149 = vld [vmem:[%s10134 + $0x38] sm:$0xf]
    %v10150 = vld [vmem:[%s10134 + $0x3c] sm:$0xf]
    %v10167 = vunpack.c.l.b16 %v10135
    %v10168 = vunpack.c.l.b16 %v10136
    %v10169 = vunpack.c.l.b16 %v10137
    %v10170 = vunpack.c.l.b16 %v10138
    %v10171 = vunpack.c.l.b16 %v10139
    %v10172 = vunpack.c.l.b16 %v10140
    %v10173 = vunpack.c.l.b16 %v10141
    %v10174 = vunpack.c.l.b16 %v10142
    %v10175 = vunpack.c.l.b16 %v10143
    %v10176 = vunpack.c.l.b16 %v10144
    %v10177 = vunpack.c.l.b16 %v10145
    %v10178 = vunpack.c.l.b16 %v10146
    %v10179 = vunpack.c.l.b16 %v10147
    %v10180 = vunpack.c.l.b16 %v10148
    %v10181 = vunpack.c.l.b16 %v10149
    %v10182 = vunpack.c.l.b16 %v10150
    %v10183 = vpack.c.b16 %v10168, %v10167
    %v10184 = vpack.c.b16 %v10170, %v10169
    %v10185 = vpack.c.b16 %v10172, %v10171
    %v10186 = vpack.c.b16 %v10174, %v10173
    %v10187 = vpack.c.b16 %v10176, %v10175
    %v10188 = vpack.c.b16 %v10178, %v10177
    %v10189 = vpack.c.b16 %v10180, %v10179
    %v10190 = vpack.c.b16 %v10182, %v10181
    %10199 = vmatprep.subr.bf16.mxu0 0
    %10200 = vmatpush1.bf16.msra.mxu0 %v10190
    %10201 = vmatprep.subr.bf16.mxu0 0
    %10202 = vmatpush1.bf16.msra.mxu0 %v10189
    %10203 = vmatprep.subr.bf16.mxu0 0
    %10204 = vmatpush1.bf16.msra.mxu0 %v10188
    %10205 = vmatprep.subr.bf16.mxu0 0
    %10206 = vmatpush1.bf16.msra.mxu0 %v10187
    %10207 = vmatprep.subr.bf16.mxu0 0
    %10208 = vmatpush1.bf16.msra.mxu0 %v10186
    %10209 = vmatprep.subr.bf16.mxu0 0
    %10210 = vmatpush1.bf16.msra.mxu0 %v10185
    %10211 = vmatprep.subr.bf16.mxu0 0
    %10212 = vmatpush1.bf16.msra.mxu0 %v10184
    %10213 = vmatprep.subr.bf16.mxu0 0
    %10214 = vmatpush1.bf16.msra.mxu0 %v10183
    %10215 = vmatprep.subr.bf16.mxu0 0
    %10216 = vmatpush2.bf16.msra.mxu0 0
    %10217 = vmatprep.subr.bf16.mxu0 0
    %10218 = vmatpush2.bf16.msra.mxu0 0
    %10219 = vmatprep.subr.bf16.mxu0 0
    %10220 = vmatpush2.bf16.msra.mxu0 0
    %10221 = vmatprep.subr.bf16.mxu0 0
    %10222 = vmatpush2.bf16.msra.mxu0 0
    %10223 = vmatprep.subr.bf16.mxu0 0
    %10224 = vmatpush2.bf16.msra.mxu0 0
    %10225 = vmatprep.subr.bf16.mxu0 0
    %10226 = vmatpush2.bf16.msra.mxu0 0
    %10227 = vmatprep.subr.bf16.mxu0 0
    %10228 = vmatpush2.bf16.msra.mxu0 0
    %10229 = vmatprep.subr.bf16.mxu0 0
    %10230 = vmatpush2.bf16.msra.mxu0 0
    %10231 = vmatprep.mubr.bf16.mxu0 0
    %10232 = vmatmul.mubr.bf16.gmra.mxu0 %v9043
    %v10233 = vpop.f32.mrf.mxu0
    %v10234 = vadd.f32 0.0, %v10233
    %v10235 = vpop.f32.mrf.mxu0
    %v10236 = vpop.f32.mrf.mxu0
    %v10237 = vadd.f32 0.0, %v10236
    %v10238 = vpop.f32.mrf.mxu0
    %10239 = vmatprep.mubr.bf16.mxu0 0
    %10240 = vmatmul.mubr.bf16.gmra.mxu0 %v9044
    %v10241 = vpop.f32.mrf.mxu0
    %v10242 = vadd.f32 0.0, %v10241
    %v10243 = vpop.f32.mrf.mxu0
    %v10244 = vpop.f32.mrf.mxu0
    %v10245 = vadd.f32 0.0, %v10244
    %v10246 = vpop.f32.mrf.mxu0
    %10247 = vmatprep.mubr.bf16.mxu0 0
    %10248 = vmatmul.mubr.bf16.gmra.mxu0 %v9045
    %v10249 = vpop.f32.mrf.mxu0
    %v10250 = vadd.f32 0.0, %v10249
    %v10251 = vpop.f32.mrf.mxu0
    %v10252 = vpop.f32.mrf.mxu0
    %v10253 = vadd.f32 0.0, %v10252
    %v10254 = vpop.f32.mrf.mxu0
    %10255 = vmatprep.mubr.bf16.mxu0 0
    %10256 = vmatmul.mubr.bf16.gmra.mxu0 %v9046
    %v10257 = vpop.f32.mrf.mxu0
    %v10258 = vadd.f32 0.0, %v10257
    %v10259 = vpop.f32.mrf.mxu0
    %v10260 = vpop.f32.mrf.mxu0
    %v10261 = vadd.f32 0.0, %v10260
    %v10262 = vpop.f32.mrf.mxu0
    %10263 = vdwg.mxu0
    %v10264 = vadd.f32 %v10126, %v10234
    %v10265 = vadd.f32 %v10127, %v10237
    %v10266 = vadd.f32 %v10128, %v10242
    %v10267 = vadd.f32 %v10129, %v10245
    %v10268 = vadd.f32 %v10130, %v10250
    %v10269 = vadd.f32 %v10131, %v10253
    %v10270 = vadd.f32 %v10132, %v10258
    %v10271 = vadd.f32 %v10133, %v10261
    %v10272 = vld [vmem:[%s10] sm:$0x1]
    %v10274 = vlaneseq
    %v10275 = vshrl.u32 %v10274, 7
    %v10276 = vsub.s32 0, %v10275
    %v10277 = vrot.slane %v10272, %v10276
    %v10279 = vadd.f32 %v10264, %v10277
    %v10280 = vadd.f32 %v10265, %v10277
    %v10281 = vadd.f32 %v10266, %v10277
    %v10282 = vadd.f32 %v10267, %v10277
    %v10283 = vadd.f32 %v10268, %v10277
    %v10284 = vadd.f32 %v10269, %v10277
    %v10285 = vadd.f32 %v10270, %v10277
    %v10286 = vadd.f32 %v10271, %v10277
    %v10287 = vmax.f32 %v10279, 0.0
    %v10288 = vmax.f32 %v10280, 0.0
    %v10289 = vmax.f32 %v10281, 0.0
    %v10290 = vmax.f32 %v10282, 0.0
    %v10291 = vmax.f32 %v10283, 0.0
    %v10292 = vmax.f32 %v10284, 0.0
    %v10293 = vmax.f32 %v10285, 0.0
    %v10294 = vmax.f32 %v10286, 0.0
    %v10295 = vld [vmem:[%s11] sm:$0xff]
    %v10297 = vsel %vm8581, %v10295, 0
    %10299 = vmatprep.subr.mxu0 0.0
    %10300 = vmatpush1.msra.mxu0 0.0
    %10301 = vmatprep.subr.mxu0 0.0
    %10302 = vmatpush1.msra.mxu0 0.0
    %10303 = vmatprep.subr.mxu0 0.0
    %10304 = vmatpush1.msra.mxu0 0.0
    %10305 = vmatprep.subr.mxu0 0.0
    %10306 = vmatpush1.msra.mxu0 0.0
    %10307 = vmatprep.subr.mxu0 0.0
    %10308 = vmatpush1.msra.mxu0 0.0
    %10309 = vmatprep.subr.mxu0 0.0
    %10310 = vmatpush1.msra.mxu0 0.0
    %10311 = vmatprep.subr.mxu0 0.0
    %10312 = vmatpush1.msra.mxu0 0.0
    %10313 = vmatprep.subr.mxu0 0.0
    %10314 = vmatpush1.msra.mxu0 0.0
    %10315 = vmatprep.subr.mxu0 0.0
    %10316 = vmatpush1.msra.mxu0 %v10294
    %10317 = vmatprep.subr.mxu0 0.0
    %10318 = vmatpush1.msra.mxu0 %v10293
    %10319 = vmatprep.subr.mxu0 0.0
    %10320 = vmatpush1.msra.mxu0 %v10292
    %10321 = vmatprep.subr.mxu0 0.0
    %10322 = vmatpush1.msra.mxu0 %v10291
    %10323 = vmatprep.subr.mxu0 0.0
    %10324 = vmatpush1.msra.mxu0 %v10290
    %10325 = vmatprep.subr.mxu0 0.0
    %10326 = vmatpush1.msra.mxu0 %v10289
    %10327 = vmatprep.subr.mxu0 0.0
    %10328 = vmatpush1.msra.mxu0 %v10288
    %10329 = vmatprep.subr.mxu0 0.0
    %10330 = vmatpush1.msra.mxu0 %v10287
    %10331 = vmatprep.subr.mxu0 0.0
    %10332 = vmatpush2.msra.mxu0 0.0
    %10333 = vmatprep.subr.mxu0 0.0
    %10334 = vmatpush2.msra.mxu0 0.0
    %10335 = vmatprep.subr.mxu0 0.0
    %10336 = vmatpush2.msra.mxu0 0.0
    %10337 = vmatprep.subr.mxu0 0.0
    %10338 = vmatpush2.msra.mxu0 0.0
    %10339 = vmatprep.subr.mxu0 0.0
    %10340 = vmatpush2.msra.mxu0 0.0
    %10341 = vmatprep.subr.mxu0 0.0
    %10342 = vmatpush2.msra.mxu0 0.0
    %10343 = vmatprep.subr.mxu0 0.0
    %10344 = vmatpush2.msra.mxu0 0.0
    %10345 = vmatprep.subr.mxu0 0.0
    %10346 = vmatpush2.msra.mxu0 0.0
    %10347 = vmatprep.subr.mxu0 0.0
    %10348 = vmatpush2.msra.mxu0 0.0
    %10349 = vmatprep.subr.mxu0 0.0
    %10350 = vmatpush2.msra.mxu0 0.0
    %10351 = vmatprep.subr.mxu0 0.0
    %10352 = vmatpush2.msra.mxu0 0.0
    %10353 = vmatprep.subr.mxu0 0.0
    %10354 = vmatpush2.msra.mxu0 0.0
    %10355 = vmatprep.subr.mxu0 0.0
    %10356 = vmatpush2.msra.mxu0 0.0
    %10357 = vmatprep.subr.mxu0 0.0
    %10358 = vmatpush2.msra.mxu0 0.0
    %10359 = vmatprep.subr.mxu0 0.0
    %10360 = vmatpush2.msra.mxu0 0.0
    %10361 = vmatprep.subr.mxu0 0.0
    %10362 = vmatpush2.msra.mxu0 0.0
    %10363 = vmatprep.mubr.f32.mxu0 0.0
    %10364 = vmatmul.mubr.f32.gmra.mxu0 %v10297
    %v10365 = vpop.f32.mrf.mxu0
    %v10366 = vadd.f32 0.0, %v10365
    %v10367 = vpop.f32.mrf.mxu0
    %10368 = vdwg.mxu0
    %v10369 = vmul.f32 %v2775, %v2775
    %v10370 = vmul.f32 %v2776, %v2776
    %v10371 = vmul.f32 %v2777, %v2777
    %v10372 = vmul.f32 %v2778, %v2778
    %v10373 = vmul.f32 %v2779, %v2779
    %v10374 = vmul.f32 %v2780, %v2780
    %v10375 = vmul.f32 %v2781, %v2781
    %v10376 = vmul.f32 %v2782, %v2782
    %v10377 = vmul.f32 %v2783, %v2783
    %v10378 = vmul.f32 %v2784, %v2784
    %v10379 = vmul.f32 %v2785, %v2785
    %v10380 = vmul.f32 %v2786, %v2786
    %v10381 = vmul.f32 %v2787, %v2787
    %v10382 = vmul.f32 %v2788, %v2788
    %v10383 = vmul.f32 %v2789, %v2789
    %v10384 = vmul.f32 %v2790, %v2790
    %v10385 = vadd.f32 %v10369, %v10370
    %v10386 = vadd.f32 %v10385, %v10371
    %v10387 = vadd.f32 %v10386, %v10372
    %v10388 = vadd.f32 %v10387, %v10373
    %v10389 = vadd.f32 %v10388, %v10374
    %v10390 = vadd.f32 %v10389, %v10375
    %v10391 = vadd.f32 %v10390, %v10376
    %v10392 = vadd.f32 %v10391, %v10377
    %v10393 = vadd.f32 %v10392, %v10378
    %v10394 = vadd.f32 %v10393, %v10379
    %v10395 = vadd.f32 %v10394, %v10380
    %v10396 = vadd.f32 %v10395, %v10381
    %v10397 = vadd.f32 %v10396, %v10382
    %v10398 = vadd.f32 %v10397, %v10383
    %v10399 = vadd.f32 %v10398, %v10384
    %10400 = vadd.xlane.f32.xlu0 %v10399
    %v10401 = vpop.xlane.xlu0 %10400
    %v10402 = vrot.slane %v10401, 4
    %v10403 = vadd.f32 %v10401, %v10402
    %v10404 = vrot.slane %v10403, 2
    %v10405 = vadd.f32 %v10403, %v10404
    %v10406 = vrot.slane %v10405, 1
    %v10407 = vadd.f32 %v10405, %v10406
    %s10408 = vtos %v10407
    %s10409 = smul.f32 %s10408, 0.0009765625
    %v10410 = vmul.f32 %v8321, %v8321
    %v10411 = vmul.f32 %v8322, %v8322
    %v10412 = vmul.f32 %v8323, %v8323
    %v10413 = vmul.f32 %v8324, %v8324
    %v10414 = vadd.f32 %v10410, %v10411
    %v10415 = vadd.f32 %v10414, %v10412
    %v10416 = vadd.f32 %v10415, %v10413
    %10417 = vadd.xlane.f32.xlu0 %v10416
    %v10418 = vpop.xlane.xlu0 %10417
    %v10419 = vrot.slane %v10418, 4
    %v10420 = vadd.f32 %v10418, %v10419
    %v10421 = vrot.slane %v10420, 2
    %v10422 = vadd.f32 %v10420, %v10421
    %v10423 = vrot.slane %v10422, 1
    %v10424 = vadd.f32 %v10422, %v10423
    %s10425 = vtos %v10424
    %s10426 = smul.f32 %s10425, 0.001953125
    %s10427 = sadd.f32 %s10409, %s10426
    %v10428 = vmul.f32 %v10366, %v10366
    %10429 = vadd.xlane.f32.xlu0 %v10428
    %v10430 = vpop.xlane.xlu0 %10429
    %v10431 = vrot.slane %v10430, 4
    %v10432 = vadd.f32 %v10430, %v10431
    %v10433 = vrot.slane %v10432, 2
    %v10434 = vadd.f32 %v10432, %v10433
    %v10435 = vrot.slane %v10434, 1
    %v10436 = vadd.f32 %v10434, %v10435
    %s10437 = vtos %v10436
    %s10438 = smul.f32 %s10437, 0.015625
    %s10439 = sadd.f32 %s10427, %s10438
    %s10440 = smul.f32 %s10439, 0.33333334
    %s10441 = scalar_lea.smem [#allocation2], 0
    %10442 = sst [smem:[%s10441]] %s10440
    // Predicated region
    $region50: #{fid_loss.1} parent=1 // pred_check
      _
    $region51: #{fid_loss.1} parent=1 // pred_check_branch
      %10444 = sbr.rel (0) target = $region53
    $region52: #{fid_loss.1} parent=1 // pred_region
      %s10446 = ssub.s32 16, 16
      %10447 = vsyncadd [#allocation3], %s10446
      %10450 = dma.smem_to_hbm [#allocation2], 16, %s12, [#allocation3]
    $region53: #{fid_loss.1} parent=1 // pred_fallthru
      _
    // Predicated region
    $region54: #{fid_loss.1} parent=1 // pred_check
      _
    $region55: #{fid_loss.1} parent=1 // pred_check_branch
      %10452 = sbr.rel (0) target = $region57
    $region56: #{fid_loss.1} parent=1 // pred_region
      %10453 = dma.done [#allocation3], 16
    $region57: #{fid_loss.1} parent=1 // pred_fallthru
      _
    %10454 = sfence
    %10455 = vsyncpa [#allocation3], 1

</llo_original>
